<compile_context>
chip_gen: v7x
topology: tpu7x:2x2x1
jax: 0.10.0
libtpu: 0.0.40
codegen_flags: <defaults>
</compile_context>

<pallas_src>
import numpy as np

import jax
import jax.numpy as jnp
from jax.experimental import pallas as pl
from jax.experimental.pallas import tpu as pltpu

# ----------------------------- config (small) -------------------------------
B = 2                # batch
SEQ = 64             # 8x8 board squares
VOCAB = 13           # piece vocabulary (incl. empty)
VOCAB_PAD = 16       # vocab padded for clean tiling of the one-hot matmul
EMB_CNN = 16         # CNN embedding channels
CONV_CH = 32         # conv channels
HIDDEN_CNN = 64      # CNN FC hidden
D_MODEL = 32         # transformer model dim
N_HEADS = 4
HEAD_DIM = D_MODEL // N_HEADS
FFN = 64
NUM_ACTIONS = 128    # q_hat logits
NUM_AUX = 64         # aux logits
HEADS_OUT = NUM_ACTIONS + NUM_AUX   # fused q|aux head width (192)
ROWS = B * SEQ       # 128 board-square rows


# --------------------- constant helper matrices (numpy) ----------------------
def _make_conv_tap_masks() -> np.ndarray:
    """mask[r, k] = 1 iff tap k = (dh, dw) of square r stays on the 8x8 board.

    Because validity is checked for BOTH the row (dh) and column (dw) offsets,
    rolled reads that would cross a board/batch boundary are always masked out.
    """
    m = np.zeros((ROWS, 9), np.float32)
    for k in range(9):
        dh, dw = k // 3, k % 3
        for b in range(B):
            for i in range(8):
                for j in range(8):
                    if 0 <= i + dh - 1 < 8 and 0 <= j + dw - 1 < 8:
                        m[b * 64 + i * 8 + j, k] = 1.0
    return m


def _make_flatten_mats():
    """Constants that express the (B*64,32) -> (B, 64*32) flatten as MXU matmuls.

    flat[b, s*32+c] = sum_r Pool[b,r] * (h @ TileMat)[r, s*32+c] * FlatMask[r, s*32+c]
                    = h[b*64+s, c]
    """
    tilemat = np.tile(np.eye(CONV_CH, dtype=np.float32), (1, SEQ))      # (32, 2048)
    flatmask = np.zeros((ROWS, SEQ * CONV_CH), np.float32)              # (128, 2048)
    for r in range(ROWS):
        s = r % SEQ
        flatmask[r, s * CONV_CH:(s + 1) * CONV_CH] = 1.0
    pool = np.zeros((B, ROWS), np.float32)                              # (2, 128)
    for b in range(B):
        pool[b, b * SEQ:(b + 1) * SEQ] = 1.0
    return tilemat, flatmask, pool


_CONV_MASK = _make_conv_tap_masks()
_TILEMAT, _FLATMASK, _POOL = _make_flatten_mats()


# --------------------------- the single fused kernel --------------------------
def _ensemble_kernel(tok_ref, cnn_emb_ref, tr_emb_ref, pos_ref,
                     c1w_ref, c1b_ref, c2w_ref, c2b_ref, cmask_ref,
                     tilemat_ref, flatmask_ref, pool_ref,
                     fcw_ref, fcb_ref, chw_ref, chb_ref,
                     wqkv_ref, bqkv_ref, wo_ref, bo_ref,
                     ln1g_ref, ln1b_ref, ln2g_ref, ln2b_ref,
                     f1w_ref, f1b_ref, f2w_ref, f2b_ref,
                     thw_ref, thb_ref, blend_ref, out_ref):
    f32 = jnp.float32

    # ---- in-kernel one-hot: tokens (B*64,1) int32 vs iota over VOCAB_PAD lanes ----
    tok = tok_ref[...]                                                    # (128, 1) i32
    lane = jax.lax.broadcasted_iota(jnp.int32, (ROWS, VOCAB_PAD), 1)
    onehot = (lane == tok).astype(f32)                                    # (128, 16)

    # =============================== CNN branch ===============================
    x = jnp.dot(onehot, cnn_emb_ref[...], preferred_element_type=f32)     # (128, 16)

    def conv3x3(xin, w_ref, b_ref):
        # one lane-dense matmul for all 9 taps, then roll+mask+accumulate the
        # 32-lane per-tap slices (rolls go to the XLU, masks to the VPU).
        p = jnp.dot(xin, w_ref[...], preferred_element_type=f32)          # (128, 288)
        acc = p[:, 4 * CONV_CH:5 * CONV_CH]                               # center tap
        for k in range(9):
            if k == 4:
                continue
            dh, dw = k // 3, k % 3
            delta = (dh - 1) * 8 + (dw - 1)
            shift = (-delta) % ROWS
            pk = pltpu.roll(p[:, k * CONV_CH:(k + 1) * CONV_CH], shift, 0)
            acc = acc + pk * cmask_ref[:, k:k + 1]
        return jnp.maximum(acc + b_ref[...], 0.0)

    h = conv3x3(x, c1w_ref, c1b_ref)                                      # (128, 32)
    h = conv3x3(h, c2w_ref, c2b_ref)                                      # (128, 32)

    # flatten (B*64, 32) -> (B, 64*32) with MXU matmuls (no sublane->lane copies)
    tile_h = jnp.dot(h, tilemat_ref[...], preferred_element_type=f32)     # (128, 2048)
    flat = jnp.dot(pool_ref[...], tile_h * flatmask_ref[...],
                   preferred_element_type=f32)                            # (B, 2048)

    fc = jnp.dot(flat, fcw_ref[...], preferred_element_type=f32) + fcb_ref[...]
    fc = jnp.maximum(fc, 0.0)                                             # (B, 64)
    cnn_heads = jnp.dot(fc, chw_ref[...], preferred_element_type=f32) + chb_ref[...]   # (B, 192)

    # ============================ transformer branch ============================
    def layer_norm(t, g, b):
        mu = jnp.mean(t, axis=-1, keepdims=True)
        var = jnp.mean((t - mu) ** 2, axis=-1, keepdims=True)
        return (t - mu) * jax.lax.rsqrt(var + 1e-5) * g + b

    xt = jnp.dot(onehot, tr_emb_ref[...], preferred_element_type=f32) + pos_ref[...]   # (128, 32)
    qkv = jnp.dot(xt, wqkv_ref[...], preferred_element_type=f32) + bqkv_ref[...]       # (128, 96)

    scale = 1.0 / (HEAD_DIM ** 0.5)
    dn = (((1,), (1,)), ((), ()))                      # contract last dims (q @ k^T)
    ctx_rows = []
    for b in range(B):
        r0 = b * SEQ
        head_outs = []
        for hh in range(N_HEADS):
            c0 = hh * HEAD_DIM
            qh = qkv[r0:r0 + SEQ, c0:c0 + HEAD_DIM]
            kh = qkv[r0:r0 + SEQ, D_MODEL + c0:D_MODEL + c0 + HEAD_DIM]
            vh = qkv[r0:r0 + SEQ, 2 * D_MODEL + c0:2 * D_MODEL + c0 + HEAD_DIM]
            s = jax.lax.dot_general(qh, kh, dn, preferred_element_type=f32) * scale    # (64, 64)
            s = s - jnp.max(s, axis=-1, keepdims=True)
            p = jnp.exp(s)
            p = p * pl.reciprocal(jnp.sum(p, axis=-1, keepdims=True), approx=True)
            head_outs.append(jnp.dot(p, vh, preferred_element_type=f32))               # (64, 8)
        ctx_rows.append(jnp.concatenate(head_outs, axis=1))                            # (64, 32)
    ctx = jnp.concatenate(ctx_rows, axis=0)                                            # (128, 32)

    attn = jnp.dot(ctx, wo_ref[...], preferred_element_type=f32) + bo_ref[...]
    h1 = layer_norm(xt + attn, ln1g_ref[...], ln1b_ref[...])

    ff = jnp.dot(h1, f1w_ref[...], preferred_element_type=f32) + f1b_ref[...]
    ff = jnp.maximum(ff, 0.0)
    ff = jnp.dot(ff, f2w_ref[...], preferred_element_type=f32) + f2b_ref[...]
    h2 = layer_norm(h1 + ff, ln2g_ref[...], ln2b_ref[...])

    # mean-pool over the 64 squares as one MXU dot against the constant pool matrix
    pooled = jnp.dot(pool_ref[...], h2, preferred_element_type=f32) * (1.0 / SEQ)      # (B, 32)
    tr_heads = jnp.dot(pooled, thw_ref[...], preferred_element_type=f32) + thb_ref[...]  # (B, 192)

    # ensemble blend: lane-dense (B, 192) output; blend vector built in the wrapper
    bw = blend_ref[...]                                                   # (1, 192)
    out_ref[...] = cnn_heads * bw + tr_heads * (1.0 - bw)


def _vmem_spec():
    return pl.BlockSpec(memory_space=pltpu.MemorySpace.VMEM)


# ------------------------------ forward pass ---------------------------------
@jax.jit
def ensemble_forward(params, x_tokens):
    f32 = jnp.float32
    tok = x_tokens.reshape(ROWS, 1).astype(jnp.int32)

    cnn_emb = jnp.zeros((VOCAB_PAD, EMB_CNN), f32).at[:VOCAB].set(params["cnn_emb"])
    tr_emb = jnp.zeros((VOCAB_PAD, D_MODEL), f32).at[:VOCAB].set(params["tr_emb"])
    pos = jnp.tile(params["tr_pos"], (B, 1))                               # (B*64, 32)

    # conv weights re-laid-out to lane-dense (cin, 9*CONV_CH): W_all[c, k*32+o]
    c1w = params["conv1_w"].reshape(9, EMB_CNN, CONV_CH).transpose(1, 0, 2).reshape(EMB_CNN, 9 * CONV_CH)
    c2w = params["conv2_w"].reshape(9, CONV_CH, CONV_CH).transpose(1, 0, 2).reshape(CONV_CH, 9 * CONV_CH)

    wqkv = jnp.concatenate([params["tr_wq"], params["tr_wk"], params["tr_wv"]], axis=1)
    bqkv = jnp.concatenate([params["tr_wq_b"], params["tr_wk_b"], params["tr_wv_b"]], axis=0)
    cnn_head_w = jnp.concatenate([params["cnn_q_w"], params["cnn_aux_w"]], axis=1)
    cnn_head_b = jnp.concatenate([params["cnn_q_b"], params["cnn_aux_b"]], axis=0)
    tr_head_w = jnp.concatenate([params["tr_q_w"], params["tr_aux_w"]], axis=1)
    tr_head_b = jnp.concatenate([params["tr_q_b"], params["tr_aux_b"]], axis=0)

    # lane-aligned blend vector: q_weight on the 128 q lanes, aux_weight on the 64 aux lanes
    blend = jnp.concatenate([
        jnp.broadcast_to(jnp.asarray(params["q_weight"], f32), (NUM_ACTIONS,)),
        jnp.broadcast_to(jnp.asarray(params["aux_weight"], f32), (NUM_AUX,)),
    ]).reshape(1, HEADS_OUT)

    args = (
        tok, cnn_emb, tr_emb, pos,
        c1w, params["conv1_b"].reshape(1, -1),
        c2w, params["conv2_b"].reshape(1, -1),
        jnp.asarray(_CONV_MASK), jnp.asarray(_TILEMAT), jnp.asarray(_FLATMASK), jnp.asarray(_POOL),
        params["cnn_fc_w"], params["cnn_fc_b"].reshape(1, -1),
        cnn_head_w, cnn_head_b.reshape(1, -1),
        wqkv, bqkv.reshape(1, -1),
        params["tr_wo"], params["tr_wo_b"].reshape(1, -1),
        params["tr_ln1_g"].reshape(1, -1), params["tr_ln1_b"].reshape(1, -1),
        params["tr_ln2_g"].reshape(1, -1), params["tr_ln2_b"].reshape(1, -1),
        params["tr_ffn1_w"], params["tr_ffn1_b"].reshape(1, -1),
        params["tr_ffn2_w"], params["tr_ffn2_b"].reshape(1, -1),
        tr_head_w, tr_head_b.reshape(1, -1),
        blend,
    )

    out = pl.pallas_call(
        _ensemble_kernel,
        out_shape=jax.ShapeDtypeStruct((B, HEADS_OUT), jnp.float32),
        in_specs=[_vmem_spec() for _ in args],
        out_specs=_vmem_spec(),
    )(*args)

    return out[:, :NUM_ACTIONS], out[:, NUM_ACTIONS:]


# --------------------------- deterministic init ------------------------------
def init_params(key):
    keys = iter(jax.random.split(key, 20))

    def nrm(shape):
        return (0.02 * jax.random.normal(next(keys), shape)).astype(jnp.float32)

    p = {}
    # CNN branch
    p["cnn_emb"] = nrm((VOCAB, EMB_CNN))
    p["conv1_w"] = nrm((9 * EMB_CNN, CONV_CH))
    p["conv1_b"] = jnp.zeros((CONV_CH,), jnp.float32)
    p["conv2_w"] = nrm((9 * CONV_CH, CONV_CH))
    p["conv2_b"] = jnp.zeros((CONV_CH,), jnp.float32)
    p["cnn_fc_w"] = nrm((64 * CONV_CH, HIDDEN_CNN))
    p["cnn_fc_b"] = jnp.zeros((HIDDEN_CNN,), jnp.float32)
    p["cnn_q_w"] = nrm((HIDDEN_CNN, NUM_ACTIONS))
    p["cnn_q_b"] = jnp.zeros((NUM_ACTIONS,), jnp.float32)
    p["cnn_aux_w"] = nrm((HIDDEN_CNN, NUM_AUX))
    p["cnn_aux_b"] = jnp.zeros((NUM_AUX,), jnp.float32)
    # Transformer branch
    p["tr_emb"] = nrm((VOCAB, D_MODEL))
    p["tr_pos"] = nrm((SEQ, D_MODEL))
    for name in ("wq", "wk", "wv", "wo"):
        p[f"tr_{name}"] = nrm((D_MODEL, D_MODEL))
        p[f"tr_{name}_b"] = jnp.zeros((D_MODEL,), jnp.float32)
    p["tr_ln1_g"] = jnp.ones((D_MODEL,), jnp.float32)
    p["tr_ln1_b"] = jnp.zeros((D_MODEL,), jnp.float32)
    p["tr_ln2_g"] = jnp.ones((D_MODEL,), jnp.float32)
    p["tr_ln2_b"] = jnp.zeros((D_MODEL,), jnp.float32)
    p["tr_ffn1_w"] = nrm((D_MODEL, FFN))
    p["tr_ffn1_b"] = jnp.zeros((FFN,), jnp.float32)
    p["tr_ffn2_w"] = nrm((FFN, D_MODEL))
    p["tr_ffn2_b"] = jnp.zeros((D_MODEL,), jnp.float32)
    p["tr_q_w"] = nrm((D_MODEL, NUM_ACTIONS))
    p["tr_q_b"] = jnp.zeros((NUM_ACTIONS,), jnp.float32)
    p["tr_aux_w"] = nrm((D_MODEL, NUM_AUX))
    p["tr_aux_b"] = jnp.zeros((NUM_AUX,), jnp.float32)
    # nn.Parameter(torch.tensor(0.5)) x2
    p["q_weight"] = jnp.float32(0.5)
    p["aux_weight"] = jnp.float32(0.5)
    return p


# ----------------------- pure-JAX reference (correctness) --------------------
def _reference_forward(params, x_tokens):
    b = x_tokens.shape[0]
    # CNN branch (NHWC, im2col conv)
    emb = jnp.take(params["cnn_emb"], x_tokens, axis=0).reshape(b, 8, 8, EMB_CNN)

    def im2col(t):
        Bx, H, W, C = t.shape
        tp = jnp.pad(t, ((0, 0), (1, 1), (1, 1), (0, 0)))
        cols = [tp[:, dh:dh + H, dw:dw + W, :] for dh in range(3) for dw in range(3)]
        return jnp.concatenate(cols, axis=-1).reshape(Bx * H * W, 9 * C)

    h = jnp.maximum(im2col(emb) @ params["conv1_w"] + params["conv1_b"], 0.0)
    h = h.reshape(b, 8, 8, CONV_CH)
    h = jnp.maximum(im2col(h) @ params["conv2_w"] + params["conv2_b"], 0.0)
    h = h.reshape(b, 64 * CONV_CH)
    h = jnp.maximum(h @ params["cnn_fc_w"] + params["cnn_fc_b"], 0.0)
    cnn_q = h @ params["cnn_q_w"] + params["cnn_q_b"]
    cnn_aux = h @ params["cnn_aux_w"] + params["cnn_aux_b"]

    # Transformer branch
    t = jnp.take(params["tr_emb"], x_tokens, axis=0) + params["tr_pos"][None]
    t2 = t.reshape(b * SEQ, D_MODEL)
    q = t2 @ params["tr_wq"] + params["tr_wq_b"]
    k = t2 @ params["tr_wk"] + params["tr_wk_b"]
    v = t2 @ params["tr_wv"] + params["tr_wv_b"]

    def split(u):
        return u.reshape(b, SEQ, N_HEADS, HEAD_DIM).transpose(0, 2, 1, 3)

    qh, kh, vh = split(q), split(k), split(v)
    s = jnp.einsum("bhqd,bhkd->bhqk", qh, kh) / (HEAD_DIM ** 0.5)
    p = jax.nn.softmax(s, axis=-1)
    a = jnp.einsum("bhqk,bhkd->bhqd", p, vh).transpose(0, 2, 1, 3).reshape(b * SEQ, D_MODEL)
    a = a @ params["tr_wo"] + params["tr_wo_b"]

    def ln(u, g, bb):
        mu = u.mean(-1, keepdims=True)
        var = ((u - mu) ** 2).mean(-1, keepdims=True)
        return (u - mu) * jax.lax.rsqrt(var + 1e-5) * g + bb

    h1 = ln(t2 + a, params["tr_ln1_g"], params["tr_ln1_b"])
    ff = jnp.maximum(h1 @ params["tr_ffn1_w"] + params["tr_ffn1_b"], 0.0)
    ff = ff @ params["tr_ffn2_w"] + params["tr_ffn2_b"]
    h2 = ln(h1 + ff, params["tr_ln2_g"], params["tr_ln2_b"])
    pooled = h2.reshape(b, SEQ, D_MODEL).mean(axis=1)
    tr_q = pooled @ params["tr_q_w"] + params["tr_q_b"]
    tr_aux = pooled @ params["tr_aux_w"] + params["tr_aux_b"]

    qw, aw = params["q_weight"], params["aux_weight"]
    return cnn_q * qw + tr_q * (1 - qw), cnn_aux * aw + tr_aux * (1 - aw)


# ---------------------------------- main -------------------------------------
if __name__ == "__main__":
    key = jax.random.PRNGKey(0)
    k_param, k_x = jax.random.split(key)
    params = init_params(k_param)
    x = jax.random.randint(k_x, (B, SEQ), 0, VOCAB, dtype=jnp.int32)

    q_hat, aux_logits = ensemble_forward(params, x)
    jax.block_until_ready((q_hat, aux_logits))

    assert q_hat.shape == (B, NUM_ACTIONS) and q_hat.dtype == jnp.float32
    assert aux_logits.shape == (B, NUM_AUX) and aux_logits.dtype == jnp.float32

    # correctness vs pure-JAX reference (kernels are f32 end-to-end)
    ref_q, ref_aux = _reference_forward(params, x)
    assert jnp.allclose(q_hat, ref_q, rtol=5e-3, atol=1e-5), "q_hat mismatch vs reference"
    assert jnp.allclose(aux_logits, ref_aux, rtol=5e-3, atol=1e-5), "aux mismatch vs reference"

    print("KERNEL_OK")
</pallas_src>

<mosaic_0001>
module attributes {stable_mosaic.version = 11 : i64} {
  func.func @_ensemble_kernel(%arg0: memref<128x1xi32, #tpu.memory_space<vmem>>, %arg1: memref<16x16xf32, #tpu.memory_space<vmem>>, %arg2: memref<16x32xf32, #tpu.memory_space<vmem>>, %arg3: memref<128x32xf32, #tpu.memory_space<vmem>>, %arg4: memref<16x288xf32, #tpu.memory_space<vmem>>, %arg5: memref<1x32xf32, #tpu.memory_space<vmem>>, %arg6: memref<32x288xf32, #tpu.memory_space<vmem>>, %arg7: memref<1x32xf32, #tpu.memory_space<vmem>>, %arg8: memref<128x9xf32, #tpu.memory_space<vmem>>, %arg9: memref<32x2048xf32, #tpu.memory_space<vmem>>, %arg10: memref<128x2048xf32, #tpu.memory_space<vmem>>, %arg11: memref<2x128xf32, #tpu.memory_space<vmem>>, %arg12: memref<2048x64xf32, #tpu.memory_space<vmem>>, %arg13: memref<1x64xf32, #tpu.memory_space<vmem>>, %arg14: memref<64x192xf32, #tpu.memory_space<vmem>>, %arg15: memref<1x192xf32, #tpu.memory_space<vmem>>, %arg16: memref<32x96xf32, #tpu.memory_space<vmem>>, %arg17: memref<1x96xf32, #tpu.memory_space<vmem>>, %arg18: memref<32x32xf32, #tpu.memory_space<vmem>>, %arg19: memref<1x32xf32, #tpu.memory_space<vmem>>, %arg20: memref<1x32xf32, #tpu.memory_space<vmem>>, %arg21: memref<1x32xf32, #tpu.memory_space<vmem>>, %arg22: memref<1x32xf32, #tpu.memory_space<vmem>>, %arg23: memref<1x32xf32, #tpu.memory_space<vmem>>, %arg24: memref<32x64xf32, #tpu.memory_space<vmem>>, %arg25: memref<1x64xf32, #tpu.memory_space<vmem>>, %arg26: memref<64x32xf32, #tpu.memory_space<vmem>>, %arg27: memref<1x32xf32, #tpu.memory_space<vmem>>, %arg28: memref<32x192xf32, #tpu.memory_space<vmem>>, %arg29: memref<1x192xf32, #tpu.memory_space<vmem>>, %arg30: memref<1x192xf32, #tpu.memory_space<vmem>>, %arg31: memref<2x192xf32, #tpu.memory_space<vmem>>) attributes {dimension_semantics = [], scalar_prefetch = 0 : i64, scratch_operands = 0 : i64, tpu.core_type = #tpu.core_type<tc>} {
    %c0 = arith.constant 0 : index
    %c0_0 = arith.constant 0 : index
    %0 = vector.load %arg0[%c0, %c0_0] : memref<128x1xi32, #tpu.memory_space<vmem>>, vector<128x1xi32>
    %1 = tpu.iota {dimensions = array<i32: 1>} : vector<128x16xi32>
    %2 = vector.broadcast %0 : vector<128x1xi32> to vector<128x16xi32>
    %3 = arith.cmpi eq, %1, %2 : vector<128x16xi32>
    %4 = arith.extui %3 : vector<128x16xi1> to vector<128x16xi32>
    %5 = arith.sitofp %4 : vector<128x16xi32> to vector<128x16xf32>
    %c0_1 = arith.constant 0 : index
    %c0_2 = arith.constant 0 : index
    %6 = vector.load %arg1[%c0_1, %c0_2] : memref<16x16xf32, #tpu.memory_space<vmem>>, vector<16x16xf32>
    %cst = arith.constant dense<0.000000e+00> : vector<128x16xf32>
    %7 = tpu.matmul %5, %6, %cst {dimension_numbers = #tpu.dot_dimension_numbers<[1], [0], [0], [1], [0, 0, 1, 1], [], []>} : vector<128x16xf32>, vector<16x16xf32>, vector<128x16xf32> -> vector<128x16xf32>
    %c0_3 = arith.constant 0 : index
    %c0_4 = arith.constant 0 : index
    %8 = vector.load %arg4[%c0_3, %c0_4] : memref<16x288xf32, #tpu.memory_space<vmem>>, vector<16x288xf32>
    %cst_5 = arith.constant dense<0.000000e+00> : vector<128x288xf32>
    %9 = tpu.matmul %7, %8, %cst_5 {dimension_numbers = #tpu.dot_dimension_numbers<[1], [0], [0], [1], [0, 0, 1, 1], [], []>} : vector<128x16xf32>, vector<16x288xf32>, vector<128x288xf32> -> vector<128x288xf32>
    %10 = vector.extract_strided_slice %9 {offsets = [0, 128], sizes = [128, 32], strides = [1, 1]} : vector<128x288xf32> to vector<128x32xf32>
    %11 = vector.extract_strided_slice %9 {offsets = [0, 0], sizes = [128, 32], strides = [1, 1]} : vector<128x288xf32> to vector<128x32xf32>
    %c9_i32 = arith.constant 9 : i32
    %12 = tpu.dynamic_rotate %11 by %c9_i32 dim 0 : vector<128x32xf32>, i32 -> vector<128x32xf32>
    %c0_6 = arith.constant 0 : index
    %c0_7 = arith.constant 0 : index
    %13 = vector.load %arg8[%c0_6, %c0_7] : memref<128x9xf32, #tpu.memory_space<vmem>>, vector<128x1xf32>
    %14 = vector.broadcast %13 : vector<128x1xf32> to vector<128x32xf32>
    %15 = arith.mulf %12, %14 : vector<128x32xf32>
    %16 = arith.addf %10, %15 : vector<128x32xf32>
    %17 = vector.extract_strided_slice %9 {offsets = [0, 32], sizes = [128, 32], strides = [1, 1]} : vector<128x288xf32> to vector<128x32xf32>
    %c8_i32 = arith.constant 8 : i32
    %18 = tpu.dynamic_rotate %17 by %c8_i32 dim 0 : vector<128x32xf32>, i32 -> vector<128x32xf32>
    %c0_8 = arith.constant 0 : index
    %c1 = arith.constant 1 : index
    %19 = vector.load %arg8[%c0_8, %c1] : memref<128x9xf32, #tpu.memory_space<vmem>>, vector<128x1xf32>
    %20 = vector.broadcast %19 : vector<128x1xf32> to vector<128x32xf32>
    %21 = arith.mulf %18, %20 : vector<128x32xf32>
    %22 = arith.addf %16, %21 : vector<128x32xf32>
    %23 = vector.extract_strided_slice %9 {offsets = [0, 64], sizes = [128, 32], strides = [1, 1]} : vector<128x288xf32> to vector<128x32xf32>
    %c7_i32 = arith.constant 7 : i32
    %24 = tpu.dynamic_rotate %23 by %c7_i32 dim 0 : vector<128x32xf32>, i32 -> vector<128x32xf32>
    %c0_9 = arith.constant 0 : index
    %c2 = arith.constant 2 : index
    %25 = vector.load %arg8[%c0_9, %c2] : memref<128x9xf32, #tpu.memory_space<vmem>>, vector<128x1xf32>
    %26 = vector.broadcast %25 : vector<128x1xf32> to vector<128x32xf32>
    %27 = arith.mulf %24, %26 : vector<128x32xf32>
    %28 = arith.addf %22, %27 : vector<128x32xf32>
    %29 = vector.extract_strided_slice %9 {offsets = [0, 96], sizes = [128, 32], strides = [1, 1]} : vector<128x288xf32> to vector<128x32xf32>
    %c1_i32 = arith.constant 1 : i32
    %30 = tpu.dynamic_rotate %29 by %c1_i32 dim 0 : vector<128x32xf32>, i32 -> vector<128x32xf32>
    %c0_10 = arith.constant 0 : index
    %c3 = arith.constant 3 : index
    %31 = vector.load %arg8[%c0_10, %c3] : memref<128x9xf32, #tpu.memory_space<vmem>>, vector<128x1xf32>
    %32 = vector.broadcast %31 : vector<128x1xf32> to vector<128x32xf32>
    %33 = arith.mulf %30, %32 : vector<128x32xf32>
    %34 = arith.addf %28, %33 : vector<128x32xf32>
    %35 = vector.extract_strided_slice %9 {offsets = [0, 160], sizes = [128, 32], strides = [1, 1]} : vector<128x288xf32> to vector<128x32xf32>
    %c127_i32 = arith.constant 127 : i32
    %36 = tpu.dynamic_rotate %35 by %c127_i32 dim 0 : vector<128x32xf32>, i32 -> vector<128x32xf32>
    %c0_11 = arith.constant 0 : index
    %c5 = arith.constant 5 : index
    %37 = vector.load %arg8[%c0_11, %c5] : memref<128x9xf32, #tpu.memory_space<vmem>>, vector<128x1xf32>
    %38 = vector.broadcast %37 : vector<128x1xf32> to vector<128x32xf32>
    %39 = arith.mulf %36, %38 : vector<128x32xf32>
    %40 = arith.addf %34, %39 : vector<128x32xf32>
    %41 = vector.extract_strided_slice %9 {offsets = [0, 192], sizes = [128, 32], strides = [1, 1]} : vector<128x288xf32> to vector<128x32xf32>
    %c121_i32 = arith.constant 121 : i32
    %42 = tpu.dynamic_rotate %41 by %c121_i32 dim 0 : vector<128x32xf32>, i32 -> vector<128x32xf32>
    %c0_12 = arith.constant 0 : index
    %c6 = arith.constant 6 : index
    %43 = vector.load %arg8[%c0_12, %c6] : memref<128x9xf32, #tpu.memory_space<vmem>>, vector<128x1xf32>
    %44 = vector.broadcast %43 : vector<128x1xf32> to vector<128x32xf32>
    %45 = arith.mulf %42, %44 : vector<128x32xf32>
    %46 = arith.addf %40, %45 : vector<128x32xf32>
    %47 = vector.extract_strided_slice %9 {offsets = [0, 224], sizes = [128, 32], strides = [1, 1]} : vector<128x288xf32> to vector<128x32xf32>
    %c120_i32 = arith.constant 120 : i32
    %48 = tpu.dynamic_rotate %47 by %c120_i32 dim 0 : vector<128x32xf32>, i32 -> vector<128x32xf32>
    %c0_13 = arith.constant 0 : index
    %c7 = arith.constant 7 : index
    %49 = vector.load %arg8[%c0_13, %c7] : memref<128x9xf32, #tpu.memory_space<vmem>>, vector<128x1xf32>
    %50 = vector.broadcast %49 : vector<128x1xf32> to vector<128x32xf32>
    %51 = arith.mulf %48, %50 : vector<128x32xf32>
    %52 = arith.addf %46, %51 : vector<128x32xf32>
    %53 = vector.extract_strided_slice %9 {offsets = [0, 256], sizes = [128, 32], strides = [1, 1]} : vector<128x288xf32> to vector<128x32xf32>
    %c119_i32 = arith.constant 119 : i32
    %54 = tpu.dynamic_rotate %53 by %c119_i32 dim 0 : vector<128x32xf32>, i32 -> vector<128x32xf32>
    %c0_14 = arith.constant 0 : index
    %c8 = arith.constant 8 : index
    %55 = vector.load %arg8[%c0_14, %c8] : memref<128x9xf32, #tpu.memory_space<vmem>>, vector<128x1xf32>
    %56 = vector.broadcast %55 : vector<128x1xf32> to vector<128x32xf32>
    %57 = arith.mulf %54, %56 : vector<128x32xf32>
    %58 = arith.addf %52, %57 : vector<128x32xf32>
    %c0_15 = arith.constant 0 : index
    %c0_16 = arith.constant 0 : index
    %59 = vector.load %arg5[%c0_15, %c0_16] : memref<1x32xf32, #tpu.memory_space<vmem>>, vector<1x32xf32>
    %60 = vector.broadcast %59 : vector<1x32xf32> to vector<128x32xf32>
    %61 = arith.addf %58, %60 : vector<128x32xf32>
    %cst_17 = arith.constant 0.000000e+00 : f32
    %62 = vector.broadcast %cst_17 : f32 to vector<128x32xf32>
    %63 = arith.maximumf %61, %62 : vector<128x32xf32>
    %c0_18 = arith.constant 0 : index
    %c0_19 = arith.constant 0 : index
    %64 = vector.load %arg6[%c0_18, %c0_19] : memref<32x288xf32, #tpu.memory_space<vmem>>, vector<32x288xf32>
    %cst_20 = arith.constant dense<0.000000e+00> : vector<128x288xf32>
    %65 = tpu.matmul %63, %64, %cst_20 {dimension_numbers = #tpu.dot_dimension_numbers<[1], [0], [0], [1], [0, 0, 1, 1], [], []>} : vector<128x32xf32>, vector<32x288xf32>, vector<128x288xf32> -> vector<128x288xf32>
    %66 = vector.extract_strided_slice %65 {offsets = [0, 128], sizes = [128, 32], strides = [1, 1]} : vector<128x288xf32> to vector<128x32xf32>
    %67 = vector.extract_strided_slice %65 {offsets = [0, 0], sizes = [128, 32], strides = [1, 1]} : vector<128x288xf32> to vector<128x32xf32>
    %c9_i32_21 = arith.constant 9 : i32
    %68 = tpu.dynamic_rotate %67 by %c9_i32_21 dim 0 : vector<128x32xf32>, i32 -> vector<128x32xf32>
    %c0_22 = arith.constant 0 : index
    %c0_23 = arith.constant 0 : index
    %69 = vector.load %arg8[%c0_22, %c0_23] : memref<128x9xf32, #tpu.memory_space<vmem>>, vector<128x1xf32>
    %70 = vector.broadcast %69 : vector<128x1xf32> to vector<128x32xf32>
    %71 = arith.mulf %68, %70 : vector<128x32xf32>
    %72 = arith.addf %66, %71 : vector<128x32xf32>
    %73 = vector.extract_strided_slice %65 {offsets = [0, 32], sizes = [128, 32], strides = [1, 1]} : vector<128x288xf32> to vector<128x32xf32>
    %c8_i32_24 = arith.constant 8 : i32
    %74 = tpu.dynamic_rotate %73 by %c8_i32_24 dim 0 : vector<128x32xf32>, i32 -> vector<128x32xf32>
    %c0_25 = arith.constant 0 : index
    %c1_26 = arith.constant 1 : index
    %75 = vector.load %arg8[%c0_25, %c1_26] : memref<128x9xf32, #tpu.memory_space<vmem>>, vector<128x1xf32>
    %76 = vector.broadcast %75 : vector<128x1xf32> to vector<128x32xf32>
    %77 = arith.mulf %74, %76 : vector<128x32xf32>
    %78 = arith.addf %72, %77 : vector<128x32xf32>
    %79 = vector.extract_strided_slice %65 {offsets = [0, 64], sizes = [128, 32], strides = [1, 1]} : vector<128x288xf32> to vector<128x32xf32>
    %c7_i32_27 = arith.constant 7 : i32
    %80 = tpu.dynamic_rotate %79 by %c7_i32_27 dim 0 : vector<128x32xf32>, i32 -> vector<128x32xf32>
    %c0_28 = arith.constant 0 : index
    %c2_29 = arith.constant 2 : index
    %81 = vector.load %arg8[%c0_28, %c2_29] : memref<128x9xf32, #tpu.memory_space<vmem>>, vector<128x1xf32>
    %82 = vector.broadcast %81 : vector<128x1xf32> to vector<128x32xf32>
    %83 = arith.mulf %80, %82 : vector<128x32xf32>
    %84 = arith.addf %78, %83 : vector<128x32xf32>
    %85 = vector.extract_strided_slice %65 {offsets = [0, 96], sizes = [128, 32], strides = [1, 1]} : vector<128x288xf32> to vector<128x32xf32>
    %c1_i32_30 = arith.constant 1 : i32
    %86 = tpu.dynamic_rotate %85 by %c1_i32_30 dim 0 : vector<128x32xf32>, i32 -> vector<128x32xf32>
    %c0_31 = arith.constant 0 : index
    %c3_32 = arith.constant 3 : index
    %87 = vector.load %arg8[%c0_31, %c3_32] : memref<128x9xf32, #tpu.memory_space<vmem>>, vector<128x1xf32>
    %88 = vector.broadcast %87 : vector<128x1xf32> to vector<128x32xf32>
    %89 = arith.mulf %86, %88 : vector<128x32xf32>
    %90 = arith.addf %84, %89 : vector<128x32xf32>
    %91 = vector.extract_strided_slice %65 {offsets = [0, 160], sizes = [128, 32], strides = [1, 1]} : vector<128x288xf32> to vector<128x32xf32>
    %c127_i32_33 = arith.constant 127 : i32
    %92 = tpu.dynamic_rotate %91 by %c127_i32_33 dim 0 : vector<128x32xf32>, i32 -> vector<128x32xf32>
    %c0_34 = arith.constant 0 : index
    %c5_35 = arith.constant 5 : index
    %93 = vector.load %arg8[%c0_34, %c5_35] : memref<128x9xf32, #tpu.memory_space<vmem>>, vector<128x1xf32>
    %94 = vector.broadcast %93 : vector<128x1xf32> to vector<128x32xf32>
    %95 = arith.mulf %92, %94 : vector<128x32xf32>
    %96 = arith.addf %90, %95 : vector<128x32xf32>
    %97 = vector.extract_strided_slice %65 {offsets = [0, 192], sizes = [128, 32], strides = [1, 1]} : vector<128x288xf32> to vector<128x32xf32>
    %c121_i32_36 = arith.constant 121 : i32
    %98 = tpu.dynamic_rotate %97 by %c121_i32_36 dim 0 : vector<128x32xf32>, i32 -> vector<128x32xf32>
    %c0_37 = arith.constant 0 : index
    %c6_38 = arith.constant 6 : index
    %99 = vector.load %arg8[%c0_37, %c6_38] : memref<128x9xf32, #tpu.memory_space<vmem>>, vector<128x1xf32>
    %100 = vector.broadcast %99 : vector<128x1xf32> to vector<128x32xf32>
    %101 = arith.mulf %98, %100 : vector<128x32xf32>
    %102 = arith.addf %96, %101 : vector<128x32xf32>
    %103 = vector.extract_strided_slice %65 {offsets = [0, 224], sizes = [128, 32], strides = [1, 1]} : vector<128x288xf32> to vector<128x32xf32>
    %c120_i32_39 = arith.constant 120 : i32
    %104 = tpu.dynamic_rotate %103 by %c120_i32_39 dim 0 : vector<128x32xf32>, i32 -> vector<128x32xf32>
    %c0_40 = arith.constant 0 : index
    %c7_41 = arith.constant 7 : index
    %105 = vector.load %arg8[%c0_40, %c7_41] : memref<128x9xf32, #tpu.memory_space<vmem>>, vector<128x1xf32>
    %106 = vector.broadcast %105 : vector<128x1xf32> to vector<128x32xf32>
    %107 = arith.mulf %104, %106 : vector<128x32xf32>
    %108 = arith.addf %102, %107 : vector<128x32xf32>
    %109 = vector.extract_strided_slice %65 {offsets = [0, 256], sizes = [128, 32], strides = [1, 1]} : vector<128x288xf32> to vector<128x32xf32>
    %c119_i32_42 = arith.constant 119 : i32
    %110 = tpu.dynamic_rotate %109 by %c119_i32_42 dim 0 : vector<128x32xf32>, i32 -> vector<128x32xf32>
    %c0_43 = arith.constant 0 : index
    %c8_44 = arith.constant 8 : index
    %111 = vector.load %arg8[%c0_43, %c8_44] : memref<128x9xf32, #tpu.memory_space<vmem>>, vector<128x1xf32>
    %112 = vector.broadcast %111 : vector<128x1xf32> to vector<128x32xf32>
    %113 = arith.mulf %110, %112 : vector<128x32xf32>
    %114 = arith.addf %108, %113 : vector<128x32xf32>
    %c0_45 = arith.constant 0 : index
    %c0_46 = arith.constant 0 : index
    %115 = vector.load %arg7[%c0_45, %c0_46] : memref<1x32xf32, #tpu.memory_space<vmem>>, vector<1x32xf32>
    %116 = vector.broadcast %115 : vector<1x32xf32> to vector<128x32xf32>
    %117 = arith.addf %114, %116 : vector<128x32xf32>
    %cst_47 = arith.constant 0.000000e+00 : f32
    %118 = vector.broadcast %cst_47 : f32 to vector<128x32xf32>
    %119 = arith.maximumf %117, %118 : vector<128x32xf32>
    %c0_48 = arith.constant 0 : index
    %c0_49 = arith.constant 0 : index
    %120 = vector.load %arg9[%c0_48, %c0_49] : memref<32x2048xf32, #tpu.memory_space<vmem>>, vector<32x2048xf32>
    %cst_50 = arith.constant dense<0.000000e+00> : vector<128x2048xf32>
    %121 = tpu.matmul %119, %120, %cst_50 {dimension_numbers = #tpu.dot_dimension_numbers<[1], [0], [0], [1], [0, 0, 1, 1], [], []>} : vector<128x32xf32>, vector<32x2048xf32>, vector<128x2048xf32> -> vector<128x2048xf32>
    %c0_51 = arith.constant 0 : index
    %c0_52 = arith.constant 0 : index
    %122 = vector.load %arg11[%c0_51, %c0_52] : memref<2x128xf32, #tpu.memory_space<vmem>>, vector<2x128xf32>
    %c0_53 = arith.constant 0 : index
    %c0_54 = arith.constant 0 : index
    %123 = vector.load %arg10[%c0_53, %c0_54] : memref<128x2048xf32, #tpu.memory_space<vmem>>, vector<128x2048xf32>
    %124 = arith.mulf %121, %123 : vector<128x2048xf32>
    %cst_55 = arith.constant dense<0.000000e+00> : vector<2x2048xf32>
    %125 = tpu.matmul %122, %124, %cst_55 {dimension_numbers = #tpu.dot_dimension_numbers<[1], [0], [0], [1], [0, 0, 1, 1], [], []>} : vector<2x128xf32>, vector<128x2048xf32>, vector<2x2048xf32> -> vector<2x2048xf32>
    %c0_56 = arith.constant 0 : index
    %c0_57 = arith.constant 0 : index
    %126 = vector.load %arg12[%c0_56, %c0_57] : memref<2048x64xf32, #tpu.memory_space<vmem>>, vector<2048x64xf32>
    %cst_58 = arith.constant dense<0.000000e+00> : vector<2x64xf32>
    %127 = tpu.matmul %125, %126, %cst_58 {dimension_numbers = #tpu.dot_dimension_numbers<[1], [0], [0], [1], [0, 0, 1, 1], [], []>} : vector<2x2048xf32>, vector<2048x64xf32>, vector<2x64xf32> -> vector<2x64xf32>
    %c0_59 = arith.constant 0 : index
    %c0_60 = arith.constant 0 : index
    %128 = vector.load %arg13[%c0_59, %c0_60] : memref<1x64xf32, #tpu.memory_space<vmem>>, vector<1x64xf32>
    %129 = vector.broadcast %128 : vector<1x64xf32> to vector<2x64xf32>
    %130 = arith.addf %127, %129 : vector<2x64xf32>
    %cst_61 = arith.constant 0.000000e+00 : f32
    %131 = vector.broadcast %cst_61 : f32 to vector<2x64xf32>
    %132 = arith.maximumf %130, %131 : vector<2x64xf32>
    %c0_62 = arith.constant 0 : index
    %c0_63 = arith.constant 0 : index
    %133 = vector.load %arg14[%c0_62, %c0_63] : memref<64x192xf32, #tpu.memory_space<vmem>>, vector<64x192xf32>
    %cst_64 = arith.constant dense<0.000000e+00> : vector<2x192xf32>
    %134 = tpu.matmul %132, %133, %cst_64 {dimension_numbers = #tpu.dot_dimension_numbers<[1], [0], [0], [1], [0, 0, 1, 1], [], []>} : vector<2x64xf32>, vector<64x192xf32>, vector<2x192xf32> -> vector<2x192xf32>
    %c0_65 = arith.constant 0 : index
    %c0_66 = arith.constant 0 : index
    %135 = vector.load %arg15[%c0_65, %c0_66] : memref<1x192xf32, #tpu.memory_space<vmem>>, vector<1x192xf32>
    %136 = vector.broadcast %135 : vector<1x192xf32> to vector<2x192xf32>
    %137 = arith.addf %134, %136 : vector<2x192xf32>
    %c0_67 = arith.constant 0 : index
    %c0_68 = arith.constant 0 : index
    %138 = vector.load %arg2[%c0_67, %c0_68] : memref<16x32xf32, #tpu.memory_space<vmem>>, vector<16x32xf32>
    %cst_69 = arith.constant dense<0.000000e+00> : vector<128x32xf32>
    %139 = tpu.matmul %5, %138, %cst_69 {dimension_numbers = #tpu.dot_dimension_numbers<[1], [0], [0], [1], [0, 0, 1, 1], [], []>} : vector<128x16xf32>, vector<16x32xf32>, vector<128x32xf32> -> vector<128x32xf32>
    %c0_70 = arith.constant 0 : index
    %c0_71 = arith.constant 0 : index
    %140 = vector.load %arg3[%c0_70, %c0_71] : memref<128x32xf32, #tpu.memory_space<vmem>>, vector<128x32xf32>
    %141 = arith.addf %139, %140 : vector<128x32xf32>
    %c0_72 = arith.constant 0 : index
    %c0_73 = arith.constant 0 : index
    %142 = vector.load %arg16[%c0_72, %c0_73] : memref<32x96xf32, #tpu.memory_space<vmem>>, vector<32x96xf32>
    %cst_74 = arith.constant dense<0.000000e+00> : vector<128x96xf32>
    %143 = tpu.matmul %141, %142, %cst_74 {dimension_numbers = #tpu.dot_dimension_numbers<[1], [0], [0], [1], [0, 0, 1, 1], [], []>} : vector<128x32xf32>, vector<32x96xf32>, vector<128x96xf32> -> vector<128x96xf32>
    %c0_75 = arith.constant 0 : index
    %c0_76 = arith.constant 0 : index
    %144 = vector.load %arg17[%c0_75, %c0_76] : memref<1x96xf32, #tpu.memory_space<vmem>>, vector<1x96xf32>
    %145 = vector.broadcast %144 : vector<1x96xf32> to vector<128x96xf32>
    %146 = arith.addf %143, %145 : vector<128x96xf32>
    %147 = vector.extract_strided_slice %146 {offsets = [0, 0], sizes = [64, 8], strides = [1, 1]} : vector<128x96xf32> to vector<64x8xf32>
    %148 = vector.extract_strided_slice %146 {offsets = [0, 32], sizes = [64, 8], strides = [1, 1]} : vector<128x96xf32> to vector<64x8xf32>
    %149 = vector.extract_strided_slice %146 {offsets = [0, 64], sizes = [64, 8], strides = [1, 1]} : vector<128x96xf32> to vector<64x8xf32>
    %cst_77 = arith.constant dense<0.000000e+00> : vector<64x64xf32>
    %150 = tpu.matmul %147, %148, %cst_77 {dimension_numbers = #tpu.dot_dimension_numbers<[1], [1], [0], [0], [0, 0, 1, 0], [], []>} : vector<64x8xf32>, vector<64x8xf32>, vector<64x64xf32> -> vector<64x64xf32>
    %cst_78 = arith.constant 0.353553385 : f32
    %151 = vector.broadcast %cst_78 : f32 to vector<64x64xf32>
    %152 = arith.mulf %150, %151 : vector<64x64xf32>
    %cst_79 = arith.constant dense<0xFF800000> : vector<64xf32>
    %153 = vector.multi_reduction <maximumf>, %152, %cst_79 [1] : vector<64x64xf32> to vector<64xf32>
    %154 = vector.shape_cast %153 : vector<64xf32> to vector<64x1xf32>
    %155 = vector.broadcast %154 : vector<64x1xf32> to vector<64x64xf32>
    %156 = arith.subf %152, %155 : vector<64x64xf32>
    %157 = math.exp %156 : vector<64x64xf32>
    %cst_80 = arith.constant dense<0.000000e+00> : vector<64xf32>
    %158 = vector.multi_reduction <add>, %157, %cst_80 [1] : vector<64x64xf32> to vector<64xf32>
    %159 = vector.shape_cast %158 : vector<64xf32> to vector<64x1xf32>
    %160 = tpu.reciprocal %159 {approx = true} : vector<64x1xf32> -> vector<64x1xf32>
    %161 = vector.broadcast %160 : vector<64x1xf32> to vector<64x64xf32>
    %162 = arith.mulf %157, %161 : vector<64x64xf32>
    %cst_81 = arith.constant dense<0.000000e+00> : vector<64x8xf32>
    %163 = tpu.matmul %162, %149, %cst_81 {dimension_numbers = #tpu.dot_dimension_numbers<[1], [0], [0], [1], [0, 0, 1, 1], [], []>} : vector<64x64xf32>, vector<64x8xf32>, vector<64x8xf32> -> vector<64x8xf32>
    %164 = vector.extract_strided_slice %146 {offsets = [0, 8], sizes = [64, 8], strides = [1, 1]} : vector<128x96xf32> to vector<64x8xf32>
    %165 = vector.extract_strided_slice %146 {offsets = [0, 40], sizes = [64, 8], strides = [1, 1]} : vector<128x96xf32> to vector<64x8xf32>
    %166 = vector.extract_strided_slice %146 {offsets = [0, 72], sizes = [64, 8], strides = [1, 1]} : vector<128x96xf32> to vector<64x8xf32>
    %cst_82 = arith.constant dense<0.000000e+00> : vector<64x64xf32>
    %167 = tpu.matmul %164, %165, %cst_82 {dimension_numbers = #tpu.dot_dimension_numbers<[1], [1], [0], [0], [0, 0, 1, 0], [], []>} : vector<64x8xf32>, vector<64x8xf32>, vector<64x64xf32> -> vector<64x64xf32>
    %cst_83 = arith.constant 0.353553385 : f32
    %168 = vector.broadcast %cst_83 : f32 to vector<64x64xf32>
    %169 = arith.mulf %167, %168 : vector<64x64xf32>
    %cst_84 = arith.constant dense<0xFF800000> : vector<64xf32>
    %170 = vector.multi_reduction <maximumf>, %169, %cst_84 [1] : vector<64x64xf32> to vector<64xf32>
    %171 = vector.shape_cast %170 : vector<64xf32> to vector<64x1xf32>
    %172 = vector.broadcast %171 : vector<64x1xf32> to vector<64x64xf32>
    %173 = arith.subf %169, %172 : vector<64x64xf32>
    %174 = math.exp %173 : vector<64x64xf32>
    %cst_85 = arith.constant dense<0.000000e+00> : vector<64xf32>
    %175 = vector.multi_reduction <add>, %174, %cst_85 [1] : vector<64x64xf32> to vector<64xf32>
    %176 = vector.shape_cast %175 : vector<64xf32> to vector<64x1xf32>
    %177 = tpu.reciprocal %176 {approx = true} : vector<64x1xf32> -> vector<64x1xf32>
    %178 = vector.broadcast %177 : vector<64x1xf32> to vector<64x64xf32>
    %179 = arith.mulf %174, %178 : vector<64x64xf32>
    %cst_86 = arith.constant dense<0.000000e+00> : vector<64x8xf32>
    %180 = tpu.matmul %179, %166, %cst_86 {dimension_numbers = #tpu.dot_dimension_numbers<[1], [0], [0], [1], [0, 0, 1, 1], [], []>} : vector<64x64xf32>, vector<64x8xf32>, vector<64x8xf32> -> vector<64x8xf32>
    %181 = vector.extract_strided_slice %146 {offsets = [0, 16], sizes = [64, 8], strides = [1, 1]} : vector<128x96xf32> to vector<64x8xf32>
    %182 = vector.extract_strided_slice %146 {offsets = [0, 48], sizes = [64, 8], strides = [1, 1]} : vector<128x96xf32> to vector<64x8xf32>
    %183 = vector.extract_strided_slice %146 {offsets = [0, 80], sizes = [64, 8], strides = [1, 1]} : vector<128x96xf32> to vector<64x8xf32>
    %cst_87 = arith.constant dense<0.000000e+00> : vector<64x64xf32>
    %184 = tpu.matmul %181, %182, %cst_87 {dimension_numbers = #tpu.dot_dimension_numbers<[1], [1], [0], [0], [0, 0, 1, 0], [], []>} : vector<64x8xf32>, vector<64x8xf32>, vector<64x64xf32> -> vector<64x64xf32>
    %cst_88 = arith.constant 0.353553385 : f32
    %185 = vector.broadcast %cst_88 : f32 to vector<64x64xf32>
    %186 = arith.mulf %184, %185 : vector<64x64xf32>
    %cst_89 = arith.constant dense<0xFF800000> : vector<64xf32>
    %187 = vector.multi_reduction <maximumf>, %186, %cst_89 [1] : vector<64x64xf32> to vector<64xf32>
    %188 = vector.shape_cast %187 : vector<64xf32> to vector<64x1xf32>
    %189 = vector.broadcast %188 : vector<64x1xf32> to vector<64x64xf32>
    %190 = arith.subf %186, %189 : vector<64x64xf32>
    %191 = math.exp %190 : vector<64x64xf32>
    %cst_90 = arith.constant dense<0.000000e+00> : vector<64xf32>
    %192 = vector.multi_reduction <add>, %191, %cst_90 [1] : vector<64x64xf32> to vector<64xf32>
    %193 = vector.shape_cast %192 : vector<64xf32> to vector<64x1xf32>
    %194 = tpu.reciprocal %193 {approx = true} : vector<64x1xf32> -> vector<64x1xf32>
    %195 = vector.broadcast %194 : vector<64x1xf32> to vector<64x64xf32>
    %196 = arith.mulf %191, %195 : vector<64x64xf32>
    %cst_91 = arith.constant dense<0.000000e+00> : vector<64x8xf32>
    %197 = tpu.matmul %196, %183, %cst_91 {dimension_numbers = #tpu.dot_dimension_numbers<[1], [0], [0], [1], [0, 0, 1, 1], [], []>} : vector<64x64xf32>, vector<64x8xf32>, vector<64x8xf32> -> vector<64x8xf32>
    %198 = vector.extract_strided_slice %146 {offsets = [0, 24], sizes = [64, 8], strides = [1, 1]} : vector<128x96xf32> to vector<64x8xf32>
    %199 = vector.extract_strided_slice %146 {offsets = [0, 56], sizes = [64, 8], strides = [1, 1]} : vector<128x96xf32> to vector<64x8xf32>
    %200 = vector.extract_strided_slice %146 {offsets = [0, 88], sizes = [64, 8], strides = [1, 1]} : vector<128x96xf32> to vector<64x8xf32>
    %cst_92 = arith.constant dense<0.000000e+00> : vector<64x64xf32>
    %201 = tpu.matmul %198, %199, %cst_92 {dimension_numbers = #tpu.dot_dimension_numbers<[1], [1], [0], [0], [0, 0, 1, 0], [], []>} : vector<64x8xf32>, vector<64x8xf32>, vector<64x64xf32> -> vector<64x64xf32>
    %cst_93 = arith.constant 0.353553385 : f32
    %202 = vector.broadcast %cst_93 : f32 to vector<64x64xf32>
    %203 = arith.mulf %201, %202 : vector<64x64xf32>
    %cst_94 = arith.constant dense<0xFF800000> : vector<64xf32>
    %204 = vector.multi_reduction <maximumf>, %203, %cst_94 [1] : vector<64x64xf32> to vector<64xf32>
    %205 = vector.shape_cast %204 : vector<64xf32> to vector<64x1xf32>
    %206 = vector.broadcast %205 : vector<64x1xf32> to vector<64x64xf32>
    %207 = arith.subf %203, %206 : vector<64x64xf32>
    %208 = math.exp %207 : vector<64x64xf32>
    %cst_95 = arith.constant dense<0.000000e+00> : vector<64xf32>
    %209 = vector.multi_reduction <add>, %208, %cst_95 [1] : vector<64x64xf32> to vector<64xf32>
    %210 = vector.shape_cast %209 : vector<64xf32> to vector<64x1xf32>
    %211 = tpu.reciprocal %210 {approx = true} : vector<64x1xf32> -> vector<64x1xf32>
    %212 = vector.broadcast %211 : vector<64x1xf32> to vector<64x64xf32>
    %213 = arith.mulf %208, %212 : vector<64x64xf32>
    %cst_96 = arith.constant dense<0.000000e+00> : vector<64x8xf32>
    %214 = tpu.matmul %213, %200, %cst_96 {dimension_numbers = #tpu.dot_dimension_numbers<[1], [0], [0], [1], [0, 0, 1, 1], [], []>} : vector<64x64xf32>, vector<64x8xf32>, vector<64x8xf32> -> vector<64x8xf32>
    %215 = tpu.concatenate %163, %180, %197, %214 in 1 : vector<64x8xf32>, vector<64x8xf32>, vector<64x8xf32>, vector<64x8xf32> -> vector<64x32xf32>
    %216 = vector.extract_strided_slice %146 {offsets = [64, 0], sizes = [64, 8], strides = [1, 1]} : vector<128x96xf32> to vector<64x8xf32>
    %217 = vector.extract_strided_slice %146 {offsets = [64, 32], sizes = [64, 8], strides = [1, 1]} : vector<128x96xf32> to vector<64x8xf32>
    %218 = vector.extract_strided_slice %146 {offsets = [64, 64], sizes = [64, 8], strides = [1, 1]} : vector<128x96xf32> to vector<64x8xf32>
    %cst_97 = arith.constant dense<0.000000e+00> : vector<64x64xf32>
    %219 = tpu.matmul %216, %217, %cst_97 {dimension_numbers = #tpu.dot_dimension_numbers<[1], [1], [0], [0], [0, 0, 1, 0], [], []>} : vector<64x8xf32>, vector<64x8xf32>, vector<64x64xf32> -> vector<64x64xf32>
    %cst_98 = arith.constant 0.353553385 : f32
    %220 = vector.broadcast %cst_98 : f32 to vector<64x64xf32>
    %221 = arith.mulf %219, %220 : vector<64x64xf32>
    %cst_99 = arith.constant dense<0xFF800000> : vector<64xf32>
    %222 = vector.multi_reduction <maximumf>, %221, %cst_99 [1] : vector<64x64xf32> to vector<64xf32>
    %223 = vector.shape_cast %222 : vector<64xf32> to vector<64x1xf32>
    %224 = vector.broadcast %223 : vector<64x1xf32> to vector<64x64xf32>
    %225 = arith.subf %221, %224 : vector<64x64xf32>
    %226 = math.exp %225 : vector<64x64xf32>
    %cst_100 = arith.constant dense<0.000000e+00> : vector<64xf32>
    %227 = vector.multi_reduction <add>, %226, %cst_100 [1] : vector<64x64xf32> to vector<64xf32>
    %228 = vector.shape_cast %227 : vector<64xf32> to vector<64x1xf32>
    %229 = tpu.reciprocal %228 {approx = true} : vector<64x1xf32> -> vector<64x1xf32>
    %230 = vector.broadcast %229 : vector<64x1xf32> to vector<64x64xf32>
    %231 = arith.mulf %226, %230 : vector<64x64xf32>
    %cst_101 = arith.constant dense<0.000000e+00> : vector<64x8xf32>
    %232 = tpu.matmul %231, %218, %cst_101 {dimension_numbers = #tpu.dot_dimension_numbers<[1], [0], [0], [1], [0, 0, 1, 1], [], []>} : vector<64x64xf32>, vector<64x8xf32>, vector<64x8xf32> -> vector<64x8xf32>
    %233 = vector.extract_strided_slice %146 {offsets = [64, 8], sizes = [64, 8], strides = [1, 1]} : vector<128x96xf32> to vector<64x8xf32>
    %234 = vector.extract_strided_slice %146 {offsets = [64, 40], sizes = [64, 8], strides = [1, 1]} : vector<128x96xf32> to vector<64x8xf32>
    %235 = vector.extract_strided_slice %146 {offsets = [64, 72], sizes = [64, 8], strides = [1, 1]} : vector<128x96xf32> to vector<64x8xf32>
    %cst_102 = arith.constant dense<0.000000e+00> : vector<64x64xf32>
    %236 = tpu.matmul %233, %234, %cst_102 {dimension_numbers = #tpu.dot_dimension_numbers<[1], [1], [0], [0], [0, 0, 1, 0], [], []>} : vector<64x8xf32>, vector<64x8xf32>, vector<64x64xf32> -> vector<64x64xf32>
    %cst_103 = arith.constant 0.353553385 : f32
    %237 = vector.broadcast %cst_103 : f32 to vector<64x64xf32>
    %238 = arith.mulf %236, %237 : vector<64x64xf32>
    %cst_104 = arith.constant dense<0xFF800000> : vector<64xf32>
    %239 = vector.multi_reduction <maximumf>, %238, %cst_104 [1] : vector<64x64xf32> to vector<64xf32>
    %240 = vector.shape_cast %239 : vector<64xf32> to vector<64x1xf32>
    %241 = vector.broadcast %240 : vector<64x1xf32> to vector<64x64xf32>
    %242 = arith.subf %238, %241 : vector<64x64xf32>
    %243 = math.exp %242 : vector<64x64xf32>
    %cst_105 = arith.constant dense<0.000000e+00> : vector<64xf32>
    %244 = vector.multi_reduction <add>, %243, %cst_105 [1] : vector<64x64xf32> to vector<64xf32>
    %245 = vector.shape_cast %244 : vector<64xf32> to vector<64x1xf32>
    %246 = tpu.reciprocal %245 {approx = true} : vector<64x1xf32> -> vector<64x1xf32>
    %247 = vector.broadcast %246 : vector<64x1xf32> to vector<64x64xf32>
    %248 = arith.mulf %243, %247 : vector<64x64xf32>
    %cst_106 = arith.constant dense<0.000000e+00> : vector<64x8xf32>
    %249 = tpu.matmul %248, %235, %cst_106 {dimension_numbers = #tpu.dot_dimension_numbers<[1], [0], [0], [1], [0, 0, 1, 1], [], []>} : vector<64x64xf32>, vector<64x8xf32>, vector<64x8xf32> -> vector<64x8xf32>
    %250 = vector.extract_strided_slice %146 {offsets = [64, 16], sizes = [64, 8], strides = [1, 1]} : vector<128x96xf32> to vector<64x8xf32>
    %251 = vector.extract_strided_slice %146 {offsets = [64, 48], sizes = [64, 8], strides = [1, 1]} : vector<128x96xf32> to vector<64x8xf32>
    %252 = vector.extract_strided_slice %146 {offsets = [64, 80], sizes = [64, 8], strides = [1, 1]} : vector<128x96xf32> to vector<64x8xf32>
    %cst_107 = arith.constant dense<0.000000e+00> : vector<64x64xf32>
    %253 = tpu.matmul %250, %251, %cst_107 {dimension_numbers = #tpu.dot_dimension_numbers<[1], [1], [0], [0], [0, 0, 1, 0], [], []>} : vector<64x8xf32>, vector<64x8xf32>, vector<64x64xf32> -> vector<64x64xf32>
    %cst_108 = arith.constant 0.353553385 : f32
    %254 = vector.broadcast %cst_108 : f32 to vector<64x64xf32>
    %255 = arith.mulf %253, %254 : vector<64x64xf32>
    %cst_109 = arith.constant dense<0xFF800000> : vector<64xf32>
    %256 = vector.multi_reduction <maximumf>, %255, %cst_109 [1] : vector<64x64xf32> to vector<64xf32>
    %257 = vector.shape_cast %256 : vector<64xf32> to vector<64x1xf32>
    %258 = vector.broadcast %257 : vector<64x1xf32> to vector<64x64xf32>
    %259 = arith.subf %255, %258 : vector<64x64xf32>
    %260 = math.exp %259 : vector<64x64xf32>
    %cst_110 = arith.constant dense<0.000000e+00> : vector<64xf32>
    %261 = vector.multi_reduction <add>, %260, %cst_110 [1] : vector<64x64xf32> to vector<64xf32>
    %262 = vector.shape_cast %261 : vector<64xf32> to vector<64x1xf32>
    %263 = tpu.reciprocal %262 {approx = true} : vector<64x1xf32> -> vector<64x1xf32>
    %264 = vector.broadcast %263 : vector<64x1xf32> to vector<64x64xf32>
    %265 = arith.mulf %260, %264 : vector<64x64xf32>
    %cst_111 = arith.constant dense<0.000000e+00> : vector<64x8xf32>
    %266 = tpu.matmul %265, %252, %cst_111 {dimension_numbers = #tpu.dot_dimension_numbers<[1], [0], [0], [1], [0, 0, 1, 1], [], []>} : vector<64x64xf32>, vector<64x8xf32>, vector<64x8xf32> -> vector<64x8xf32>
    %267 = vector.extract_strided_slice %146 {offsets = [64, 24], sizes = [64, 8], strides = [1, 1]} : vector<128x96xf32> to vector<64x8xf32>
    %268 = vector.extract_strided_slice %146 {offsets = [64, 56], sizes = [64, 8], strides = [1, 1]} : vector<128x96xf32> to vector<64x8xf32>
    %269 = vector.extract_strided_slice %146 {offsets = [64, 88], sizes = [64, 8], strides = [1, 1]} : vector<128x96xf32> to vector<64x8xf32>
    %cst_112 = arith.constant dense<0.000000e+00> : vector<64x64xf32>
    %270 = tpu.matmul %267, %268, %cst_112 {dimension_numbers = #tpu.dot_dimension_numbers<[1], [1], [0], [0], [0, 0, 1, 0], [], []>} : vector<64x8xf32>, vector<64x8xf32>, vector<64x64xf32> -> vector<64x64xf32>
    %cst_113 = arith.constant 0.353553385 : f32
    %271 = vector.broadcast %cst_113 : f32 to vector<64x64xf32>
    %272 = arith.mulf %270, %271 : vector<64x64xf32>
    %cst_114 = arith.constant dense<0xFF800000> : vector<64xf32>
    %273 = vector.multi_reduction <maximumf>, %272, %cst_114 [1] : vector<64x64xf32> to vector<64xf32>
    %274 = vector.shape_cast %273 : vector<64xf32> to vector<64x1xf32>
    %275 = vector.broadcast %274 : vector<64x1xf32> to vector<64x64xf32>
    %276 = arith.subf %272, %275 : vector<64x64xf32>
    %277 = math.exp %276 : vector<64x64xf32>
    %cst_115 = arith.constant dense<0.000000e+00> : vector<64xf32>
    %278 = vector.multi_reduction <add>, %277, %cst_115 [1] : vector<64x64xf32> to vector<64xf32>
    %279 = vector.shape_cast %278 : vector<64xf32> to vector<64x1xf32>
    %280 = tpu.reciprocal %279 {approx = true} : vector<64x1xf32> -> vector<64x1xf32>
    %281 = vector.broadcast %280 : vector<64x1xf32> to vector<64x64xf32>
    %282 = arith.mulf %277, %281 : vector<64x64xf32>
    %cst_116 = arith.constant dense<0.000000e+00> : vector<64x8xf32>
    %283 = tpu.matmul %282, %269, %cst_116 {dimension_numbers = #tpu.dot_dimension_numbers<[1], [0], [0], [1], [0, 0, 1, 1], [], []>} : vector<64x64xf32>, vector<64x8xf32>, vector<64x8xf32> -> vector<64x8xf32>
    %284 = tpu.concatenate %232, %249, %266, %283 in 1 : vector<64x8xf32>, vector<64x8xf32>, vector<64x8xf32>, vector<64x8xf32> -> vector<64x32xf32>
    %285 = tpu.concatenate %215, %284 in 0 : vector<64x32xf32>, vector<64x32xf32> -> vector<128x32xf32>
    %c0_117 = arith.constant 0 : index
    %c0_118 = arith.constant 0 : index
    %286 = vector.load %arg18[%c0_117, %c0_118] : memref<32x32xf32, #tpu.memory_space<vmem>>, vector<32x32xf32>
    %cst_119 = arith.constant dense<0.000000e+00> : vector<128x32xf32>
    %287 = tpu.matmul %285, %286, %cst_119 {dimension_numbers = #tpu.dot_dimension_numbers<[1], [0], [0], [1], [0, 0, 1, 1], [], []>} : vector<128x32xf32>, vector<32x32xf32>, vector<128x32xf32> -> vector<128x32xf32>
    %c0_120 = arith.constant 0 : index
    %c0_121 = arith.constant 0 : index
    %288 = vector.load %arg19[%c0_120, %c0_121] : memref<1x32xf32, #tpu.memory_space<vmem>>, vector<1x32xf32>
    %289 = vector.broadcast %288 : vector<1x32xf32> to vector<128x32xf32>
    %290 = arith.addf %287, %289 : vector<128x32xf32>
    %291 = arith.addf %141, %290 : vector<128x32xf32>
    %c0_122 = arith.constant 0 : index
    %c0_123 = arith.constant 0 : index
    %292 = vector.load %arg20[%c0_122, %c0_123] : memref<1x32xf32, #tpu.memory_space<vmem>>, vector<1x32xf32>
    %c0_124 = arith.constant 0 : index
    %c0_125 = arith.constant 0 : index
    %293 = vector.load %arg21[%c0_124, %c0_125] : memref<1x32xf32, #tpu.memory_space<vmem>>, vector<1x32xf32>
    %cst_126 = arith.constant dense<0.000000e+00> : vector<128xf32>
    %294 = vector.multi_reduction <add>, %291, %cst_126 [1] : vector<128x32xf32> to vector<128xf32>
    %295 = vector.shape_cast %294 : vector<128xf32> to vector<128x1xf32>
    %cst_127 = arith.constant 3.200000e+01 : f32
    %296 = vector.broadcast %cst_127 : f32 to vector<128x1xf32>
    %297 = arith.divf %295, %296 : vector<128x1xf32>
    %298 = vector.broadcast %297 : vector<128x1xf32> to vector<128x32xf32>
    %299 = arith.subf %291, %298 : vector<128x32xf32>
    %300 = arith.mulf %299, %299 : vector<128x32xf32>
    %cst_128 = arith.constant dense<0.000000e+00> : vector<128xf32>
    %301 = vector.multi_reduction <add>, %300, %cst_128 [1] : vector<128x32xf32> to vector<128xf32>
    %302 = vector.shape_cast %301 : vector<128xf32> to vector<128x1xf32>
    %cst_129 = arith.constant 3.200000e+01 : f32
    %303 = vector.broadcast %cst_129 : f32 to vector<128x1xf32>
    %304 = arith.divf %302, %303 : vector<128x1xf32>
    %305 = vector.broadcast %297 : vector<128x1xf32> to vector<128x32xf32>
    %306 = arith.subf %291, %305 : vector<128x32xf32>
    %cst_130 = arith.constant 9.99999974E-6 : f32
    %307 = vector.broadcast %cst_130 : f32 to vector<128x1xf32>
    %308 = arith.addf %304, %307 : vector<128x1xf32>
    %309 = math.rsqrt %308 : vector<128x1xf32>
    %310 = vector.broadcast %309 : vector<128x1xf32> to vector<128x32xf32>
    %311 = arith.mulf %306, %310 : vector<128x32xf32>
    %312 = vector.broadcast %292 : vector<1x32xf32> to vector<128x32xf32>
    %313 = arith.mulf %311, %312 : vector<128x32xf32>
    %314 = vector.broadcast %293 : vector<1x32xf32> to vector<128x32xf32>
    %315 = arith.addf %313, %314 : vector<128x32xf32>
    %c0_131 = arith.constant 0 : index
    %c0_132 = arith.constant 0 : index
    %316 = vector.load %arg24[%c0_131, %c0_132] : memref<32x64xf32, #tpu.memory_space<vmem>>, vector<32x64xf32>
    %cst_133 = arith.constant dense<0.000000e+00> : vector<128x64xf32>
    %317 = tpu.matmul %315, %316, %cst_133 {dimension_numbers = #tpu.dot_dimension_numbers<[1], [0], [0], [1], [0, 0, 1, 1], [], []>} : vector<128x32xf32>, vector<32x64xf32>, vector<128x64xf32> -> vector<128x64xf32>
    %c0_134 = arith.constant 0 : index
    %c0_135 = arith.constant 0 : index
    %318 = vector.load %arg25[%c0_134, %c0_135] : memref<1x64xf32, #tpu.memory_space<vmem>>, vector<1x64xf32>
    %319 = vector.broadcast %318 : vector<1x64xf32> to vector<128x64xf32>
    %320 = arith.addf %317, %319 : vector<128x64xf32>
    %cst_136 = arith.constant 0.000000e+00 : f32
    %321 = vector.broadcast %cst_136 : f32 to vector<128x64xf32>
    %322 = arith.maximumf %320, %321 : vector<128x64xf32>
    %c0_137 = arith.constant 0 : index
    %c0_138 = arith.constant 0 : index
    %323 = vector.load %arg26[%c0_137, %c0_138] : memref<64x32xf32, #tpu.memory_space<vmem>>, vector<64x32xf32>
    %cst_139 = arith.constant dense<0.000000e+00> : vector<128x32xf32>
    %324 = tpu.matmul %322, %323, %cst_139 {dimension_numbers = #tpu.dot_dimension_numbers<[1], [0], [0], [1], [0, 0, 1, 1], [], []>} : vector<128x64xf32>, vector<64x32xf32>, vector<128x32xf32> -> vector<128x32xf32>
    %c0_140 = arith.constant 0 : index
    %c0_141 = arith.constant 0 : index
    %325 = vector.load %arg27[%c0_140, %c0_141] : memref<1x32xf32, #tpu.memory_space<vmem>>, vector<1x32xf32>
    %326 = vector.broadcast %325 : vector<1x32xf32> to vector<128x32xf32>
    %327 = arith.addf %324, %326 : vector<128x32xf32>
    %328 = arith.addf %315, %327 : vector<128x32xf32>
    %c0_142 = arith.constant 0 : index
    %c0_143 = arith.constant 0 : index
    %329 = vector.load %arg22[%c0_142, %c0_143] : memref<1x32xf32, #tpu.memory_space<vmem>>, vector<1x32xf32>
    %c0_144 = arith.constant 0 : index
    %c0_145 = arith.constant 0 : index
    %330 = vector.load %arg23[%c0_144, %c0_145] : memref<1x32xf32, #tpu.memory_space<vmem>>, vector<1x32xf32>
    %cst_146 = arith.constant dense<0.000000e+00> : vector<128xf32>
    %331 = vector.multi_reduction <add>, %328, %cst_146 [1] : vector<128x32xf32> to vector<128xf32>
    %332 = vector.shape_cast %331 : vector<128xf32> to vector<128x1xf32>
    %cst_147 = arith.constant 3.200000e+01 : f32
    %333 = vector.broadcast %cst_147 : f32 to vector<128x1xf32>
    %334 = arith.divf %332, %333 : vector<128x1xf32>
    %335 = vector.broadcast %334 : vector<128x1xf32> to vector<128x32xf32>
    %336 = arith.subf %328, %335 : vector<128x32xf32>
    %337 = arith.mulf %336, %336 : vector<128x32xf32>
    %cst_148 = arith.constant dense<0.000000e+00> : vector<128xf32>
    %338 = vector.multi_reduction <add>, %337, %cst_148 [1] : vector<128x32xf32> to vector<128xf32>
    %339 = vector.shape_cast %338 : vector<128xf32> to vector<128x1xf32>
    %cst_149 = arith.constant 3.200000e+01 : f32
    %340 = vector.broadcast %cst_149 : f32 to vector<128x1xf32>
    %341 = arith.divf %339, %340 : vector<128x1xf32>
    %342 = vector.broadcast %334 : vector<128x1xf32> to vector<128x32xf32>
    %343 = arith.subf %328, %342 : vector<128x32xf32>
    %cst_150 = arith.constant 9.99999974E-6 : f32
    %344 = vector.broadcast %cst_150 : f32 to vector<128x1xf32>
    %345 = arith.addf %341, %344 : vector<128x1xf32>
    %346 = math.rsqrt %345 : vector<128x1xf32>
    %347 = vector.broadcast %346 : vector<128x1xf32> to vector<128x32xf32>
    %348 = arith.mulf %343, %347 : vector<128x32xf32>
    %349 = vector.broadcast %329 : vector<1x32xf32> to vector<128x32xf32>
    %350 = arith.mulf %348, %349 : vector<128x32xf32>
    %351 = vector.broadcast %330 : vector<1x32xf32> to vector<128x32xf32>
    %352 = arith.addf %350, %351 : vector<128x32xf32>
    %c0_151 = arith.constant 0 : index
    %c0_152 = arith.constant 0 : index
    %353 = vector.load %arg11[%c0_151, %c0_152] : memref<2x128xf32, #tpu.memory_space<vmem>>, vector<2x128xf32>
    %cst_153 = arith.constant dense<0.000000e+00> : vector<2x32xf32>
    %354 = tpu.matmul %353, %352, %cst_153 {dimension_numbers = #tpu.dot_dimension_numbers<[1], [0], [0], [1], [0, 0, 1, 1], [], []>} : vector<2x128xf32>, vector<128x32xf32>, vector<2x32xf32> -> vector<2x32xf32>
    %cst_154 = arith.constant 1.562500e-02 : f32
    %355 = vector.broadcast %cst_154 : f32 to vector<2x32xf32>
    %356 = arith.mulf %354, %355 : vector<2x32xf32>
    %c0_155 = arith.constant 0 : index
    %c0_156 = arith.constant 0 : index
    %357 = vector.load %arg28[%c0_155, %c0_156] : memref<32x192xf32, #tpu.memory_space<vmem>>, vector<32x192xf32>
    %cst_157 = arith.constant dense<0.000000e+00> : vector<2x192xf32>
    %358 = tpu.matmul %356, %357, %cst_157 {dimension_numbers = #tpu.dot_dimension_numbers<[1], [0], [0], [1], [0, 0, 1, 1], [], []>} : vector<2x32xf32>, vector<32x192xf32>, vector<2x192xf32> -> vector<2x192xf32>
    %c0_158 = arith.constant 0 : index
    %c0_159 = arith.constant 0 : index
    %359 = vector.load %arg29[%c0_158, %c0_159] : memref<1x192xf32, #tpu.memory_space<vmem>>, vector<1x192xf32>
    %360 = vector.broadcast %359 : vector<1x192xf32> to vector<2x192xf32>
    %361 = arith.addf %358, %360 : vector<2x192xf32>
    %c0_160 = arith.constant 0 : index
    %c0_161 = arith.constant 0 : index
    %362 = vector.load %arg30[%c0_160, %c0_161] : memref<1x192xf32, #tpu.memory_space<vmem>>, vector<1x192xf32>
    %363 = vector.broadcast %362 : vector<1x192xf32> to vector<2x192xf32>
    %364 = arith.mulf %137, %363 : vector<2x192xf32>
    %cst_162 = arith.constant 1.000000e+00 : f32
    %365 = vector.broadcast %cst_162 : f32 to vector<1x192xf32>
    %366 = arith.subf %365, %362 : vector<1x192xf32>
    %367 = vector.broadcast %366 : vector<1x192xf32> to vector<2x192xf32>
    %368 = arith.mulf %361, %367 : vector<2x192xf32>
    %369 = arith.addf %364, %368 : vector<2x192xf32>
    %c0_163 = arith.constant 0 : index
    %c0_164 = arith.constant 0 : index
    %370 = vector.load %arg31[%c0_163, %c0_164] : memref<2x192xf32, #tpu.memory_space<vmem>>, vector<2x192xf32>
    tpu.vector_store %arg31[%c0_163, %c0_164], %369 {strides = array<i32>} : memref<2x192xf32, #tpu.memory_space<vmem>>, vector<2x192xf32>,
    return
  }
}

</mosaic_0001>

<llo_original>
// kernel: ensemble_forward.1
$region0: #{ensemble_forward.1}
  #allocation0 [shape = 'u32[]', space=smem, size = 0x4, offset = 0x4, fixed_abs, tag = 'smem constant byte address 0x4 - core index']
  #allocation1 [shape = 'u32[144,128]{1,0:T(1,128)}', space=vmem, size = 0x12000, scoped, tag = 'internal scratch']
  %s0 = inlined_call_operand.smem [shape: u32[32], index: -1, kind: input, shape index: {}]
  %s1 = sld [smem:[%s0]]
  %s2 = scalar_lea.smem %s0, 1
  %s3 = sld [smem:[%s2]]
  %s4 = scalar_lea.smem %s0, 2
  %s5 = sld [smem:[%s4]]
  %s6 = scalar_lea.smem %s0, 3
  %s7 = sld [smem:[%s6]]
  %s8 = scalar_lea.smem %s0, 4
  %s9 = sld [smem:[%s8]]
  %s10 = scalar_lea.smem %s0, 5
  %s11 = sld [smem:[%s10]]
  %s12 = scalar_lea.smem %s0, 6
  %s13 = sld [smem:[%s12]]
  %s14 = scalar_lea.smem %s0, 7
  %s15 = sld [smem:[%s14]]
  %s16 = scalar_lea.smem %s0, 8
  %s17 = sld [smem:[%s16]]
  %s18 = scalar_lea.smem %s0, 9
  %s19 = sld [smem:[%s18]]
  %s20 = scalar_lea.smem %s0, 10
  %s21 = sld [smem:[%s20]]
  %s22 = scalar_lea.smem %s0, 11
  %s23 = sld [smem:[%s22]]
  %s24 = scalar_lea.smem %s0, 12
  %s25 = sld [smem:[%s24]]
  %s26 = scalar_lea.smem %s0, 13
  %s27 = sld [smem:[%s26]]
  %s28 = scalar_lea.smem %s0, 14
  %s29 = sld [smem:[%s28]]
  %s30 = scalar_lea.smem %s0, 15
  %s31 = sld [smem:[%s30]]
  %s32 = scalar_lea.smem %s0, 16
  %s33 = sld [smem:[%s32]]
  %s34 = scalar_lea.smem %s0, 17
  %s35 = sld [smem:[%s34]]
  %s36 = scalar_lea.smem %s0, 18
  %s37 = sld [smem:[%s36]]
  %s38 = scalar_lea.smem %s0, 19
  %s39 = sld [smem:[%s38]]
  %s40 = scalar_lea.smem %s0, 20
  %s41 = sld [smem:[%s40]]
  %s42 = scalar_lea.smem %s0, 21
  %s43 = sld [smem:[%s42]]
  %s44 = scalar_lea.smem %s0, 22
  %s45 = sld [smem:[%s44]]
  %s46 = scalar_lea.smem %s0, 23
  %s47 = sld [smem:[%s46]]
  %s48 = scalar_lea.smem %s0, 24
  %s49 = sld [smem:[%s48]]
  %s50 = scalar_lea.smem %s0, 25
  %s51 = sld [smem:[%s50]]
  %s52 = scalar_lea.smem %s0, 26
  %s53 = sld [smem:[%s52]]
  %s54 = scalar_lea.smem %s0, 27
  %s55 = sld [smem:[%s54]]
  %s56 = scalar_lea.smem %s0, 28
  %s57 = sld [smem:[%s56]]
  %s58 = scalar_lea.smem %s0, 29
  %s59 = sld [smem:[%s58]]
  %s60 = scalar_lea.smem %s0, 30
  %s61 = sld [smem:[%s60]]
  %s62 = scalar_lea.smem %s0, 31
  %s63 = sld [smem:[%s62]]
  %s64 = sld [smem:[#allocation0]]
  $region134: #{ensemble_forward.1} parent=0
    _
  %s66 = ssub.s32 1, %s64
  %s67 = scalar_select 0, %s66, %s64
  // Predicated region
  $region2: #{ensemble_forward.1} parent=0 // pred_check
    _
  $region3: #{ensemble_forward.1} parent=0 // pred_check_branch
    %69 = sbr.rel (0) target = $region5
  $region4: #{ensemble_forward.1} parent=0 // pred_region
    _
  $region5: #{ensemble_forward.1} parent=0 // pred_fallthru
    _
  // Predicated region
  $region6: #{ensemble_forward.1} parent=0 // pred_check
    _
  $region7: #{ensemble_forward.1} parent=0 // pred_check_branch
    %71 = sbr.rel (0) target = $region9
  $region8: #{ensemble_forward.1} parent=0 // pred_region
    _
  $region9: #{ensemble_forward.1} parent=0 // pred_fallthru
    _
  // Predicated region
  $region10: #{ensemble_forward.1} parent=0 // pred_check
    _
  $region11: #{ensemble_forward.1} parent=0 // pred_check_branch
    %73 = sbr.rel (0) target = $region13
  $region12: #{ensemble_forward.1} parent=0 // pred_region
    _
  $region13: #{ensemble_forward.1} parent=0 // pred_fallthru
    _
  // Predicated region
  $region14: #{ensemble_forward.1} parent=0 // pred_check
    _
  $region15: #{ensemble_forward.1} parent=0 // pred_check_branch
    %75 = sbr.rel (0) target = $region17
  $region16: #{ensemble_forward.1} parent=0 // pred_region
    _
  $region17: #{ensemble_forward.1} parent=0 // pred_fallthru
    _
  // Predicated region
  $region18: #{ensemble_forward.1} parent=0 // pred_check
    _
  $region19: #{ensemble_forward.1} parent=0 // pred_check_branch
    %77 = sbr.rel (0) target = $region21
  $region20: #{ensemble_forward.1} parent=0 // pred_region
    _
  $region21: #{ensemble_forward.1} parent=0 // pred_fallthru
    _
  // Predicated region
  $region22: #{ensemble_forward.1} parent=0 // pred_check
    _
  $region23: #{ensemble_forward.1} parent=0 // pred_check_branch
    %79 = sbr.rel (0) target = $region25
  $region24: #{ensemble_forward.1} parent=0 // pred_region
    _
  $region25: #{ensemble_forward.1} parent=0 // pred_fallthru
    _
  // Predicated region
  $region26: #{ensemble_forward.1} parent=0 // pred_check
    _
  $region27: #{ensemble_forward.1} parent=0 // pred_check_branch
    %81 = sbr.rel (0) target = $region29
  $region28: #{ensemble_forward.1} parent=0 // pred_region
    _
  $region29: #{ensemble_forward.1} parent=0 // pred_fallthru
    _
  // Predicated region
  $region30: #{ensemble_forward.1} parent=0 // pred_check
    _
  $region31: #{ensemble_forward.1} parent=0 // pred_check_branch
    %83 = sbr.rel (0) target = $region33
  $region32: #{ensemble_forward.1} parent=0 // pred_region
    _
  $region33: #{ensemble_forward.1} parent=0 // pred_fallthru
    _
  // Predicated region
  $region34: #{ensemble_forward.1} parent=0 // pred_check
    _
  $region35: #{ensemble_forward.1} parent=0 // pred_check_branch
    %85 = sbr.rel (0) target = $region37
  $region36: #{ensemble_forward.1} parent=0 // pred_region
    _
  $region37: #{ensemble_forward.1} parent=0 // pred_fallthru
    _
  // Predicated region
  $region38: #{ensemble_forward.1} parent=0 // pred_check
    _
  $region39: #{ensemble_forward.1} parent=0 // pred_check_branch
    %87 = sbr.rel (0) target = $region41
  $region40: #{ensemble_forward.1} parent=0 // pred_region
    _
  $region41: #{ensemble_forward.1} parent=0 // pred_fallthru
    _
  // Predicated region
  $region42: #{ensemble_forward.1} parent=0 // pred_check
    _
  $region43: #{ensemble_forward.1} parent=0 // pred_check_branch
    %89 = sbr.rel (0) target = $region45
  $region44: #{ensemble_forward.1} parent=0 // pred_region
    _
  $region45: #{ensemble_forward.1} parent=0 // pred_fallthru
    _
  // Predicated region
  $region46: #{ensemble_forward.1} parent=0 // pred_check
    _
  $region47: #{ensemble_forward.1} parent=0 // pred_check_branch
    %91 = sbr.rel (0) target = $region49
  $region48: #{ensemble_forward.1} parent=0 // pred_region
    _
  $region49: #{ensemble_forward.1} parent=0 // pred_fallthru
    _
  // Predicated region
  $region50: #{ensemble_forward.1} parent=0 // pred_check
    _
  $region51: #{ensemble_forward.1} parent=0 // pred_check_branch
    %93 = sbr.rel (0) target = $region53
  $region52: #{ensemble_forward.1} parent=0 // pred_region
    _
  $region53: #{ensemble_forward.1} parent=0 // pred_fallthru
    _
  // Predicated region
  $region54: #{ensemble_forward.1} parent=0 // pred_check
    _
  $region55: #{ensemble_forward.1} parent=0 // pred_check_branch
    %95 = sbr.rel (0) target = $region57
  $region56: #{ensemble_forward.1} parent=0 // pred_region
    _
  $region57: #{ensemble_forward.1} parent=0 // pred_fallthru
    _
  // Predicated region
  $region58: #{ensemble_forward.1} parent=0 // pred_check
    _
  $region59: #{ensemble_forward.1} parent=0 // pred_check_branch
    %97 = sbr.rel (0) target = $region61
  $region60: #{ensemble_forward.1} parent=0 // pred_region
    _
  $region61: #{ensemble_forward.1} parent=0 // pred_fallthru
    _
  // Predicated region
  $region62: #{ensemble_forward.1} parent=0 // pred_check
    _
  $region63: #{ensemble_forward.1} parent=0 // pred_check_branch
    %99 = sbr.rel (0) target = $region65
  $region64: #{ensemble_forward.1} parent=0 // pred_region
    _
  $region65: #{ensemble_forward.1} parent=0 // pred_fallthru
    _
  // Predicated region
  $region66: #{ensemble_forward.1} parent=0 // pred_check
    _
  $region67: #{ensemble_forward.1} parent=0 // pred_check_branch
    %101 = sbr.rel (0) target = $region69
  $region68: #{ensemble_forward.1} parent=0 // pred_region
    _
  $region69: #{ensemble_forward.1} parent=0 // pred_fallthru
    _
  // Predicated region
  $region70: #{ensemble_forward.1} parent=0 // pred_check
    _
  $region71: #{ensemble_forward.1} parent=0 // pred_check_branch
    %103 = sbr.rel (0) target = $region73
  $region72: #{ensemble_forward.1} parent=0 // pred_region
    _
  $region73: #{ensemble_forward.1} parent=0 // pred_fallthru
    _
  // Predicated region
  $region74: #{ensemble_forward.1} parent=0 // pred_check
    _
  $region75: #{ensemble_forward.1} parent=0 // pred_check_branch
    %105 = sbr.rel (0) target = $region77
  $region76: #{ensemble_forward.1} parent=0 // pred_region
    _
  $region77: #{ensemble_forward.1} parent=0 // pred_fallthru
    _
  // Predicated region
  $region78: #{ensemble_forward.1} parent=0 // pred_check
    _
  $region79: #{ensemble_forward.1} parent=0 // pred_check_branch
    %107 = sbr.rel (0) target = $region81
  $region80: #{ensemble_forward.1} parent=0 // pred_region
    _
  $region81: #{ensemble_forward.1} parent=0 // pred_fallthru
    _
  // Predicated region
  $region82: #{ensemble_forward.1} parent=0 // pred_check
    _
  $region83: #{ensemble_forward.1} parent=0 // pred_check_branch
    %109 = sbr.rel (0) target = $region85
  $region84: #{ensemble_forward.1} parent=0 // pred_region
    _
  $region85: #{ensemble_forward.1} parent=0 // pred_fallthru
    _
  // Predicated region
  $region86: #{ensemble_forward.1} parent=0 // pred_check
    _
  $region87: #{ensemble_forward.1} parent=0 // pred_check_branch
    %111 = sbr.rel (0) target = $region89
  $region88: #{ensemble_forward.1} parent=0 // pred_region
    _
  $region89: #{ensemble_forward.1} parent=0 // pred_fallthru
    _
  // Predicated region
  $region90: #{ensemble_forward.1} parent=0 // pred_check
    _
  $region91: #{ensemble_forward.1} parent=0 // pred_check_branch
    %113 = sbr.rel (0) target = $region93
  $region92: #{ensemble_forward.1} parent=0 // pred_region
    _
  $region93: #{ensemble_forward.1} parent=0 // pred_fallthru
    _
  // Predicated region
  $region94: #{ensemble_forward.1} parent=0 // pred_check
    _
  $region95: #{ensemble_forward.1} parent=0 // pred_check_branch
    %115 = sbr.rel (0) target = $region97
  $region96: #{ensemble_forward.1} parent=0 // pred_region
    _
  $region97: #{ensemble_forward.1} parent=0 // pred_fallthru
    _
  // Predicated region
  $region98: #{ensemble_forward.1} parent=0 // pred_check
    _
  $region99: #{ensemble_forward.1} parent=0 // pred_check_branch
    %117 = sbr.rel (0) target = $region101
  $region100: #{ensemble_forward.1} parent=0 // pred_region
    _
  $region101: #{ensemble_forward.1} parent=0 // pred_fallthru
    _
  // Predicated region
  $region102: #{ensemble_forward.1} parent=0 // pred_check
    _
  $region103: #{ensemble_forward.1} parent=0 // pred_check_branch
    %119 = sbr.rel (0) target = $region105
  $region104: #{ensemble_forward.1} parent=0 // pred_region
    _
  $region105: #{ensemble_forward.1} parent=0 // pred_fallthru
    _
  // Predicated region
  $region106: #{ensemble_forward.1} parent=0 // pred_check
    _
  $region107: #{ensemble_forward.1} parent=0 // pred_check_branch
    %121 = sbr.rel (0) target = $region109
  $region108: #{ensemble_forward.1} parent=0 // pred_region
    _
  $region109: #{ensemble_forward.1} parent=0 // pred_fallthru
    _
  // Predicated region
  $region110: #{ensemble_forward.1} parent=0 // pred_check
    _
  $region111: #{ensemble_forward.1} parent=0 // pred_check_branch
    %123 = sbr.rel (0) target = $region113
  $region112: #{ensemble_forward.1} parent=0 // pred_region
    _
  $region113: #{ensemble_forward.1} parent=0 // pred_fallthru
    _
  // Predicated region
  $region114: #{ensemble_forward.1} parent=0 // pred_check
    _
  $region115: #{ensemble_forward.1} parent=0 // pred_check_branch
    %125 = sbr.rel (0) target = $region117
  $region116: #{ensemble_forward.1} parent=0 // pred_region
    _
  $region117: #{ensemble_forward.1} parent=0 // pred_fallthru
    _
  // Predicated region
  $region118: #{ensemble_forward.1} parent=0 // pred_check
    _
  $region119: #{ensemble_forward.1} parent=0 // pred_check_branch
    %127 = sbr.rel (0) target = $region121
  $region120: #{ensemble_forward.1} parent=0 // pred_region
    _
  $region121: #{ensemble_forward.1} parent=0 // pred_fallthru
    _
  // Predicated region
  $region122: #{ensemble_forward.1} parent=0 // pred_check
    _
  $region123: #{ensemble_forward.1} parent=0 // pred_check_branch
    %129 = sbr.rel (0) target = $region125
  $region124: #{ensemble_forward.1} parent=0 // pred_region
    _
  $region125: #{ensemble_forward.1} parent=0 // pred_fallthru
    _
  %v130 = vld [vmem:[%s1] sm:$0xff]
  %v131 = vld [vmem:[%s1 + $0x8] sm:$0xff]
  %v132 = vld [vmem:[%s1 + $0x10] sm:$0xff]
  %v133 = vld [vmem:[%s1 + $0x18] sm:$0xff]
  %v134 = vld [vmem:[%s1 + $0x20] sm:$0xff]
  %v135 = vld [vmem:[%s1 + $0x28] sm:$0xff]
  %v136 = vld [vmem:[%s1 + $0x30] sm:$0xff]
  %v137 = vld [vmem:[%s1 + $0x38] sm:$0xff]
  %v138 = vld [vmem:[%s1 + $0x40] sm:$0xff]
  %v139 = vld [vmem:[%s1 + $0x48] sm:$0xff]
  %v140 = vld [vmem:[%s1 + $0x50] sm:$0xff]
  %v141 = vld [vmem:[%s1 + $0x58] sm:$0xff]
  %v142 = vld [vmem:[%s1 + $0x60] sm:$0xff]
  %v143 = vld [vmem:[%s1 + $0x68] sm:$0xff]
  %v144 = vld [vmem:[%s1 + $0x70] sm:$0xff]
  %v145 = vld [vmem:[%s1 + $0x78] sm:$0xff]
  %v146 = vlaneseq
  %v147 = vand.u32 %v146, 127
  %148 = vset.pattern.permute.xlu0 0
  %149 = vperm.xlu0 %148, %v130
  %v150 = vpop.permute.xlu0 %149
  %151 = vset.pattern.permute.xlu0 0
  %152 = vperm.xlu0 %151, %v131
  %v153 = vpop.permute.xlu0 %152
  %154 = vset.pattern.permute.xlu0 0
  %155 = vperm.xlu0 %154, %v132
  %v156 = vpop.permute.xlu0 %155
  %157 = vset.pattern.permute.xlu0 0
  %158 = vperm.xlu0 %157, %v133
  %v159 = vpop.permute.xlu0 %158
  %160 = vset.pattern.permute.xlu0 0
  %161 = vperm.xlu0 %160, %v134
  %v162 = vpop.permute.xlu0 %161
  %163 = vset.pattern.permute.xlu0 0
  %164 = vperm.xlu0 %163, %v135
  %v165 = vpop.permute.xlu0 %164
  %166 = vset.pattern.permute.xlu0 0
  %167 = vperm.xlu0 %166, %v136
  %v168 = vpop.permute.xlu0 %167
  %169 = vset.pattern.permute.xlu0 0
  %170 = vperm.xlu0 %169, %v137
  %v171 = vpop.permute.xlu0 %170
  %172 = vset.pattern.permute.xlu0 0
  %173 = vperm.xlu0 %172, %v138
  %v174 = vpop.permute.xlu0 %173
  %175 = vset.pattern.permute.xlu0 0
  %176 = vperm.xlu0 %175, %v139
  %v177 = vpop.permute.xlu0 %176
  %178 = vset.pattern.permute.xlu0 0
  %179 = vperm.xlu0 %178, %v140
  %v180 = vpop.permute.xlu0 %179
  %181 = vset.pattern.permute.xlu0 0
  %182 = vperm.xlu0 %181, %v141
  %v183 = vpop.permute.xlu0 %182
  %184 = vset.pattern.permute.xlu0 0
  %185 = vperm.xlu0 %184, %v142
  %v186 = vpop.permute.xlu0 %185
  %187 = vset.pattern.permute.xlu0 0
  %188 = vperm.xlu0 %187, %v143
  %v189 = vpop.permute.xlu0 %188
  %190 = vset.pattern.permute.xlu0 0
  %191 = vperm.xlu0 %190, %v144
  %v192 = vpop.permute.xlu0 %191
  %193 = vset.pattern.permute.xlu0 0
  %194 = vperm.xlu0 %193, %v145
  %v195 = vpop.permute.xlu0 %194
  %vm196 = vcmp.eq.s32.totalorder %v147, %v150
  %vm197 = vcmp.eq.s32.totalorder %v147, %v153
  %vm198 = vcmp.eq.s32.totalorder %v147, %v156
  %vm199 = vcmp.eq.s32.totalorder %v147, %v159
  %vm200 = vcmp.eq.s32.totalorder %v147, %v162
  %vm201 = vcmp.eq.s32.totalorder %v147, %v165
  %vm202 = vcmp.eq.s32.totalorder %v147, %v168
  %vm203 = vcmp.eq.s32.totalorder %v147, %v171
  %vm204 = vcmp.eq.s32.totalorder %v147, %v174
  %vm205 = vcmp.eq.s32.totalorder %v147, %v177
  %vm206 = vcmp.eq.s32.totalorder %v147, %v180
  %vm207 = vcmp.eq.s32.totalorder %v147, %v183
  %vm208 = vcmp.eq.s32.totalorder %v147, %v186
  %vm209 = vcmp.eq.s32.totalorder %v147, %v189
  %vm210 = vcmp.eq.s32.totalorder %v147, %v192
  %vm211 = vcmp.eq.s32.totalorder %v147, %v195
  %v212 = vsel %vm196, 1, 0
  %v213 = vsel %vm197, 1, 0
  %v214 = vsel %vm198, 1, 0
  %v215 = vsel %vm199, 1, 0
  %v216 = vsel %vm200, 1, 0
  %v217 = vsel %vm201, 1, 0
  %v218 = vsel %vm202, 1, 0
  %v219 = vsel %vm203, 1, 0
  %v220 = vsel %vm204, 1, 0
  %v221 = vsel %vm205, 1, 0
  %v222 = vsel %vm206, 1, 0
  %v223 = vsel %vm207, 1, 0
  %v224 = vsel %vm208, 1, 0
  %v225 = vsel %vm209, 1, 0
  %v226 = vsel %vm210, 1, 0
  %v227 = vsel %vm211, 1, 0
  %v228 = vcvt.s32.f32 %v212
  %v229 = vcvt.s32.f32 %v213
  %v230 = vcvt.s32.f32 %v214
  %v231 = vcvt.s32.f32 %v215
  %v232 = vcvt.s32.f32 %v216
  %v233 = vcvt.s32.f32 %v217
  %v234 = vcvt.s32.f32 %v218
  %v235 = vcvt.s32.f32 %v219
  %v236 = vcvt.s32.f32 %v220
  %v237 = vcvt.s32.f32 %v221
  %v238 = vcvt.s32.f32 %v222
  %v239 = vcvt.s32.f32 %v223
  %v240 = vcvt.s32.f32 %v224
  %v241 = vcvt.s32.f32 %v225
  %v242 = vcvt.s32.f32 %v226
  %v243 = vcvt.s32.f32 %v227
  %v244 = vld [vmem:[%s3] sm:$0xff]
  %v245 = vld [vmem:[%s3 + $0x8] sm:$0xff]
  %vm246 = vcmask 130048
  %v248 = vsel %vm246, %v228, 0
  %v251 = vsel %vm246, %v229, 0
  %v254 = vsel %vm246, %v230, 0
  %v257 = vsel %vm246, %v231, 0
  %v260 = vsel %vm246, %v232, 0
  %v263 = vsel %vm246, %v233, 0
  %v266 = vsel %vm246, %v234, 0
  %v269 = vsel %vm246, %v235, 0
  %v272 = vsel %vm246, %v236, 0
  %v275 = vsel %vm246, %v237, 0
  %v278 = vsel %vm246, %v238, 0
  %v281 = vsel %vm246, %v239, 0
  %v284 = vsel %vm246, %v240, 0
  %v287 = vsel %vm246, %v241, 0
  %v290 = vsel %vm246, %v242, 0
  %v293 = vsel %vm246, %v243, 0
  %295 = vmatprep.subr.mxu0 0.0
  %296 = vmatpush1.msra.mxu0 %v244
  %297 = vmatprep.subr.mxu0 0.0
  %298 = vmatpush1.msra.mxu0 %v245
  %299 = vmatprep.subr.mxu0 0.0
  %300 = vmatpush1.msra.mxu0 0.0
  %301 = vmatprep.subr.mxu0 0.0
  %302 = vmatpush1.msra.mxu0 0.0
  %303 = vmatprep.subr.mxu0 0.0
  %304 = vmatpush1.msra.mxu0 0.0
  %305 = vmatprep.subr.mxu0 0.0
  %306 = vmatpush1.msra.mxu0 0.0
  %307 = vmatprep.subr.mxu0 0.0
  %308 = vmatpush1.msra.mxu0 0.0
  %309 = vmatprep.subr.mxu0 0.0
  %310 = vmatpush1.msra.mxu0 0.0
  %311 = vmatprep.subr.mxu0 0.0
  %312 = vmatpush1.msra.mxu0 0.0
  %313 = vmatprep.subr.mxu0 0.0
  %314 = vmatpush1.msra.mxu0 0.0
  %315 = vmatprep.subr.mxu0 0.0
  %316 = vmatpush1.msra.mxu0 0.0
  %317 = vmatprep.subr.mxu0 0.0
  %318 = vmatpush1.msra.mxu0 0.0
  %319 = vmatprep.subr.mxu0 0.0
  %320 = vmatpush1.msra.mxu0 0.0
  %321 = vmatprep.subr.mxu0 0.0
  %322 = vmatpush1.msra.mxu0 0.0
  %323 = vmatprep.subr.mxu0 0.0
  %324 = vmatpush1.msra.mxu0 0.0
  %325 = vmatprep.subr.mxu0 0.0
  %326 = vmatpush1.msra.mxu0 0.0
  %327 = vmatprep.subr.mxu0 0.0
  %328 = vmatpush1.msra.mxu0 0.0
  %329 = vmatprep.subr.mxu0 0.0
  %330 = vmatpush1.msra.mxu0 0.0
  %331 = vmatprep.subr.mxu0 0.0
  %332 = vmatpush1.msra.mxu0 0.0
  %333 = vmatprep.subr.mxu0 0.0
  %334 = vmatpush1.msra.mxu0 0.0
  %335 = vmatprep.subr.mxu0 0.0
  %336 = vmatpush1.msra.mxu0 0.0
  %337 = vmatprep.subr.mxu0 0.0
  %338 = vmatpush1.msra.mxu0 0.0
  %339 = vmatprep.subr.mxu0 0.0
  %340 = vmatpush1.msra.mxu0 0.0
  %341 = vmatprep.subr.mxu0 0.0
  %342 = vmatpush1.msra.mxu0 0.0
  %343 = vmatprep.subr.mxu0 0.0
  %344 = vmatpush1.msra.mxu0 0.0
  %345 = vmatprep.subr.mxu0 0.0
  %346 = vmatpush1.msra.mxu0 0.0
  %347 = vmatprep.subr.mxu0 0.0
  %348 = vmatpush1.msra.mxu0 0.0
  %349 = vmatprep.subr.mxu0 0.0
  %350 = vmatpush1.msra.mxu0 0.0
  %351 = vmatprep.subr.mxu0 0.0
  %352 = vmatpush1.msra.mxu0 0.0
  %353 = vmatprep.subr.mxu0 0.0
  %354 = vmatpush1.msra.mxu0 0.0
  %355 = vmatprep.subr.mxu0 0.0
  %356 = vmatpush1.msra.mxu0 0.0
  %357 = vmatprep.subr.mxu0 0.0
  %358 = vmatpush1.msra.mxu0 0.0
  %359 = vmatprep.mubr.f32.mxu0 0.0
  %360 = vmatmul.mubr.f32.gmra.mrb[0].mxu0 %v248
  %v361 = vpop.f32.mrb[0].mxu0
  %v362 = vadd.f32 0.0, %v361
  %v363 = vpop.f32.mrb[0].mxu0
  %364 = vmatprep.mubr.f32.mxu0 0.0
  %365 = vmatmul.mubr.f32.gmra.mrb[0].mxu0 %v251
  %v366 = vpop.f32.mrb[0].mxu0
  %v367 = vadd.f32 0.0, %v366
  %v368 = vpop.f32.mrb[0].mxu0
  %369 = vmatprep.mubr.f32.mxu0 0.0
  %370 = vmatmul.mubr.f32.gmra.mrb[0].mxu0 %v254
  %v371 = vpop.f32.mrb[0].mxu0
  %v372 = vadd.f32 0.0, %v371
  %v373 = vpop.f32.mrb[0].mxu0
  %374 = vmatprep.mubr.f32.mxu0 0.0
  %375 = vmatmul.mubr.f32.gmra.mrb[0].mxu0 %v257
  %v376 = vpop.f32.mrb[0].mxu0
  %v377 = vadd.f32 0.0, %v376
  %v378 = vpop.f32.mrb[0].mxu0
  %379 = vmatprep.mubr.f32.mxu0 0.0
  %380 = vmatmul.mubr.f32.gmra.mrb[0].mxu0 %v260
  %v381 = vpop.f32.mrb[0].mxu0
  %v382 = vadd.f32 0.0, %v381
  %v383 = vpop.f32.mrb[0].mxu0
  %384 = vmatprep.mubr.f32.mxu0 0.0
  %385 = vmatmul.mubr.f32.gmra.mrb[0].mxu0 %v263
  %v386 = vpop.f32.mrb[0].mxu0
  %v387 = vadd.f32 0.0, %v386
  %v388 = vpop.f32.mrb[0].mxu0
  %389 = vmatprep.mubr.f32.mxu0 0.0
  %390 = vmatmul.mubr.f32.gmra.mrb[0].mxu0 %v266
  %v391 = vpop.f32.mrb[0].mxu0
  %v392 = vadd.f32 0.0, %v391
  %v393 = vpop.f32.mrb[0].mxu0
  %394 = vmatprep.mubr.f32.mxu0 0.0
  %395 = vmatmul.mubr.f32.gmra.mrb[0].mxu0 %v269
  %v396 = vpop.f32.mrb[0].mxu0
  %v397 = vadd.f32 0.0, %v396
  %v398 = vpop.f32.mrb[0].mxu0
  %399 = vmatprep.mubr.f32.mxu0 0.0
  %400 = vmatmul.mubr.f32.gmra.mrb[0].mxu0 %v272
  %v401 = vpop.f32.mrb[0].mxu0
  %v402 = vadd.f32 0.0, %v401
  %v403 = vpop.f32.mrb[0].mxu0
  %404 = vmatprep.mubr.f32.mxu0 0.0
  %405 = vmatmul.mubr.f32.gmra.mrb[0].mxu0 %v275
  %v406 = vpop.f32.mrb[0].mxu0
  %v407 = vadd.f32 0.0, %v406
  %v408 = vpop.f32.mrb[0].mxu0
  %409 = vmatprep.mubr.f32.mxu0 0.0
  %410 = vmatmul.mubr.f32.gmra.mrb[0].mxu0 %v278
  %v411 = vpop.f32.mrb[0].mxu0
  %v412 = vadd.f32 0.0, %v411
  %v413 = vpop.f32.mrb[0].mxu0
  %414 = vmatprep.mubr.f32.mxu0 0.0
  %415 = vmatmul.mubr.f32.gmra.mrb[0].mxu0 %v281
  %v416 = vpop.f32.mrb[0].mxu0
  %v417 = vadd.f32 0.0, %v416
  %v418 = vpop.f32.mrb[0].mxu0
  %419 = vmatprep.mubr.f32.mxu0 0.0
  %420 = vmatmul.mubr.f32.gmra.mrb[0].mxu0 %v284
  %v421 = vpop.f32.mrb[0].mxu0
  %v422 = vadd.f32 0.0, %v421
  %v423 = vpop.f32.mrb[0].mxu0
  %424 = vmatprep.mubr.f32.mxu0 0.0
  %425 = vmatmul.mubr.f32.gmra.mrb[0].mxu0 %v287
  %v426 = vpop.f32.mrb[0].mxu0
  %v427 = vadd.f32 0.0, %v426
  %v428 = vpop.f32.mrb[0].mxu0
  %429 = vmatprep.mubr.f32.mxu0 0.0
  %430 = vmatmul.mubr.f32.gmra.mrb[0].mxu0 %v290
  %v431 = vpop.f32.mrb[0].mxu0
  %v432 = vadd.f32 0.0, %v431
  %v433 = vpop.f32.mrb[0].mxu0
  %434 = vmatprep.mubr.f32.mxu0 0.0
  %435 = vmatmul.mubr.f32.gmra.mrb[0].mxu0 %v293
  %v436 = vpop.f32.mrb[0].mxu0
  %v437 = vadd.f32 0.0, %v436
  %v438 = vpop.f32.mrb[0].mxu0
  %439 = vdwg.mxu0
  %v440 = vld [vmem:[%s9] sm:$0xff]
  %v441 = vld [vmem:[%s9 + $0x8] sm:$0xff]
  %v442 = vld [vmem:[%s9 + $0x10] sm:$0xff]
  %v443 = vld [vmem:[%s9 + $0x18] sm:$0xff]
  %v444 = vld [vmem:[%s9 + $0x20] sm:$0xff]
  %v445 = vld [vmem:[%s9 + $0x28] sm:$0xff]
  %v447 = vsel %vm246, %v362, 0
  %v450 = vsel %vm246, %v367, 0
  %v453 = vsel %vm246, %v372, 0
  %v456 = vsel %vm246, %v377, 0
  %v459 = vsel %vm246, %v382, 0
  %v462 = vsel %vm246, %v387, 0
  %v465 = vsel %vm246, %v392, 0
  %v468 = vsel %vm246, %v397, 0
  %v471 = vsel %vm246, %v402, 0
  %v474 = vsel %vm246, %v407, 0
  %v477 = vsel %vm246, %v412, 0
  %v480 = vsel %vm246, %v417, 0
  %v483 = vsel %vm246, %v422, 0
  %v486 = vsel %vm246, %v427, 0
  %v489 = vsel %vm246, %v432, 0
  %v492 = vsel %vm246, %v437, 0
  %494 = vmatprep.subr.mxu0 %v441
  %495 = vmatpush1.msra.mxu0 %v440
  %496 = vmatprep.subr.mxu0 %v444
  %497 = vmatpush1.msra.mxu0 %v443
  %498 = vmatprep.subr.mxu0 0.0
  %499 = vmatpush1.msra.mxu0 0.0
  %500 = vmatprep.subr.mxu0 0.0
  %501 = vmatpush1.msra.mxu0 0.0
  %502 = vmatprep.subr.mxu0 0.0
  %503 = vmatpush1.msra.mxu0 0.0
  %504 = vmatprep.subr.mxu0 0.0
  %505 = vmatpush1.msra.mxu0 0.0
  %506 = vmatprep.subr.mxu0 0.0
  %507 = vmatpush1.msra.mxu0 0.0
  %508 = vmatprep.subr.mxu0 0.0
  %509 = vmatpush1.msra.mxu0 0.0
  %510 = vmatprep.subr.mxu0 0.0
  %511 = vmatpush1.msra.mxu0 0.0
  %512 = vmatprep.subr.mxu0 0.0
  %513 = vmatpush1.msra.mxu0 0.0
  %514 = vmatprep.subr.mxu0 0.0
  %515 = vmatpush1.msra.mxu0 0.0
  %516 = vmatprep.subr.mxu0 0.0
  %517 = vmatpush1.msra.mxu0 0.0
  %518 = vmatprep.subr.mxu0 0.0
  %519 = vmatpush1.msra.mxu0 0.0
  %520 = vmatprep.subr.mxu0 0.0
  %521 = vmatpush1.msra.mxu0 0.0
  %522 = vmatprep.subr.mxu0 0.0
  %523 = vmatpush1.msra.mxu0 0.0
  %524 = vmatprep.subr.mxu0 0.0
  %525 = vmatpush1.msra.mxu0 0.0
  %526 = vmatprep.subr.mxu0 0.0
  %527 = vmatpush1.msra.mxu0 0.0
  %528 = vmatprep.subr.mxu0 0.0
  %529 = vmatpush1.msra.mxu0 0.0
  %530 = vmatprep.subr.mxu0 0.0
  %531 = vmatpush1.msra.mxu0 0.0
  %532 = vmatprep.subr.mxu0 0.0
  %533 = vmatpush1.msra.mxu0 0.0
  %534 = vmatprep.subr.mxu0 0.0
  %535 = vmatpush1.msra.mxu0 0.0
  %536 = vmatprep.subr.mxu0 0.0
  %537 = vmatpush1.msra.mxu0 0.0
  %538 = vmatprep.subr.mxu0 0.0
  %539 = vmatpush1.msra.mxu0 0.0
  %540 = vmatprep.subr.mxu0 0.0
  %541 = vmatpush1.msra.mxu0 0.0
  %542 = vmatprep.subr.mxu0 0.0
  %543 = vmatpush1.msra.mxu0 0.0
  %544 = vmatprep.subr.mxu0 0.0
  %545 = vmatpush1.msra.mxu0 0.0
  %546 = vmatprep.subr.mxu0 0.0
  %547 = vmatpush1.msra.mxu0 0.0
  %548 = vmatprep.subr.mxu0 0.0
  %549 = vmatpush1.msra.mxu0 0.0
  %550 = vmatprep.subr.mxu0 0.0
  %551 = vmatpush1.msra.mxu0 0.0
  %552 = vmatprep.subr.mxu0 0.0
  %553 = vmatpush1.msra.mxu0 0.0
  %554 = vmatprep.subr.mxu0 0.0
  %555 = vmatpush1.msra.mxu0 0.0
  %556 = vmatprep.subr.mxu0 0.0
  %557 = vmatpush1.msra.mxu0 0.0
  %558 = vmatprep.mubr.f32.mxu0 0.0
  %559 = vmatmul.mubr.f32.gmra.mrb[0].mxu0 %v447
  %v560 = vpop.f32.mrb[0].mxu0
  %v561 = vadd.f32 0.0, %v560
  %v562 = vpop.f32.mrb[0].mxu0
  %v563 = vadd.f32 0.0, %v562
  %564 = vmatprep.mubr.f32.mxu0 0.0
  %565 = vmatmul.mubr.f32.gmra.mrb[0].mxu0 %v450
  %v566 = vpop.f32.mrb[0].mxu0
  %v567 = vadd.f32 0.0, %v566
  %v568 = vpop.f32.mrb[0].mxu0
  %v569 = vadd.f32 0.0, %v568
  %570 = vmatprep.mubr.f32.mxu0 0.0
  %571 = vmatmul.mubr.f32.gmra.mrb[0].mxu0 %v453
  %v572 = vpop.f32.mrb[0].mxu0
  %v573 = vadd.f32 0.0, %v572
  %v574 = vpop.f32.mrb[0].mxu0
  %v575 = vadd.f32 0.0, %v574
  %576 = vmatprep.mubr.f32.mxu0 0.0
  %577 = vmatmul.mubr.f32.gmra.mrb[0].mxu0 %v456
  %v578 = vpop.f32.mrb[0].mxu0
  %v579 = vadd.f32 0.0, %v578
  %v580 = vpop.f32.mrb[0].mxu0
  %v581 = vadd.f32 0.0, %v580
  %582 = vmatprep.mubr.f32.mxu0 0.0
  %583 = vmatmul.mubr.f32.gmra.mrb[0].mxu0 %v459
  %v584 = vpop.f32.mrb[0].mxu0
  %v585 = vadd.f32 0.0, %v584
  %v586 = vpop.f32.mrb[0].mxu0
  %v587 = vadd.f32 0.0, %v586
  %588 = vmatprep.mubr.f32.mxu0 0.0
  %589 = vmatmul.mubr.f32.gmra.mrb[0].mxu0 %v462
  %v590 = vpop.f32.mrb[0].mxu0
  %v591 = vadd.f32 0.0, %v590
  %v592 = vpop.f32.mrb[0].mxu0
  %v593 = vadd.f32 0.0, %v592
  %594 = vmatprep.mubr.f32.mxu0 0.0
  %595 = vmatmul.mubr.f32.gmra.mrb[0].mxu0 %v465
  %v596 = vpop.f32.mrb[0].mxu0
  %v597 = vadd.f32 0.0, %v596
  %v598 = vpop.f32.mrb[0].mxu0
  %v599 = vadd.f32 0.0, %v598
  %600 = vmatprep.mubr.f32.mxu0 0.0
  %601 = vmatmul.mubr.f32.gmra.mrb[0].mxu0 %v468
  %v602 = vpop.f32.mrb[0].mxu0
  %v603 = vadd.f32 0.0, %v602
  %v604 = vpop.f32.mrb[0].mxu0
  %v605 = vadd.f32 0.0, %v604
  %606 = vmatprep.mubr.f32.mxu0 0.0
  %607 = vmatmul.mubr.f32.gmra.mrb[0].mxu0 %v471
  %v608 = vpop.f32.mrb[0].mxu0
  %v609 = vadd.f32 0.0, %v608
  %v610 = vpop.f32.mrb[0].mxu0
  %v611 = vadd.f32 0.0, %v610
  %612 = vmatprep.mubr.f32.mxu0 0.0
  %613 = vmatmul.mubr.f32.gmra.mrb[0].mxu0 %v474
  %v614 = vpop.f32.mrb[0].mxu0
  %v615 = vadd.f32 0.0, %v614
  %v616 = vpop.f32.mrb[0].mxu0
  %v617 = vadd.f32 0.0, %v616
  %618 = vmatprep.mubr.f32.mxu0 0.0
  %619 = vmatmul.mubr.f32.gmra.mrb[0].mxu0 %v477
  %v620 = vpop.f32.mrb[0].mxu0
  %v621 = vadd.f32 0.0, %v620
  %v622 = vpop.f32.mrb[0].mxu0
  %v623 = vadd.f32 0.0, %v622
  %624 = vmatprep.mubr.f32.mxu0 0.0
  %625 = vmatmul.mubr.f32.gmra.mrb[0].mxu0 %v480
  %v626 = vpop.f32.mrb[0].mxu0
  %v627 = vadd.f32 0.0, %v626
  %v628 = vpop.f32.mrb[0].mxu0
  %v629 = vadd.f32 0.0, %v628
  %630 = vmatprep.mubr.f32.mxu0 0.0
  %631 = vmatmul.mubr.f32.gmra.mrb[0].mxu0 %v483
  %v632 = vpop.f32.mrb[0].mxu0
  %v633 = vadd.f32 0.0, %v632
  %v634 = vpop.f32.mrb[0].mxu0
  %v635 = vadd.f32 0.0, %v634
  %636 = vmatprep.mubr.f32.mxu0 0.0
  %637 = vmatmul.mubr.f32.gmra.mrb[0].mxu0 %v486
  %v638 = vpop.f32.mrb[0].mxu0
  %v639 = vadd.f32 0.0, %v638
  %v640 = vpop.f32.mrb[0].mxu0
  %v641 = vadd.f32 0.0, %v640
  %642 = vmatprep.mubr.f32.mxu0 0.0
  %643 = vmatmul.mubr.f32.gmra.mrb[0].mxu0 %v489
  %v644 = vpop.f32.mrb[0].mxu0
  %v645 = vadd.f32 0.0, %v644
  %v646 = vpop.f32.mrb[0].mxu0
  %v647 = vadd.f32 0.0, %v646
  %648 = vmatprep.mubr.f32.mxu0 0.0
  %649 = vmatmul.mubr.f32.gmra.mrb[0].mxu0 %v492
  %v650 = vpop.f32.mrb[0].mxu0
  %v651 = vadd.f32 0.0, %v650
  %v652 = vpop.f32.mrb[0].mxu0
  %v653 = vadd.f32 0.0, %v652
  %654 = vdwg.mxu0
  %655 = vmatprep.subr.mxu0 0.0
  %656 = vmatpush1.msra.mxu0 %v442
  %657 = vmatprep.subr.mxu0 0.0
  %658 = vmatpush1.msra.mxu0 %v445
  %659 = vmatprep.subr.mxu0 0.0
  %660 = vmatpush1.msra.mxu0 0.0
  %661 = vmatprep.subr.mxu0 0.0
  %662 = vmatpush1.msra.mxu0 0.0
  %663 = vmatprep.subr.mxu0 0.0
  %664 = vmatpush1.msra.mxu0 0.0
  %665 = vmatprep.subr.mxu0 0.0
  %666 = vmatpush1.msra.mxu0 0.0
  %667 = vmatprep.subr.mxu0 0.0
  %668 = vmatpush1.msra.mxu0 0.0
  %669 = vmatprep.subr.mxu0 0.0
  %670 = vmatpush1.msra.mxu0 0.0
  %671 = vmatprep.subr.mxu0 0.0
  %672 = vmatpush1.msra.mxu0 0.0
  %673 = vmatprep.subr.mxu0 0.0
  %674 = vmatpush1.msra.mxu0 0.0
  %675 = vmatprep.subr.mxu0 0.0
  %676 = vmatpush1.msra.mxu0 0.0
  %677 = vmatprep.subr.mxu0 0.0
  %678 = vmatpush1.msra.mxu0 0.0
  %679 = vmatprep.subr.mxu0 0.0
  %680 = vmatpush1.msra.mxu0 0.0
  %681 = vmatprep.subr.mxu0 0.0
  %682 = vmatpush1.msra.mxu0 0.0
  %683 = vmatprep.subr.mxu0 0.0
  %684 = vmatpush1.msra.mxu0 0.0
  %685 = vmatprep.subr.mxu0 0.0
  %686 = vmatpush1.msra.mxu0 0.0
  %687 = vmatprep.subr.mxu0 0.0
  %688 = vmatpush1.msra.mxu0 0.0
  %689 = vmatprep.subr.mxu0 0.0
  %690 = vmatpush1.msra.mxu0 0.0
  %691 = vmatprep.subr.mxu0 0.0
  %692 = vmatpush1.msra.mxu0 0.0
  %693 = vmatprep.subr.mxu0 0.0
  %694 = vmatpush1.msra.mxu0 0.0
  %695 = vmatprep.subr.mxu0 0.0
  %696 = vmatpush1.msra.mxu0 0.0
  %697 = vmatprep.subr.mxu0 0.0
  %698 = vmatpush1.msra.mxu0 0.0
  %699 = vmatprep.subr.mxu0 0.0
  %700 = vmatpush1.msra.mxu0 0.0
  %701 = vmatprep.subr.mxu0 0.0
  %702 = vmatpush1.msra.mxu0 0.0
  %703 = vmatprep.subr.mxu0 0.0
  %704 = vmatpush1.msra.mxu0 0.0
  %705 = vmatprep.subr.mxu0 0.0
  %706 = vmatpush1.msra.mxu0 0.0
  %707 = vmatprep.subr.mxu0 0.0
  %708 = vmatpush1.msra.mxu0 0.0
  %709 = vmatprep.subr.mxu0 0.0
  %710 = vmatpush1.msra.mxu0 0.0
  %711 = vmatprep.subr.mxu0 0.0
  %712 = vmatpush1.msra.mxu0 0.0
  %713 = vmatprep.subr.mxu0 0.0
  %714 = vmatpush1.msra.mxu0 0.0
  %715 = vmatprep.subr.mxu0 0.0
  %716 = vmatpush1.msra.mxu0 0.0
  %717 = vmatprep.subr.mxu0 0.0
  %718 = vmatpush1.msra.mxu0 0.0
  %719 = vmatprep.mubr.f32.mxu0 0.0
  %720 = vmatmul.mubr.f32.gmra.mrb[0].mxu0 %v447
  %v721 = vpop.f32.mrb[0].mxu0
  %v722 = vadd.f32 0.0, %v721
  %v723 = vpop.f32.mrb[0].mxu0
  %724 = vmatprep.mubr.f32.mxu0 0.0
  %725 = vmatmul.mubr.f32.gmra.mrb[0].mxu0 %v450
  %v726 = vpop.f32.mrb[0].mxu0
  %v727 = vadd.f32 0.0, %v726
  %v728 = vpop.f32.mrb[0].mxu0
  %729 = vmatprep.mubr.f32.mxu0 0.0
  %730 = vmatmul.mubr.f32.gmra.mrb[0].mxu0 %v453
  %v731 = vpop.f32.mrb[0].mxu0
  %v732 = vadd.f32 0.0, %v731
  %v733 = vpop.f32.mrb[0].mxu0
  %734 = vmatprep.mubr.f32.mxu0 0.0
  %735 = vmatmul.mubr.f32.gmra.mrb[0].mxu0 %v456
  %v736 = vpop.f32.mrb[0].mxu0
  %v737 = vadd.f32 0.0, %v736
  %v738 = vpop.f32.mrb[0].mxu0
  %739 = vmatprep.mubr.f32.mxu0 0.0
  %740 = vmatmul.mubr.f32.gmra.mrb[0].mxu0 %v459
  %v741 = vpop.f32.mrb[0].mxu0
  %v742 = vadd.f32 0.0, %v741
  %v743 = vpop.f32.mrb[0].mxu0
  %744 = vmatprep.mubr.f32.mxu0 0.0
  %745 = vmatmul.mubr.f32.gmra.mrb[0].mxu0 %v462
  %v746 = vpop.f32.mrb[0].mxu0
  %v747 = vadd.f32 0.0, %v746
  %v748 = vpop.f32.mrb[0].mxu0
  %749 = vmatprep.mubr.f32.mxu0 0.0
  %750 = vmatmul.mubr.f32.gmra.mrb[0].mxu0 %v465
  %v751 = vpop.f32.mrb[0].mxu0
  %v752 = vadd.f32 0.0, %v751
  %v753 = vpop.f32.mrb[0].mxu0
  %754 = vmatprep.mubr.f32.mxu0 0.0
  %755 = vmatmul.mubr.f32.gmra.mrb[0].mxu0 %v468
  %v756 = vpop.f32.mrb[0].mxu0
  %v757 = vadd.f32 0.0, %v756
  %v758 = vpop.f32.mrb[0].mxu0
  %759 = vmatprep.mubr.f32.mxu0 0.0
  %760 = vmatmul.mubr.f32.gmra.mrb[0].mxu0 %v471
  %v761 = vpop.f32.mrb[0].mxu0
  %v762 = vadd.f32 0.0, %v761
  %v763 = vpop.f32.mrb[0].mxu0
  %764 = vmatprep.mubr.f32.mxu0 0.0
  %765 = vmatmul.mubr.f32.gmra.mrb[0].mxu0 %v474
  %v766 = vpop.f32.mrb[0].mxu0
  %v767 = vadd.f32 0.0, %v766
  %v768 = vpop.f32.mrb[0].mxu0
  %769 = vmatprep.mubr.f32.mxu0 0.0
  %770 = vmatmul.mubr.f32.gmra.mrb[0].mxu0 %v477
  %v771 = vpop.f32.mrb[0].mxu0
  %v772 = vadd.f32 0.0, %v771
  %v773 = vpop.f32.mrb[0].mxu0
  %774 = vmatprep.mubr.f32.mxu0 0.0
  %775 = vmatmul.mubr.f32.gmra.mrb[0].mxu0 %v480
  %v776 = vpop.f32.mrb[0].mxu0
  %v777 = vadd.f32 0.0, %v776
  %v778 = vpop.f32.mrb[0].mxu0
  %779 = vmatprep.mubr.f32.mxu0 0.0
  %780 = vmatmul.mubr.f32.gmra.mrb[0].mxu0 %v483
  %v781 = vpop.f32.mrb[0].mxu0
  %v782 = vadd.f32 0.0, %v781
  %v783 = vpop.f32.mrb[0].mxu0
  %784 = vmatprep.mubr.f32.mxu0 0.0
  %785 = vmatmul.mubr.f32.gmra.mrb[0].mxu0 %v486
  %v786 = vpop.f32.mrb[0].mxu0
  %v787 = vadd.f32 0.0, %v786
  %v788 = vpop.f32.mrb[0].mxu0
  %789 = vmatprep.mubr.f32.mxu0 0.0
  %790 = vmatmul.mubr.f32.gmra.mrb[0].mxu0 %v489
  %v791 = vpop.f32.mrb[0].mxu0
  %v792 = vadd.f32 0.0, %v791
  %v793 = vpop.f32.mrb[0].mxu0
  %794 = vmatprep.mubr.f32.mxu0 0.0
  %795 = vmatmul.mubr.f32.gmra.mrb[0].mxu0 %v492
  %v796 = vpop.f32.mrb[0].mxu0
  %v797 = vadd.f32 0.0, %v796
  %v798 = vpop.f32.mrb[0].mxu0
  %799 = vdwg.mxu0
  %v800 = vrot.slane %v561, 7
  %v801 = vrot.slane %v567, 7
  %v802 = vrot.slane %v573, 7
  %v803 = vrot.slane %v579, 7
  %v804 = vrot.slane %v585, 7
  %v805 = vrot.slane %v591, 7
  %v806 = vrot.slane %v597, 7
  %v807 = vrot.slane %v603, 7
  %v808 = vrot.slane %v609, 7
  %v809 = vrot.slane %v615, 7
  %v810 = vrot.slane %v621, 7
  %v811 = vrot.slane %v627, 7
  %v812 = vrot.slane %v633, 7
  %v813 = vrot.slane %v639, 7
  %v814 = vrot.slane %v645, 7
  %v815 = vrot.slane %v651, 7
  %v816 = vlaneseq
  %v817 = vshrl.u32 %v816, 7
  %vm818 = vcmp.lt.s32.totalorder %v817, 1
  %v819 = vsel %vm818, %v814, %v815
  %v820 = vsel %vm818, %v813, %v814
  %v821 = vsel %vm818, %v812, %v813
  %v822 = vsel %vm818, %v811, %v812
  %v823 = vsel %vm818, %v810, %v811
  %v824 = vsel %vm818, %v809, %v810
  %v825 = vsel %vm818, %v808, %v809
  %v826 = vsel %vm818, %v807, %v808
  %v827 = vsel %vm818, %v806, %v807
  %v828 = vsel %vm818, %v805, %v806
  %v829 = vsel %vm818, %v804, %v805
  %v830 = vsel %vm818, %v803, %v804
  %v831 = vsel %vm818, %v802, %v803
  %v832 = vsel %vm818, %v801, %v802
  %v833 = vsel %vm818, %v800, %v801
  %v834 = vsel %vm818, %v815, %v800
  %v835 = vld [vmem:[%s17] sm:$0xff]
  %v836 = vld [vmem:[%s17 + $0x8] sm:$0xff]
  %v837 = vld [vmem:[%s17 + $0x10] sm:$0xff]
  %v838 = vld [vmem:[%s17 + $0x18] sm:$0xff]
  %v839 = vld [vmem:[%s17 + $0x20] sm:$0xff]
  %v840 = vld [vmem:[%s17 + $0x28] sm:$0xff]
  %v841 = vld [vmem:[%s17 + $0x30] sm:$0xff]
  %v842 = vld [vmem:[%s17 + $0x38] sm:$0xff]
  %v843 = vld [vmem:[%s17 + $0x40] sm:$0xff]
  %v844 = vld [vmem:[%s17 + $0x48] sm:$0xff]
  %v845 = vld [vmem:[%s17 + $0x50] sm:$0xff]
  %v846 = vld [vmem:[%s17 + $0x58] sm:$0xff]
  %v847 = vld [vmem:[%s17 + $0x60] sm:$0xff]
  %v848 = vld [vmem:[%s17 + $0x68] sm:$0xff]
  %v849 = vld [vmem:[%s17 + $0x70] sm:$0xff]
  %v850 = vld [vmem:[%s17 + $0x78] sm:$0xff]
  %852 = vset.pattern.permute.xlu0 0
  %853 = vperm.xlu0 %852, %v835
  %v854 = vpop.permute.xlu0 %853
  %857 = vset.pattern.permute.xlu0 0
  %858 = vperm.xlu0 %857, %v836
  %v859 = vpop.permute.xlu0 %858
  %862 = vset.pattern.permute.xlu0 0
  %863 = vperm.xlu0 %862, %v837
  %v864 = vpop.permute.xlu0 %863
  %867 = vset.pattern.permute.xlu0 0
  %868 = vperm.xlu0 %867, %v838
  %v869 = vpop.permute.xlu0 %868
  %872 = vset.pattern.permute.xlu0 0
  %873 = vperm.xlu0 %872, %v839
  %v874 = vpop.permute.xlu0 %873
  %877 = vset.pattern.permute.xlu0 0
  %878 = vperm.xlu0 %877, %v840
  %v879 = vpop.permute.xlu0 %878
  %882 = vset.pattern.permute.xlu0 0
  %883 = vperm.xlu0 %882, %v841
  %v884 = vpop.permute.xlu0 %883
  %887 = vset.pattern.permute.xlu0 0
  %888 = vperm.xlu0 %887, %v842
  %v889 = vpop.permute.xlu0 %888
  %892 = vset.pattern.permute.xlu0 0
  %893 = vperm.xlu0 %892, %v843
  %v894 = vpop.permute.xlu0 %893
  %897 = vset.pattern.permute.xlu0 0
  %898 = vperm.xlu0 %897, %v844
  %v899 = vpop.permute.xlu0 %898
  %902 = vset.pattern.permute.xlu0 0
  %903 = vperm.xlu0 %902, %v845
  %v904 = vpop.permute.xlu0 %903
  %907 = vset.pattern.permute.xlu0 0
  %908 = vperm.xlu0 %907, %v846
  %v909 = vpop.permute.xlu0 %908
  %912 = vset.pattern.permute.xlu0 0
  %913 = vperm.xlu0 %912, %v847
  %v914 = vpop.permute.xlu0 %913
  %917 = vset.pattern.permute.xlu0 0
  %918 = vperm.xlu0 %917, %v848
  %v919 = vpop.permute.xlu0 %918
  %922 = vset.pattern.permute.xlu0 0
  %923 = vperm.xlu0 %922, %v849
  %v924 = vpop.permute.xlu0 %923
  %927 = vset.pattern.permute.xlu0 0
  %928 = vperm.xlu0 %927, %v850
  %v929 = vpop.permute.xlu0 %928
  %v931 = vmul.f32 %v819, %v854
  %v932 = vmul.f32 %v834, %v859
  %v933 = vmul.f32 %v833, %v864
  %v934 = vmul.f32 %v832, %v869
  %v935 = vmul.f32 %v831, %v874
  %v936 = vmul.f32 %v830, %v879
  %v937 = vmul.f32 %v829, %v884
  %v938 = vmul.f32 %v828, %v889
  %v939 = vmul.f32 %v827, %v894
  %v940 = vmul.f32 %v826, %v899
  %v941 = vmul.f32 %v825, %v904
  %v942 = vmul.f32 %v824, %v909
  %v943 = vmul.f32 %v823, %v914
  %v944 = vmul.f32 %v822, %v919
  %v945 = vmul.f32 %v821, %v924
  %v946 = vmul.f32 %v820, %v929
  %v947 = vadd.f32 %v563, %v931
  %v948 = vadd.f32 %v569, %v932
  %v949 = vadd.f32 %v575, %v933
  %v950 = vadd.f32 %v581, %v934
  %v951 = vadd.f32 %v587, %v935
  %v952 = vadd.f32 %v593, %v936
  %v953 = vadd.f32 %v599, %v937
  %v954 = vadd.f32 %v605, %v938
  %v955 = vadd.f32 %v611, %v939
  %v956 = vadd.f32 %v617, %v940
  %v957 = vadd.f32 %v623, %v941
  %v958 = vadd.f32 %v629, %v942
  %v959 = vadd.f32 %v635, %v943
  %v960 = vadd.f32 %v641, %v944
  %v961 = vadd.f32 %v647, %v945
  %v962 = vadd.f32 %v653, %v946
  %979 = vrot.lane.b32.xlu0 %v561, 96
  %v980 = vpop.permute.xlu0 %979
  %981 = vrot.lane.b32.xlu0 %v567, 96
  %v982 = vpop.permute.xlu0 %981
  %983 = vrot.lane.b32.xlu0 %v573, 96
  %v984 = vpop.permute.xlu0 %983
  %985 = vrot.lane.b32.xlu0 %v579, 96
  %v986 = vpop.permute.xlu0 %985
  %987 = vrot.lane.b32.xlu0 %v585, 96
  %v988 = vpop.permute.xlu0 %987
  %989 = vrot.lane.b32.xlu0 %v591, 96
  %v990 = vpop.permute.xlu0 %989
  %991 = vrot.lane.b32.xlu0 %v597, 96
  %v992 = vpop.permute.xlu0 %991
  %993 = vrot.lane.b32.xlu0 %v603, 96
  %v994 = vpop.permute.xlu0 %993
  %995 = vrot.lane.b32.xlu0 %v609, 96
  %v996 = vpop.permute.xlu0 %995
  %997 = vrot.lane.b32.xlu0 %v615, 96
  %v998 = vpop.permute.xlu0 %997
  %999 = vrot.lane.b32.xlu0 %v621, 96
  %v1000 = vpop.permute.xlu0 %999
  %1001 = vrot.lane.b32.xlu0 %v627, 96
  %v1002 = vpop.permute.xlu0 %1001
  %1003 = vrot.lane.b32.xlu0 %v633, 96
  %v1004 = vpop.permute.xlu0 %1003
  %1005 = vrot.lane.b32.xlu0 %v639, 96
  %v1006 = vpop.permute.xlu0 %1005
  %1007 = vrot.lane.b32.xlu0 %v645, 96
  %v1008 = vpop.permute.xlu0 %1007
  %1009 = vrot.lane.b32.xlu0 %v651, 96
  %v1010 = vpop.permute.xlu0 %1009
  %1027 = vset.pattern.permute.xlu0 1
  %1028 = vperm.xlu0 %1027, %v835
  %v1029 = vpop.permute.xlu0 %1028
  %1031 = vset.pattern.permute.xlu0 1
  %1032 = vperm.xlu0 %1031, %v836
  %v1033 = vpop.permute.xlu0 %1032
  %1035 = vset.pattern.permute.xlu0 1
  %1036 = vperm.xlu0 %1035, %v837
  %v1037 = vpop.permute.xlu0 %1036
  %1039 = vset.pattern.permute.xlu0 1
  %1040 = vperm.xlu0 %1039, %v838
  %v1041 = vpop.permute.xlu0 %1040
  %1043 = vset.pattern.permute.xlu0 1
  %1044 = vperm.xlu0 %1043, %v839
  %v1045 = vpop.permute.xlu0 %1044
  %1047 = vset.pattern.permute.xlu0 1
  %1048 = vperm.xlu0 %1047, %v840
  %v1049 = vpop.permute.xlu0 %1048
  %1051 = vset.pattern.permute.xlu0 1
  %1052 = vperm.xlu0 %1051, %v841
  %v1053 = vpop.permute.xlu0 %1052
  %1055 = vset.pattern.permute.xlu0 1
  %1056 = vperm.xlu0 %1055, %v842
  %v1057 = vpop.permute.xlu0 %1056
  %1059 = vset.pattern.permute.xlu0 1
  %1060 = vperm.xlu0 %1059, %v843
  %v1061 = vpop.permute.xlu0 %1060
  %1063 = vset.pattern.permute.xlu0 1
  %1064 = vperm.xlu0 %1063, %v844
  %v1065 = vpop.permute.xlu0 %1064
  %1067 = vset.pattern.permute.xlu0 1
  %1068 = vperm.xlu0 %1067, %v845
  %v1069 = vpop.permute.xlu0 %1068
  %1071 = vset.pattern.permute.xlu0 1
  %1072 = vperm.xlu0 %1071, %v846
  %v1073 = vpop.permute.xlu0 %1072
  %1075 = vset.pattern.permute.xlu0 1
  %1076 = vperm.xlu0 %1075, %v847
  %v1077 = vpop.permute.xlu0 %1076
  %1079 = vset.pattern.permute.xlu0 1
  %1080 = vperm.xlu0 %1079, %v848
  %v1081 = vpop.permute.xlu0 %1080
  %1083 = vset.pattern.permute.xlu0 1
  %1084 = vperm.xlu0 %1083, %v849
  %v1085 = vpop.permute.xlu0 %1084
  %1087 = vset.pattern.permute.xlu0 1
  %1088 = vperm.xlu0 %1087, %v850
  %v1089 = vpop.permute.xlu0 %1088
  %v1091 = vmul.f32 %v1010, %v1029
  %v1092 = vmul.f32 %v980, %v1033
  %v1093 = vmul.f32 %v982, %v1037
  %v1094 = vmul.f32 %v984, %v1041
  %v1095 = vmul.f32 %v986, %v1045
  %v1096 = vmul.f32 %v988, %v1049
  %v1097 = vmul.f32 %v990, %v1053
  %v1098 = vmul.f32 %v992, %v1057
  %v1099 = vmul.f32 %v994, %v1061
  %v1100 = vmul.f32 %v996, %v1065
  %v1101 = vmul.f32 %v998, %v1069
  %v1102 = vmul.f32 %v1000, %v1073
  %v1103 = vmul.f32 %v1002, %v1077
  %v1104 = vmul.f32 %v1004, %v1081
  %v1105 = vmul.f32 %v1006, %v1085
  %v1106 = vmul.f32 %v1008, %v1089
  %v1107 = vadd.f32 %v947, %v1091
  %v1108 = vadd.f32 %v948, %v1092
  %v1109 = vadd.f32 %v949, %v1093
  %v1110 = vadd.f32 %v950, %v1094
  %v1111 = vadd.f32 %v951, %v1095
  %v1112 = vadd.f32 %v952, %v1096
  %v1113 = vadd.f32 %v953, %v1097
  %v1114 = vadd.f32 %v954, %v1098
  %v1115 = vadd.f32 %v955, %v1099
  %v1116 = vadd.f32 %v956, %v1100
  %v1117 = vadd.f32 %v957, %v1101
  %v1118 = vadd.f32 %v958, %v1102
  %v1119 = vadd.f32 %v959, %v1103
  %v1120 = vadd.f32 %v960, %v1104
  %v1121 = vadd.f32 %v961, %v1105
  %v1122 = vadd.f32 %v962, %v1106
  %1123 = vrot.lane.b32.xlu0 %v561, 64
  %v1124 = vpop.permute.xlu0 %1123
  %1125 = vrot.lane.b32.xlu0 %v567, 64
  %v1126 = vpop.permute.xlu0 %1125
  %1127 = vrot.lane.b32.xlu0 %v573, 64
  %v1128 = vpop.permute.xlu0 %1127
  %1129 = vrot.lane.b32.xlu0 %v579, 64
  %v1130 = vpop.permute.xlu0 %1129
  %1131 = vrot.lane.b32.xlu0 %v585, 64
  %v1132 = vpop.permute.xlu0 %1131
  %1133 = vrot.lane.b32.xlu0 %v591, 64
  %v1134 = vpop.permute.xlu0 %1133
  %1135 = vrot.lane.b32.xlu0 %v597, 64
  %v1136 = vpop.permute.xlu0 %1135
  %1137 = vrot.lane.b32.xlu0 %v603, 64
  %v1138 = vpop.permute.xlu0 %1137
  %1139 = vrot.lane.b32.xlu0 %v609, 64
  %v1140 = vpop.permute.xlu0 %1139
  %1141 = vrot.lane.b32.xlu0 %v615, 64
  %v1142 = vpop.permute.xlu0 %1141
  %1143 = vrot.lane.b32.xlu0 %v621, 64
  %v1144 = vpop.permute.xlu0 %1143
  %1145 = vrot.lane.b32.xlu0 %v627, 64
  %v1146 = vpop.permute.xlu0 %1145
  %1147 = vrot.lane.b32.xlu0 %v633, 64
  %v1148 = vpop.permute.xlu0 %1147
  %1149 = vrot.lane.b32.xlu0 %v639, 64
  %v1150 = vpop.permute.xlu0 %1149
  %1151 = vrot.lane.b32.xlu0 %v645, 64
  %v1152 = vpop.permute.xlu0 %1151
  %1153 = vrot.lane.b32.xlu0 %v651, 64
  %v1154 = vpop.permute.xlu0 %1153
  %v1171 = vrot.slane %v1124, 1
  %v1172 = vrot.slane %v1126, 1
  %v1173 = vrot.slane %v1128, 1
  %v1174 = vrot.slane %v1130, 1
  %v1175 = vrot.slane %v1132, 1
  %v1176 = vrot.slane %v1134, 1
  %v1177 = vrot.slane %v1136, 1
  %v1178 = vrot.slane %v1138, 1
  %v1179 = vrot.slane %v1140, 1
  %v1180 = vrot.slane %v1142, 1
  %v1181 = vrot.slane %v1144, 1
  %v1182 = vrot.slane %v1146, 1
  %v1183 = vrot.slane %v1148, 1
  %v1184 = vrot.slane %v1150, 1
  %v1185 = vrot.slane %v1152, 1
  %v1186 = vrot.slane %v1154, 1
  %vm1187 = vcmp.lt.s32.totalorder %v817, 7
  %v1188 = vsel %vm1187, %v1185, %v1186
  %v1189 = vsel %vm1187, %v1184, %v1185
  %v1190 = vsel %vm1187, %v1183, %v1184
  %v1191 = vsel %vm1187, %v1182, %v1183
  %v1192 = vsel %vm1187, %v1181, %v1182
  %v1193 = vsel %vm1187, %v1180, %v1181
  %v1194 = vsel %vm1187, %v1179, %v1180
  %v1195 = vsel %vm1187, %v1178, %v1179
  %v1196 = vsel %vm1187, %v1177, %v1178
  %v1197 = vsel %vm1187, %v1176, %v1177
  %v1198 = vsel %vm1187, %v1175, %v1176
  %v1199 = vsel %vm1187, %v1174, %v1175
  %v1200 = vsel %vm1187, %v1173, %v1174
  %v1201 = vsel %vm1187, %v1172, %v1173
  %v1202 = vsel %vm1187, %v1171, %v1172
  %v1203 = vsel %vm1187, %v1186, %v1171
  %1204 = vset.pattern.permute.xlu0 2
  %1205 = vperm.xlu0 %1204, %v835
  %v1206 = vpop.permute.xlu0 %1205
  %1208 = vset.pattern.permute.xlu0 2
  %1209 = vperm.xlu0 %1208, %v836
  %v1210 = vpop.permute.xlu0 %1209
  %1212 = vset.pattern.permute.xlu0 2
  %1213 = vperm.xlu0 %1212, %v837
  %v1214 = vpop.permute.xlu0 %1213
  %1216 = vset.pattern.permute.xlu0 2
  %1217 = vperm.xlu0 %1216, %v838
  %v1218 = vpop.permute.xlu0 %1217
  %1220 = vset.pattern.permute.xlu0 2
  %1221 = vperm.xlu0 %1220, %v839
  %v1222 = vpop.permute.xlu0 %1221
  %1224 = vset.pattern.permute.xlu0 2
  %1225 = vperm.xlu0 %1224, %v840
  %v1226 = vpop.permute.xlu0 %1225
  %1228 = vset.pattern.permute.xlu0 2
  %1229 = vperm.xlu0 %1228, %v841
  %v1230 = vpop.permute.xlu0 %1229
  %1232 = vset.pattern.permute.xlu0 2
  %1233 = vperm.xlu0 %1232, %v842
  %v1234 = vpop.permute.xlu0 %1233
  %1236 = vset.pattern.permute.xlu0 2
  %1237 = vperm.xlu0 %1236, %v843
  %v1238 = vpop.permute.xlu0 %1237
  %1240 = vset.pattern.permute.xlu0 2
  %1241 = vperm.xlu0 %1240, %v844
  %v1242 = vpop.permute.xlu0 %1241
  %1244 = vset.pattern.permute.xlu0 2
  %1245 = vperm.xlu0 %1244, %v845
  %v1246 = vpop.permute.xlu0 %1245
  %1248 = vset.pattern.permute.xlu0 2
  %1249 = vperm.xlu0 %1248, %v846
  %v1250 = vpop.permute.xlu0 %1249
  %1252 = vset.pattern.permute.xlu0 2
  %1253 = vperm.xlu0 %1252, %v847
  %v1254 = vpop.permute.xlu0 %1253
  %1256 = vset.pattern.permute.xlu0 2
  %1257 = vperm.xlu0 %1256, %v848
  %v1258 = vpop.permute.xlu0 %1257
  %1260 = vset.pattern.permute.xlu0 2
  %1261 = vperm.xlu0 %1260, %v849
  %v1262 = vpop.permute.xlu0 %1261
  %1264 = vset.pattern.permute.xlu0 2
  %1265 = vperm.xlu0 %1264, %v850
  %v1266 = vpop.permute.xlu0 %1265
  %v1268 = vmul.f32 %v1203, %v1206
  %v1269 = vmul.f32 %v1202, %v1210
  %v1270 = vmul.f32 %v1201, %v1214
  %v1271 = vmul.f32 %v1200, %v1218
  %v1272 = vmul.f32 %v1199, %v1222
  %v1273 = vmul.f32 %v1198, %v1226
  %v1274 = vmul.f32 %v1197, %v1230
  %v1275 = vmul.f32 %v1196, %v1234
  %v1276 = vmul.f32 %v1195, %v1238
  %v1277 = vmul.f32 %v1194, %v1242
  %v1278 = vmul.f32 %v1193, %v1246
  %v1279 = vmul.f32 %v1192, %v1250
  %v1280 = vmul.f32 %v1191, %v1254
  %v1281 = vmul.f32 %v1190, %v1258
  %v1282 = vmul.f32 %v1189, %v1262
  %v1283 = vmul.f32 %v1188, %v1266
  %v1284 = vadd.f32 %v1107, %v1268
  %v1285 = vadd.f32 %v1108, %v1269
  %v1286 = vadd.f32 %v1109, %v1270
  %v1287 = vadd.f32 %v1110, %v1271
  %v1288 = vadd.f32 %v1111, %v1272
  %v1289 = vadd.f32 %v1112, %v1273
  %v1290 = vadd.f32 %v1113, %v1274
  %v1291 = vadd.f32 %v1114, %v1275
  %v1292 = vadd.f32 %v1115, %v1276
  %v1293 = vadd.f32 %v1116, %v1277
  %v1294 = vadd.f32 %v1117, %v1278
  %v1295 = vadd.f32 %v1118, %v1279
  %v1296 = vadd.f32 %v1119, %v1280
  %v1297 = vadd.f32 %v1120, %v1281
  %v1298 = vadd.f32 %v1121, %v1282
  %v1299 = vadd.f32 %v1122, %v1283
  %1300 = vrot.lane.b32.xlu0 %v561, 32
  %v1301 = vpop.permute.xlu0 %1300
  %1302 = vrot.lane.b32.xlu0 %v567, 32
  %v1303 = vpop.permute.xlu0 %1302
  %1304 = vrot.lane.b32.xlu0 %v573, 32
  %v1305 = vpop.permute.xlu0 %1304
  %1306 = vrot.lane.b32.xlu0 %v579, 32
  %v1307 = vpop.permute.xlu0 %1306
  %1308 = vrot.lane.b32.xlu0 %v585, 32
  %v1309 = vpop.permute.xlu0 %1308
  %1310 = vrot.lane.b32.xlu0 %v591, 32
  %v1311 = vpop.permute.xlu0 %1310
  %1312 = vrot.lane.b32.xlu0 %v597, 32
  %v1313 = vpop.permute.xlu0 %1312
  %1314 = vrot.lane.b32.xlu0 %v603, 32
  %v1315 = vpop.permute.xlu0 %1314
  %1316 = vrot.lane.b32.xlu0 %v609, 32
  %v1317 = vpop.permute.xlu0 %1316
  %1318 = vrot.lane.b32.xlu0 %v615, 32
  %v1319 = vpop.permute.xlu0 %1318
  %1320 = vrot.lane.b32.xlu0 %v621, 32
  %v1321 = vpop.permute.xlu0 %1320
  %1322 = vrot.lane.b32.xlu0 %v627, 32
  %v1323 = vpop.permute.xlu0 %1322
  %1324 = vrot.lane.b32.xlu0 %v633, 32
  %v1325 = vpop.permute.xlu0 %1324
  %1326 = vrot.lane.b32.xlu0 %v639, 32
  %v1327 = vpop.permute.xlu0 %1326
  %1328 = vrot.lane.b32.xlu0 %v645, 32
  %v1329 = vpop.permute.xlu0 %1328
  %1330 = vrot.lane.b32.xlu0 %v651, 32
  %v1331 = vpop.permute.xlu0 %1330
  %v1348 = vrot.slane %v1301, 7
  %v1349 = vrot.slane %v1303, 7
  %v1350 = vrot.slane %v1305, 7
  %v1351 = vrot.slane %v1307, 7
  %v1352 = vrot.slane %v1309, 7
  %v1353 = vrot.slane %v1311, 7
  %v1354 = vrot.slane %v1313, 7
  %v1355 = vrot.slane %v1315, 7
  %v1356 = vrot.slane %v1317, 7
  %v1357 = vrot.slane %v1319, 7
  %v1358 = vrot.slane %v1321, 7
  %v1359 = vrot.slane %v1323, 7
  %v1360 = vrot.slane %v1325, 7
  %v1361 = vrot.slane %v1327, 7
  %v1362 = vrot.slane %v1329, 7
  %v1363 = vrot.slane %v1331, 7
  %v1364 = vsel %vm818, %v1362, %v1363
  %v1365 = vsel %vm818, %v1361, %v1362
  %v1366 = vsel %vm818, %v1360, %v1361
  %v1367 = vsel %vm818, %v1359, %v1360
  %v1368 = vsel %vm818, %v1358, %v1359
  %v1369 = vsel %vm818, %v1357, %v1358
  %v1370 = vsel %vm818, %v1356, %v1357
  %v1371 = vsel %vm818, %v1355, %v1356
  %v1372 = vsel %vm818, %v1354, %v1355
  %v1373 = vsel %vm818, %v1353, %v1354
  %v1374 = vsel %vm818, %v1352, %v1353
  %v1375 = vsel %vm818, %v1351, %v1352
  %v1376 = vsel %vm818, %v1350, %v1351
  %v1377 = vsel %vm818, %v1349, %v1350
  %v1378 = vsel %vm818, %v1348, %v1349
  %v1379 = vsel %vm818, %v1363, %v1348
  %1380 = vset.pattern.permute.xlu0 3
  %1381 = vperm.xlu0 %1380, %v835
  %v1382 = vpop.permute.xlu0 %1381
  %1384 = vset.pattern.permute.xlu0 3
  %1385 = vperm.xlu0 %1384, %v836
  %v1386 = vpop.permute.xlu0 %1385
  %1388 = vset.pattern.permute.xlu0 3
  %1389 = vperm.xlu0 %1388, %v837
  %v1390 = vpop.permute.xlu0 %1389
  %1392 = vset.pattern.permute.xlu0 3
  %1393 = vperm.xlu0 %1392, %v838
  %v1394 = vpop.permute.xlu0 %1393
  %1396 = vset.pattern.permute.xlu0 3
  %1397 = vperm.xlu0 %1396, %v839
  %v1398 = vpop.permute.xlu0 %1397
  %1400 = vset.pattern.permute.xlu0 3
  %1401 = vperm.xlu0 %1400, %v840
  %v1402 = vpop.permute.xlu0 %1401
  %1404 = vset.pattern.permute.xlu0 3
  %1405 = vperm.xlu0 %1404, %v841
  %v1406 = vpop.permute.xlu0 %1405
  %1408 = vset.pattern.permute.xlu0 3
  %1409 = vperm.xlu0 %1408, %v842
  %v1410 = vpop.permute.xlu0 %1409
  %1412 = vset.pattern.permute.xlu0 3
  %1413 = vperm.xlu0 %1412, %v843
  %v1414 = vpop.permute.xlu0 %1413
  %1416 = vset.pattern.permute.xlu0 3
  %1417 = vperm.xlu0 %1416, %v844
  %v1418 = vpop.permute.xlu0 %1417
  %1420 = vset.pattern.permute.xlu0 3
  %1421 = vperm.xlu0 %1420, %v845
  %v1422 = vpop.permute.xlu0 %1421
  %1424 = vset.pattern.permute.xlu0 3
  %1425 = vperm.xlu0 %1424, %v846
  %v1426 = vpop.permute.xlu0 %1425
  %1428 = vset.pattern.permute.xlu0 3
  %1429 = vperm.xlu0 %1428, %v847
  %v1430 = vpop.permute.xlu0 %1429
  %1432 = vset.pattern.permute.xlu0 3
  %1433 = vperm.xlu0 %1432, %v848
  %v1434 = vpop.permute.xlu0 %1433
  %1436 = vset.pattern.permute.xlu0 3
  %1437 = vperm.xlu0 %1436, %v849
  %v1438 = vpop.permute.xlu0 %1437
  %1440 = vset.pattern.permute.xlu0 3
  %1441 = vperm.xlu0 %1440, %v850
  %v1442 = vpop.permute.xlu0 %1441
  %v1444 = vmul.f32 %v1379, %v1382
  %v1445 = vmul.f32 %v1378, %v1386
  %v1446 = vmul.f32 %v1377, %v1390
  %v1447 = vmul.f32 %v1376, %v1394
  %v1448 = vmul.f32 %v1375, %v1398
  %v1449 = vmul.f32 %v1374, %v1402
  %v1450 = vmul.f32 %v1373, %v1406
  %v1451 = vmul.f32 %v1372, %v1410
  %v1452 = vmul.f32 %v1371, %v1414
  %v1453 = vmul.f32 %v1370, %v1418
  %v1454 = vmul.f32 %v1369, %v1422
  %v1455 = vmul.f32 %v1368, %v1426
  %v1456 = vmul.f32 %v1367, %v1430
  %v1457 = vmul.f32 %v1366, %v1434
  %v1458 = vmul.f32 %v1365, %v1438
  %v1459 = vmul.f32 %v1364, %v1442
  %v1460 = vadd.f32 %v1284, %v1444
  %v1461 = vadd.f32 %v1285, %v1445
  %v1462 = vadd.f32 %v1286, %v1446
  %v1463 = vadd.f32 %v1287, %v1447
  %v1464 = vadd.f32 %v1288, %v1448
  %v1465 = vadd.f32 %v1289, %v1449
  %v1466 = vadd.f32 %v1290, %v1450
  %v1467 = vadd.f32 %v1291, %v1451
  %v1468 = vadd.f32 %v1292, %v1452
  %v1469 = vadd.f32 %v1293, %v1453
  %v1470 = vadd.f32 %v1294, %v1454
  %v1471 = vadd.f32 %v1295, %v1455
  %v1472 = vadd.f32 %v1296, %v1456
  %v1473 = vadd.f32 %v1297, %v1457
  %v1474 = vadd.f32 %v1298, %v1458
  %v1475 = vadd.f32 %v1299, %v1459
  %1492 = vrot.lane.b32.xlu0 %v563, 96
  %v1493 = vpop.permute.xlu0 %1492
  %1494 = vrot.lane.b32.xlu0 %v569, 96
  %v1495 = vpop.permute.xlu0 %1494
  %1496 = vrot.lane.b32.xlu0 %v575, 96
  %v1497 = vpop.permute.xlu0 %1496
  %1498 = vrot.lane.b32.xlu0 %v581, 96
  %v1499 = vpop.permute.xlu0 %1498
  %1500 = vrot.lane.b32.xlu0 %v587, 96
  %v1501 = vpop.permute.xlu0 %1500
  %1502 = vrot.lane.b32.xlu0 %v593, 96
  %v1503 = vpop.permute.xlu0 %1502
  %1504 = vrot.lane.b32.xlu0 %v599, 96
  %v1505 = vpop.permute.xlu0 %1504
  %1506 = vrot.lane.b32.xlu0 %v605, 96
  %v1507 = vpop.permute.xlu0 %1506
  %1508 = vrot.lane.b32.xlu0 %v611, 96
  %v1509 = vpop.permute.xlu0 %1508
  %1510 = vrot.lane.b32.xlu0 %v617, 96
  %v1511 = vpop.permute.xlu0 %1510
  %1512 = vrot.lane.b32.xlu0 %v623, 96
  %v1513 = vpop.permute.xlu0 %1512
  %1514 = vrot.lane.b32.xlu0 %v629, 96
  %v1515 = vpop.permute.xlu0 %1514
  %1516 = vrot.lane.b32.xlu0 %v635, 96
  %v1517 = vpop.permute.xlu0 %1516
  %1518 = vrot.lane.b32.xlu0 %v641, 96
  %v1519 = vpop.permute.xlu0 %1518
  %1520 = vrot.lane.b32.xlu0 %v647, 96
  %v1521 = vpop.permute.xlu0 %1520
  %1522 = vrot.lane.b32.xlu0 %v653, 96
  %v1523 = vpop.permute.xlu0 %1522
  %v1540 = vrot.slane %v1493, 1
  %v1541 = vrot.slane %v1495, 1
  %v1542 = vrot.slane %v1497, 1
  %v1543 = vrot.slane %v1499, 1
  %v1544 = vrot.slane %v1501, 1
  %v1545 = vrot.slane %v1503, 1
  %v1546 = vrot.slane %v1505, 1
  %v1547 = vrot.slane %v1507, 1
  %v1548 = vrot.slane %v1509, 1
  %v1549 = vrot.slane %v1511, 1
  %v1550 = vrot.slane %v1513, 1
  %v1551 = vrot.slane %v1515, 1
  %v1552 = vrot.slane %v1517, 1
  %v1553 = vrot.slane %v1519, 1
  %v1554 = vrot.slane %v1521, 1
  %v1555 = vrot.slane %v1523, 1
  %v1556 = vsel %vm1187, %v1554, %v1555
  %v1557 = vsel %vm1187, %v1553, %v1554
  %v1558 = vsel %vm1187, %v1552, %v1553
  %v1559 = vsel %vm1187, %v1551, %v1552
  %v1560 = vsel %vm1187, %v1550, %v1551
  %v1561 = vsel %vm1187, %v1549, %v1550
  %v1562 = vsel %vm1187, %v1548, %v1549
  %v1563 = vsel %vm1187, %v1547, %v1548
  %v1564 = vsel %vm1187, %v1546, %v1547
  %v1565 = vsel %vm1187, %v1545, %v1546
  %v1566 = vsel %vm1187, %v1544, %v1545
  %v1567 = vsel %vm1187, %v1543, %v1544
  %v1568 = vsel %vm1187, %v1542, %v1543
  %v1569 = vsel %vm1187, %v1541, %v1542
  %v1570 = vsel %vm1187, %v1540, %v1541
  %v1571 = vsel %vm1187, %v1555, %v1540
  %1572 = vset.pattern.permute.xlu0 5
  %1573 = vperm.xlu0 %1572, %v835
  %v1574 = vpop.permute.xlu0 %1573
  %1576 = vset.pattern.permute.xlu0 5
  %1577 = vperm.xlu0 %1576, %v836
  %v1578 = vpop.permute.xlu0 %1577
  %1580 = vset.pattern.permute.xlu0 5
  %1581 = vperm.xlu0 %1580, %v837
  %v1582 = vpop.permute.xlu0 %1581
  %1584 = vset.pattern.permute.xlu0 5
  %1585 = vperm.xlu0 %1584, %v838
  %v1586 = vpop.permute.xlu0 %1585
  %1588 = vset.pattern.permute.xlu0 5
  %1589 = vperm.xlu0 %1588, %v839
  %v1590 = vpop.permute.xlu0 %1589
  %1592 = vset.pattern.permute.xlu0 5
  %1593 = vperm.xlu0 %1592, %v840
  %v1594 = vpop.permute.xlu0 %1593
  %1596 = vset.pattern.permute.xlu0 5
  %1597 = vperm.xlu0 %1596, %v841
  %v1598 = vpop.permute.xlu0 %1597
  %1600 = vset.pattern.permute.xlu0 5
  %1601 = vperm.xlu0 %1600, %v842
  %v1602 = vpop.permute.xlu0 %1601
  %1604 = vset.pattern.permute.xlu0 5
  %1605 = vperm.xlu0 %1604, %v843
  %v1606 = vpop.permute.xlu0 %1605
  %1608 = vset.pattern.permute.xlu0 5
  %1609 = vperm.xlu0 %1608, %v844
  %v1610 = vpop.permute.xlu0 %1609
  %1612 = vset.pattern.permute.xlu0 5
  %1613 = vperm.xlu0 %1612, %v845
  %v1614 = vpop.permute.xlu0 %1613
  %1616 = vset.pattern.permute.xlu0 5
  %1617 = vperm.xlu0 %1616, %v846
  %v1618 = vpop.permute.xlu0 %1617
  %1620 = vset.pattern.permute.xlu0 5
  %1621 = vperm.xlu0 %1620, %v847
  %v1622 = vpop.permute.xlu0 %1621
  %1624 = vset.pattern.permute.xlu0 5
  %1625 = vperm.xlu0 %1624, %v848
  %v1626 = vpop.permute.xlu0 %1625
  %1628 = vset.pattern.permute.xlu0 5
  %1629 = vperm.xlu0 %1628, %v849
  %v1630 = vpop.permute.xlu0 %1629
  %1632 = vset.pattern.permute.xlu0 5
  %1633 = vperm.xlu0 %1632, %v850
  %v1634 = vpop.permute.xlu0 %1633
  %v1636 = vmul.f32 %v1570, %v1574
  %v1637 = vmul.f32 %v1569, %v1578
  %v1638 = vmul.f32 %v1568, %v1582
  %v1639 = vmul.f32 %v1567, %v1586
  %v1640 = vmul.f32 %v1566, %v1590
  %v1641 = vmul.f32 %v1565, %v1594
  %v1642 = vmul.f32 %v1564, %v1598
  %v1643 = vmul.f32 %v1563, %v1602
  %v1644 = vmul.f32 %v1562, %v1606
  %v1645 = vmul.f32 %v1561, %v1610
  %v1646 = vmul.f32 %v1560, %v1614
  %v1647 = vmul.f32 %v1559, %v1618
  %v1648 = vmul.f32 %v1558, %v1622
  %v1649 = vmul.f32 %v1557, %v1626
  %v1650 = vmul.f32 %v1556, %v1630
  %v1651 = vmul.f32 %v1571, %v1634
  %v1652 = vadd.f32 %v1460, %v1636
  %v1653 = vadd.f32 %v1461, %v1637
  %v1654 = vadd.f32 %v1462, %v1638
  %v1655 = vadd.f32 %v1463, %v1639
  %v1656 = vadd.f32 %v1464, %v1640
  %v1657 = vadd.f32 %v1465, %v1641
  %v1658 = vadd.f32 %v1466, %v1642
  %v1659 = vadd.f32 %v1467, %v1643
  %v1660 = vadd.f32 %v1468, %v1644
  %v1661 = vadd.f32 %v1469, %v1645
  %v1662 = vadd.f32 %v1470, %v1646
  %v1663 = vadd.f32 %v1471, %v1647
  %v1664 = vadd.f32 %v1472, %v1648
  %v1665 = vadd.f32 %v1473, %v1649
  %v1666 = vadd.f32 %v1474, %v1650
  %v1667 = vadd.f32 %v1475, %v1651
  %1668 = vrot.lane.b32.xlu0 %v563, 64
  %v1669 = vpop.permute.xlu0 %1668
  %1670 = vrot.lane.b32.xlu0 %v569, 64
  %v1671 = vpop.permute.xlu0 %1670
  %1672 = vrot.lane.b32.xlu0 %v575, 64
  %v1673 = vpop.permute.xlu0 %1672
  %1674 = vrot.lane.b32.xlu0 %v581, 64
  %v1675 = vpop.permute.xlu0 %1674
  %1676 = vrot.lane.b32.xlu0 %v587, 64
  %v1677 = vpop.permute.xlu0 %1676
  %1678 = vrot.lane.b32.xlu0 %v593, 64
  %v1679 = vpop.permute.xlu0 %1678
  %1680 = vrot.lane.b32.xlu0 %v599, 64
  %v1681 = vpop.permute.xlu0 %1680
  %1682 = vrot.lane.b32.xlu0 %v605, 64
  %v1683 = vpop.permute.xlu0 %1682
  %1684 = vrot.lane.b32.xlu0 %v611, 64
  %v1685 = vpop.permute.xlu0 %1684
  %1686 = vrot.lane.b32.xlu0 %v617, 64
  %v1687 = vpop.permute.xlu0 %1686
  %1688 = vrot.lane.b32.xlu0 %v623, 64
  %v1689 = vpop.permute.xlu0 %1688
  %1690 = vrot.lane.b32.xlu0 %v629, 64
  %v1691 = vpop.permute.xlu0 %1690
  %1692 = vrot.lane.b32.xlu0 %v635, 64
  %v1693 = vpop.permute.xlu0 %1692
  %1694 = vrot.lane.b32.xlu0 %v641, 64
  %v1695 = vpop.permute.xlu0 %1694
  %1696 = vrot.lane.b32.xlu0 %v647, 64
  %v1697 = vpop.permute.xlu0 %1696
  %1698 = vrot.lane.b32.xlu0 %v653, 64
  %v1699 = vpop.permute.xlu0 %1698
  %v1716 = vrot.slane %v1669, 7
  %v1717 = vrot.slane %v1671, 7
  %v1718 = vrot.slane %v1673, 7
  %v1719 = vrot.slane %v1675, 7
  %v1720 = vrot.slane %v1677, 7
  %v1721 = vrot.slane %v1679, 7
  %v1722 = vrot.slane %v1681, 7
  %v1723 = vrot.slane %v1683, 7
  %v1724 = vrot.slane %v1685, 7
  %v1725 = vrot.slane %v1687, 7
  %v1726 = vrot.slane %v1689, 7
  %v1727 = vrot.slane %v1691, 7
  %v1728 = vrot.slane %v1693, 7
  %v1729 = vrot.slane %v1695, 7
  %v1730 = vrot.slane %v1697, 7
  %v1731 = vrot.slane %v1699, 7
  %v1732 = vsel %vm818, %v1730, %v1731
  %v1733 = vsel %vm818, %v1729, %v1730
  %v1734 = vsel %vm818, %v1728, %v1729
  %v1735 = vsel %vm818, %v1727, %v1728
  %v1736 = vsel %vm818, %v1726, %v1727
  %v1737 = vsel %vm818, %v1725, %v1726
  %v1738 = vsel %vm818, %v1724, %v1725
  %v1739 = vsel %vm818, %v1723, %v1724
  %v1740 = vsel %vm818, %v1722, %v1723
  %v1741 = vsel %vm818, %v1721, %v1722
  %v1742 = vsel %vm818, %v1720, %v1721
  %v1743 = vsel %vm818, %v1719, %v1720
  %v1744 = vsel %vm818, %v1718, %v1719
  %v1745 = vsel %vm818, %v1717, %v1718
  %v1746 = vsel %vm818, %v1716, %v1717
  %v1747 = vsel %vm818, %v1731, %v1716
  %1748 = vset.pattern.permute.xlu0 6
  %1749 = vperm.xlu0 %1748, %v835
  %v1750 = vpop.permute.xlu0 %1749
  %1752 = vset.pattern.permute.xlu0 6
  %1753 = vperm.xlu0 %1752, %v836
  %v1754 = vpop.permute.xlu0 %1753
  %1756 = vset.pattern.permute.xlu0 6
  %1757 = vperm.xlu0 %1756, %v837
  %v1758 = vpop.permute.xlu0 %1757
  %1760 = vset.pattern.permute.xlu0 6
  %1761 = vperm.xlu0 %1760, %v838
  %v1762 = vpop.permute.xlu0 %1761
  %1764 = vset.pattern.permute.xlu0 6
  %1765 = vperm.xlu0 %1764, %v839
  %v1766 = vpop.permute.xlu0 %1765
  %1768 = vset.pattern.permute.xlu0 6
  %1769 = vperm.xlu0 %1768, %v840
  %v1770 = vpop.permute.xlu0 %1769
  %1772 = vset.pattern.permute.xlu0 6
  %1773 = vperm.xlu0 %1772, %v841
  %v1774 = vpop.permute.xlu0 %1773
  %1776 = vset.pattern.permute.xlu0 6
  %1777 = vperm.xlu0 %1776, %v842
  %v1778 = vpop.permute.xlu0 %1777
  %1780 = vset.pattern.permute.xlu0 6
  %1781 = vperm.xlu0 %1780, %v843
  %v1782 = vpop.permute.xlu0 %1781
  %1784 = vset.pattern.permute.xlu0 6
  %1785 = vperm.xlu0 %1784, %v844
  %v1786 = vpop.permute.xlu0 %1785
  %1788 = vset.pattern.permute.xlu0 6
  %1789 = vperm.xlu0 %1788, %v845
  %v1790 = vpop.permute.xlu0 %1789
  %1792 = vset.pattern.permute.xlu0 6
  %1793 = vperm.xlu0 %1792, %v846
  %v1794 = vpop.permute.xlu0 %1793
  %1796 = vset.pattern.permute.xlu0 6
  %1797 = vperm.xlu0 %1796, %v847
  %v1798 = vpop.permute.xlu0 %1797
  %1800 = vset.pattern.permute.xlu0 6
  %1801 = vperm.xlu0 %1800, %v848
  %v1802 = vpop.permute.xlu0 %1801
  %1804 = vset.pattern.permute.xlu0 6
  %1805 = vperm.xlu0 %1804, %v849
  %v1806 = vpop.permute.xlu0 %1805
  %1808 = vset.pattern.permute.xlu0 6
  %1809 = vperm.xlu0 %1808, %v850
  %v1810 = vpop.permute.xlu0 %1809
  %v1812 = vmul.f32 %v1746, %v1750
  %v1813 = vmul.f32 %v1745, %v1754
  %v1814 = vmul.f32 %v1744, %v1758
  %v1815 = vmul.f32 %v1743, %v1762
  %v1816 = vmul.f32 %v1742, %v1766
  %v1817 = vmul.f32 %v1741, %v1770
  %v1818 = vmul.f32 %v1740, %v1774
  %v1819 = vmul.f32 %v1739, %v1778
  %v1820 = vmul.f32 %v1738, %v1782
  %v1821 = vmul.f32 %v1737, %v1786
  %v1822 = vmul.f32 %v1736, %v1790
  %v1823 = vmul.f32 %v1735, %v1794
  %v1824 = vmul.f32 %v1734, %v1798
  %v1825 = vmul.f32 %v1733, %v1802
  %v1826 = vmul.f32 %v1732, %v1806
  %v1827 = vmul.f32 %v1747, %v1810
  %v1828 = vadd.f32 %v1652, %v1812
  %v1829 = vadd.f32 %v1653, %v1813
  %v1830 = vadd.f32 %v1654, %v1814
  %v1831 = vadd.f32 %v1655, %v1815
  %v1832 = vadd.f32 %v1656, %v1816
  %v1833 = vadd.f32 %v1657, %v1817
  %v1834 = vadd.f32 %v1658, %v1818
  %v1835 = vadd.f32 %v1659, %v1819
  %v1836 = vadd.f32 %v1660, %v1820
  %v1837 = vadd.f32 %v1661, %v1821
  %v1838 = vadd.f32 %v1662, %v1822
  %v1839 = vadd.f32 %v1663, %v1823
  %v1840 = vadd.f32 %v1664, %v1824
  %v1841 = vadd.f32 %v1665, %v1825
  %v1842 = vadd.f32 %v1666, %v1826
  %v1843 = vadd.f32 %v1667, %v1827
  %1844 = vrot.lane.b32.xlu0 %v563, 32
  %v1845 = vpop.permute.xlu0 %1844
  %1846 = vrot.lane.b32.xlu0 %v569, 32
  %v1847 = vpop.permute.xlu0 %1846
  %1848 = vrot.lane.b32.xlu0 %v575, 32
  %v1849 = vpop.permute.xlu0 %1848
  %1850 = vrot.lane.b32.xlu0 %v581, 32
  %v1851 = vpop.permute.xlu0 %1850
  %1852 = vrot.lane.b32.xlu0 %v587, 32
  %v1853 = vpop.permute.xlu0 %1852
  %1854 = vrot.lane.b32.xlu0 %v593, 32
  %v1855 = vpop.permute.xlu0 %1854
  %1856 = vrot.lane.b32.xlu0 %v599, 32
  %v1857 = vpop.permute.xlu0 %1856
  %1858 = vrot.lane.b32.xlu0 %v605, 32
  %v1859 = vpop.permute.xlu0 %1858
  %1860 = vrot.lane.b32.xlu0 %v611, 32
  %v1861 = vpop.permute.xlu0 %1860
  %1862 = vrot.lane.b32.xlu0 %v617, 32
  %v1863 = vpop.permute.xlu0 %1862
  %1864 = vrot.lane.b32.xlu0 %v623, 32
  %v1865 = vpop.permute.xlu0 %1864
  %1866 = vrot.lane.b32.xlu0 %v629, 32
  %v1867 = vpop.permute.xlu0 %1866
  %1868 = vrot.lane.b32.xlu0 %v635, 32
  %v1869 = vpop.permute.xlu0 %1868
  %1870 = vrot.lane.b32.xlu0 %v641, 32
  %v1871 = vpop.permute.xlu0 %1870
  %1872 = vrot.lane.b32.xlu0 %v647, 32
  %v1873 = vpop.permute.xlu0 %1872
  %1874 = vrot.lane.b32.xlu0 %v653, 32
  %v1875 = vpop.permute.xlu0 %1874
  %1892 = vset.pattern.permute.xlu0 7
  %1893 = vperm.xlu0 %1892, %v835
  %v1894 = vpop.permute.xlu0 %1893
  %1896 = vset.pattern.permute.xlu0 7
  %1897 = vperm.xlu0 %1896, %v836
  %v1898 = vpop.permute.xlu0 %1897
  %1900 = vset.pattern.permute.xlu0 7
  %1901 = vperm.xlu0 %1900, %v837
  %v1902 = vpop.permute.xlu0 %1901
  %1904 = vset.pattern.permute.xlu0 7
  %1905 = vperm.xlu0 %1904, %v838
  %v1906 = vpop.permute.xlu0 %1905
  %1908 = vset.pattern.permute.xlu0 7
  %1909 = vperm.xlu0 %1908, %v839
  %v1910 = vpop.permute.xlu0 %1909
  %1912 = vset.pattern.permute.xlu0 7
  %1913 = vperm.xlu0 %1912, %v840
  %v1914 = vpop.permute.xlu0 %1913
  %1916 = vset.pattern.permute.xlu0 7
  %1917 = vperm.xlu0 %1916, %v841
  %v1918 = vpop.permute.xlu0 %1917
  %1920 = vset.pattern.permute.xlu0 7
  %1921 = vperm.xlu0 %1920, %v842
  %v1922 = vpop.permute.xlu0 %1921
  %1924 = vset.pattern.permute.xlu0 7
  %1925 = vperm.xlu0 %1924, %v843
  %v1926 = vpop.permute.xlu0 %1925
  %1928 = vset.pattern.permute.xlu0 7
  %1929 = vperm.xlu0 %1928, %v844
  %v1930 = vpop.permute.xlu0 %1929
  %1932 = vset.pattern.permute.xlu0 7
  %1933 = vperm.xlu0 %1932, %v845
  %v1934 = vpop.permute.xlu0 %1933
  %1936 = vset.pattern.permute.xlu0 7
  %1937 = vperm.xlu0 %1936, %v846
  %v1938 = vpop.permute.xlu0 %1937
  %1940 = vset.pattern.permute.xlu0 7
  %1941 = vperm.xlu0 %1940, %v847
  %v1942 = vpop.permute.xlu0 %1941
  %1944 = vset.pattern.permute.xlu0 7
  %1945 = vperm.xlu0 %1944, %v848
  %v1946 = vpop.permute.xlu0 %1945
  %1948 = vset.pattern.permute.xlu0 7
  %1949 = vperm.xlu0 %1948, %v849
  %v1950 = vpop.permute.xlu0 %1949
  %1952 = vset.pattern.permute.xlu0 7
  %1953 = vperm.xlu0 %1952, %v850
  %v1954 = vpop.permute.xlu0 %1953
  %v1956 = vmul.f32 %v1847, %v1894
  %v1957 = vmul.f32 %v1849, %v1898
  %v1958 = vmul.f32 %v1851, %v1902
  %v1959 = vmul.f32 %v1853, %v1906
  %v1960 = vmul.f32 %v1855, %v1910
  %v1961 = vmul.f32 %v1857, %v1914
  %v1962 = vmul.f32 %v1859, %v1918
  %v1963 = vmul.f32 %v1861, %v1922
  %v1964 = vmul.f32 %v1863, %v1926
  %v1965 = vmul.f32 %v1865, %v1930
  %v1966 = vmul.f32 %v1867, %v1934
  %v1967 = vmul.f32 %v1869, %v1938
  %v1968 = vmul.f32 %v1871, %v1942
  %v1969 = vmul.f32 %v1873, %v1946
  %v1970 = vmul.f32 %v1875, %v1950
  %v1971 = vmul.f32 %v1845, %v1954
  %v1972 = vadd.f32 %v1828, %v1956
  %v1973 = vadd.f32 %v1829, %v1957
  %v1974 = vadd.f32 %v1830, %v1958
  %v1975 = vadd.f32 %v1831, %v1959
  %v1976 = vadd.f32 %v1832, %v1960
  %v1977 = vadd.f32 %v1833, %v1961
  %v1978 = vadd.f32 %v1834, %v1962
  %v1979 = vadd.f32 %v1835, %v1963
  %v1980 = vadd.f32 %v1836, %v1964
  %v1981 = vadd.f32 %v1837, %v1965
  %v1982 = vadd.f32 %v1838, %v1966
  %v1983 = vadd.f32 %v1839, %v1967
  %v1984 = vadd.f32 %v1840, %v1968
  %v1985 = vadd.f32 %v1841, %v1969
  %v1986 = vadd.f32 %v1842, %v1970
  %v1987 = vadd.f32 %v1843, %v1971
  %v1988 = vrot.slane %v722, 1
  %v1989 = vrot.slane %v727, 1
  %v1990 = vrot.slane %v732, 1
  %v1991 = vrot.slane %v737, 1
  %v1992 = vrot.slane %v742, 1
  %v1993 = vrot.slane %v747, 1
  %v1994 = vrot.slane %v752, 1
  %v1995 = vrot.slane %v757, 1
  %v1996 = vrot.slane %v762, 1
  %v1997 = vrot.slane %v767, 1
  %v1998 = vrot.slane %v772, 1
  %v1999 = vrot.slane %v777, 1
  %v2000 = vrot.slane %v782, 1
  %v2001 = vrot.slane %v787, 1
  %v2002 = vrot.slane %v792, 1
  %v2003 = vrot.slane %v797, 1
  %v2004 = vsel %vm1187, %v2002, %v2003
  %v2005 = vsel %vm1187, %v2001, %v2002
  %v2006 = vsel %vm1187, %v2000, %v2001
  %v2007 = vsel %vm1187, %v1999, %v2000
  %v2008 = vsel %vm1187, %v1998, %v1999
  %v2009 = vsel %vm1187, %v1997, %v1998
  %v2010 = vsel %vm1187, %v1996, %v1997
  %v2011 = vsel %vm1187, %v1995, %v1996
  %v2012 = vsel %vm1187, %v1994, %v1995
  %v2013 = vsel %vm1187, %v1993, %v1994
  %v2014 = vsel %vm1187, %v1992, %v1993
  %v2015 = vsel %vm1187, %v1991, %v1992
  %v2016 = vsel %vm1187, %v1990, %v1991
  %v2017 = vsel %vm1187, %v1989, %v1990
  %v2018 = vsel %vm1187, %v1988, %v1989
  %v2019 = vsel %vm1187, %v2003, %v1988
  %2020 = vset.pattern.permute.xlu0 8
  %2021 = vperm.xlu0 %2020, %v835
  %v2022 = vpop.permute.xlu0 %2021
  %2024 = vset.pattern.permute.xlu0 8
  %2025 = vperm.xlu0 %2024, %v836
  %v2026 = vpop.permute.xlu0 %2025
  %2028 = vset.pattern.permute.xlu0 8
  %2029 = vperm.xlu0 %2028, %v837
  %v2030 = vpop.permute.xlu0 %2029
  %2032 = vset.pattern.permute.xlu0 8
  %2033 = vperm.xlu0 %2032, %v838
  %v2034 = vpop.permute.xlu0 %2033
  %2036 = vset.pattern.permute.xlu0 8
  %2037 = vperm.xlu0 %2036, %v839
  %v2038 = vpop.permute.xlu0 %2037
  %2040 = vset.pattern.permute.xlu0 8
  %2041 = vperm.xlu0 %2040, %v840
  %v2042 = vpop.permute.xlu0 %2041
  %2044 = vset.pattern.permute.xlu0 8
  %2045 = vperm.xlu0 %2044, %v841
  %v2046 = vpop.permute.xlu0 %2045
  %2048 = vset.pattern.permute.xlu0 8
  %2049 = vperm.xlu0 %2048, %v842
  %v2050 = vpop.permute.xlu0 %2049
  %2052 = vset.pattern.permute.xlu0 8
  %2053 = vperm.xlu0 %2052, %v843
  %v2054 = vpop.permute.xlu0 %2053
  %2056 = vset.pattern.permute.xlu0 8
  %2057 = vperm.xlu0 %2056, %v844
  %v2058 = vpop.permute.xlu0 %2057
  %2060 = vset.pattern.permute.xlu0 8
  %2061 = vperm.xlu0 %2060, %v845
  %v2062 = vpop.permute.xlu0 %2061
  %2064 = vset.pattern.permute.xlu0 8
  %2065 = vperm.xlu0 %2064, %v846
  %v2066 = vpop.permute.xlu0 %2065
  %2068 = vset.pattern.permute.xlu0 8
  %2069 = vperm.xlu0 %2068, %v847
  %v2070 = vpop.permute.xlu0 %2069
  %2072 = vset.pattern.permute.xlu0 8
  %2073 = vperm.xlu0 %2072, %v848
  %v2074 = vpop.permute.xlu0 %2073
  %2076 = vset.pattern.permute.xlu0 8
  %2077 = vperm.xlu0 %2076, %v849
  %v2078 = vpop.permute.xlu0 %2077
  %2080 = vset.pattern.permute.xlu0 8
  %2081 = vperm.xlu0 %2080, %v850
  %v2082 = vpop.permute.xlu0 %2081
  %v2084 = vmul.f32 %v2017, %v2022
  %v2085 = vmul.f32 %v2016, %v2026
  %v2086 = vmul.f32 %v2015, %v2030
  %v2087 = vmul.f32 %v2014, %v2034
  %v2088 = vmul.f32 %v2013, %v2038
  %v2089 = vmul.f32 %v2012, %v2042
  %v2090 = vmul.f32 %v2011, %v2046
  %v2091 = vmul.f32 %v2010, %v2050
  %v2092 = vmul.f32 %v2009, %v2054
  %v2093 = vmul.f32 %v2008, %v2058
  %v2094 = vmul.f32 %v2007, %v2062
  %v2095 = vmul.f32 %v2006, %v2066
  %v2096 = vmul.f32 %v2005, %v2070
  %v2097 = vmul.f32 %v2004, %v2074
  %v2098 = vmul.f32 %v2019, %v2078
  %v2099 = vmul.f32 %v2018, %v2082
  %v2100 = vadd.f32 %v1972, %v2084
  %v2101 = vadd.f32 %v1973, %v2085
  %v2102 = vadd.f32 %v1974, %v2086
  %v2103 = vadd.f32 %v1975, %v2087
  %v2104 = vadd.f32 %v1976, %v2088
  %v2105 = vadd.f32 %v1977, %v2089
  %v2106 = vadd.f32 %v1978, %v2090
  %v2107 = vadd.f32 %v1979, %v2091
  %v2108 = vadd.f32 %v1980, %v2092
  %v2109 = vadd.f32 %v1981, %v2093
  %v2110 = vadd.f32 %v1982, %v2094
  %v2111 = vadd.f32 %v1983, %v2095
  %v2112 = vadd.f32 %v1984, %v2096
  %v2113 = vadd.f32 %v1985, %v2097
  %v2114 = vadd.f32 %v1986, %v2098
  %v2115 = vadd.f32 %v1987, %v2099
  %v2116 = vld [vmem:[%s11] sm:$0x1]
  %v2118 = vlaneseq
  %v2119 = vshrl.u32 %v2118, 7
  %v2120 = vsub.s32 0, %v2119
  %v2121 = vrot.slane %v2116, %v2120
  %v2123 = vadd.f32 %v2100, %v2121
  %v2124 = vadd.f32 %v2101, %v2121
  %v2125 = vadd.f32 %v2102, %v2121
  %v2126 = vadd.f32 %v2103, %v2121
  %v2127 = vadd.f32 %v2104, %v2121
  %v2128 = vadd.f32 %v2105, %v2121
  %v2129 = vadd.f32 %v2106, %v2121
  %v2130 = vadd.f32 %v2107, %v2121
  %v2131 = vadd.f32 %v2108, %v2121
  %v2132 = vadd.f32 %v2109, %v2121
  %v2133 = vadd.f32 %v2110, %v2121
  %v2134 = vadd.f32 %v2111, %v2121
  %v2135 = vadd.f32 %v2112, %v2121
  %v2136 = vadd.f32 %v2113, %v2121
  %v2137 = vadd.f32 %v2114, %v2121
  %v2138 = vadd.f32 %v2115, %v2121
  %v2139 = vmax.f32 %v2123, 0.0
  %v2140 = vmax.f32 %v2124, 0.0
  %v2141 = vmax.f32 %v2125, 0.0
  %v2142 = vmax.f32 %v2126, 0.0
  %v2143 = vmax.f32 %v2127, 0.0
  %v2144 = vmax.f32 %v2128, 0.0
  %v2145 = vmax.f32 %v2129, 0.0
  %v2146 = vmax.f32 %v2130, 0.0
  %v2147 = vmax.f32 %v2131, 0.0
  %v2148 = vmax.f32 %v2132, 0.0
  %v2149 = vmax.f32 %v2133, 0.0
  %v2150 = vmax.f32 %v2134, 0.0
  %v2151 = vmax.f32 %v2135, 0.0
  %v2152 = vmax.f32 %v2136, 0.0
  %v2153 = vmax.f32 %v2137, 0.0
  %v2154 = vmax.f32 %v2138, 0.0
  %v2155 = vld [vmem:[%s13] sm:$0xff]
  %v2156 = vld [vmem:[%s13 + $0x8] sm:$0xff]
  %v2157 = vld [vmem:[%s13 + $0x10] sm:$0xff]
  %v2158 = vld [vmem:[%s13 + $0x18] sm:$0xff]
  %v2159 = vld [vmem:[%s13 + $0x20] sm:$0xff]
  %v2160 = vld [vmem:[%s13 + $0x28] sm:$0xff]
  %v2161 = vld [vmem:[%s13 + $0x30] sm:$0xff]
  %v2162 = vld [vmem:[%s13 + $0x38] sm:$0xff]
  %v2163 = vld [vmem:[%s13 + $0x40] sm:$0xff]
  %v2164 = vld [vmem:[%s13 + $0x48] sm:$0xff]
  %v2165 = vld [vmem:[%s13 + $0x50] sm:$0xff]
  %v2166 = vld [vmem:[%s13 + $0x58] sm:$0xff]
  %vm2167 = vcmask 261120
  %v2169 = vsel %vm2167, %v2139, 0
  %v2172 = vsel %vm2167, %v2140, 0
  %v2175 = vsel %vm2167, %v2141, 0
  %v2178 = vsel %vm2167, %v2142, 0
  %v2181 = vsel %vm2167, %v2143, 0
  %v2184 = vsel %vm2167, %v2144, 0
  %v2187 = vsel %vm2167, %v2145, 0
  %v2190 = vsel %vm2167, %v2146, 0
  %v2193 = vsel %vm2167, %v2147, 0
  %v2196 = vsel %vm2167, %v2148, 0
  %v2199 = vsel %vm2167, %v2149, 0
  %v2202 = vsel %vm2167, %v2150, 0
  %v2205 = vsel %vm2167, %v2151, 0
  %v2208 = vsel %vm2167, %v2152, 0
  %v2211 = vsel %vm2167, %v2153, 0
  %v2214 = vsel %vm2167, %v2154, 0
  %2216 = vmatprep.subr.mxu0 %v2156
  %2217 = vmatpush1.msra.mxu0 %v2155
  %2218 = vmatprep.subr.mxu0 %v2159
  %2219 = vmatpush1.msra.mxu0 %v2158
  %2220 = vmatprep.subr.mxu0 %v2162
  %2221 = vmatpush1.msra.mxu0 %v2161
  %2222 = vmatprep.subr.mxu0 %v2165
  %2223 = vmatpush1.msra.mxu0 %v2164
  %2224 = vmatprep.subr.mxu0 0.0
  %2225 = vmatpush1.msra.mxu0 0.0
  %2226 = vmatprep.subr.mxu0 0.0
  %2227 = vmatpush1.msra.mxu0 0.0
  %2228 = vmatprep.subr.mxu0 0.0
  %2229 = vmatpush1.msra.mxu0 0.0
  %2230 = vmatprep.subr.mxu0 0.0
  %2231 = vmatpush1.msra.mxu0 0.0
  %2232 = vmatprep.subr.mxu0 0.0
  %2233 = vmatpush1.msra.mxu0 0.0
  %2234 = vmatprep.subr.mxu0 0.0
  %2235 = vmatpush1.msra.mxu0 0.0
  %2236 = vmatprep.subr.mxu0 0.0
  %2237 = vmatpush1.msra.mxu0 0.0
  %2238 = vmatprep.subr.mxu0 0.0
  %2239 = vmatpush1.msra.mxu0 0.0
  %2240 = vmatprep.subr.mxu0 0.0
  %2241 = vmatpush1.msra.mxu0 0.0
  %2242 = vmatprep.subr.mxu0 0.0
  %2243 = vmatpush1.msra.mxu0 0.0
  %2244 = vmatprep.subr.mxu0 0.0
  %2245 = vmatpush1.msra.mxu0 0.0
  %2246 = vmatprep.subr.mxu0 0.0
  %2247 = vmatpush1.msra.mxu0 0.0
  %2248 = vmatprep.subr.mxu0 0.0
  %2249 = vmatpush1.msra.mxu0 0.0
  %2250 = vmatprep.subr.mxu0 0.0
  %2251 = vmatpush1.msra.mxu0 0.0
  %2252 = vmatprep.subr.mxu0 0.0
  %2253 = vmatpush1.msra.mxu0 0.0
  %2254 = vmatprep.subr.mxu0 0.0
  %2255 = vmatpush1.msra.mxu0 0.0
  %2256 = vmatprep.subr.mxu0 0.0
  %2257 = vmatpush1.msra.mxu0 0.0
  %2258 = vmatprep.subr.mxu0 0.0
  %2259 = vmatpush1.msra.mxu0 0.0
  %2260 = vmatprep.subr.mxu0 0.0
  %2261 = vmatpush1.msra.mxu0 0.0
  %2262 = vmatprep.subr.mxu0 0.0
  %2263 = vmatpush1.msra.mxu0 0.0
  %2264 = vmatprep.subr.mxu0 0.0
  %2265 = vmatpush1.msra.mxu0 0.0
  %2266 = vmatprep.subr.mxu0 0.0
  %2267 = vmatpush1.msra.mxu0 0.0
  %2268 = vmatprep.subr.mxu0 0.0
  %2269 = vmatpush1.msra.mxu0 0.0
  %2270 = vmatprep.subr.mxu0 0.0
  %2271 = vmatpush1.msra.mxu0 0.0
  %2272 = vmatprep.subr.mxu0 0.0
  %2273 = vmatpush1.msra.mxu0 0.0
  %2274 = vmatprep.subr.mxu0 0.0
  %2275 = vmatpush1.msra.mxu0 0.0
  %2276 = vmatprep.subr.mxu0 0.0
  %2277 = vmatpush1.msra.mxu0 0.0
  %2278 = vmatprep.subr.mxu0 0.0
  %2279 = vmatpush1.msra.mxu0 0.0
  %2280 = vmatprep.mubr.f32.mxu0 0.0
  %2281 = vmatmul.mubr.f32.gmra.mrb[0].mxu0 %v2169
  %v2282 = vpop.f32.mrb[0].mxu0
  %v2283 = vadd.f32 0.0, %v2282
  %v2284 = vpop.f32.mrb[0].mxu0
  %v2285 = vadd.f32 0.0, %v2284
  %2286 = vmatprep.mubr.f32.mxu0 0.0
  %2287 = vmatmul.mubr.f32.gmra.mrb[0].mxu0 %v2172
  %v2288 = vpop.f32.mrb[0].mxu0
  %v2289 = vadd.f32 0.0, %v2288
  %v2290 = vpop.f32.mrb[0].mxu0
  %v2291 = vadd.f32 0.0, %v2290
  %2292 = vmatprep.mubr.f32.mxu0 0.0
  %2293 = vmatmul.mubr.f32.gmra.mrb[0].mxu0 %v2175
  %v2294 = vpop.f32.mrb[0].mxu0
  %v2295 = vadd.f32 0.0, %v2294
  %v2296 = vpop.f32.mrb[0].mxu0
  %v2297 = vadd.f32 0.0, %v2296
  %2298 = vmatprep.mubr.f32.mxu0 0.0
  %2299 = vmatmul.mubr.f32.gmra.mrb[0].mxu0 %v2178
  %v2300 = vpop.f32.mrb[0].mxu0
  %v2301 = vadd.f32 0.0, %v2300
  %v2302 = vpop.f32.mrb[0].mxu0
  %v2303 = vadd.f32 0.0, %v2302
  %2304 = vmatprep.mubr.f32.mxu0 0.0
  %2305 = vmatmul.mubr.f32.gmra.mrb[0].mxu0 %v2181
  %v2306 = vpop.f32.mrb[0].mxu0
  %v2307 = vadd.f32 0.0, %v2306
  %v2308 = vpop.f32.mrb[0].mxu0
  %v2309 = vadd.f32 0.0, %v2308
  %2310 = vmatprep.mubr.f32.mxu0 0.0
  %2311 = vmatmul.mubr.f32.gmra.mrb[0].mxu0 %v2184
  %v2312 = vpop.f32.mrb[0].mxu0
  %v2313 = vadd.f32 0.0, %v2312
  %v2314 = vpop.f32.mrb[0].mxu0
  %v2315 = vadd.f32 0.0, %v2314
  %2316 = vmatprep.mubr.f32.mxu0 0.0
  %2317 = vmatmul.mubr.f32.gmra.mrb[0].mxu0 %v2187
  %v2318 = vpop.f32.mrb[0].mxu0
  %v2319 = vadd.f32 0.0, %v2318
  %v2320 = vpop.f32.mrb[0].mxu0
  %v2321 = vadd.f32 0.0, %v2320
  %2322 = vmatprep.mubr.f32.mxu0 0.0
  %2323 = vmatmul.mubr.f32.gmra.mrb[0].mxu0 %v2190
  %v2324 = vpop.f32.mrb[0].mxu0
  %v2325 = vadd.f32 0.0, %v2324
  %v2326 = vpop.f32.mrb[0].mxu0
  %v2327 = vadd.f32 0.0, %v2326
  %2328 = vmatprep.mubr.f32.mxu0 0.0
  %2329 = vmatmul.mubr.f32.gmra.mrb[0].mxu0 %v2193
  %v2330 = vpop.f32.mrb[0].mxu0
  %v2331 = vadd.f32 0.0, %v2330
  %v2332 = vpop.f32.mrb[0].mxu0
  %v2333 = vadd.f32 0.0, %v2332
  %2334 = vmatprep.mubr.f32.mxu0 0.0
  %2335 = vmatmul.mubr.f32.gmra.mrb[0].mxu0 %v2196
  %v2336 = vpop.f32.mrb[0].mxu0
  %v2337 = vadd.f32 0.0, %v2336
  %v2338 = vpop.f32.mrb[0].mxu0
  %v2339 = vadd.f32 0.0, %v2338
  %2340 = vmatprep.mubr.f32.mxu0 0.0
  %2341 = vmatmul.mubr.f32.gmra.mrb[0].mxu0 %v2199
  %v2342 = vpop.f32.mrb[0].mxu0
  %v2343 = vadd.f32 0.0, %v2342
  %v2344 = vpop.f32.mrb[0].mxu0
  %v2345 = vadd.f32 0.0, %v2344
  %2346 = vmatprep.mubr.f32.mxu0 0.0
  %2347 = vmatmul.mubr.f32.gmra.mrb[0].mxu0 %v2202
  %v2348 = vpop.f32.mrb[0].mxu0
  %v2349 = vadd.f32 0.0, %v2348
  %v2350 = vpop.f32.mrb[0].mxu0
  %v2351 = vadd.f32 0.0, %v2350
  %2352 = vmatprep.mubr.f32.mxu0 0.0
  %2353 = vmatmul.mubr.f32.gmra.mrb[0].mxu0 %v2205
  %v2354 = vpop.f32.mrb[0].mxu0
  %v2355 = vadd.f32 0.0, %v2354
  %v2356 = vpop.f32.mrb[0].mxu0
  %v2357 = vadd.f32 0.0, %v2356
  %2358 = vmatprep.mubr.f32.mxu0 0.0
  %2359 = vmatmul.mubr.f32.gmra.mrb[0].mxu0 %v2208
  %v2360 = vpop.f32.mrb[0].mxu0
  %v2361 = vadd.f32 0.0, %v2360
  %v2362 = vpop.f32.mrb[0].mxu0
  %v2363 = vadd.f32 0.0, %v2362
  %2364 = vmatprep.mubr.f32.mxu0 0.0
  %2365 = vmatmul.mubr.f32.gmra.mrb[0].mxu0 %v2211
  %v2366 = vpop.f32.mrb[0].mxu0
  %v2367 = vadd.f32 0.0, %v2366
  %v2368 = vpop.f32.mrb[0].mxu0
  %v2369 = vadd.f32 0.0, %v2368
  %2370 = vmatprep.mubr.f32.mxu0 0.0
  %2371 = vmatmul.mubr.f32.gmra.mrb[0].mxu0 %v2214
  %v2372 = vpop.f32.mrb[0].mxu0
  %v2373 = vadd.f32 0.0, %v2372
  %v2374 = vpop.f32.mrb[0].mxu0
  %v2375 = vadd.f32 0.0, %v2374
  %2376 = vdwg.mxu0
  %2377 = vmatprep.subr.mxu0 0.0
  %2378 = vmatpush1.msra.mxu0 %v2157
  %2379 = vmatprep.subr.mxu0 0.0
  %2380 = vmatpush1.msra.mxu0 %v2160
  %2381 = vmatprep.subr.mxu0 0.0
  %2382 = vmatpush1.msra.mxu0 %v2163
  %2383 = vmatprep.subr.mxu0 0.0
  %2384 = vmatpush1.msra.mxu0 %v2166
  %2385 = vmatprep.subr.mxu0 0.0
  %2386 = vmatpush1.msra.mxu0 0.0
  %2387 = vmatprep.subr.mxu0 0.0
  %2388 = vmatpush1.msra.mxu0 0.0
  %2389 = vmatprep.subr.mxu0 0.0
  %2390 = vmatpush1.msra.mxu0 0.0
  %2391 = vmatprep.subr.mxu0 0.0
  %2392 = vmatpush1.msra.mxu0 0.0
  %2393 = vmatprep.subr.mxu0 0.0
  %2394 = vmatpush1.msra.mxu0 0.0
  %2395 = vmatprep.subr.mxu0 0.0
  %2396 = vmatpush1.msra.mxu0 0.0
  %2397 = vmatprep.subr.mxu0 0.0
  %2398 = vmatpush1.msra.mxu0 0.0
  %2399 = vmatprep.subr.mxu0 0.0
  %2400 = vmatpush1.msra.mxu0 0.0
  %2401 = vmatprep.subr.mxu0 0.0
  %2402 = vmatpush1.msra.mxu0 0.0
  %2403 = vmatprep.subr.mxu0 0.0
  %2404 = vmatpush1.msra.mxu0 0.0
  %2405 = vmatprep.subr.mxu0 0.0
  %2406 = vmatpush1.msra.mxu0 0.0
  %2407 = vmatprep.subr.mxu0 0.0
  %2408 = vmatpush1.msra.mxu0 0.0
  %2409 = vmatprep.subr.mxu0 0.0
  %2410 = vmatpush1.msra.mxu0 0.0
  %2411 = vmatprep.subr.mxu0 0.0
  %2412 = vmatpush1.msra.mxu0 0.0
  %2413 = vmatprep.subr.mxu0 0.0
  %2414 = vmatpush1.msra.mxu0 0.0
  %2415 = vmatprep.subr.mxu0 0.0
  %2416 = vmatpush1.msra.mxu0 0.0
  %2417 = vmatprep.subr.mxu0 0.0
  %2418 = vmatpush1.msra.mxu0 0.0
  %2419 = vmatprep.subr.mxu0 0.0
  %2420 = vmatpush1.msra.mxu0 0.0
  %2421 = vmatprep.subr.mxu0 0.0
  %2422 = vmatpush1.msra.mxu0 0.0
  %2423 = vmatprep.subr.mxu0 0.0
  %2424 = vmatpush1.msra.mxu0 0.0
  %2425 = vmatprep.subr.mxu0 0.0
  %2426 = vmatpush1.msra.mxu0 0.0
  %2427 = vmatprep.subr.mxu0 0.0
  %2428 = vmatpush1.msra.mxu0 0.0
  %2429 = vmatprep.subr.mxu0 0.0
  %2430 = vmatpush1.msra.mxu0 0.0
  %2431 = vmatprep.subr.mxu0 0.0
  %2432 = vmatpush1.msra.mxu0 0.0
  %2433 = vmatprep.subr.mxu0 0.0
  %2434 = vmatpush1.msra.mxu0 0.0
  %2435 = vmatprep.subr.mxu0 0.0
  %2436 = vmatpush1.msra.mxu0 0.0
  %2437 = vmatprep.subr.mxu0 0.0
  %2438 = vmatpush1.msra.mxu0 0.0
  %2439 = vmatprep.subr.mxu0 0.0
  %2440 = vmatpush1.msra.mxu0 0.0
  %2441 = vmatprep.mubr.f32.mxu0 0.0
  %2442 = vmatmul.mubr.f32.gmra.mrb[0].mxu0 %v2169
  %v2443 = vpop.f32.mrb[0].mxu0
  %v2444 = vadd.f32 0.0, %v2443
  %v2445 = vpop.f32.mrb[0].mxu0
  %2446 = vmatprep.mubr.f32.mxu0 0.0
  %2447 = vmatmul.mubr.f32.gmra.mrb[0].mxu0 %v2172
  %v2448 = vpop.f32.mrb[0].mxu0
  %v2449 = vadd.f32 0.0, %v2448
  %v2450 = vpop.f32.mrb[0].mxu0
  %2451 = vmatprep.mubr.f32.mxu0 0.0
  %2452 = vmatmul.mubr.f32.gmra.mrb[0].mxu0 %v2175
  %v2453 = vpop.f32.mrb[0].mxu0
  %v2454 = vadd.f32 0.0, %v2453
  %v2455 = vpop.f32.mrb[0].mxu0
  %2456 = vmatprep.mubr.f32.mxu0 0.0
  %2457 = vmatmul.mubr.f32.gmra.mrb[0].mxu0 %v2178
  %v2458 = vpop.f32.mrb[0].mxu0
  %v2459 = vadd.f32 0.0, %v2458
  %v2460 = vpop.f32.mrb[0].mxu0
  %2461 = vmatprep.mubr.f32.mxu0 0.0
  %2462 = vmatmul.mubr.f32.gmra.mrb[0].mxu0 %v2181
  %v2463 = vpop.f32.mrb[0].mxu0
  %v2464 = vadd.f32 0.0, %v2463
  %v2465 = vpop.f32.mrb[0].mxu0
  %2466 = vmatprep.mubr.f32.mxu0 0.0
  %2467 = vmatmul.mubr.f32.gmra.mrb[0].mxu0 %v2184
  %v2468 = vpop.f32.mrb[0].mxu0
  %v2469 = vadd.f32 0.0, %v2468
  %v2470 = vpop.f32.mrb[0].mxu0
  %2471 = vmatprep.mubr.f32.mxu0 0.0
  %2472 = vmatmul.mubr.f32.gmra.mrb[0].mxu0 %v2187
  %v2473 = vpop.f32.mrb[0].mxu0
  %v2474 = vadd.f32 0.0, %v2473
  %v2475 = vpop.f32.mrb[0].mxu0
  %2476 = vmatprep.mubr.f32.mxu0 0.0
  %2477 = vmatmul.mubr.f32.gmra.mrb[0].mxu0 %v2190
  %v2478 = vpop.f32.mrb[0].mxu0
  %v2479 = vadd.f32 0.0, %v2478
  %v2480 = vpop.f32.mrb[0].mxu0
  %2481 = vmatprep.mubr.f32.mxu0 0.0
  %2482 = vmatmul.mubr.f32.gmra.mrb[0].mxu0 %v2193
  %v2483 = vpop.f32.mrb[0].mxu0
  %v2484 = vadd.f32 0.0, %v2483
  %v2485 = vpop.f32.mrb[0].mxu0
  %2486 = vmatprep.mubr.f32.mxu0 0.0
  %2487 = vmatmul.mubr.f32.gmra.mrb[0].mxu0 %v2196
  %v2488 = vpop.f32.mrb[0].mxu0
  %v2489 = vadd.f32 0.0, %v2488
  %v2490 = vpop.f32.mrb[0].mxu0
  %2491 = vmatprep.mubr.f32.mxu0 0.0
  %2492 = vmatmul.mubr.f32.gmra.mrb[0].mxu0 %v2199
  %v2493 = vpop.f32.mrb[0].mxu0
  %v2494 = vadd.f32 0.0, %v2493
  %v2495 = vpop.f32.mrb[0].mxu0
  %2496 = vmatprep.mubr.f32.mxu0 0.0
  %2497 = vmatmul.mubr.f32.gmra.mrb[0].mxu0 %v2202
  %v2498 = vpop.f32.mrb[0].mxu0
  %v2499 = vadd.f32 0.0, %v2498
  %v2500 = vpop.f32.mrb[0].mxu0
  %2501 = vmatprep.mubr.f32.mxu0 0.0
  %2502 = vmatmul.mubr.f32.gmra.mrb[0].mxu0 %v2205
  %v2503 = vpop.f32.mrb[0].mxu0
  %v2504 = vadd.f32 0.0, %v2503
  %v2505 = vpop.f32.mrb[0].mxu0
  %2506 = vmatprep.mubr.f32.mxu0 0.0
  %2507 = vmatmul.mubr.f32.gmra.mrb[0].mxu0 %v2208
  %v2508 = vpop.f32.mrb[0].mxu0
  %v2509 = vadd.f32 0.0, %v2508
  %v2510 = vpop.f32.mrb[0].mxu0
  %2511 = vmatprep.mubr.f32.mxu0 0.0
  %2512 = vmatmul.mubr.f32.gmra.mrb[0].mxu0 %v2211
  %v2513 = vpop.f32.mrb[0].mxu0
  %v2514 = vadd.f32 0.0, %v2513
  %v2515 = vpop.f32.mrb[0].mxu0
  %2516 = vmatprep.mubr.f32.mxu0 0.0
  %2517 = vmatmul.mubr.f32.gmra.mrb[0].mxu0 %v2214
  %v2518 = vpop.f32.mrb[0].mxu0
  %v2519 = vadd.f32 0.0, %v2518
  %v2520 = vpop.f32.mrb[0].mxu0
  %2521 = vdwg.mxu0
  %v2522 = vrot.slane %v2283, 7
  %v2523 = vrot.slane %v2289, 7
  %v2524 = vrot.slane %v2295, 7
  %v2525 = vrot.slane %v2301, 7
  %v2526 = vrot.slane %v2307, 7
  %v2527 = vrot.slane %v2313, 7
  %v2528 = vrot.slane %v2319, 7
  %v2529 = vrot.slane %v2325, 7
  %v2530 = vrot.slane %v2331, 7
  %v2531 = vrot.slane %v2337, 7
  %v2532 = vrot.slane %v2343, 7
  %v2533 = vrot.slane %v2349, 7
  %v2534 = vrot.slane %v2355, 7
  %v2535 = vrot.slane %v2361, 7
  %v2536 = vrot.slane %v2367, 7
  %v2537 = vrot.slane %v2373, 7
  %v2538 = vsel %vm818, %v2536, %v2537
  %v2539 = vsel %vm818, %v2535, %v2536
  %v2540 = vsel %vm818, %v2534, %v2535
  %v2541 = vsel %vm818, %v2533, %v2534
  %v2542 = vsel %vm818, %v2532, %v2533
  %v2543 = vsel %vm818, %v2531, %v2532
  %v2544 = vsel %vm818, %v2530, %v2531
  %v2545 = vsel %vm818, %v2529, %v2530
  %v2546 = vsel %vm818, %v2528, %v2529
  %v2547 = vsel %vm818, %v2527, %v2528
  %v2548 = vsel %vm818, %v2526, %v2527
  %v2549 = vsel %vm818, %v2525, %v2526
  %v2550 = vsel %vm818, %v2524, %v2525
  %v2551 = vsel %vm818, %v2523, %v2524
  %v2552 = vsel %vm818, %v2522, %v2523
  %v2553 = vsel %vm818, %v2537, %v2522
  %v2554 = vmul.f32 %v2538, %v854
  %v2555 = vmul.f32 %v2553, %v859
  %v2556 = vmul.f32 %v2552, %v864
  %v2557 = vmul.f32 %v2551, %v869
  %v2558 = vmul.f32 %v2550, %v874
  %v2559 = vmul.f32 %v2549, %v879
  %v2560 = vmul.f32 %v2548, %v884
  %v2561 = vmul.f32 %v2547, %v889
  %v2562 = vmul.f32 %v2546, %v894
  %v2563 = vmul.f32 %v2545, %v899
  %v2564 = vmul.f32 %v2544, %v904
  %v2565 = vmul.f32 %v2543, %v909
  %v2566 = vmul.f32 %v2542, %v914
  %v2567 = vmul.f32 %v2541, %v919
  %v2568 = vmul.f32 %v2540, %v924
  %v2569 = vmul.f32 %v2539, %v929
  %v2570 = vadd.f32 %v2285, %v2554
  %v2571 = vadd.f32 %v2291, %v2555
  %v2572 = vadd.f32 %v2297, %v2556
  %v2573 = vadd.f32 %v2303, %v2557
  %v2574 = vadd.f32 %v2309, %v2558
  %v2575 = vadd.f32 %v2315, %v2559
  %v2576 = vadd.f32 %v2321, %v2560
  %v2577 = vadd.f32 %v2327, %v2561
  %v2578 = vadd.f32 %v2333, %v2562
  %v2579 = vadd.f32 %v2339, %v2563
  %v2580 = vadd.f32 %v2345, %v2564
  %v2581 = vadd.f32 %v2351, %v2565
  %v2582 = vadd.f32 %v2357, %v2566
  %v2583 = vadd.f32 %v2363, %v2567
  %v2584 = vadd.f32 %v2369, %v2568
  %v2585 = vadd.f32 %v2375, %v2569
  %2602 = vrot.lane.b32.xlu0 %v2283, 96
  %v2603 = vpop.permute.xlu0 %2602
  %2604 = vrot.lane.b32.xlu0 %v2289, 96
  %v2605 = vpop.permute.xlu0 %2604
  %2606 = vrot.lane.b32.xlu0 %v2295, 96
  %v2607 = vpop.permute.xlu0 %2606
  %2608 = vrot.lane.b32.xlu0 %v2301, 96
  %v2609 = vpop.permute.xlu0 %2608
  %2610 = vrot.lane.b32.xlu0 %v2307, 96
  %v2611 = vpop.permute.xlu0 %2610
  %2612 = vrot.lane.b32.xlu0 %v2313, 96
  %v2613 = vpop.permute.xlu0 %2612
  %2614 = vrot.lane.b32.xlu0 %v2319, 96
  %v2615 = vpop.permute.xlu0 %2614
  %2616 = vrot.lane.b32.xlu0 %v2325, 96
  %v2617 = vpop.permute.xlu0 %2616
  %2618 = vrot.lane.b32.xlu0 %v2331, 96
  %v2619 = vpop.permute.xlu0 %2618
  %2620 = vrot.lane.b32.xlu0 %v2337, 96
  %v2621 = vpop.permute.xlu0 %2620
  %2622 = vrot.lane.b32.xlu0 %v2343, 96
  %v2623 = vpop.permute.xlu0 %2622
  %2624 = vrot.lane.b32.xlu0 %v2349, 96
  %v2625 = vpop.permute.xlu0 %2624
  %2626 = vrot.lane.b32.xlu0 %v2355, 96
  %v2627 = vpop.permute.xlu0 %2626
  %2628 = vrot.lane.b32.xlu0 %v2361, 96
  %v2629 = vpop.permute.xlu0 %2628
  %2630 = vrot.lane.b32.xlu0 %v2367, 96
  %v2631 = vpop.permute.xlu0 %2630
  %2632 = vrot.lane.b32.xlu0 %v2373, 96
  %v2633 = vpop.permute.xlu0 %2632
  %v2650 = vmul.f32 %v2633, %v1029
  %v2651 = vmul.f32 %v2603, %v1033
  %v2652 = vmul.f32 %v2605, %v1037
  %v2653 = vmul.f32 %v2607, %v1041
  %v2654 = vmul.f32 %v2609, %v1045
  %v2655 = vmul.f32 %v2611, %v1049
  %v2656 = vmul.f32 %v2613, %v1053
  %v2657 = vmul.f32 %v2615, %v1057
  %v2658 = vmul.f32 %v2617, %v1061
  %v2659 = vmul.f32 %v2619, %v1065
  %v2660 = vmul.f32 %v2621, %v1069
  %v2661 = vmul.f32 %v2623, %v1073
  %v2662 = vmul.f32 %v2625, %v1077
  %v2663 = vmul.f32 %v2627, %v1081
  %v2664 = vmul.f32 %v2629, %v1085
  %v2665 = vmul.f32 %v2631, %v1089
  %v2666 = vadd.f32 %v2570, %v2650
  %v2667 = vadd.f32 %v2571, %v2651
  %v2668 = vadd.f32 %v2572, %v2652
  %v2669 = vadd.f32 %v2573, %v2653
  %v2670 = vadd.f32 %v2574, %v2654
  %v2671 = vadd.f32 %v2575, %v2655
  %v2672 = vadd.f32 %v2576, %v2656
  %v2673 = vadd.f32 %v2577, %v2657
  %v2674 = vadd.f32 %v2578, %v2658
  %v2675 = vadd.f32 %v2579, %v2659
  %v2676 = vadd.f32 %v2580, %v2660
  %v2677 = vadd.f32 %v2581, %v2661
  %v2678 = vadd.f32 %v2582, %v2662
  %v2679 = vadd.f32 %v2583, %v2663
  %v2680 = vadd.f32 %v2584, %v2664
  %v2681 = vadd.f32 %v2585, %v2665
  %2682 = vrot.lane.b32.xlu0 %v2283, 64
  %v2683 = vpop.permute.xlu0 %2682
  %2684 = vrot.lane.b32.xlu0 %v2289, 64
  %v2685 = vpop.permute.xlu0 %2684
  %2686 = vrot.lane.b32.xlu0 %v2295, 64
  %v2687 = vpop.permute.xlu0 %2686
  %2688 = vrot.lane.b32.xlu0 %v2301, 64
  %v2689 = vpop.permute.xlu0 %2688
  %2690 = vrot.lane.b32.xlu0 %v2307, 64
  %v2691 = vpop.permute.xlu0 %2690
  %2692 = vrot.lane.b32.xlu0 %v2313, 64
  %v2693 = vpop.permute.xlu0 %2692
  %2694 = vrot.lane.b32.xlu0 %v2319, 64
  %v2695 = vpop.permute.xlu0 %2694
  %2696 = vrot.lane.b32.xlu0 %v2325, 64
  %v2697 = vpop.permute.xlu0 %2696
  %2698 = vrot.lane.b32.xlu0 %v2331, 64
  %v2699 = vpop.permute.xlu0 %2698
  %2700 = vrot.lane.b32.xlu0 %v2337, 64
  %v2701 = vpop.permute.xlu0 %2700
  %2702 = vrot.lane.b32.xlu0 %v2343, 64
  %v2703 = vpop.permute.xlu0 %2702
  %2704 = vrot.lane.b32.xlu0 %v2349, 64
  %v2705 = vpop.permute.xlu0 %2704
  %2706 = vrot.lane.b32.xlu0 %v2355, 64
  %v2707 = vpop.permute.xlu0 %2706
  %2708 = vrot.lane.b32.xlu0 %v2361, 64
  %v2709 = vpop.permute.xlu0 %2708
  %2710 = vrot.lane.b32.xlu0 %v2367, 64
  %v2711 = vpop.permute.xlu0 %2710
  %2712 = vrot.lane.b32.xlu0 %v2373, 64
  %v2713 = vpop.permute.xlu0 %2712
  %v2730 = vrot.slane %v2683, 1
  %v2731 = vrot.slane %v2685, 1
  %v2732 = vrot.slane %v2687, 1
  %v2733 = vrot.slane %v2689, 1
  %v2734 = vrot.slane %v2691, 1
  %v2735 = vrot.slane %v2693, 1
  %v2736 = vrot.slane %v2695, 1
  %v2737 = vrot.slane %v2697, 1
  %v2738 = vrot.slane %v2699, 1
  %v2739 = vrot.slane %v2701, 1
  %v2740 = vrot.slane %v2703, 1
  %v2741 = vrot.slane %v2705, 1
  %v2742 = vrot.slane %v2707, 1
  %v2743 = vrot.slane %v2709, 1
  %v2744 = vrot.slane %v2711, 1
  %v2745 = vrot.slane %v2713, 1
  %v2746 = vsel %vm1187, %v2744, %v2745
  %v2747 = vsel %vm1187, %v2743, %v2744
  %v2748 = vsel %vm1187, %v2742, %v2743
  %v2749 = vsel %vm1187, %v2741, %v2742
  %v2750 = vsel %vm1187, %v2740, %v2741
  %v2751 = vsel %vm1187, %v2739, %v2740
  %v2752 = vsel %vm1187, %v2738, %v2739
  %v2753 = vsel %vm1187, %v2737, %v2738
  %v2754 = vsel %vm1187, %v2736, %v2737
  %v2755 = vsel %vm1187, %v2735, %v2736
  %v2756 = vsel %vm1187, %v2734, %v2735
  %v2757 = vsel %vm1187, %v2733, %v2734
  %v2758 = vsel %vm1187, %v2732, %v2733
  %v2759 = vsel %vm1187, %v2731, %v2732
  %v2760 = vsel %vm1187, %v2730, %v2731
  %v2761 = vsel %vm1187, %v2745, %v2730
  %v2762 = vmul.f32 %v2761, %v1206
  %v2763 = vmul.f32 %v2760, %v1210
  %v2764 = vmul.f32 %v2759, %v1214
  %v2765 = vmul.f32 %v2758, %v1218
  %v2766 = vmul.f32 %v2757, %v1222
  %v2767 = vmul.f32 %v2756, %v1226
  %v2768 = vmul.f32 %v2755, %v1230
  %v2769 = vmul.f32 %v2754, %v1234
  %v2770 = vmul.f32 %v2753, %v1238
  %v2771 = vmul.f32 %v2752, %v1242
  %v2772 = vmul.f32 %v2751, %v1246
  %v2773 = vmul.f32 %v2750, %v1250
  %v2774 = vmul.f32 %v2749, %v1254
  %v2775 = vmul.f32 %v2748, %v1258
  %v2776 = vmul.f32 %v2747, %v1262
  %v2777 = vmul.f32 %v2746, %v1266
  %v2778 = vadd.f32 %v2666, %v2762
  %v2779 = vadd.f32 %v2667, %v2763
  %v2780 = vadd.f32 %v2668, %v2764
  %v2781 = vadd.f32 %v2669, %v2765
  %v2782 = vadd.f32 %v2670, %v2766
  %v2783 = vadd.f32 %v2671, %v2767
  %v2784 = vadd.f32 %v2672, %v2768
  %v2785 = vadd.f32 %v2673, %v2769
  %v2786 = vadd.f32 %v2674, %v2770
  %v2787 = vadd.f32 %v2675, %v2771
  %v2788 = vadd.f32 %v2676, %v2772
  %v2789 = vadd.f32 %v2677, %v2773
  %v2790 = vadd.f32 %v2678, %v2774
  %v2791 = vadd.f32 %v2679, %v2775
  %v2792 = vadd.f32 %v2680, %v2776
  %v2793 = vadd.f32 %v2681, %v2777
  %2794 = vrot.lane.b32.xlu0 %v2283, 32
  %v2795 = vpop.permute.xlu0 %2794
  %2796 = vrot.lane.b32.xlu0 %v2289, 32
  %v2797 = vpop.permute.xlu0 %2796
  %2798 = vrot.lane.b32.xlu0 %v2295, 32
  %v2799 = vpop.permute.xlu0 %2798
  %2800 = vrot.lane.b32.xlu0 %v2301, 32
  %v2801 = vpop.permute.xlu0 %2800
  %2802 = vrot.lane.b32.xlu0 %v2307, 32
  %v2803 = vpop.permute.xlu0 %2802
  %2804 = vrot.lane.b32.xlu0 %v2313, 32
  %v2805 = vpop.permute.xlu0 %2804
  %2806 = vrot.lane.b32.xlu0 %v2319, 32
  %v2807 = vpop.permute.xlu0 %2806
  %2808 = vrot.lane.b32.xlu0 %v2325, 32
  %v2809 = vpop.permute.xlu0 %2808
  %2810 = vrot.lane.b32.xlu0 %v2331, 32
  %v2811 = vpop.permute.xlu0 %2810
  %2812 = vrot.lane.b32.xlu0 %v2337, 32
  %v2813 = vpop.permute.xlu0 %2812
  %2814 = vrot.lane.b32.xlu0 %v2343, 32
  %v2815 = vpop.permute.xlu0 %2814
  %2816 = vrot.lane.b32.xlu0 %v2349, 32
  %v2817 = vpop.permute.xlu0 %2816
  %2818 = vrot.lane.b32.xlu0 %v2355, 32
  %v2819 = vpop.permute.xlu0 %2818
  %2820 = vrot.lane.b32.xlu0 %v2361, 32
  %v2821 = vpop.permute.xlu0 %2820
  %2822 = vrot.lane.b32.xlu0 %v2367, 32
  %v2823 = vpop.permute.xlu0 %2822
  %2824 = vrot.lane.b32.xlu0 %v2373, 32
  %v2825 = vpop.permute.xlu0 %2824
  %v2842 = vrot.slane %v2795, 7
  %v2843 = vrot.slane %v2797, 7
  %v2844 = vrot.slane %v2799, 7
  %v2845 = vrot.slane %v2801, 7
  %v2846 = vrot.slane %v2803, 7
  %v2847 = vrot.slane %v2805, 7
  %v2848 = vrot.slane %v2807, 7
  %v2849 = vrot.slane %v2809, 7
  %v2850 = vrot.slane %v2811, 7
  %v2851 = vrot.slane %v2813, 7
  %v2852 = vrot.slane %v2815, 7
  %v2853 = vrot.slane %v2817, 7
  %v2854 = vrot.slane %v2819, 7
  %v2855 = vrot.slane %v2821, 7
  %v2856 = vrot.slane %v2823, 7
  %v2857 = vrot.slane %v2825, 7
  %v2858 = vsel %vm818, %v2856, %v2857
  %v2859 = vsel %vm818, %v2855, %v2856
  %v2860 = vsel %vm818, %v2854, %v2855
  %v2861 = vsel %vm818, %v2853, %v2854
  %v2862 = vsel %vm818, %v2852, %v2853
  %v2863 = vsel %vm818, %v2851, %v2852
  %v2864 = vsel %vm818, %v2850, %v2851
  %v2865 = vsel %vm818, %v2849, %v2850
  %v2866 = vsel %vm818, %v2848, %v2849
  %v2867 = vsel %vm818, %v2847, %v2848
  %v2868 = vsel %vm818, %v2846, %v2847
  %v2869 = vsel %vm818, %v2845, %v2846
  %v2870 = vsel %vm818, %v2844, %v2845
  %v2871 = vsel %vm818, %v2843, %v2844
  %v2872 = vsel %vm818, %v2842, %v2843
  %v2873 = vsel %vm818, %v2857, %v2842
  %v2874 = vmul.f32 %v2873, %v1382
  %v2875 = vmul.f32 %v2872, %v1386
  %v2876 = vmul.f32 %v2871, %v1390
  %v2877 = vmul.f32 %v2870, %v1394
  %v2878 = vmul.f32 %v2869, %v1398
  %v2879 = vmul.f32 %v2868, %v1402
  %v2880 = vmul.f32 %v2867, %v1406
  %v2881 = vmul.f32 %v2866, %v1410
  %v2882 = vmul.f32 %v2865, %v1414
  %v2883 = vmul.f32 %v2864, %v1418
  %v2884 = vmul.f32 %v2863, %v1422
  %v2885 = vmul.f32 %v2862, %v1426
  %v2886 = vmul.f32 %v2861, %v1430
  %v2887 = vmul.f32 %v2860, %v1434
  %v2888 = vmul.f32 %v2859, %v1438
  %v2889 = vmul.f32 %v2858, %v1442
  %v2890 = vadd.f32 %v2778, %v2874
  %v2891 = vadd.f32 %v2779, %v2875
  %v2892 = vadd.f32 %v2780, %v2876
  %v2893 = vadd.f32 %v2781, %v2877
  %v2894 = vadd.f32 %v2782, %v2878
  %v2895 = vadd.f32 %v2783, %v2879
  %v2896 = vadd.f32 %v2784, %v2880
  %v2897 = vadd.f32 %v2785, %v2881
  %v2898 = vadd.f32 %v2786, %v2882
  %v2899 = vadd.f32 %v2787, %v2883
  %v2900 = vadd.f32 %v2788, %v2884
  %v2901 = vadd.f32 %v2789, %v2885
  %v2902 = vadd.f32 %v2790, %v2886
  %v2903 = vadd.f32 %v2791, %v2887
  %v2904 = vadd.f32 %v2792, %v2888
  %v2905 = vadd.f32 %v2793, %v2889
  %2922 = vrot.lane.b32.xlu0 %v2285, 96
  %v2923 = vpop.permute.xlu0 %2922
  %2924 = vrot.lane.b32.xlu0 %v2291, 96
  %v2925 = vpop.permute.xlu0 %2924
  %2926 = vrot.lane.b32.xlu0 %v2297, 96
  %v2927 = vpop.permute.xlu0 %2926
  %2928 = vrot.lane.b32.xlu0 %v2303, 96
  %v2929 = vpop.permute.xlu0 %2928
  %2930 = vrot.lane.b32.xlu0 %v2309, 96
  %v2931 = vpop.permute.xlu0 %2930
  %2932 = vrot.lane.b32.xlu0 %v2315, 96
  %v2933 = vpop.permute.xlu0 %2932
  %2934 = vrot.lane.b32.xlu0 %v2321, 96
  %v2935 = vpop.permute.xlu0 %2934
  %2936 = vrot.lane.b32.xlu0 %v2327, 96
  %v2937 = vpop.permute.xlu0 %2936
  %2938 = vrot.lane.b32.xlu0 %v2333, 96
  %v2939 = vpop.permute.xlu0 %2938
  %2940 = vrot.lane.b32.xlu0 %v2339, 96
  %v2941 = vpop.permute.xlu0 %2940
  %2942 = vrot.lane.b32.xlu0 %v2345, 96
  %v2943 = vpop.permute.xlu0 %2942
  %2944 = vrot.lane.b32.xlu0 %v2351, 96
  %v2945 = vpop.permute.xlu0 %2944
  %2946 = vrot.lane.b32.xlu0 %v2357, 96
  %v2947 = vpop.permute.xlu0 %2946
  %2948 = vrot.lane.b32.xlu0 %v2363, 96
  %v2949 = vpop.permute.xlu0 %2948
  %2950 = vrot.lane.b32.xlu0 %v2369, 96
  %v2951 = vpop.permute.xlu0 %2950
  %2952 = vrot.lane.b32.xlu0 %v2375, 96
  %v2953 = vpop.permute.xlu0 %2952
  %v2970 = vrot.slane %v2923, 1
  %v2971 = vrot.slane %v2925, 1
  %v2972 = vrot.slane %v2927, 1
  %v2973 = vrot.slane %v2929, 1
  %v2974 = vrot.slane %v2931, 1
  %v2975 = vrot.slane %v2933, 1
  %v2976 = vrot.slane %v2935, 1
  %v2977 = vrot.slane %v2937, 1
  %v2978 = vrot.slane %v2939, 1
  %v2979 = vrot.slane %v2941, 1
  %v2980 = vrot.slane %v2943, 1
  %v2981 = vrot.slane %v2945, 1
  %v2982 = vrot.slane %v2947, 1
  %v2983 = vrot.slane %v2949, 1
  %v2984 = vrot.slane %v2951, 1
  %v2985 = vrot.slane %v2953, 1
  %v2986 = vsel %vm1187, %v2984, %v2985
  %v2987 = vsel %vm1187, %v2983, %v2984
  %v2988 = vsel %vm1187, %v2982, %v2983
  %v2989 = vsel %vm1187, %v2981, %v2982
  %v2990 = vsel %vm1187, %v2980, %v2981
  %v2991 = vsel %vm1187, %v2979, %v2980
  %v2992 = vsel %vm1187, %v2978, %v2979
  %v2993 = vsel %vm1187, %v2977, %v2978
  %v2994 = vsel %vm1187, %v2976, %v2977
  %v2995 = vsel %vm1187, %v2975, %v2976
  %v2996 = vsel %vm1187, %v2974, %v2975
  %v2997 = vsel %vm1187, %v2973, %v2974
  %v2998 = vsel %vm1187, %v2972, %v2973
  %v2999 = vsel %vm1187, %v2971, %v2972
  %v3000 = vsel %vm1187, %v2970, %v2971
  %v3001 = vsel %vm1187, %v2985, %v2970
  %v3002 = vmul.f32 %v3000, %v1574
  %v3003 = vmul.f32 %v2999, %v1578
  %v3004 = vmul.f32 %v2998, %v1582
  %v3005 = vmul.f32 %v2997, %v1586
  %v3006 = vmul.f32 %v2996, %v1590
  %v3007 = vmul.f32 %v2995, %v1594
  %v3008 = vmul.f32 %v2994, %v1598
  %v3009 = vmul.f32 %v2993, %v1602
  %v3010 = vmul.f32 %v2992, %v1606
  %v3011 = vmul.f32 %v2991, %v1610
  %v3012 = vmul.f32 %v2990, %v1614
  %v3013 = vmul.f32 %v2989, %v1618
  %v3014 = vmul.f32 %v2988, %v1622
  %v3015 = vmul.f32 %v2987, %v1626
  %v3016 = vmul.f32 %v2986, %v1630
  %v3017 = vmul.f32 %v3001, %v1634
  %v3018 = vadd.f32 %v2890, %v3002
  %v3019 = vadd.f32 %v2891, %v3003
  %v3020 = vadd.f32 %v2892, %v3004
  %v3021 = vadd.f32 %v2893, %v3005
  %v3022 = vadd.f32 %v2894, %v3006
  %v3023 = vadd.f32 %v2895, %v3007
  %v3024 = vadd.f32 %v2896, %v3008
  %v3025 = vadd.f32 %v2897, %v3009
  %v3026 = vadd.f32 %v2898, %v3010
  %v3027 = vadd.f32 %v2899, %v3011
  %v3028 = vadd.f32 %v2900, %v3012
  %v3029 = vadd.f32 %v2901, %v3013
  %v3030 = vadd.f32 %v2902, %v3014
  %v3031 = vadd.f32 %v2903, %v3015
  %v3032 = vadd.f32 %v2904, %v3016
  %v3033 = vadd.f32 %v2905, %v3017
  %3034 = vrot.lane.b32.xlu0 %v2285, 64
  %v3035 = vpop.permute.xlu0 %3034
  %3036 = vrot.lane.b32.xlu0 %v2291, 64
  %v3037 = vpop.permute.xlu0 %3036
  %3038 = vrot.lane.b32.xlu0 %v2297, 64
  %v3039 = vpop.permute.xlu0 %3038
  %3040 = vrot.lane.b32.xlu0 %v2303, 64
  %v3041 = vpop.permute.xlu0 %3040
  %3042 = vrot.lane.b32.xlu0 %v2309, 64
  %v3043 = vpop.permute.xlu0 %3042
  %3044 = vrot.lane.b32.xlu0 %v2315, 64
  %v3045 = vpop.permute.xlu0 %3044
  %3046 = vrot.lane.b32.xlu0 %v2321, 64
  %v3047 = vpop.permute.xlu0 %3046
  %3048 = vrot.lane.b32.xlu0 %v2327, 64
  %v3049 = vpop.permute.xlu0 %3048
  %3050 = vrot.lane.b32.xlu0 %v2333, 64
  %v3051 = vpop.permute.xlu0 %3050
  %3052 = vrot.lane.b32.xlu0 %v2339, 64
  %v3053 = vpop.permute.xlu0 %3052
  %3054 = vrot.lane.b32.xlu0 %v2345, 64
  %v3055 = vpop.permute.xlu0 %3054
  %3056 = vrot.lane.b32.xlu0 %v2351, 64
  %v3057 = vpop.permute.xlu0 %3056
  %3058 = vrot.lane.b32.xlu0 %v2357, 64
  %v3059 = vpop.permute.xlu0 %3058
  %3060 = vrot.lane.b32.xlu0 %v2363, 64
  %v3061 = vpop.permute.xlu0 %3060
  %3062 = vrot.lane.b32.xlu0 %v2369, 64
  %v3063 = vpop.permute.xlu0 %3062
  %3064 = vrot.lane.b32.xlu0 %v2375, 64
  %v3065 = vpop.permute.xlu0 %3064
  %v3082 = vrot.slane %v3035, 7
  %v3083 = vrot.slane %v3037, 7
  %v3084 = vrot.slane %v3039, 7
  %v3085 = vrot.slane %v3041, 7
  %v3086 = vrot.slane %v3043, 7
  %v3087 = vrot.slane %v3045, 7
  %v3088 = vrot.slane %v3047, 7
  %v3089 = vrot.slane %v3049, 7
  %v3090 = vrot.slane %v3051, 7
  %v3091 = vrot.slane %v3053, 7
  %v3092 = vrot.slane %v3055, 7
  %v3093 = vrot.slane %v3057, 7
  %v3094 = vrot.slane %v3059, 7
  %v3095 = vrot.slane %v3061, 7
  %v3096 = vrot.slane %v3063, 7
  %v3097 = vrot.slane %v3065, 7
  %v3098 = vsel %vm818, %v3096, %v3097
  %v3099 = vsel %vm818, %v3095, %v3096
  %v3100 = vsel %vm818, %v3094, %v3095
  %v3101 = vsel %vm818, %v3093, %v3094
  %v3102 = vsel %vm818, %v3092, %v3093
  %v3103 = vsel %vm818, %v3091, %v3092
  %v3104 = vsel %vm818, %v3090, %v3091
  %v3105 = vsel %vm818, %v3089, %v3090
  %v3106 = vsel %vm818, %v3088, %v3089
  %v3107 = vsel %vm818, %v3087, %v3088
  %v3108 = vsel %vm818, %v3086, %v3087
  %v3109 = vsel %vm818, %v3085, %v3086
  %v3110 = vsel %vm818, %v3084, %v3085
  %v3111 = vsel %vm818, %v3083, %v3084
  %v3112 = vsel %vm818, %v3082, %v3083
  %v3113 = vsel %vm818, %v3097, %v3082
  %v3114 = vmul.f32 %v3112, %v1750
  %v3115 = vmul.f32 %v3111, %v1754
  %v3116 = vmul.f32 %v3110, %v1758
  %v3117 = vmul.f32 %v3109, %v1762
  %v3118 = vmul.f32 %v3108, %v1766
  %v3119 = vmul.f32 %v3107, %v1770
  %v3120 = vmul.f32 %v3106, %v1774
  %v3121 = vmul.f32 %v3105, %v1778
  %v3122 = vmul.f32 %v3104, %v1782
  %v3123 = vmul.f32 %v3103, %v1786
  %v3124 = vmul.f32 %v3102, %v1790
  %v3125 = vmul.f32 %v3101, %v1794
  %v3126 = vmul.f32 %v3100, %v1798
  %v3127 = vmul.f32 %v3099, %v1802
  %v3128 = vmul.f32 %v3098, %v1806
  %v3129 = vmul.f32 %v3113, %v1810
  %v3130 = vadd.f32 %v3018, %v3114
  %v3131 = vadd.f32 %v3019, %v3115
  %v3132 = vadd.f32 %v3020, %v3116
  %v3133 = vadd.f32 %v3021, %v3117
  %v3134 = vadd.f32 %v3022, %v3118
  %v3135 = vadd.f32 %v3023, %v3119
  %v3136 = vadd.f32 %v3024, %v3120
  %v3137 = vadd.f32 %v3025, %v3121
  %v3138 = vadd.f32 %v3026, %v3122
  %v3139 = vadd.f32 %v3027, %v3123
  %v3140 = vadd.f32 %v3028, %v3124
  %v3141 = vadd.f32 %v3029, %v3125
  %v3142 = vadd.f32 %v3030, %v3126
  %v3143 = vadd.f32 %v3031, %v3127
  %v3144 = vadd.f32 %v3032, %v3128
  %v3145 = vadd.f32 %v3033, %v3129
  %3146 = vrot.lane.b32.xlu0 %v2285, 32
  %v3147 = vpop.permute.xlu0 %3146
  %3148 = vrot.lane.b32.xlu0 %v2291, 32
  %v3149 = vpop.permute.xlu0 %3148
  %3150 = vrot.lane.b32.xlu0 %v2297, 32
  %v3151 = vpop.permute.xlu0 %3150
  %3152 = vrot.lane.b32.xlu0 %v2303, 32
  %v3153 = vpop.permute.xlu0 %3152
  %3154 = vrot.lane.b32.xlu0 %v2309, 32
  %v3155 = vpop.permute.xlu0 %3154
  %3156 = vrot.lane.b32.xlu0 %v2315, 32
  %v3157 = vpop.permute.xlu0 %3156
  %3158 = vrot.lane.b32.xlu0 %v2321, 32
  %v3159 = vpop.permute.xlu0 %3158
  %3160 = vrot.lane.b32.xlu0 %v2327, 32
  %v3161 = vpop.permute.xlu0 %3160
  %3162 = vrot.lane.b32.xlu0 %v2333, 32
  %v3163 = vpop.permute.xlu0 %3162
  %3164 = vrot.lane.b32.xlu0 %v2339, 32
  %v3165 = vpop.permute.xlu0 %3164
  %3166 = vrot.lane.b32.xlu0 %v2345, 32
  %v3167 = vpop.permute.xlu0 %3166
  %3168 = vrot.lane.b32.xlu0 %v2351, 32
  %v3169 = vpop.permute.xlu0 %3168
  %3170 = vrot.lane.b32.xlu0 %v2357, 32
  %v3171 = vpop.permute.xlu0 %3170
  %3172 = vrot.lane.b32.xlu0 %v2363, 32
  %v3173 = vpop.permute.xlu0 %3172
  %3174 = vrot.lane.b32.xlu0 %v2369, 32
  %v3175 = vpop.permute.xlu0 %3174
  %3176 = vrot.lane.b32.xlu0 %v2375, 32
  %v3177 = vpop.permute.xlu0 %3176
  %v3194 = vmul.f32 %v3149, %v1894
  %v3195 = vmul.f32 %v3151, %v1898
  %v3196 = vmul.f32 %v3153, %v1902
  %v3197 = vmul.f32 %v3155, %v1906
  %v3198 = vmul.f32 %v3157, %v1910
  %v3199 = vmul.f32 %v3159, %v1914
  %v3200 = vmul.f32 %v3161, %v1918
  %v3201 = vmul.f32 %v3163, %v1922
  %v3202 = vmul.f32 %v3165, %v1926
  %v3203 = vmul.f32 %v3167, %v1930
  %v3204 = vmul.f32 %v3169, %v1934
  %v3205 = vmul.f32 %v3171, %v1938
  %v3206 = vmul.f32 %v3173, %v1942
  %v3207 = vmul.f32 %v3175, %v1946
  %v3208 = vmul.f32 %v3177, %v1950
  %v3209 = vmul.f32 %v3147, %v1954
  %v3210 = vadd.f32 %v3130, %v3194
  %v3211 = vadd.f32 %v3131, %v3195
  %v3212 = vadd.f32 %v3132, %v3196
  %v3213 = vadd.f32 %v3133, %v3197
  %v3214 = vadd.f32 %v3134, %v3198
  %v3215 = vadd.f32 %v3135, %v3199
  %v3216 = vadd.f32 %v3136, %v3200
  %v3217 = vadd.f32 %v3137, %v3201
  %v3218 = vadd.f32 %v3138, %v3202
  %v3219 = vadd.f32 %v3139, %v3203
  %v3220 = vadd.f32 %v3140, %v3204
  %v3221 = vadd.f32 %v3141, %v3205
  %v3222 = vadd.f32 %v3142, %v3206
  %v3223 = vadd.f32 %v3143, %v3207
  %v3224 = vadd.f32 %v3144, %v3208
  %v3225 = vadd.f32 %v3145, %v3209
  %v3226 = vrot.slane %v2444, 1
  %v3227 = vrot.slane %v2449, 1
  %v3228 = vrot.slane %v2454, 1
  %v3229 = vrot.slane %v2459, 1
  %v3230 = vrot.slane %v2464, 1
  %v3231 = vrot.slane %v2469, 1
  %v3232 = vrot.slane %v2474, 1
  %v3233 = vrot.slane %v2479, 1
  %v3234 = vrot.slane %v2484, 1
  %v3235 = vrot.slane %v2489, 1
  %v3236 = vrot.slane %v2494, 1
  %v3237 = vrot.slane %v2499, 1
  %v3238 = vrot.slane %v2504, 1
  %v3239 = vrot.slane %v2509, 1
  %v3240 = vrot.slane %v2514, 1
  %v3241 = vrot.slane %v2519, 1
  %v3242 = vsel %vm1187, %v3240, %v3241
  %v3243 = vsel %vm1187, %v3239, %v3240
  %v3244 = vsel %vm1187, %v3238, %v3239
  %v3245 = vsel %vm1187, %v3237, %v3238
  %v3246 = vsel %vm1187, %v3236, %v3237
  %v3247 = vsel %vm1187, %v3235, %v3236
  %v3248 = vsel %vm1187, %v3234, %v3235
  %v3249 = vsel %vm1187, %v3233, %v3234
  %v3250 = vsel %vm1187, %v3232, %v3233
  %v3251 = vsel %vm1187, %v3231, %v3232
  %v3252 = vsel %vm1187, %v3230, %v3231
  %v3253 = vsel %vm1187, %v3229, %v3230
  %v3254 = vsel %vm1187, %v3228, %v3229
  %v3255 = vsel %vm1187, %v3227, %v3228
  %v3256 = vsel %vm1187, %v3226, %v3227
  %v3257 = vsel %vm1187, %v3241, %v3226
  %v3258 = vmul.f32 %v3255, %v2022
  %v3259 = vmul.f32 %v3254, %v2026
  %v3260 = vmul.f32 %v3253, %v2030
  %v3261 = vmul.f32 %v3252, %v2034
  %v3262 = vmul.f32 %v3251, %v2038
  %v3263 = vmul.f32 %v3250, %v2042
  %v3264 = vmul.f32 %v3249, %v2046
  %v3265 = vmul.f32 %v3248, %v2050
  %v3266 = vmul.f32 %v3247, %v2054
  %v3267 = vmul.f32 %v3246, %v2058
  %v3268 = vmul.f32 %v3245, %v2062
  %v3269 = vmul.f32 %v3244, %v2066
  %v3270 = vmul.f32 %v3243, %v2070
  %v3271 = vmul.f32 %v3242, %v2074
  %v3272 = vmul.f32 %v3257, %v2078
  %v3273 = vmul.f32 %v3256, %v2082
  %v3274 = vadd.f32 %v3210, %v3258
  %v3275 = vadd.f32 %v3211, %v3259
  %v3276 = vadd.f32 %v3212, %v3260
  %v3277 = vadd.f32 %v3213, %v3261
  %v3278 = vadd.f32 %v3214, %v3262
  %v3279 = vadd.f32 %v3215, %v3263
  %v3280 = vadd.f32 %v3216, %v3264
  %v3281 = vadd.f32 %v3217, %v3265
  %v3282 = vadd.f32 %v3218, %v3266
  %v3283 = vadd.f32 %v3219, %v3267
  %v3284 = vadd.f32 %v3220, %v3268
  %v3285 = vadd.f32 %v3221, %v3269
  %v3286 = vadd.f32 %v3222, %v3270
  %v3287 = vadd.f32 %v3223, %v3271
  %v3288 = vadd.f32 %v3224, %v3272
  %v3289 = vadd.f32 %v3225, %v3273
  %v3290 = vld [vmem:[%s15] sm:$0x1]
  %v3292 = vlaneseq
  %v3293 = vshrl.u32 %v3292, 7
  %v3294 = vsub.s32 0, %v3293
  %v3295 = vrot.slane %v3290, %v3294
  %v3297 = vadd.f32 %v3274, %v3295
  %v3298 = vadd.f32 %v3275, %v3295
  %v3299 = vadd.f32 %v3276, %v3295
  %v3300 = vadd.f32 %v3277, %v3295
  %v3301 = vadd.f32 %v3278, %v3295
  %v3302 = vadd.f32 %v3279, %v3295
  %v3303 = vadd.f32 %v3280, %v3295
  %v3304 = vadd.f32 %v3281, %v3295
  %v3305 = vadd.f32 %v3282, %v3295
  %v3306 = vadd.f32 %v3283, %v3295
  %v3307 = vadd.f32 %v3284, %v3295
  %v3308 = vadd.f32 %v3285, %v3295
  %v3309 = vadd.f32 %v3286, %v3295
  %v3310 = vadd.f32 %v3287, %v3295
  %v3311 = vadd.f32 %v3288, %v3295
  %v3312 = vadd.f32 %v3289, %v3295
  %v3313 = vmax.f32 %v3297, 0.0
  %v3314 = vmax.f32 %v3298, 0.0
  %v3315 = vmax.f32 %v3299, 0.0
  %v3316 = vmax.f32 %v3300, 0.0
  %v3317 = vmax.f32 %v3301, 0.0
  %v3318 = vmax.f32 %v3302, 0.0
  %v3319 = vmax.f32 %v3303, 0.0
  %v3320 = vmax.f32 %v3304, 0.0
  %v3321 = vmax.f32 %v3305, 0.0
  %v3322 = vmax.f32 %v3306, 0.0
  %v3323 = vmax.f32 %v3307, 0.0
  %v3324 = vmax.f32 %v3308, 0.0
  %v3325 = vmax.f32 %v3309, 0.0
  %v3326 = vmax.f32 %v3310, 0.0
  %v3327 = vmax.f32 %v3311, 0.0
  %v3328 = vmax.f32 %v3312, 0.0
  %v3329 = vld [vmem:[%s19] sm:$0xff]
  %v3330 = vld [vmem:[%s19 + $0x8] sm:$0xff]
  %v3331 = vld [vmem:[%s19 + $0x10] sm:$0xff]
  %v3332 = vld [vmem:[%s19 + $0x18] sm:$0xff]
  %v3333 = vld [vmem:[%s19 + $0x20] sm:$0xff]
  %v3334 = vld [vmem:[%s19 + $0x28] sm:$0xff]
  %v3335 = vld [vmem:[%s19 + $0x30] sm:$0xff]
  %v3336 = vld [vmem:[%s19 + $0x38] sm:$0xff]
  %v3337 = vld [vmem:[%s19 + $0x40] sm:$0xff]
  %v3338 = vld [vmem:[%s19 + $0x48] sm:$0xff]
  %v3339 = vld [vmem:[%s19 + $0x50] sm:$0xff]
  %v3340 = vld [vmem:[%s19 + $0x58] sm:$0xff]
  %v3341 = vld [vmem:[%s19 + $0x60] sm:$0xff]
  %v3342 = vld [vmem:[%s19 + $0x68] sm:$0xff]
  %v3343 = vld [vmem:[%s19 + $0x70] sm:$0xff]
  %v3344 = vld [vmem:[%s19 + $0x78] sm:$0xff]
  %v3345 = vld [vmem:[%s19 + $0x80] sm:$0xff]
  %v3346 = vld [vmem:[%s19 + $0x88] sm:$0xff]
  %v3347 = vld [vmem:[%s19 + $0x90] sm:$0xff]
  %v3348 = vld [vmem:[%s19 + $0x98] sm:$0xff]
  %v3349 = vld [vmem:[%s19 + $0xa0] sm:$0xff]
  %v3350 = vld [vmem:[%s19 + $0xa8] sm:$0xff]
  %v3351 = vld [vmem:[%s19 + $0xb0] sm:$0xff]
  %v3352 = vld [vmem:[%s19 + $0xb8] sm:$0xff]
  %v3353 = vld [vmem:[%s19 + $0xc0] sm:$0xff]
  %v3354 = vld [vmem:[%s19 + $0xc8] sm:$0xff]
  %v3355 = vld [vmem:[%s19 + $0xd0] sm:$0xff]
  %v3356 = vld [vmem:[%s19 + $0xd8] sm:$0xff]
  %v3357 = vld [vmem:[%s19 + $0xe0] sm:$0xff]
  %v3358 = vld [vmem:[%s19 + $0xe8] sm:$0xff]
  %v3359 = vld [vmem:[%s19 + $0xf0] sm:$0xff]
  %v3360 = vld [vmem:[%s19 + $0xf8] sm:$0xff]
  %v3361 = vld [vmem:[%s19 + $0x100] sm:$0xff]
  %v3362 = vld [vmem:[%s19 + $0x108] sm:$0xff]
  %v3363 = vld [vmem:[%s19 + $0x110] sm:$0xff]
  %v3364 = vld [vmem:[%s19 + $0x118] sm:$0xff]
  %v3365 = vld [vmem:[%s19 + $0x120] sm:$0xff]
  %v3366 = vld [vmem:[%s19 + $0x128] sm:$0xff]
  %v3367 = vld [vmem:[%s19 + $0x130] sm:$0xff]
  %v3368 = vld [vmem:[%s19 + $0x138] sm:$0xff]
  %v3369 = vld [vmem:[%s19 + $0x140] sm:$0xff]
  %v3370 = vld [vmem:[%s19 + $0x148] sm:$0xff]
  %v3371 = vld [vmem:[%s19 + $0x150] sm:$0xff]
  %v3372 = vld [vmem:[%s19 + $0x158] sm:$0xff]
  %v3373 = vld [vmem:[%s19 + $0x160] sm:$0xff]
  %v3374 = vld [vmem:[%s19 + $0x168] sm:$0xff]
  %v3375 = vld [vmem:[%s19 + $0x170] sm:$0xff]
  %v3376 = vld [vmem:[%s19 + $0x178] sm:$0xff]
  %v3377 = vld [vmem:[%s19 + $0x180] sm:$0xff]
  %v3378 = vld [vmem:[%s19 + $0x188] sm:$0xff]
  %v3379 = vld [vmem:[%s19 + $0x190] sm:$0xff]
  %v3380 = vld [vmem:[%s19 + $0x198] sm:$0xff]
  %v3381 = vld [vmem:[%s19 + $0x1a0] sm:$0xff]
  %v3382 = vld [vmem:[%s19 + $0x1a8] sm:$0xff]
  %v3383 = vld [vmem:[%s19 + $0x1b0] sm:$0xff]
  %v3384 = vld [vmem:[%s19 + $0x1b8] sm:$0xff]
  %v3385 = vld [vmem:[%s19 + $0x1c0] sm:$0xff]
  %v3386 = vld [vmem:[%s19 + $0x1c8] sm:$0xff]
  %v3387 = vld [vmem:[%s19 + $0x1d0] sm:$0xff]
  %v3388 = vld [vmem:[%s19 + $0x1d8] sm:$0xff]
  %v3389 = vld [vmem:[%s19 + $0x1e0] sm:$0xff]
  %v3390 = vld [vmem:[%s19 + $0x1e8] sm:$0xff]
  %v3391 = vld [vmem:[%s19 + $0x1f0] sm:$0xff]
  %v3392 = vld [vmem:[%s19 + $0x1f8] sm:$0xff]
  %v3394 = vsel %vm2167, %v3313, 0
  %v3397 = vsel %vm2167, %v3314, 0
  %v3400 = vsel %vm2167, %v3315, 0
  %v3403 = vsel %vm2167, %v3316, 0
  %v3406 = vsel %vm2167, %v3317, 0
  %v3409 = vsel %vm2167, %v3318, 0
  %v3412 = vsel %vm2167, %v3319, 0
  %v3415 = vsel %vm2167, %v3320, 0
  %v3418 = vsel %vm2167, %v3321, 0
  %v3421 = vsel %vm2167, %v3322, 0
  %v3424 = vsel %vm2167, %v3323, 0
  %v3427 = vsel %vm2167, %v3324, 0
  %v3430 = vsel %vm2167, %v3325, 0
  %v3433 = vsel %vm2167, %v3326, 0
  %v3436 = vsel %vm2167, %v3327, 0
  %v3439 = vsel %vm2167, %v3328, 0
  %3441 = vmatprep.subr.mxu0 %v3330
  %3442 = vmatpush1.msra.mxu0 %v3329
  %3443 = vmatprep.subr.mxu0 %v3346
  %3444 = vmatpush1.msra.mxu0 %v3345
  %3445 = vmatprep.subr.mxu0 %v3362
  %3446 = vmatpush1.msra.mxu0 %v3361
  %3447 = vmatprep.subr.mxu0 %v3378
  %3448 = vmatpush1.msra.mxu0 %v3377
  %3449 = vmatprep.subr.mxu0 0.0
  %3450 = vmatpush1.msra.mxu0 0.0
  %3451 = vmatprep.subr.mxu0 0.0
  %3452 = vmatpush1.msra.mxu0 0.0
  %3453 = vmatprep.subr.mxu0 0.0
  %3454 = vmatpush1.msra.mxu0 0.0
  %3455 = vmatprep.subr.mxu0 0.0
  %3456 = vmatpush1.msra.mxu0 0.0
  %3457 = vmatprep.subr.mxu0 0.0
  %3458 = vmatpush1.msra.mxu0 0.0
  %3459 = vmatprep.subr.mxu0 0.0
  %3460 = vmatpush1.msra.mxu0 0.0
  %3461 = vmatprep.subr.mxu0 0.0
  %3462 = vmatpush1.msra.mxu0 0.0
  %3463 = vmatprep.subr.mxu0 0.0
  %3464 = vmatpush1.msra.mxu0 0.0
  %3465 = vmatprep.subr.mxu0 0.0
  %3466 = vmatpush1.msra.mxu0 0.0
  %3467 = vmatprep.subr.mxu0 0.0
  %3468 = vmatpush1.msra.mxu0 0.0
  %3469 = vmatprep.subr.mxu0 0.0
  %3470 = vmatpush1.msra.mxu0 0.0
  %3471 = vmatprep.subr.mxu0 0.0
  %3472 = vmatpush1.msra.mxu0 0.0
  %3473 = vmatprep.subr.mxu0 0.0
  %3474 = vmatpush1.msra.mxu0 0.0
  %3475 = vmatprep.subr.mxu0 0.0
  %3476 = vmatpush1.msra.mxu0 0.0
  %3477 = vmatprep.subr.mxu0 0.0
  %3478 = vmatpush1.msra.mxu0 0.0
  %3479 = vmatprep.subr.mxu0 0.0
  %3480 = vmatpush1.msra.mxu0 0.0
  %3481 = vmatprep.subr.mxu0 0.0
  %3482 = vmatpush1.msra.mxu0 0.0
  %3483 = vmatprep.subr.mxu0 0.0
  %3484 = vmatpush1.msra.mxu0 0.0
  %3485 = vmatprep.subr.mxu0 0.0
  %3486 = vmatpush1.msra.mxu0 0.0
  %3487 = vmatprep.subr.mxu0 0.0
  %3488 = vmatpush1.msra.mxu0 0.0
  %3489 = vmatprep.subr.mxu0 0.0
  %3490 = vmatpush1.msra.mxu0 0.0
  %3491 = vmatprep.subr.mxu0 0.0
  %3492 = vmatpush1.msra.mxu0 0.0
  %3493 = vmatprep.subr.mxu0 0.0
  %3494 = vmatpush1.msra.mxu0 0.0
  %3495 = vmatprep.subr.mxu0 0.0
  %3496 = vmatpush1.msra.mxu0 0.0
  %3497 = vmatprep.subr.mxu0 0.0
  %3498 = vmatpush1.msra.mxu0 0.0
  %3499 = vmatprep.subr.mxu0 0.0
  %3500 = vmatpush1.msra.mxu0 0.0
  %3501 = vmatprep.subr.mxu0 0.0
  %3502 = vmatpush1.msra.mxu0 0.0
  %3503 = vmatprep.subr.mxu0 0.0
  %3504 = vmatpush1.msra.mxu0 0.0
  %3505 = vmatprep.mubr.f32.mxu0 0.0
  %3506 = vmatmul.mubr.f32.gmra.mrb[0].mxu0 %v3394
  %v3507 = vpop.f32.mrb[0].mxu0
  %v3508 = vadd.f32 0.0, %v3507
  %v3509 = vpop.f32.mrb[0].mxu0
  %v3510 = vadd.f32 0.0, %v3509
  %3511 = vmatprep.mubr.f32.mxu0 0.0
  %3512 = vmatmul.mubr.f32.gmra.mrb[0].mxu0 %v3397
  %v3513 = vpop.f32.mrb[0].mxu0
  %v3514 = vadd.f32 0.0, %v3513
  %v3515 = vpop.f32.mrb[0].mxu0
  %v3516 = vadd.f32 0.0, %v3515
  %3517 = vmatprep.mubr.f32.mxu0 0.0
  %3518 = vmatmul.mubr.f32.gmra.mrb[0].mxu0 %v3400
  %v3519 = vpop.f32.mrb[0].mxu0
  %v3520 = vadd.f32 0.0, %v3519
  %v3521 = vpop.f32.mrb[0].mxu0
  %v3522 = vadd.f32 0.0, %v3521
  %3523 = vmatprep.mubr.f32.mxu0 0.0
  %3524 = vmatmul.mubr.f32.gmra.mrb[0].mxu0 %v3403
  %v3525 = vpop.f32.mrb[0].mxu0
  %v3526 = vadd.f32 0.0, %v3525
  %v3527 = vpop.f32.mrb[0].mxu0
  %v3528 = vadd.f32 0.0, %v3527
  %3529 = vmatprep.mubr.f32.mxu0 0.0
  %3530 = vmatmul.mubr.f32.gmra.mrb[0].mxu0 %v3406
  %v3531 = vpop.f32.mrb[0].mxu0
  %v3532 = vadd.f32 0.0, %v3531
  %v3533 = vpop.f32.mrb[0].mxu0
  %v3534 = vadd.f32 0.0, %v3533
  %3535 = vmatprep.mubr.f32.mxu0 0.0
  %3536 = vmatmul.mubr.f32.gmra.mrb[0].mxu0 %v3409
  %v3537 = vpop.f32.mrb[0].mxu0
  %v3538 = vadd.f32 0.0, %v3537
  %v3539 = vpop.f32.mrb[0].mxu0
  %v3540 = vadd.f32 0.0, %v3539
  %3541 = vmatprep.mubr.f32.mxu0 0.0
  %3542 = vmatmul.mubr.f32.gmra.mrb[0].mxu0 %v3412
  %v3543 = vpop.f32.mrb[0].mxu0
  %v3544 = vadd.f32 0.0, %v3543
  %v3545 = vpop.f32.mrb[0].mxu0
  %v3546 = vadd.f32 0.0, %v3545
  %3547 = vmatprep.mubr.f32.mxu0 0.0
  %3548 = vmatmul.mubr.f32.gmra.mrb[0].mxu0 %v3415
  %v3549 = vpop.f32.mrb[0].mxu0
  %v3550 = vadd.f32 0.0, %v3549
  %v3551 = vpop.f32.mrb[0].mxu0
  %v3552 = vadd.f32 0.0, %v3551
  %3553 = vmatprep.mubr.f32.mxu0 0.0
  %3554 = vmatmul.mubr.f32.gmra.mrb[0].mxu0 %v3418
  %v3555 = vpop.f32.mrb[0].mxu0
  %v3556 = vadd.f32 0.0, %v3555
  %v3557 = vpop.f32.mrb[0].mxu0
  %v3558 = vadd.f32 0.0, %v3557
  %3559 = vmatprep.mubr.f32.mxu0 0.0
  %3560 = vmatmul.mubr.f32.gmra.mrb[0].mxu0 %v3421
  %v3561 = vpop.f32.mrb[0].mxu0
  %v3562 = vadd.f32 0.0, %v3561
  %v3563 = vpop.f32.mrb[0].mxu0
  %v3564 = vadd.f32 0.0, %v3563
  %3565 = vmatprep.mubr.f32.mxu0 0.0
  %3566 = vmatmul.mubr.f32.gmra.mrb[0].mxu0 %v3424
  %v3567 = vpop.f32.mrb[0].mxu0
  %v3568 = vadd.f32 0.0, %v3567
  %v3569 = vpop.f32.mrb[0].mxu0
  %v3570 = vadd.f32 0.0, %v3569
  %3571 = vmatprep.mubr.f32.mxu0 0.0
  %3572 = vmatmul.mubr.f32.gmra.mrb[0].mxu0 %v3427
  %v3573 = vpop.f32.mrb[0].mxu0
  %v3574 = vadd.f32 0.0, %v3573
  %v3575 = vpop.f32.mrb[0].mxu0
  %v3576 = vadd.f32 0.0, %v3575
  %3577 = vmatprep.mubr.f32.mxu0 0.0
  %3578 = vmatmul.mubr.f32.gmra.mrb[0].mxu0 %v3430
  %v3579 = vpop.f32.mrb[0].mxu0
  %v3580 = vadd.f32 0.0, %v3579
  %v3581 = vpop.f32.mrb[0].mxu0
  %v3582 = vadd.f32 0.0, %v3581
  %3583 = vmatprep.mubr.f32.mxu0 0.0
  %3584 = vmatmul.mubr.f32.gmra.mrb[0].mxu0 %v3433
  %v3585 = vpop.f32.mrb[0].mxu0
  %v3586 = vadd.f32 0.0, %v3585
  %v3587 = vpop.f32.mrb[0].mxu0
  %v3588 = vadd.f32 0.0, %v3587
  %3589 = vmatprep.mubr.f32.mxu0 0.0
  %3590 = vmatmul.mubr.f32.gmra.mrb[0].mxu0 %v3436
  %v3591 = vpop.f32.mrb[0].mxu0
  %v3592 = vadd.f32 0.0, %v3591
  %v3593 = vpop.f32.mrb[0].mxu0
  %v3594 = vadd.f32 0.0, %v3593
  %3595 = vmatprep.mubr.f32.mxu0 0.0
  %3596 = vmatmul.mubr.f32.gmra.mrb[0].mxu0 %v3439
  %v3597 = vpop.f32.mrb[0].mxu0
  %v3598 = vadd.f32 0.0, %v3597
  %v3599 = vpop.f32.mrb[0].mxu0
  %v3600 = vadd.f32 0.0, %v3599
  %3601 = vdwg.mxu0
  %3602 = vmatprep.subr.mxu0 %v3332
  %3603 = vmatpush1.msra.mxu0 %v3331
  %3604 = vmatprep.subr.mxu0 %v3348
  %3605 = vmatpush1.msra.mxu0 %v3347
  %3606 = vmatprep.subr.mxu0 %v3364
  %3607 = vmatpush1.msra.mxu0 %v3363
  %3608 = vmatprep.subr.mxu0 %v3380
  %3609 = vmatpush1.msra.mxu0 %v3379
  %3610 = vmatprep.subr.mxu0 0.0
  %3611 = vmatpush1.msra.mxu0 0.0
  %3612 = vmatprep.subr.mxu0 0.0
  %3613 = vmatpush1.msra.mxu0 0.0
  %3614 = vmatprep.subr.mxu0 0.0
  %3615 = vmatpush1.msra.mxu0 0.0
  %3616 = vmatprep.subr.mxu0 0.0
  %3617 = vmatpush1.msra.mxu0 0.0
  %3618 = vmatprep.subr.mxu0 0.0
  %3619 = vmatpush1.msra.mxu0 0.0
  %3620 = vmatprep.subr.mxu0 0.0
  %3621 = vmatpush1.msra.mxu0 0.0
  %3622 = vmatprep.subr.mxu0 0.0
  %3623 = vmatpush1.msra.mxu0 0.0
  %3624 = vmatprep.subr.mxu0 0.0
  %3625 = vmatpush1.msra.mxu0 0.0
  %3626 = vmatprep.subr.mxu0 0.0
  %3627 = vmatpush1.msra.mxu0 0.0
  %3628 = vmatprep.subr.mxu0 0.0
  %3629 = vmatpush1.msra.mxu0 0.0
  %3630 = vmatprep.subr.mxu0 0.0
  %3631 = vmatpush1.msra.mxu0 0.0
  %3632 = vmatprep.subr.mxu0 0.0
  %3633 = vmatpush1.msra.mxu0 0.0
  %3634 = vmatprep.subr.mxu0 0.0
  %3635 = vmatpush1.msra.mxu0 0.0
  %3636 = vmatprep.subr.mxu0 0.0
  %3637 = vmatpush1.msra.mxu0 0.0
  %3638 = vmatprep.subr.mxu0 0.0
  %3639 = vmatpush1.msra.mxu0 0.0
  %3640 = vmatprep.subr.mxu0 0.0
  %3641 = vmatpush1.msra.mxu0 0.0
  %3642 = vmatprep.subr.mxu0 0.0
  %3643 = vmatpush1.msra.mxu0 0.0
  %3644 = vmatprep.subr.mxu0 0.0
  %3645 = vmatpush1.msra.mxu0 0.0
  %3646 = vmatprep.subr.mxu0 0.0
  %3647 = vmatpush1.msra.mxu0 0.0
  %3648 = vmatprep.subr.mxu0 0.0
  %3649 = vmatpush1.msra.mxu0 0.0
  %3650 = vmatprep.subr.mxu0 0.0
  %3651 = vmatpush1.msra.mxu0 0.0
  %3652 = vmatprep.subr.mxu0 0.0
  %3653 = vmatpush1.msra.mxu0 0.0
  %3654 = vmatprep.subr.mxu0 0.0
  %3655 = vmatpush1.msra.mxu0 0.0
  %3656 = vmatprep.subr.mxu0 0.0
  %3657 = vmatpush1.msra.mxu0 0.0
  %3658 = vmatprep.subr.mxu0 0.0
  %3659 = vmatpush1.msra.mxu0 0.0
  %3660 = vmatprep.subr.mxu0 0.0
  %3661 = vmatpush1.msra.mxu0 0.0
  %3662 = vmatprep.subr.mxu0 0.0
  %3663 = vmatpush1.msra.mxu0 0.0
  %3664 = vmatprep.subr.mxu0 0.0
  %3665 = vmatpush1.msra.mxu0 0.0
  %3666 = vmatprep.mubr.f32.mxu0 0.0
  %3667 = vmatmul.mubr.f32.gmra.mrb[0].mxu0 %v3394
  %v3668 = vpop.f32.mrb[0].mxu0
  %v3669 = vadd.f32 0.0, %v3668
  %v3670 = vpop.f32.mrb[0].mxu0
  %v3671 = vadd.f32 0.0, %v3670
  %3672 = vmatprep.mubr.f32.mxu0 0.0
  %3673 = vmatmul.mubr.f32.gmra.mrb[0].mxu0 %v3397
  %v3674 = vpop.f32.mrb[0].mxu0
  %v3675 = vadd.f32 0.0, %v3674
  %v3676 = vpop.f32.mrb[0].mxu0
  %v3677 = vadd.f32 0.0, %v3676
  %3678 = vmatprep.mubr.f32.mxu0 0.0
  %3679 = vmatmul.mubr.f32.gmra.mrb[0].mxu0 %v3400
  %v3680 = vpop.f32.mrb[0].mxu0
  %v3681 = vadd.f32 0.0, %v3680
  %v3682 = vpop.f32.mrb[0].mxu0
  %v3683 = vadd.f32 0.0, %v3682
  %3684 = vmatprep.mubr.f32.mxu0 0.0
  %3685 = vmatmul.mubr.f32.gmra.mrb[0].mxu0 %v3403
  %v3686 = vpop.f32.mrb[0].mxu0
  %v3687 = vadd.f32 0.0, %v3686
  %v3688 = vpop.f32.mrb[0].mxu0
  %v3689 = vadd.f32 0.0, %v3688
  %3690 = vmatprep.mubr.f32.mxu0 0.0
  %3691 = vmatmul.mubr.f32.gmra.mrb[0].mxu0 %v3406
  %v3692 = vpop.f32.mrb[0].mxu0
  %v3693 = vadd.f32 0.0, %v3692
  %v3694 = vpop.f32.mrb[0].mxu0
  %v3695 = vadd.f32 0.0, %v3694
  %3696 = vmatprep.mubr.f32.mxu0 0.0
  %3697 = vmatmul.mubr.f32.gmra.mrb[0].mxu0 %v3409
  %v3698 = vpop.f32.mrb[0].mxu0
  %v3699 = vadd.f32 0.0, %v3698
  %v3700 = vpop.f32.mrb[0].mxu0
  %v3701 = vadd.f32 0.0, %v3700
  %3702 = vmatprep.mubr.f32.mxu0 0.0
  %3703 = vmatmul.mubr.f32.gmra.mrb[0].mxu0 %v3412
  %v3704 = vpop.f32.mrb[0].mxu0
  %v3705 = vadd.f32 0.0, %v3704
  %v3706 = vpop.f32.mrb[0].mxu0
  %v3707 = vadd.f32 0.0, %v3706
  %3708 = vmatprep.mubr.f32.mxu0 0.0
  %3709 = vmatmul.mubr.f32.gmra.mrb[0].mxu0 %v3415
  %v3710 = vpop.f32.mrb[0].mxu0
  %v3711 = vadd.f32 0.0, %v3710
  %v3712 = vpop.f32.mrb[0].mxu0
  %v3713 = vadd.f32 0.0, %v3712
  %3714 = vmatprep.mubr.f32.mxu0 0.0
  %3715 = vmatmul.mubr.f32.gmra.mrb[0].mxu0 %v3418
  %v3716 = vpop.f32.mrb[0].mxu0
  %v3717 = vadd.f32 0.0, %v3716
  %v3718 = vpop.f32.mrb[0].mxu0
  %v3719 = vadd.f32 0.0, %v3718
  %3720 = vmatprep.mubr.f32.mxu0 0.0
  %3721 = vmatmul.mubr.f32.gmra.mrb[0].mxu0 %v3421
  %v3722 = vpop.f32.mrb[0].mxu0
  %v3723 = vadd.f32 0.0, %v3722
  %v3724 = vpop.f32.mrb[0].mxu0
  %v3725 = vadd.f32 0.0, %v3724
  %3726 = vmatprep.mubr.f32.mxu0 0.0
  %3727 = vmatmul.mubr.f32.gmra.mrb[0].mxu0 %v3424
  %v3728 = vpop.f32.mrb[0].mxu0
  %v3729 = vadd.f32 0.0, %v3728
  %v3730 = vpop.f32.mrb[0].mxu0
  %v3731 = vadd.f32 0.0, %v3730
  %3732 = vmatprep.mubr.f32.mxu0 0.0
  %3733 = vmatmul.mubr.f32.gmra.mrb[0].mxu0 %v3427
  %v3734 = vpop.f32.mrb[0].mxu0
  %v3735 = vadd.f32 0.0, %v3734
  %v3736 = vpop.f32.mrb[0].mxu0
  %v3737 = vadd.f32 0.0, %v3736
  %3738 = vmatprep.mubr.f32.mxu0 0.0
  %3739 = vmatmul.mubr.f32.gmra.mrb[0].mxu0 %v3430
  %v3740 = vpop.f32.mrb[0].mxu0
  %v3741 = vadd.f32 0.0, %v3740
  %v3742 = vpop.f32.mrb[0].mxu0
  %v3743 = vadd.f32 0.0, %v3742
  %3744 = vmatprep.mubr.f32.mxu0 0.0
  %3745 = vmatmul.mubr.f32.gmra.mrb[0].mxu0 %v3433
  %v3746 = vpop.f32.mrb[0].mxu0
  %v3747 = vadd.f32 0.0, %v3746
  %v3748 = vpop.f32.mrb[0].mxu0
  %v3749 = vadd.f32 0.0, %v3748
  %3750 = vmatprep.mubr.f32.mxu0 0.0
  %3751 = vmatmul.mubr.f32.gmra.mrb[0].mxu0 %v3436
  %v3752 = vpop.f32.mrb[0].mxu0
  %v3753 = vadd.f32 0.0, %v3752
  %v3754 = vpop.f32.mrb[0].mxu0
  %v3755 = vadd.f32 0.0, %v3754
  %3756 = vmatprep.mubr.f32.mxu0 0.0
  %3757 = vmatmul.mubr.f32.gmra.mrb[0].mxu0 %v3439
  %v3758 = vpop.f32.mrb[0].mxu0
  %v3759 = vadd.f32 0.0, %v3758
  %v3760 = vpop.f32.mrb[0].mxu0
  %v3761 = vadd.f32 0.0, %v3760
  %3762 = vdwg.mxu0
  %3763 = vmatprep.subr.mxu0 %v3334
  %3764 = vmatpush1.msra.mxu0 %v3333
  %3765 = vmatprep.subr.mxu0 %v3350
  %3766 = vmatpush1.msra.mxu0 %v3349
  %3767 = vmatprep.subr.mxu0 %v3366
  %3768 = vmatpush1.msra.mxu0 %v3365
  %3769 = vmatprep.subr.mxu0 %v3382
  %3770 = vmatpush1.msra.mxu0 %v3381
  %3771 = vmatprep.subr.mxu0 0.0
  %3772 = vmatpush1.msra.mxu0 0.0
  %3773 = vmatprep.subr.mxu0 0.0
  %3774 = vmatpush1.msra.mxu0 0.0
  %3775 = vmatprep.subr.mxu0 0.0
  %3776 = vmatpush1.msra.mxu0 0.0
  %3777 = vmatprep.subr.mxu0 0.0
  %3778 = vmatpush1.msra.mxu0 0.0
  %3779 = vmatprep.subr.mxu0 0.0
  %3780 = vmatpush1.msra.mxu0 0.0
  %3781 = vmatprep.subr.mxu0 0.0
  %3782 = vmatpush1.msra.mxu0 0.0
  %3783 = vmatprep.subr.mxu0 0.0
  %3784 = vmatpush1.msra.mxu0 0.0
  %3785 = vmatprep.subr.mxu0 0.0
  %3786 = vmatpush1.msra.mxu0 0.0
  %3787 = vmatprep.subr.mxu0 0.0
  %3788 = vmatpush1.msra.mxu0 0.0
  %3789 = vmatprep.subr.mxu0 0.0
  %3790 = vmatpush1.msra.mxu0 0.0
  %3791 = vmatprep.subr.mxu0 0.0
  %3792 = vmatpush1.msra.mxu0 0.0
  %3793 = vmatprep.subr.mxu0 0.0
  %3794 = vmatpush1.msra.mxu0 0.0
  %3795 = vmatprep.subr.mxu0 0.0
  %3796 = vmatpush1.msra.mxu0 0.0
  %3797 = vmatprep.subr.mxu0 0.0
  %3798 = vmatpush1.msra.mxu0 0.0
  %3799 = vmatprep.subr.mxu0 0.0
  %3800 = vmatpush1.msra.mxu0 0.0
  %3801 = vmatprep.subr.mxu0 0.0
  %3802 = vmatpush1.msra.mxu0 0.0
  %3803 = vmatprep.subr.mxu0 0.0
  %3804 = vmatpush1.msra.mxu0 0.0
  %3805 = vmatprep.subr.mxu0 0.0
  %3806 = vmatpush1.msra.mxu0 0.0
  %3807 = vmatprep.subr.mxu0 0.0
  %3808 = vmatpush1.msra.mxu0 0.0
  %3809 = vmatprep.subr.mxu0 0.0
  %3810 = vmatpush1.msra.mxu0 0.0
  %3811 = vmatprep.subr.mxu0 0.0
  %3812 = vmatpush1.msra.mxu0 0.0
  %3813 = vmatprep.subr.mxu0 0.0
  %3814 = vmatpush1.msra.mxu0 0.0
  %3815 = vmatprep.subr.mxu0 0.0
  %3816 = vmatpush1.msra.mxu0 0.0
  %3817 = vmatprep.subr.mxu0 0.0
  %3818 = vmatpush1.msra.mxu0 0.0
  %3819 = vmatprep.subr.mxu0 0.0
  %3820 = vmatpush1.msra.mxu0 0.0
  %3821 = vmatprep.subr.mxu0 0.0
  %3822 = vmatpush1.msra.mxu0 0.0
  %3823 = vmatprep.subr.mxu0 0.0
  %3824 = vmatpush1.msra.mxu0 0.0
  %3825 = vmatprep.subr.mxu0 0.0
  %3826 = vmatpush1.msra.mxu0 0.0
  %3827 = vmatprep.mubr.f32.mxu0 0.0
  %3828 = vmatmul.mubr.f32.gmra.mrb[0].mxu0 %v3394
  %v3829 = vpop.f32.mrb[0].mxu0
  %v3830 = vadd.f32 0.0, %v3829
  %v3831 = vpop.f32.mrb[0].mxu0
  %v3832 = vadd.f32 0.0, %v3831
  %3833 = vmatprep.mubr.f32.mxu0 0.0
  %3834 = vmatmul.mubr.f32.gmra.mrb[0].mxu0 %v3397
  %v3835 = vpop.f32.mrb[0].mxu0
  %v3836 = vadd.f32 0.0, %v3835
  %v3837 = vpop.f32.mrb[0].mxu0
  %v3838 = vadd.f32 0.0, %v3837
  %3839 = vmatprep.mubr.f32.mxu0 0.0
  %3840 = vmatmul.mubr.f32.gmra.mrb[0].mxu0 %v3400
  %v3841 = vpop.f32.mrb[0].mxu0
  %v3842 = vadd.f32 0.0, %v3841
  %v3843 = vpop.f32.mrb[0].mxu0
  %v3844 = vadd.f32 0.0, %v3843
  %3845 = vmatprep.mubr.f32.mxu0 0.0
  %3846 = vmatmul.mubr.f32.gmra.mrb[0].mxu0 %v3403
  %v3847 = vpop.f32.mrb[0].mxu0
  %v3848 = vadd.f32 0.0, %v3847
  %v3849 = vpop.f32.mrb[0].mxu0
  %v3850 = vadd.f32 0.0, %v3849
  %3851 = vmatprep.mubr.f32.mxu0 0.0
  %3852 = vmatmul.mubr.f32.gmra.mrb[0].mxu0 %v3406
  %v3853 = vpop.f32.mrb[0].mxu0
  %v3854 = vadd.f32 0.0, %v3853
  %v3855 = vpop.f32.mrb[0].mxu0
  %v3856 = vadd.f32 0.0, %v3855
  %3857 = vmatprep.mubr.f32.mxu0 0.0
  %3858 = vmatmul.mubr.f32.gmra.mrb[0].mxu0 %v3409
  %v3859 = vpop.f32.mrb[0].mxu0
  %v3860 = vadd.f32 0.0, %v3859
  %v3861 = vpop.f32.mrb[0].mxu0
  %v3862 = vadd.f32 0.0, %v3861
  %3863 = vmatprep.mubr.f32.mxu0 0.0
  %3864 = vmatmul.mubr.f32.gmra.mrb[0].mxu0 %v3412
  %v3865 = vpop.f32.mrb[0].mxu0
  %v3866 = vadd.f32 0.0, %v3865
  %v3867 = vpop.f32.mrb[0].mxu0
  %v3868 = vadd.f32 0.0, %v3867
  %3869 = vmatprep.mubr.f32.mxu0 0.0
  %3870 = vmatmul.mubr.f32.gmra.mrb[0].mxu0 %v3415
  %v3871 = vpop.f32.mrb[0].mxu0
  %v3872 = vadd.f32 0.0, %v3871
  %v3873 = vpop.f32.mrb[0].mxu0
  %v3874 = vadd.f32 0.0, %v3873
  %3875 = vmatprep.mubr.f32.mxu0 0.0
  %3876 = vmatmul.mubr.f32.gmra.mrb[0].mxu0 %v3418
  %v3877 = vpop.f32.mrb[0].mxu0
  %v3878 = vadd.f32 0.0, %v3877
  %v3879 = vpop.f32.mrb[0].mxu0
  %v3880 = vadd.f32 0.0, %v3879
  %3881 = vmatprep.mubr.f32.mxu0 0.0
  %3882 = vmatmul.mubr.f32.gmra.mrb[0].mxu0 %v3421
  %v3883 = vpop.f32.mrb[0].mxu0
  %v3884 = vadd.f32 0.0, %v3883
  %v3885 = vpop.f32.mrb[0].mxu0
  %v3886 = vadd.f32 0.0, %v3885
  %3887 = vmatprep.mubr.f32.mxu0 0.0
  %3888 = vmatmul.mubr.f32.gmra.mrb[0].mxu0 %v3424
  %v3889 = vpop.f32.mrb[0].mxu0
  %v3890 = vadd.f32 0.0, %v3889
  %v3891 = vpop.f32.mrb[0].mxu0
  %v3892 = vadd.f32 0.0, %v3891
  %3893 = vmatprep.mubr.f32.mxu0 0.0
  %3894 = vmatmul.mubr.f32.gmra.mrb[0].mxu0 %v3427
  %v3895 = vpop.f32.mrb[0].mxu0
  %v3896 = vadd.f32 0.0, %v3895
  %v3897 = vpop.f32.mrb[0].mxu0
  %v3898 = vadd.f32 0.0, %v3897
  %3899 = vmatprep.mubr.f32.mxu0 0.0
  %3900 = vmatmul.mubr.f32.gmra.mrb[0].mxu0 %v3430
  %v3901 = vpop.f32.mrb[0].mxu0
  %v3902 = vadd.f32 0.0, %v3901
  %v3903 = vpop.f32.mrb[0].mxu0
  %v3904 = vadd.f32 0.0, %v3903
  %3905 = vmatprep.mubr.f32.mxu0 0.0
  %3906 = vmatmul.mubr.f32.gmra.mrb[0].mxu0 %v3433
  %v3907 = vpop.f32.mrb[0].mxu0
  %v3908 = vadd.f32 0.0, %v3907
  %v3909 = vpop.f32.mrb[0].mxu0
  %v3910 = vadd.f32 0.0, %v3909
  %3911 = vmatprep.mubr.f32.mxu0 0.0
  %3912 = vmatmul.mubr.f32.gmra.mrb[0].mxu0 %v3436
  %v3913 = vpop.f32.mrb[0].mxu0
  %v3914 = vadd.f32 0.0, %v3913
  %v3915 = vpop.f32.mrb[0].mxu0
  %v3916 = vadd.f32 0.0, %v3915
  %3917 = vmatprep.mubr.f32.mxu0 0.0
  %3918 = vmatmul.mubr.f32.gmra.mrb[0].mxu0 %v3439
  %v3919 = vpop.f32.mrb[0].mxu0
  %v3920 = vadd.f32 0.0, %v3919
  %v3921 = vpop.f32.mrb[0].mxu0
  %v3922 = vadd.f32 0.0, %v3921
  %3923 = vdwg.mxu0
  %3924 = vmatprep.subr.mxu0 %v3336
  %3925 = vmatpush1.msra.mxu0 %v3335
  %3926 = vmatprep.subr.mxu0 %v3352
  %3927 = vmatpush1.msra.mxu0 %v3351
  %3928 = vmatprep.subr.mxu0 %v3368
  %3929 = vmatpush1.msra.mxu0 %v3367
  %3930 = vmatprep.subr.mxu0 %v3384
  %3931 = vmatpush1.msra.mxu0 %v3383
  %3932 = vmatprep.subr.mxu0 0.0
  %3933 = vmatpush1.msra.mxu0 0.0
  %3934 = vmatprep.subr.mxu0 0.0
  %3935 = vmatpush1.msra.mxu0 0.0
  %3936 = vmatprep.subr.mxu0 0.0
  %3937 = vmatpush1.msra.mxu0 0.0
  %3938 = vmatprep.subr.mxu0 0.0
  %3939 = vmatpush1.msra.mxu0 0.0
  %3940 = vmatprep.subr.mxu0 0.0
  %3941 = vmatpush1.msra.mxu0 0.0
  %3942 = vmatprep.subr.mxu0 0.0
  %3943 = vmatpush1.msra.mxu0 0.0
  %3944 = vmatprep.subr.mxu0 0.0
  %3945 = vmatpush1.msra.mxu0 0.0
  %3946 = vmatprep.subr.mxu0 0.0
  %3947 = vmatpush1.msra.mxu0 0.0
  %3948 = vmatprep.subr.mxu0 0.0
  %3949 = vmatpush1.msra.mxu0 0.0
  %3950 = vmatprep.subr.mxu0 0.0
  %3951 = vmatpush1.msra.mxu0 0.0
  %3952 = vmatprep.subr.mxu0 0.0
  %3953 = vmatpush1.msra.mxu0 0.0
  %3954 = vmatprep.subr.mxu0 0.0
  %3955 = vmatpush1.msra.mxu0 0.0
  %3956 = vmatprep.subr.mxu0 0.0
  %3957 = vmatpush1.msra.mxu0 0.0
  %3958 = vmatprep.subr.mxu0 0.0
  %3959 = vmatpush1.msra.mxu0 0.0
  %3960 = vmatprep.subr.mxu0 0.0
  %3961 = vmatpush1.msra.mxu0 0.0
  %3962 = vmatprep.subr.mxu0 0.0
  %3963 = vmatpush1.msra.mxu0 0.0
  %3964 = vmatprep.subr.mxu0 0.0
  %3965 = vmatpush1.msra.mxu0 0.0
  %3966 = vmatprep.subr.mxu0 0.0
  %3967 = vmatpush1.msra.mxu0 0.0
  %3968 = vmatprep.subr.mxu0 0.0
  %3969 = vmatpush1.msra.mxu0 0.0
  %3970 = vmatprep.subr.mxu0 0.0
  %3971 = vmatpush1.msra.mxu0 0.0
  %3972 = vmatprep.subr.mxu0 0.0
  %3973 = vmatpush1.msra.mxu0 0.0
  %3974 = vmatprep.subr.mxu0 0.0
  %3975 = vmatpush1.msra.mxu0 0.0
  %3976 = vmatprep.subr.mxu0 0.0
  %3977 = vmatpush1.msra.mxu0 0.0
  %3978 = vmatprep.subr.mxu0 0.0
  %3979 = vmatpush1.msra.mxu0 0.0
  %3980 = vmatprep.subr.mxu0 0.0
  %3981 = vmatpush1.msra.mxu0 0.0
  %3982 = vmatprep.subr.mxu0 0.0
  %3983 = vmatpush1.msra.mxu0 0.0
  %3984 = vmatprep.subr.mxu0 0.0
  %3985 = vmatpush1.msra.mxu0 0.0
  %3986 = vmatprep.subr.mxu0 0.0
  %3987 = vmatpush1.msra.mxu0 0.0
  %3988 = vmatprep.mubr.f32.mxu0 0.0
  %3989 = vmatmul.mubr.f32.gmra.mrb[0].mxu0 %v3394
  %v3990 = vpop.f32.mrb[0].mxu0
  %v3991 = vadd.f32 0.0, %v3990
  %v3992 = vpop.f32.mrb[0].mxu0
  %v3993 = vadd.f32 0.0, %v3992
  %3994 = vmatprep.mubr.f32.mxu0 0.0
  %3995 = vmatmul.mubr.f32.gmra.mrb[0].mxu0 %v3397
  %v3996 = vpop.f32.mrb[0].mxu0
  %v3997 = vadd.f32 0.0, %v3996
  %v3998 = vpop.f32.mrb[0].mxu0
  %v3999 = vadd.f32 0.0, %v3998
  %4000 = vmatprep.mubr.f32.mxu0 0.0
  %4001 = vmatmul.mubr.f32.gmra.mrb[0].mxu0 %v3400
  %v4002 = vpop.f32.mrb[0].mxu0
  %v4003 = vadd.f32 0.0, %v4002
  %v4004 = vpop.f32.mrb[0].mxu0
  %v4005 = vadd.f32 0.0, %v4004
  %4006 = vmatprep.mubr.f32.mxu0 0.0
  %4007 = vmatmul.mubr.f32.gmra.mrb[0].mxu0 %v3403
  %v4008 = vpop.f32.mrb[0].mxu0
  %v4009 = vadd.f32 0.0, %v4008
  %v4010 = vpop.f32.mrb[0].mxu0
  %v4011 = vadd.f32 0.0, %v4010
  %4012 = vmatprep.mubr.f32.mxu0 0.0
  %4013 = vmatmul.mubr.f32.gmra.mrb[0].mxu0 %v3406
  %v4014 = vpop.f32.mrb[0].mxu0
  %v4015 = vadd.f32 0.0, %v4014
  %v4016 = vpop.f32.mrb[0].mxu0
  %v4017 = vadd.f32 0.0, %v4016
  %4018 = vmatprep.mubr.f32.mxu0 0.0
  %4019 = vmatmul.mubr.f32.gmra.mrb[0].mxu0 %v3409
  %v4020 = vpop.f32.mrb[0].mxu0
  %v4021 = vadd.f32 0.0, %v4020
  %v4022 = vpop.f32.mrb[0].mxu0
  %v4023 = vadd.f32 0.0, %v4022
  %4024 = vmatprep.mubr.f32.mxu0 0.0
  %4025 = vmatmul.mubr.f32.gmra.mrb[0].mxu0 %v3412
  %v4026 = vpop.f32.mrb[0].mxu0
  %v4027 = vadd.f32 0.0, %v4026
  %v4028 = vpop.f32.mrb[0].mxu0
  %v4029 = vadd.f32 0.0, %v4028
  %4030 = vmatprep.mubr.f32.mxu0 0.0
  %4031 = vmatmul.mubr.f32.gmra.mrb[0].mxu0 %v3415
  %v4032 = vpop.f32.mrb[0].mxu0
  %v4033 = vadd.f32 0.0, %v4032
  %v4034 = vpop.f32.mrb[0].mxu0
  %v4035 = vadd.f32 0.0, %v4034
  %4036 = vmatprep.mubr.f32.mxu0 0.0
  %4037 = vmatmul.mubr.f32.gmra.mrb[0].mxu0 %v3418
  %v4038 = vpop.f32.mrb[0].mxu0
  %v4039 = vadd.f32 0.0, %v4038
  %v4040 = vpop.f32.mrb[0].mxu0
  %v4041 = vadd.f32 0.0, %v4040
  %4042 = vmatprep.mubr.f32.mxu0 0.0
  %4043 = vmatmul.mubr.f32.gmra.mrb[0].mxu0 %v3421
  %v4044 = vpop.f32.mrb[0].mxu0
  %v4045 = vadd.f32 0.0, %v4044
  %v4046 = vpop.f32.mrb[0].mxu0
  %v4047 = vadd.f32 0.0, %v4046
  %4048 = vmatprep.mubr.f32.mxu0 0.0
  %4049 = vmatmul.mubr.f32.gmra.mrb[0].mxu0 %v3424
  %v4050 = vpop.f32.mrb[0].mxu0
  %v4051 = vadd.f32 0.0, %v4050
  %v4052 = vpop.f32.mrb[0].mxu0
  %v4053 = vadd.f32 0.0, %v4052
  %4054 = vmatprep.mubr.f32.mxu0 0.0
  %4055 = vmatmul.mubr.f32.gmra.mrb[0].mxu0 %v3427
  %v4056 = vpop.f32.mrb[0].mxu0
  %v4057 = vadd.f32 0.0, %v4056
  %v4058 = vpop.f32.mrb[0].mxu0
  %v4059 = vadd.f32 0.0, %v4058
  %4060 = vmatprep.mubr.f32.mxu0 0.0
  %4061 = vmatmul.mubr.f32.gmra.mrb[0].mxu0 %v3430
  %v4062 = vpop.f32.mrb[0].mxu0
  %v4063 = vadd.f32 0.0, %v4062
  %v4064 = vpop.f32.mrb[0].mxu0
  %v4065 = vadd.f32 0.0, %v4064
  %4066 = vmatprep.mubr.f32.mxu0 0.0
  %4067 = vmatmul.mubr.f32.gmra.mrb[0].mxu0 %v3433
  %v4068 = vpop.f32.mrb[0].mxu0
  %v4069 = vadd.f32 0.0, %v4068
  %v4070 = vpop.f32.mrb[0].mxu0
  %v4071 = vadd.f32 0.0, %v4070
  %4072 = vmatprep.mubr.f32.mxu0 0.0
  %4073 = vmatmul.mubr.f32.gmra.mrb[0].mxu0 %v3436
  %v4074 = vpop.f32.mrb[0].mxu0
  %v4075 = vadd.f32 0.0, %v4074
  %v4076 = vpop.f32.mrb[0].mxu0
  %v4077 = vadd.f32 0.0, %v4076
  %4078 = vmatprep.mubr.f32.mxu0 0.0
  %4079 = vmatmul.mubr.f32.gmra.mrb[0].mxu0 %v3439
  %v4080 = vpop.f32.mrb[0].mxu0
  %v4081 = vadd.f32 0.0, %v4080
  %v4082 = vpop.f32.mrb[0].mxu0
  %v4083 = vadd.f32 0.0, %v4082
  %4084 = vdwg.mxu0
  %4085 = vmatprep.subr.mxu0 %v3338
  %4086 = vmatpush1.msra.mxu0 %v3337
  %4087 = vmatprep.subr.mxu0 %v3354
  %4088 = vmatpush1.msra.mxu0 %v3353
  %4089 = vmatprep.subr.mxu0 %v3370
  %4090 = vmatpush1.msra.mxu0 %v3369
  %4091 = vmatprep.subr.mxu0 %v3386
  %4092 = vmatpush1.msra.mxu0 %v3385
  %4093 = vmatprep.subr.mxu0 0.0
  %4094 = vmatpush1.msra.mxu0 0.0
  %4095 = vmatprep.subr.mxu0 0.0
  %4096 = vmatpush1.msra.mxu0 0.0
  %4097 = vmatprep.subr.mxu0 0.0
  %4098 = vmatpush1.msra.mxu0 0.0
  %4099 = vmatprep.subr.mxu0 0.0
  %4100 = vmatpush1.msra.mxu0 0.0
  %4101 = vmatprep.subr.mxu0 0.0
  %4102 = vmatpush1.msra.mxu0 0.0
  %4103 = vmatprep.subr.mxu0 0.0
  %4104 = vmatpush1.msra.mxu0 0.0
  %4105 = vmatprep.subr.mxu0 0.0
  %4106 = vmatpush1.msra.mxu0 0.0
  %4107 = vmatprep.subr.mxu0 0.0
  %4108 = vmatpush1.msra.mxu0 0.0
  %4109 = vmatprep.subr.mxu0 0.0
  %4110 = vmatpush1.msra.mxu0 0.0
  %4111 = vmatprep.subr.mxu0 0.0
  %4112 = vmatpush1.msra.mxu0 0.0
  %4113 = vmatprep.subr.mxu0 0.0
  %4114 = vmatpush1.msra.mxu0 0.0
  %4115 = vmatprep.subr.mxu0 0.0
  %4116 = vmatpush1.msra.mxu0 0.0
  %4117 = vmatprep.subr.mxu0 0.0
  %4118 = vmatpush1.msra.mxu0 0.0
  %4119 = vmatprep.subr.mxu0 0.0
  %4120 = vmatpush1.msra.mxu0 0.0
  %4121 = vmatprep.subr.mxu0 0.0
  %4122 = vmatpush1.msra.mxu0 0.0
  %4123 = vmatprep.subr.mxu0 0.0
  %4124 = vmatpush1.msra.mxu0 0.0
  %4125 = vmatprep.subr.mxu0 0.0
  %4126 = vmatpush1.msra.mxu0 0.0
  %4127 = vmatprep.subr.mxu0 0.0
  %4128 = vmatpush1.msra.mxu0 0.0
  %4129 = vmatprep.subr.mxu0 0.0
  %4130 = vmatpush1.msra.mxu0 0.0
  %4131 = vmatprep.subr.mxu0 0.0
  %4132 = vmatpush1.msra.mxu0 0.0
  %4133 = vmatprep.subr.mxu0 0.0
  %4134 = vmatpush1.msra.mxu0 0.0
  %4135 = vmatprep.subr.mxu0 0.0
  %4136 = vmatpush1.msra.mxu0 0.0
  %4137 = vmatprep.subr.mxu0 0.0
  %4138 = vmatpush1.msra.mxu0 0.0
  %4139 = vmatprep.subr.mxu0 0.0
  %4140 = vmatpush1.msra.mxu0 0.0
  %4141 = vmatprep.subr.mxu0 0.0
  %4142 = vmatpush1.msra.mxu0 0.0
  %4143 = vmatprep.subr.mxu0 0.0
  %4144 = vmatpush1.msra.mxu0 0.0
  %4145 = vmatprep.subr.mxu0 0.0
  %4146 = vmatpush1.msra.mxu0 0.0
  %4147 = vmatprep.subr.mxu0 0.0
  %4148 = vmatpush1.msra.mxu0 0.0
  %4149 = vmatprep.mubr.f32.mxu0 0.0
  %4150 = vmatmul.mubr.f32.gmra.mrb[0].mxu0 %v3394
  %v4151 = vpop.f32.mrb[0].mxu0
  %v4152 = vadd.f32 0.0, %v4151
  %v4153 = vpop.f32.mrb[0].mxu0
  %v4154 = vadd.f32 0.0, %v4153
  %4155 = vmatprep.mubr.f32.mxu0 0.0
  %4156 = vmatmul.mubr.f32.gmra.mrb[0].mxu0 %v3397
  %v4157 = vpop.f32.mrb[0].mxu0
  %v4158 = vadd.f32 0.0, %v4157
  %v4159 = vpop.f32.mrb[0].mxu0
  %v4160 = vadd.f32 0.0, %v4159
  %4161 = vmatprep.mubr.f32.mxu0 0.0
  %4162 = vmatmul.mubr.f32.gmra.mrb[0].mxu0 %v3400
  %v4163 = vpop.f32.mrb[0].mxu0
  %v4164 = vadd.f32 0.0, %v4163
  %v4165 = vpop.f32.mrb[0].mxu0
  %v4166 = vadd.f32 0.0, %v4165
  %4167 = vmatprep.mubr.f32.mxu0 0.0
  %4168 = vmatmul.mubr.f32.gmra.mrb[0].mxu0 %v3403
  %v4169 = vpop.f32.mrb[0].mxu0
  %v4170 = vadd.f32 0.0, %v4169
  %v4171 = vpop.f32.mrb[0].mxu0
  %v4172 = vadd.f32 0.0, %v4171
  %4173 = vmatprep.mubr.f32.mxu0 0.0
  %4174 = vmatmul.mubr.f32.gmra.mrb[0].mxu0 %v3406
  %v4175 = vpop.f32.mrb[0].mxu0
  %v4176 = vadd.f32 0.0, %v4175
  %v4177 = vpop.f32.mrb[0].mxu0
  %v4178 = vadd.f32 0.0, %v4177
  %4179 = vmatprep.mubr.f32.mxu0 0.0
  %4180 = vmatmul.mubr.f32.gmra.mrb[0].mxu0 %v3409
  %v4181 = vpop.f32.mrb[0].mxu0
  %v4182 = vadd.f32 0.0, %v4181
  %v4183 = vpop.f32.mrb[0].mxu0
  %v4184 = vadd.f32 0.0, %v4183
  %4185 = vmatprep.mubr.f32.mxu0 0.0
  %4186 = vmatmul.mubr.f32.gmra.mrb[0].mxu0 %v3412
  %v4187 = vpop.f32.mrb[0].mxu0
  %v4188 = vadd.f32 0.0, %v4187
  %v4189 = vpop.f32.mrb[0].mxu0
  %v4190 = vadd.f32 0.0, %v4189
  %4191 = vmatprep.mubr.f32.mxu0 0.0
  %4192 = vmatmul.mubr.f32.gmra.mrb[0].mxu0 %v3415
  %v4193 = vpop.f32.mrb[0].mxu0
  %v4194 = vadd.f32 0.0, %v4193
  %v4195 = vpop.f32.mrb[0].mxu0
  %v4196 = vadd.f32 0.0, %v4195
  %4197 = vmatprep.mubr.f32.mxu0 0.0
  %4198 = vmatmul.mubr.f32.gmra.mrb[0].mxu0 %v3418
  %v4199 = vpop.f32.mrb[0].mxu0
  %v4200 = vadd.f32 0.0, %v4199
  %v4201 = vpop.f32.mrb[0].mxu0
  %v4202 = vadd.f32 0.0, %v4201
  %4203 = vmatprep.mubr.f32.mxu0 0.0
  %4204 = vmatmul.mubr.f32.gmra.mrb[0].mxu0 %v3421
  %v4205 = vpop.f32.mrb[0].mxu0
  %v4206 = vadd.f32 0.0, %v4205
  %v4207 = vpop.f32.mrb[0].mxu0
  %v4208 = vadd.f32 0.0, %v4207
  %4209 = vmatprep.mubr.f32.mxu0 0.0
  %4210 = vmatmul.mubr.f32.gmra.mrb[0].mxu0 %v3424
  %v4211 = vpop.f32.mrb[0].mxu0
  %v4212 = vadd.f32 0.0, %v4211
  %v4213 = vpop.f32.mrb[0].mxu0
  %v4214 = vadd.f32 0.0, %v4213
  %4215 = vmatprep.mubr.f32.mxu0 0.0
  %4216 = vmatmul.mubr.f32.gmra.mrb[0].mxu0 %v3427
  %v4217 = vpop.f32.mrb[0].mxu0
  %v4218 = vadd.f32 0.0, %v4217
  %v4219 = vpop.f32.mrb[0].mxu0
  %v4220 = vadd.f32 0.0, %v4219
  %4221 = vmatprep.mubr.f32.mxu0 0.0
  %4222 = vmatmul.mubr.f32.gmra.mrb[0].mxu0 %v3430
  %v4223 = vpop.f32.mrb[0].mxu0
  %v4224 = vadd.f32 0.0, %v4223
  %v4225 = vpop.f32.mrb[0].mxu0
  %v4226 = vadd.f32 0.0, %v4225
  %4227 = vmatprep.mubr.f32.mxu0 0.0
  %4228 = vmatmul.mubr.f32.gmra.mrb[0].mxu0 %v3433
  %v4229 = vpop.f32.mrb[0].mxu0
  %v4230 = vadd.f32 0.0, %v4229
  %v4231 = vpop.f32.mrb[0].mxu0
  %v4232 = vadd.f32 0.0, %v4231
  %4233 = vmatprep.mubr.f32.mxu0 0.0
  %4234 = vmatmul.mubr.f32.gmra.mrb[0].mxu0 %v3436
  %v4235 = vpop.f32.mrb[0].mxu0
  %v4236 = vadd.f32 0.0, %v4235
  %v4237 = vpop.f32.mrb[0].mxu0
  %v4238 = vadd.f32 0.0, %v4237
  %4239 = vmatprep.mubr.f32.mxu0 0.0
  %4240 = vmatmul.mubr.f32.gmra.mrb[0].mxu0 %v3439
  %v4241 = vpop.f32.mrb[0].mxu0
  %v4242 = vadd.f32 0.0, %v4241
  %v4243 = vpop.f32.mrb[0].mxu0
  %v4244 = vadd.f32 0.0, %v4243
  %4245 = vdwg.mxu0
  %4246 = vmatprep.subr.mxu0 %v3340
  %4247 = vmatpush1.msra.mxu0 %v3339
  %4248 = vmatprep.subr.mxu0 %v3356
  %4249 = vmatpush1.msra.mxu0 %v3355
  %4250 = vmatprep.subr.mxu0 %v3372
  %4251 = vmatpush1.msra.mxu0 %v3371
  %4252 = vmatprep.subr.mxu0 %v3388
  %4253 = vmatpush1.msra.mxu0 %v3387
  %4254 = vmatprep.subr.mxu0 0.0
  %4255 = vmatpush1.msra.mxu0 0.0
  %4256 = vmatprep.subr.mxu0 0.0
  %4257 = vmatpush1.msra.mxu0 0.0
  %4258 = vmatprep.subr.mxu0 0.0
  %4259 = vmatpush1.msra.mxu0 0.0
  %4260 = vmatprep.subr.mxu0 0.0
  %4261 = vmatpush1.msra.mxu0 0.0
  %4262 = vmatprep.subr.mxu0 0.0
  %4263 = vmatpush1.msra.mxu0 0.0
  %4264 = vmatprep.subr.mxu0 0.0
  %4265 = vmatpush1.msra.mxu0 0.0
  %4266 = vmatprep.subr.mxu0 0.0
  %4267 = vmatpush1.msra.mxu0 0.0
  %4268 = vmatprep.subr.mxu0 0.0
  %4269 = vmatpush1.msra.mxu0 0.0
  %4270 = vmatprep.subr.mxu0 0.0
  %4271 = vmatpush1.msra.mxu0 0.0
  %4272 = vmatprep.subr.mxu0 0.0
  %4273 = vmatpush1.msra.mxu0 0.0
  %4274 = vmatprep.subr.mxu0 0.0
  %4275 = vmatpush1.msra.mxu0 0.0
  %4276 = vmatprep.subr.mxu0 0.0
  %4277 = vmatpush1.msra.mxu0 0.0
  %4278 = vmatprep.subr.mxu0 0.0
  %4279 = vmatpush1.msra.mxu0 0.0
  %4280 = vmatprep.subr.mxu0 0.0
  %4281 = vmatpush1.msra.mxu0 0.0
  %4282 = vmatprep.subr.mxu0 0.0
  %4283 = vmatpush1.msra.mxu0 0.0
  %4284 = vmatprep.subr.mxu0 0.0
  %4285 = vmatpush1.msra.mxu0 0.0
  %4286 = vmatprep.subr.mxu0 0.0
  %4287 = vmatpush1.msra.mxu0 0.0
  %4288 = vmatprep.subr.mxu0 0.0
  %4289 = vmatpush1.msra.mxu0 0.0
  %4290 = vmatprep.subr.mxu0 0.0
  %4291 = vmatpush1.msra.mxu0 0.0
  %4292 = vmatprep.subr.mxu0 0.0
  %4293 = vmatpush1.msra.mxu0 0.0
  %4294 = vmatprep.subr.mxu0 0.0
  %4295 = vmatpush1.msra.mxu0 0.0
  %4296 = vmatprep.subr.mxu0 0.0
  %4297 = vmatpush1.msra.mxu0 0.0
  %4298 = vmatprep.subr.mxu0 0.0
  %4299 = vmatpush1.msra.mxu0 0.0
  %4300 = vmatprep.subr.mxu0 0.0
  %4301 = vmatpush1.msra.mxu0 0.0
  %4302 = vmatprep.subr.mxu0 0.0
  %4303 = vmatpush1.msra.mxu0 0.0
  %4304 = vmatprep.subr.mxu0 0.0
  %4305 = vmatpush1.msra.mxu0 0.0
  %4306 = vmatprep.subr.mxu0 0.0
  %4307 = vmatpush1.msra.mxu0 0.0
  %4308 = vmatprep.subr.mxu0 0.0
  %4309 = vmatpush1.msra.mxu0 0.0
  %4310 = vmatprep.mubr.f32.mxu0 0.0
  %4311 = vmatmul.mubr.f32.gmra.mrb[0].mxu0 %v3394
  %v4312 = vpop.f32.mrb[0].mxu0
  %v4313 = vadd.f32 0.0, %v4312
  %v4314 = vpop.f32.mrb[0].mxu0
  %v4315 = vadd.f32 0.0, %v4314
  %4316 = vmatprep.mubr.f32.mxu0 0.0
  %4317 = vmatmul.mubr.f32.gmra.mrb[0].mxu0 %v3397
  %v4318 = vpop.f32.mrb[0].mxu0
  %v4319 = vadd.f32 0.0, %v4318
  %v4320 = vpop.f32.mrb[0].mxu0
  %v4321 = vadd.f32 0.0, %v4320
  %4322 = vmatprep.mubr.f32.mxu0 0.0
  %4323 = vmatmul.mubr.f32.gmra.mrb[0].mxu0 %v3400
  %v4324 = vpop.f32.mrb[0].mxu0
  %v4325 = vadd.f32 0.0, %v4324
  %v4326 = vpop.f32.mrb[0].mxu0
  %v4327 = vadd.f32 0.0, %v4326
  %4328 = vmatprep.mubr.f32.mxu0 0.0
  %4329 = vmatmul.mubr.f32.gmra.mrb[0].mxu0 %v3403
  %v4330 = vpop.f32.mrb[0].mxu0
  %v4331 = vadd.f32 0.0, %v4330
  %v4332 = vpop.f32.mrb[0].mxu0
  %v4333 = vadd.f32 0.0, %v4332
  %4334 = vmatprep.mubr.f32.mxu0 0.0
  %4335 = vmatmul.mubr.f32.gmra.mrb[0].mxu0 %v3406
  %v4336 = vpop.f32.mrb[0].mxu0
  %v4337 = vadd.f32 0.0, %v4336
  %v4338 = vpop.f32.mrb[0].mxu0
  %v4339 = vadd.f32 0.0, %v4338
  %4340 = vmatprep.mubr.f32.mxu0 0.0
  %4341 = vmatmul.mubr.f32.gmra.mrb[0].mxu0 %v3409
  %v4342 = vpop.f32.mrb[0].mxu0
  %v4343 = vadd.f32 0.0, %v4342
  %v4344 = vpop.f32.mrb[0].mxu0
  %v4345 = vadd.f32 0.0, %v4344
  %4346 = vmatprep.mubr.f32.mxu0 0.0
  %4347 = vmatmul.mubr.f32.gmra.mrb[0].mxu0 %v3412
  %v4348 = vpop.f32.mrb[0].mxu0
  %v4349 = vadd.f32 0.0, %v4348
  %v4350 = vpop.f32.mrb[0].mxu0
  %v4351 = vadd.f32 0.0, %v4350
  %4352 = vmatprep.mubr.f32.mxu0 0.0
  %4353 = vmatmul.mubr.f32.gmra.mrb[0].mxu0 %v3415
  %v4354 = vpop.f32.mrb[0].mxu0
  %v4355 = vadd.f32 0.0, %v4354
  %v4356 = vpop.f32.mrb[0].mxu0
  %v4357 = vadd.f32 0.0, %v4356
  %4358 = vmatprep.mubr.f32.mxu0 0.0
  %4359 = vmatmul.mubr.f32.gmra.mrb[0].mxu0 %v3418
  %v4360 = vpop.f32.mrb[0].mxu0
  %v4361 = vadd.f32 0.0, %v4360
  %v4362 = vpop.f32.mrb[0].mxu0
  %v4363 = vadd.f32 0.0, %v4362
  %4364 = vmatprep.mubr.f32.mxu0 0.0
  %4365 = vmatmul.mubr.f32.gmra.mrb[0].mxu0 %v3421
  %v4366 = vpop.f32.mrb[0].mxu0
  %v4367 = vadd.f32 0.0, %v4366
  %v4368 = vpop.f32.mrb[0].mxu0
  %v4369 = vadd.f32 0.0, %v4368
  %4370 = vmatprep.mubr.f32.mxu0 0.0
  %4371 = vmatmul.mubr.f32.gmra.mrb[0].mxu0 %v3424
  %v4372 = vpop.f32.mrb[0].mxu0
  %v4373 = vadd.f32 0.0, %v4372
  %v4374 = vpop.f32.mrb[0].mxu0
  %v4375 = vadd.f32 0.0, %v4374
  %4376 = vmatprep.mubr.f32.mxu0 0.0
  %4377 = vmatmul.mubr.f32.gmra.mrb[0].mxu0 %v3427
  %v4378 = vpop.f32.mrb[0].mxu0
  %v4379 = vadd.f32 0.0, %v4378
  %v4380 = vpop.f32.mrb[0].mxu0
  %v4381 = vadd.f32 0.0, %v4380
  %4382 = vmatprep.mubr.f32.mxu0 0.0
  %4383 = vmatmul.mubr.f32.gmra.mrb[0].mxu0 %v3430
  %v4384 = vpop.f32.mrb[0].mxu0
  %v4385 = vadd.f32 0.0, %v4384
  %v4386 = vpop.f32.mrb[0].mxu0
  %v4387 = vadd.f32 0.0, %v4386
  %4388 = vmatprep.mubr.f32.mxu0 0.0
  %4389 = vmatmul.mubr.f32.gmra.mrb[0].mxu0 %v3433
  %v4390 = vpop.f32.mrb[0].mxu0
  %v4391 = vadd.f32 0.0, %v4390
  %v4392 = vpop.f32.mrb[0].mxu0
  %v4393 = vadd.f32 0.0, %v4392
  %4394 = vmatprep.mubr.f32.mxu0 0.0
  %4395 = vmatmul.mubr.f32.gmra.mrb[0].mxu0 %v3436
  %v4396 = vpop.f32.mrb[0].mxu0
  %v4397 = vadd.f32 0.0, %v4396
  %v4398 = vpop.f32.mrb[0].mxu0
  %v4399 = vadd.f32 0.0, %v4398
  %4400 = vmatprep.mubr.f32.mxu0 0.0
  %4401 = vmatmul.mubr.f32.gmra.mrb[0].mxu0 %v3439
  %v4402 = vpop.f32.mrb[0].mxu0
  %v4403 = vadd.f32 0.0, %v4402
  %v4404 = vpop.f32.mrb[0].mxu0
  %v4405 = vadd.f32 0.0, %v4404
  %4406 = vdwg.mxu0
  %4407 = vmatprep.subr.mxu0 %v3342
  %4408 = vmatpush1.msra.mxu0 %v3341
  %4409 = vmatprep.subr.mxu0 %v3358
  %4410 = vmatpush1.msra.mxu0 %v3357
  %4411 = vmatprep.subr.mxu0 %v3374
  %4412 = vmatpush1.msra.mxu0 %v3373
  %4413 = vmatprep.subr.mxu0 %v3390
  %4414 = vmatpush1.msra.mxu0 %v3389
  %4415 = vmatprep.subr.mxu0 0.0
  %4416 = vmatpush1.msra.mxu0 0.0
  %4417 = vmatprep.subr.mxu0 0.0
  %4418 = vmatpush1.msra.mxu0 0.0
  %4419 = vmatprep.subr.mxu0 0.0
  %4420 = vmatpush1.msra.mxu0 0.0
  %4421 = vmatprep.subr.mxu0 0.0
  %4422 = vmatpush1.msra.mxu0 0.0
  %4423 = vmatprep.subr.mxu0 0.0
  %4424 = vmatpush1.msra.mxu0 0.0
  %4425 = vmatprep.subr.mxu0 0.0
  %4426 = vmatpush1.msra.mxu0 0.0
  %4427 = vmatprep.subr.mxu0 0.0
  %4428 = vmatpush1.msra.mxu0 0.0
  %4429 = vmatprep.subr.mxu0 0.0
  %4430 = vmatpush1.msra.mxu0 0.0
  %4431 = vmatprep.subr.mxu0 0.0
  %4432 = vmatpush1.msra.mxu0 0.0
  %4433 = vmatprep.subr.mxu0 0.0
  %4434 = vmatpush1.msra.mxu0 0.0
  %4435 = vmatprep.subr.mxu0 0.0
  %4436 = vmatpush1.msra.mxu0 0.0
  %4437 = vmatprep.subr.mxu0 0.0
  %4438 = vmatpush1.msra.mxu0 0.0
  %4439 = vmatprep.subr.mxu0 0.0
  %4440 = vmatpush1.msra.mxu0 0.0
  %4441 = vmatprep.subr.mxu0 0.0
  %4442 = vmatpush1.msra.mxu0 0.0
  %4443 = vmatprep.subr.mxu0 0.0
  %4444 = vmatpush1.msra.mxu0 0.0
  %4445 = vmatprep.subr.mxu0 0.0
  %4446 = vmatpush1.msra.mxu0 0.0
  %4447 = vmatprep.subr.mxu0 0.0
  %4448 = vmatpush1.msra.mxu0 0.0
  %4449 = vmatprep.subr.mxu0 0.0
  %4450 = vmatpush1.msra.mxu0 0.0
  %4451 = vmatprep.subr.mxu0 0.0
  %4452 = vmatpush1.msra.mxu0 0.0
  %4453 = vmatprep.subr.mxu0 0.0
  %4454 = vmatpush1.msra.mxu0 0.0
  %4455 = vmatprep.subr.mxu0 0.0
  %4456 = vmatpush1.msra.mxu0 0.0
  %4457 = vmatprep.subr.mxu0 0.0
  %4458 = vmatpush1.msra.mxu0 0.0
  %4459 = vmatprep.subr.mxu0 0.0
  %4460 = vmatpush1.msra.mxu0 0.0
  %4461 = vmatprep.subr.mxu0 0.0
  %4462 = vmatpush1.msra.mxu0 0.0
  %4463 = vmatprep.subr.mxu0 0.0
  %4464 = vmatpush1.msra.mxu0 0.0
  %4465 = vmatprep.subr.mxu0 0.0
  %4466 = vmatpush1.msra.mxu0 0.0
  %4467 = vmatprep.subr.mxu0 0.0
  %4468 = vmatpush1.msra.mxu0 0.0
  %4469 = vmatprep.subr.mxu0 0.0
  %4470 = vmatpush1.msra.mxu0 0.0
  %4471 = vmatprep.mubr.f32.mxu0 0.0
  %4472 = vmatmul.mubr.f32.gmra.mrb[0].mxu0 %v3394
  %v4473 = vpop.f32.mrb[0].mxu0
  %v4474 = vadd.f32 0.0, %v4473
  %v4475 = vpop.f32.mrb[0].mxu0
  %v4476 = vadd.f32 0.0, %v4475
  %4477 = vmatprep.mubr.f32.mxu0 0.0
  %4478 = vmatmul.mubr.f32.gmra.mrb[0].mxu0 %v3397
  %v4479 = vpop.f32.mrb[0].mxu0
  %v4480 = vadd.f32 0.0, %v4479
  %v4481 = vpop.f32.mrb[0].mxu0
  %v4482 = vadd.f32 0.0, %v4481
  %4483 = vmatprep.mubr.f32.mxu0 0.0
  %4484 = vmatmul.mubr.f32.gmra.mrb[0].mxu0 %v3400
  %v4485 = vpop.f32.mrb[0].mxu0
  %v4486 = vadd.f32 0.0, %v4485
  %v4487 = vpop.f32.mrb[0].mxu0
  %v4488 = vadd.f32 0.0, %v4487
  %4489 = vmatprep.mubr.f32.mxu0 0.0
  %4490 = vmatmul.mubr.f32.gmra.mrb[0].mxu0 %v3403
  %v4491 = vpop.f32.mrb[0].mxu0
  %v4492 = vadd.f32 0.0, %v4491
  %v4493 = vpop.f32.mrb[0].mxu0
  %v4494 = vadd.f32 0.0, %v4493
  %4495 = vmatprep.mubr.f32.mxu0 0.0
  %4496 = vmatmul.mubr.f32.gmra.mrb[0].mxu0 %v3406
  %v4497 = vpop.f32.mrb[0].mxu0
  %v4498 = vadd.f32 0.0, %v4497
  %v4499 = vpop.f32.mrb[0].mxu0
  %v4500 = vadd.f32 0.0, %v4499
  %4501 = vmatprep.mubr.f32.mxu0 0.0
  %4502 = vmatmul.mubr.f32.gmra.mrb[0].mxu0 %v3409
  %v4503 = vpop.f32.mrb[0].mxu0
  %v4504 = vadd.f32 0.0, %v4503
  %v4505 = vpop.f32.mrb[0].mxu0
  %v4506 = vadd.f32 0.0, %v4505
  %4507 = vmatprep.mubr.f32.mxu0 0.0
  %4508 = vmatmul.mubr.f32.gmra.mrb[0].mxu0 %v3412
  %v4509 = vpop.f32.mrb[0].mxu0
  %v4510 = vadd.f32 0.0, %v4509
  %v4511 = vpop.f32.mrb[0].mxu0
  %v4512 = vadd.f32 0.0, %v4511
  %4513 = vmatprep.mubr.f32.mxu0 0.0
  %4514 = vmatmul.mubr.f32.gmra.mrb[0].mxu0 %v3415
  %v4515 = vpop.f32.mrb[0].mxu0
  %v4516 = vadd.f32 0.0, %v4515
  %v4517 = vpop.f32.mrb[0].mxu0
  %v4518 = vadd.f32 0.0, %v4517
  %4519 = vmatprep.mubr.f32.mxu0 0.0
  %4520 = vmatmul.mubr.f32.gmra.mrb[0].mxu0 %v3418
  %v4521 = vpop.f32.mrb[0].mxu0
  %v4522 = vadd.f32 0.0, %v4521
  %v4523 = vpop.f32.mrb[0].mxu0
  %v4524 = vadd.f32 0.0, %v4523
  %4525 = vmatprep.mubr.f32.mxu0 0.0
  %4526 = vmatmul.mubr.f32.gmra.mrb[0].mxu0 %v3421
  %v4527 = vpop.f32.mrb[0].mxu0
  %v4528 = vadd.f32 0.0, %v4527
  %v4529 = vpop.f32.mrb[0].mxu0
  %v4530 = vadd.f32 0.0, %v4529
  %4531 = vmatprep.mubr.f32.mxu0 0.0
  %4532 = vmatmul.mubr.f32.gmra.mrb[0].mxu0 %v3424
  %v4533 = vpop.f32.mrb[0].mxu0
  %v4534 = vadd.f32 0.0, %v4533
  %v4535 = vpop.f32.mrb[0].mxu0
  %v4536 = vadd.f32 0.0, %v4535
  %4537 = vmatprep.mubr.f32.mxu0 0.0
  %4538 = vmatmul.mubr.f32.gmra.mrb[0].mxu0 %v3427
  %v4539 = vpop.f32.mrb[0].mxu0
  %v4540 = vadd.f32 0.0, %v4539
  %v4541 = vpop.f32.mrb[0].mxu0
  %v4542 = vadd.f32 0.0, %v4541
  %4543 = vmatprep.mubr.f32.mxu0 0.0
  %4544 = vmatmul.mubr.f32.gmra.mrb[0].mxu0 %v3430
  %v4545 = vpop.f32.mrb[0].mxu0
  %v4546 = vadd.f32 0.0, %v4545
  %v4547 = vpop.f32.mrb[0].mxu0
  %v4548 = vadd.f32 0.0, %v4547
  %4549 = vmatprep.mubr.f32.mxu0 0.0
  %4550 = vmatmul.mubr.f32.gmra.mrb[0].mxu0 %v3433
  %v4551 = vpop.f32.mrb[0].mxu0
  %v4552 = vadd.f32 0.0, %v4551
  %v4553 = vpop.f32.mrb[0].mxu0
  %v4554 = vadd.f32 0.0, %v4553
  %4555 = vmatprep.mubr.f32.mxu0 0.0
  %4556 = vmatmul.mubr.f32.gmra.mrb[0].mxu0 %v3436
  %v4557 = vpop.f32.mrb[0].mxu0
  %v4558 = vadd.f32 0.0, %v4557
  %v4559 = vpop.f32.mrb[0].mxu0
  %v4560 = vadd.f32 0.0, %v4559
  %4561 = vmatprep.mubr.f32.mxu0 0.0
  %4562 = vmatmul.mubr.f32.gmra.mrb[0].mxu0 %v3439
  %v4563 = vpop.f32.mrb[0].mxu0
  %v4564 = vadd.f32 0.0, %v4563
  %v4565 = vpop.f32.mrb[0].mxu0
  %v4566 = vadd.f32 0.0, %v4565
  %4567 = vdwg.mxu0
  %4568 = vmatprep.subr.mxu0 %v3344
  %4569 = vmatpush1.msra.mxu0 %v3343
  %4570 = vmatprep.subr.mxu0 %v3360
  %4571 = vmatpush1.msra.mxu0 %v3359
  %4572 = vmatprep.subr.mxu0 %v3376
  %4573 = vmatpush1.msra.mxu0 %v3375
  %4574 = vmatprep.subr.mxu0 %v3392
  %4575 = vmatpush1.msra.mxu0 %v3391
  %4576 = vmatprep.subr.mxu0 0.0
  %4577 = vmatpush1.msra.mxu0 0.0
  %4578 = vmatprep.subr.mxu0 0.0
  %4579 = vmatpush1.msra.mxu0 0.0
  %4580 = vmatprep.subr.mxu0 0.0
  %4581 = vmatpush1.msra.mxu0 0.0
  %4582 = vmatprep.subr.mxu0 0.0
  %4583 = vmatpush1.msra.mxu0 0.0
  %4584 = vmatprep.subr.mxu0 0.0
  %4585 = vmatpush1.msra.mxu0 0.0
  %4586 = vmatprep.subr.mxu0 0.0
  %4587 = vmatpush1.msra.mxu0 0.0
  %4588 = vmatprep.subr.mxu0 0.0
  %4589 = vmatpush1.msra.mxu0 0.0
  %4590 = vmatprep.subr.mxu0 0.0
  %4591 = vmatpush1.msra.mxu0 0.0
  %4592 = vmatprep.subr.mxu0 0.0
  %4593 = vmatpush1.msra.mxu0 0.0
  %4594 = vmatprep.subr.mxu0 0.0
  %4595 = vmatpush1.msra.mxu0 0.0
  %4596 = vmatprep.subr.mxu0 0.0
  %4597 = vmatpush1.msra.mxu0 0.0
  %4598 = vmatprep.subr.mxu0 0.0
  %4599 = vmatpush1.msra.mxu0 0.0
  %4600 = vmatprep.subr.mxu0 0.0
  %4601 = vmatpush1.msra.mxu0 0.0
  %4602 = vmatprep.subr.mxu0 0.0
  %4603 = vmatpush1.msra.mxu0 0.0
  %4604 = vmatprep.subr.mxu0 0.0
  %4605 = vmatpush1.msra.mxu0 0.0
  %4606 = vmatprep.subr.mxu0 0.0
  %4607 = vmatpush1.msra.mxu0 0.0
  %4608 = vmatprep.subr.mxu0 0.0
  %4609 = vmatpush1.msra.mxu0 0.0
  %4610 = vmatprep.subr.mxu0 0.0
  %4611 = vmatpush1.msra.mxu0 0.0
  %4612 = vmatprep.subr.mxu0 0.0
  %4613 = vmatpush1.msra.mxu0 0.0
  %4614 = vmatprep.subr.mxu0 0.0
  %4615 = vmatpush1.msra.mxu0 0.0
  %4616 = vmatprep.subr.mxu0 0.0
  %4617 = vmatpush1.msra.mxu0 0.0
  %4618 = vmatprep.subr.mxu0 0.0
  %4619 = vmatpush1.msra.mxu0 0.0
  %4620 = vmatprep.subr.mxu0 0.0
  %4621 = vmatpush1.msra.mxu0 0.0
  %4622 = vmatprep.subr.mxu0 0.0
  %4623 = vmatpush1.msra.mxu0 0.0
  %4624 = vmatprep.subr.mxu0 0.0
  %4625 = vmatpush1.msra.mxu0 0.0
  %4626 = vmatprep.subr.mxu0 0.0
  %4627 = vmatpush1.msra.mxu0 0.0
  %4628 = vmatprep.subr.mxu0 0.0
  %4629 = vmatpush1.msra.mxu0 0.0
  %4630 = vmatprep.subr.mxu0 0.0
  %4631 = vmatpush1.msra.mxu0 0.0
  %4632 = vmatprep.mubr.f32.mxu0 0.0
  %4633 = vmatmul.mubr.f32.gmra.mrb[0].mxu0 %v3394
  %v4634 = vpop.f32.mrb[0].mxu0
  %v4635 = vadd.f32 0.0, %v4634
  %v4636 = vpop.f32.mrb[0].mxu0
  %v4637 = vadd.f32 0.0, %v4636
  %4638 = vmatprep.mubr.f32.mxu0 0.0
  %4639 = vmatmul.mubr.f32.gmra.mrb[0].mxu0 %v3397
  %v4640 = vpop.f32.mrb[0].mxu0
  %v4641 = vadd.f32 0.0, %v4640
  %v4642 = vpop.f32.mrb[0].mxu0
  %v4643 = vadd.f32 0.0, %v4642
  %4644 = vmatprep.mubr.f32.mxu0 0.0
  %4645 = vmatmul.mubr.f32.gmra.mrb[0].mxu0 %v3400
  %v4646 = vpop.f32.mrb[0].mxu0
  %v4647 = vadd.f32 0.0, %v4646
  %v4648 = vpop.f32.mrb[0].mxu0
  %v4649 = vadd.f32 0.0, %v4648
  %4650 = vmatprep.mubr.f32.mxu0 0.0
  %4651 = vmatmul.mubr.f32.gmra.mrb[0].mxu0 %v3403
  %v4652 = vpop.f32.mrb[0].mxu0
  %v4653 = vadd.f32 0.0, %v4652
  %v4654 = vpop.f32.mrb[0].mxu0
  %v4655 = vadd.f32 0.0, %v4654
  %4656 = vmatprep.mubr.f32.mxu0 0.0
  %4657 = vmatmul.mubr.f32.gmra.mrb[0].mxu0 %v3406
  %v4658 = vpop.f32.mrb[0].mxu0
  %v4659 = vadd.f32 0.0, %v4658
  %v4660 = vpop.f32.mrb[0].mxu0
  %v4661 = vadd.f32 0.0, %v4660
  %4662 = vmatprep.mubr.f32.mxu0 0.0
  %4663 = vmatmul.mubr.f32.gmra.mrb[0].mxu0 %v3409
  %v4664 = vpop.f32.mrb[0].mxu0
  %v4665 = vadd.f32 0.0, %v4664
  %v4666 = vpop.f32.mrb[0].mxu0
  %v4667 = vadd.f32 0.0, %v4666
  %4668 = vmatprep.mubr.f32.mxu0 0.0
  %4669 = vmatmul.mubr.f32.gmra.mrb[0].mxu0 %v3412
  %v4670 = vpop.f32.mrb[0].mxu0
  %v4671 = vadd.f32 0.0, %v4670
  %v4672 = vpop.f32.mrb[0].mxu0
  %v4673 = vadd.f32 0.0, %v4672
  %4674 = vmatprep.mubr.f32.mxu0 0.0
  %4675 = vmatmul.mubr.f32.gmra.mrb[0].mxu0 %v3415
  %v4676 = vpop.f32.mrb[0].mxu0
  %v4677 = vadd.f32 0.0, %v4676
  %v4678 = vpop.f32.mrb[0].mxu0
  %v4679 = vadd.f32 0.0, %v4678
  %4680 = vmatprep.mubr.f32.mxu0 0.0
  %4681 = vmatmul.mubr.f32.gmra.mrb[0].mxu0 %v3418
  %v4682 = vpop.f32.mrb[0].mxu0
  %v4683 = vadd.f32 0.0, %v4682
  %v4684 = vpop.f32.mrb[0].mxu0
  %v4685 = vadd.f32 0.0, %v4684
  %4686 = vmatprep.mubr.f32.mxu0 0.0
  %4687 = vmatmul.mubr.f32.gmra.mrb[0].mxu0 %v3421
  %v4688 = vpop.f32.mrb[0].mxu0
  %v4689 = vadd.f32 0.0, %v4688
  %v4690 = vpop.f32.mrb[0].mxu0
  %v4691 = vadd.f32 0.0, %v4690
  %4692 = vmatprep.mubr.f32.mxu0 0.0
  %4693 = vmatmul.mubr.f32.gmra.mrb[0].mxu0 %v3424
  %v4694 = vpop.f32.mrb[0].mxu0
  %v4695 = vadd.f32 0.0, %v4694
  %v4696 = vpop.f32.mrb[0].mxu0
  %v4697 = vadd.f32 0.0, %v4696
  %4698 = vmatprep.mubr.f32.mxu0 0.0
  %4699 = vmatmul.mubr.f32.gmra.mrb[0].mxu0 %v3427
  %v4700 = vpop.f32.mrb[0].mxu0
  %v4701 = vadd.f32 0.0, %v4700
  %v4702 = vpop.f32.mrb[0].mxu0
  %v4703 = vadd.f32 0.0, %v4702
  %4704 = vmatprep.mubr.f32.mxu0 0.0
  %4705 = vmatmul.mubr.f32.gmra.mrb[0].mxu0 %v3430
  %v4706 = vpop.f32.mrb[0].mxu0
  %v4707 = vadd.f32 0.0, %v4706
  %v4708 = vpop.f32.mrb[0].mxu0
  %v4709 = vadd.f32 0.0, %v4708
  %4710 = vmatprep.mubr.f32.mxu0 0.0
  %4711 = vmatmul.mubr.f32.gmra.mrb[0].mxu0 %v3433
  %v4712 = vpop.f32.mrb[0].mxu0
  %v4713 = vadd.f32 0.0, %v4712
  %v4714 = vpop.f32.mrb[0].mxu0
  %v4715 = vadd.f32 0.0, %v4714
  %4716 = vmatprep.mubr.f32.mxu0 0.0
  %4717 = vmatmul.mubr.f32.gmra.mrb[0].mxu0 %v3436
  %v4718 = vpop.f32.mrb[0].mxu0
  %v4719 = vadd.f32 0.0, %v4718
  %v4720 = vpop.f32.mrb[0].mxu0
  %v4721 = vadd.f32 0.0, %v4720
  %4722 = vmatprep.mubr.f32.mxu0 0.0
  %4723 = vmatmul.mubr.f32.gmra.mrb[0].mxu0 %v3439
  %v4724 = vpop.f32.mrb[0].mxu0
  %v4725 = vadd.f32 0.0, %v4724
  %v4726 = vpop.f32.mrb[0].mxu0
  %v4727 = vadd.f32 0.0, %v4726
  %4728 = vdwg.mxu0
  %v4729 = vld [vmem:[%s23] sm:$0x3]
  %v4730 = vld [vmem:[%s21] sm:$0xff]
  %v4731 = vld [vmem:[%s21 + $0x8] sm:$0xff]
  %v4732 = vld [vmem:[%s21 + $0x10] sm:$0xff]
  %v4733 = vld [vmem:[%s21 + $0x18] sm:$0xff]
  %v4734 = vld [vmem:[%s21 + $0x20] sm:$0xff]
  %v4735 = vld [vmem:[%s21 + $0x28] sm:$0xff]
  %v4736 = vld [vmem:[%s21 + $0x30] sm:$0xff]
  %v4737 = vld [vmem:[%s21 + $0x38] sm:$0xff]
  %v4738 = vld [vmem:[%s21 + $0x40] sm:$0xff]
  %v4739 = vld [vmem:[%s21 + $0x48] sm:$0xff]
  %v4740 = vld [vmem:[%s21 + $0x50] sm:$0xff]
  %v4741 = vld [vmem:[%s21 + $0x58] sm:$0xff]
  %v4742 = vld [vmem:[%s21 + $0x60] sm:$0xff]
  %v4743 = vld [vmem:[%s21 + $0x68] sm:$0xff]
  %v4744 = vld [vmem:[%s21 + $0x70] sm:$0xff]
  %v4745 = vld [vmem:[%s21 + $0x78] sm:$0xff]
  %v4746 = vld [vmem:[%s21 + $0x80] sm:$0xff]
  %v4747 = vld [vmem:[%s21 + $0x88] sm:$0xff]
  %v4748 = vld [vmem:[%s21 + $0x90] sm:$0xff]
  %v4749 = vld [vmem:[%s21 + $0x98] sm:$0xff]
  %v4750 = vld [vmem:[%s21 + $0xa0] sm:$0xff]
  %v4751 = vld [vmem:[%s21 + $0xa8] sm:$0xff]
  %v4752 = vld [vmem:[%s21 + $0xb0] sm:$0xff]
  %v4753 = vld [vmem:[%s21 + $0xb8] sm:$0xff]
  %v4754 = vld [vmem:[%s21 + $0xc0] sm:$0xff]
  %v4755 = vld [vmem:[%s21 + $0xc8] sm:$0xff]
  %v4756 = vld [vmem:[%s21 + $0xd0] sm:$0xff]
  %v4757 = vld [vmem:[%s21 + $0xd8] sm:$0xff]
  %v4758 = vld [vmem:[%s21 + $0xe0] sm:$0xff]
  %v4759 = vld [vmem:[%s21 + $0xe8] sm:$0xff]
  %v4760 = vld [vmem:[%s21 + $0xf0] sm:$0xff]
  %v4761 = vld [vmem:[%s21 + $0xf8] sm:$0xff]
  %v4762 = vld [vmem:[%s21 + $0x100] sm:$0xff]
  %v4763 = vld [vmem:[%s21 + $0x108] sm:$0xff]
  %v4764 = vld [vmem:[%s21 + $0x110] sm:$0xff]
  %v4765 = vld [vmem:[%s21 + $0x118] sm:$0xff]
  %v4766 = vld [vmem:[%s21 + $0x120] sm:$0xff]
  %v4767 = vld [vmem:[%s21 + $0x128] sm:$0xff]
  %v4768 = vld [vmem:[%s21 + $0x130] sm:$0xff]
  %v4769 = vld [vmem:[%s21 + $0x138] sm:$0xff]
  %v4770 = vld [vmem:[%s21 + $0x140] sm:$0xff]
  %v4771 = vld [vmem:[%s21 + $0x148] sm:$0xff]
  %v4772 = vld [vmem:[%s21 + $0x150] sm:$0xff]
  %v4773 = vld [vmem:[%s21 + $0x158] sm:$0xff]
  %v4774 = vld [vmem:[%s21 + $0x160] sm:$0xff]
  %v4775 = vld [vmem:[%s21 + $0x168] sm:$0xff]
  %v4776 = vld [vmem:[%s21 + $0x170] sm:$0xff]
  %v4777 = vld [vmem:[%s21 + $0x178] sm:$0xff]
  %v4778 = vld [vmem:[%s21 + $0x180] sm:$0xff]
  %v4779 = vld [vmem:[%s21 + $0x188] sm:$0xff]
  %v4780 = vld [vmem:[%s21 + $0x190] sm:$0xff]
  %v4781 = vld [vmem:[%s21 + $0x198] sm:$0xff]
  %v4782 = vld [vmem:[%s21 + $0x1a0] sm:$0xff]
  %v4783 = vld [vmem:[%s21 + $0x1a8] sm:$0xff]
  %v4784 = vld [vmem:[%s21 + $0x1b0] sm:$0xff]
  %v4785 = vld [vmem:[%s21 + $0x1b8] sm:$0xff]
  %v4786 = vld [vmem:[%s21 + $0x1c0] sm:$0xff]
  %v4787 = vld [vmem:[%s21 + $0x1c8] sm:$0xff]
  %v4788 = vld [vmem:[%s21 + $0x1d0] sm:$0xff]
  %v4789 = vld [vmem:[%s21 + $0x1d8] sm:$0xff]
  %v4790 = vld [vmem:[%s21 + $0x1e0] sm:$0xff]
  %v4791 = vld [vmem:[%s21 + $0x1e8] sm:$0xff]
  %v4792 = vld [vmem:[%s21 + $0x1f0] sm:$0xff]
  %v4793 = vld [vmem:[%s21 + $0x1f8] sm:$0xff]
  %v4794 = vld [vmem:[%s21 + $0x200] sm:$0xff]
  %v4795 = vld [vmem:[%s21 + $0x208] sm:$0xff]
  %v4796 = vld [vmem:[%s21 + $0x210] sm:$0xff]
  %v4797 = vld [vmem:[%s21 + $0x218] sm:$0xff]
  %v4798 = vld [vmem:[%s21 + $0x220] sm:$0xff]
  %v4799 = vld [vmem:[%s21 + $0x228] sm:$0xff]
  %v4800 = vld [vmem:[%s21 + $0x230] sm:$0xff]
  %v4801 = vld [vmem:[%s21 + $0x238] sm:$0xff]
  %v4802 = vld [vmem:[%s21 + $0x240] sm:$0xff]
  %v4803 = vld [vmem:[%s21 + $0x248] sm:$0xff]
  %v4804 = vld [vmem:[%s21 + $0x250] sm:$0xff]
  %v4805 = vld [vmem:[%s21 + $0x258] sm:$0xff]
  %v4806 = vld [vmem:[%s21 + $0x260] sm:$0xff]
  %v4807 = vld [vmem:[%s21 + $0x268] sm:$0xff]
  %v4808 = vld [vmem:[%s21 + $0x270] sm:$0xff]
  %v4809 = vld [vmem:[%s21 + $0x278] sm:$0xff]
  %v4810 = vld [vmem:[%s21 + $0x280] sm:$0xff]
  %v4811 = vld [vmem:[%s21 + $0x288] sm:$0xff]
  %v4812 = vld [vmem:[%s21 + $0x290] sm:$0xff]
  %v4813 = vld [vmem:[%s21 + $0x298] sm:$0xff]
  %v4814 = vld [vmem:[%s21 + $0x2a0] sm:$0xff]
  %v4815 = vld [vmem:[%s21 + $0x2a8] sm:$0xff]
  %v4816 = vld [vmem:[%s21 + $0x2b0] sm:$0xff]
  %v4817 = vld [vmem:[%s21 + $0x2b8] sm:$0xff]
  %v4818 = vld [vmem:[%s21 + $0x2c0] sm:$0xff]
  %v4819 = vld [vmem:[%s21 + $0x2c8] sm:$0xff]
  %v4820 = vld [vmem:[%s21 + $0x2d0] sm:$0xff]
  %v4821 = vld [vmem:[%s21 + $0x2d8] sm:$0xff]
  %v4822 = vld [vmem:[%s21 + $0x2e0] sm:$0xff]
  %v4823 = vld [vmem:[%s21 + $0x2e8] sm:$0xff]
  %v4824 = vld [vmem:[%s21 + $0x2f0] sm:$0xff]
  %v4825 = vld [vmem:[%s21 + $0x2f8] sm:$0xff]
  %v4826 = vld [vmem:[%s21 + $0x300] sm:$0xff]
  %v4827 = vld [vmem:[%s21 + $0x308] sm:$0xff]
  %v4828 = vld [vmem:[%s21 + $0x310] sm:$0xff]
  %v4829 = vld [vmem:[%s21 + $0x318] sm:$0xff]
  %v4830 = vld [vmem:[%s21 + $0x320] sm:$0xff]
  %v4831 = vld [vmem:[%s21 + $0x328] sm:$0xff]
  %v4832 = vld [vmem:[%s21 + $0x330] sm:$0xff]
  %v4833 = vld [vmem:[%s21 + $0x338] sm:$0xff]
  %v4834 = vld [vmem:[%s21 + $0x340] sm:$0xff]
  %v4835 = vld [vmem:[%s21 + $0x348] sm:$0xff]
  %v4836 = vld [vmem:[%s21 + $0x350] sm:$0xff]
  %v4837 = vld [vmem:[%s21 + $0x358] sm:$0xff]
  %v4838 = vld [vmem:[%s21 + $0x360] sm:$0xff]
  %v4839 = vld [vmem:[%s21 + $0x368] sm:$0xff]
  %v4840 = vld [vmem:[%s21 + $0x370] sm:$0xff]
  %v4841 = vld [vmem:[%s21 + $0x378] sm:$0xff]
  %v4842 = vld [vmem:[%s21 + $0x380] sm:$0xff]
  %v4843 = vld [vmem:[%s21 + $0x388] sm:$0xff]
  %v4844 = vld [vmem:[%s21 + $0x390] sm:$0xff]
  %v4845 = vld [vmem:[%s21 + $0x398] sm:$0xff]
  %v4846 = vld [vmem:[%s21 + $0x3a0] sm:$0xff]
  %v4847 = vld [vmem:[%s21 + $0x3a8] sm:$0xff]
  %v4848 = vld [vmem:[%s21 + $0x3b0] sm:$0xff]
  %v4849 = vld [vmem:[%s21 + $0x3b8] sm:$0xff]
  %v4850 = vld [vmem:[%s21 + $0x3c0] sm:$0xff]
  %v4851 = vld [vmem:[%s21 + $0x3c8] sm:$0xff]
  %v4852 = vld [vmem:[%s21 + $0x3d0] sm:$0xff]
  %v4853 = vld [vmem:[%s21 + $0x3d8] sm:$0xff]
  %v4854 = vld [vmem:[%s21 + $0x3e0] sm:$0xff]
  %v4855 = vld [vmem:[%s21 + $0x3e8] sm:$0xff]
  %v4856 = vld [vmem:[%s21 + $0x3f0] sm:$0xff]
  %v4857 = vld [vmem:[%s21 + $0x3f8] sm:$0xff]
  %v4858 = vld [vmem:[%s21 + $0x400] sm:$0xff]
  %v4859 = vld [vmem:[%s21 + $0x408] sm:$0xff]
  %v4860 = vld [vmem:[%s21 + $0x410] sm:$0xff]
  %v4861 = vld [vmem:[%s21 + $0x418] sm:$0xff]
  %v4862 = vld [vmem:[%s21 + $0x420] sm:$0xff]
  %v4863 = vld [vmem:[%s21 + $0x428] sm:$0xff]
  %v4864 = vld [vmem:[%s21 + $0x430] sm:$0xff]
  %v4865 = vld [vmem:[%s21 + $0x438] sm:$0xff]
  %v4866 = vld [vmem:[%s21 + $0x440] sm:$0xff]
  %v4867 = vld [vmem:[%s21 + $0x448] sm:$0xff]
  %v4868 = vld [vmem:[%s21 + $0x450] sm:$0xff]
  %v4869 = vld [vmem:[%s21 + $0x458] sm:$0xff]
  %v4870 = vld [vmem:[%s21 + $0x460] sm:$0xff]
  %v4871 = vld [vmem:[%s21 + $0x468] sm:$0xff]
  %v4872 = vld [vmem:[%s21 + $0x470] sm:$0xff]
  %v4873 = vld [vmem:[%s21 + $0x478] sm:$0xff]
  %v4874 = vld [vmem:[%s21 + $0x480] sm:$0xff]
  %v4875 = vld [vmem:[%s21 + $0x488] sm:$0xff]
  %v4876 = vld [vmem:[%s21 + $0x490] sm:$0xff]
  %v4877 = vld [vmem:[%s21 + $0x498] sm:$0xff]
  %v4878 = vld [vmem:[%s21 + $0x4a0] sm:$0xff]
  %v4879 = vld [vmem:[%s21 + $0x4a8] sm:$0xff]
  %v4880 = vld [vmem:[%s21 + $0x4b0] sm:$0xff]
  %v4881 = vld [vmem:[%s21 + $0x4b8] sm:$0xff]
  %v4882 = vld [vmem:[%s21 + $0x4c0] sm:$0xff]
  %v4883 = vld [vmem:[%s21 + $0x4c8] sm:$0xff]
  %v4884 = vld [vmem:[%s21 + $0x4d0] sm:$0xff]
  %v4885 = vld [vmem:[%s21 + $0x4d8] sm:$0xff]
  %v4886 = vld [vmem:[%s21 + $0x4e0] sm:$0xff]
  %v4887 = vld [vmem:[%s21 + $0x4e8] sm:$0xff]
  %v4888 = vld [vmem:[%s21 + $0x4f0] sm:$0xff]
  %v4889 = vld [vmem:[%s21 + $0x4f8] sm:$0xff]
  %v4890 = vld [vmem:[%s21 + $0x500] sm:$0xff]
  %v4891 = vld [vmem:[%s21 + $0x508] sm:$0xff]
  %v4892 = vld [vmem:[%s21 + $0x510] sm:$0xff]
  %v4893 = vld [vmem:[%s21 + $0x518] sm:$0xff]
  %v4894 = vld [vmem:[%s21 + $0x520] sm:$0xff]
  %v4895 = vld [vmem:[%s21 + $0x528] sm:$0xff]
  %v4896 = vld [vmem:[%s21 + $0x530] sm:$0xff]
  %v4897 = vld [vmem:[%s21 + $0x538] sm:$0xff]
  %v4898 = vld [vmem:[%s21 + $0x540] sm:$0xff]
  %v4899 = vld [vmem:[%s21 + $0x548] sm:$0xff]
  %v4900 = vld [vmem:[%s21 + $0x550] sm:$0xff]
  %v4901 = vld [vmem:[%s21 + $0x558] sm:$0xff]
  %v4902 = vld [vmem:[%s21 + $0x560] sm:$0xff]
  %v4903 = vld [vmem:[%s21 + $0x568] sm:$0xff]
  %v4904 = vld [vmem:[%s21 + $0x570] sm:$0xff]
  %v4905 = vld [vmem:[%s21 + $0x578] sm:$0xff]
  %v4906 = vld [vmem:[%s21 + $0x580] sm:$0xff]
  %v4907 = vld [vmem:[%s21 + $0x588] sm:$0xff]
  %v4908 = vld [vmem:[%s21 + $0x590] sm:$0xff]
  %v4909 = vld [vmem:[%s21 + $0x598] sm:$0xff]
  %v4910 = vld [vmem:[%s21 + $0x5a0] sm:$0xff]
  %v4911 = vld [vmem:[%s21 + $0x5a8] sm:$0xff]
  %v4912 = vld [vmem:[%s21 + $0x5b0] sm:$0xff]
  %v4913 = vld [vmem:[%s21 + $0x5b8] sm:$0xff]
  %v4914 = vld [vmem:[%s21 + $0x5c0] sm:$0xff]
  %v4915 = vld [vmem:[%s21 + $0x5c8] sm:$0xff]
  %v4916 = vld [vmem:[%s21 + $0x5d0] sm:$0xff]
  %v4917 = vld [vmem:[%s21 + $0x5d8] sm:$0xff]
  %v4918 = vld [vmem:[%s21 + $0x5e0] sm:$0xff]
  %v4919 = vld [vmem:[%s21 + $0x5e8] sm:$0xff]
  %v4920 = vld [vmem:[%s21 + $0x5f0] sm:$0xff]
  %v4921 = vld [vmem:[%s21 + $0x5f8] sm:$0xff]
  %v4922 = vld [vmem:[%s21 + $0x600] sm:$0xff]
  %v4923 = vld [vmem:[%s21 + $0x608] sm:$0xff]
  %v4924 = vld [vmem:[%s21 + $0x610] sm:$0xff]
  %v4925 = vld [vmem:[%s21 + $0x618] sm:$0xff]
  %v4926 = vld [vmem:[%s21 + $0x620] sm:$0xff]
  %v4927 = vld [vmem:[%s21 + $0x628] sm:$0xff]
  %v4928 = vld [vmem:[%s21 + $0x630] sm:$0xff]
  %v4929 = vld [vmem:[%s21 + $0x638] sm:$0xff]
  %v4930 = vld [vmem:[%s21 + $0x640] sm:$0xff]
  %v4931 = vld [vmem:[%s21 + $0x648] sm:$0xff]
  %v4932 = vld [vmem:[%s21 + $0x650] sm:$0xff]
  %v4933 = vld [vmem:[%s21 + $0x658] sm:$0xff]
  %v4934 = vld [vmem:[%s21 + $0x660] sm:$0xff]
  %v4935 = vld [vmem:[%s21 + $0x668] sm:$0xff]
  %v4936 = vld [vmem:[%s21 + $0x670] sm:$0xff]
  %v4937 = vld [vmem:[%s21 + $0x678] sm:$0xff]
  %v4938 = vld [vmem:[%s21 + $0x680] sm:$0xff]
  %v4939 = vld [vmem:[%s21 + $0x688] sm:$0xff]
  %v4940 = vld [vmem:[%s21 + $0x690] sm:$0xff]
  %v4941 = vld [vmem:[%s21 + $0x698] sm:$0xff]
  %v4942 = vld [vmem:[%s21 + $0x6a0] sm:$0xff]
  %v4943 = vld [vmem:[%s21 + $0x6a8] sm:$0xff]
  %v4944 = vld [vmem:[%s21 + $0x6b0] sm:$0xff]
  %v4945 = vld [vmem:[%s21 + $0x6b8] sm:$0xff]
  %v4946 = vld [vmem:[%s21 + $0x6c0] sm:$0xff]
  %v4947 = vld [vmem:[%s21 + $0x6c8] sm:$0xff]
  %v4948 = vld [vmem:[%s21 + $0x6d0] sm:$0xff]
  %v4949 = vld [vmem:[%s21 + $0x6d8] sm:$0xff]
  %v4950 = vld [vmem:[%s21 + $0x6e0] sm:$0xff]
  %v4951 = vld [vmem:[%s21 + $0x6e8] sm:$0xff]
  %v4952 = vld [vmem:[%s21 + $0x6f0] sm:$0xff]
  %v4953 = vld [vmem:[%s21 + $0x6f8] sm:$0xff]
  %v4954 = vld [vmem:[%s21 + $0x700] sm:$0xff]
  %v4955 = vld [vmem:[%s21 + $0x708] sm:$0xff]
  %v4956 = vld [vmem:[%s21 + $0x710] sm:$0xff]
  %v4957 = vld [vmem:[%s21 + $0x718] sm:$0xff]
  %v4958 = vld [vmem:[%s21 + $0x720] sm:$0xff]
  %v4959 = vld [vmem:[%s21 + $0x728] sm:$0xff]
  %v4960 = vld [vmem:[%s21 + $0x730] sm:$0xff]
  %v4961 = vld [vmem:[%s21 + $0x738] sm:$0xff]
  %v4962 = vld [vmem:[%s21 + $0x740] sm:$0xff]
  %v4963 = vld [vmem:[%s21 + $0x748] sm:$0xff]
  %v4964 = vld [vmem:[%s21 + $0x750] sm:$0xff]
  %v4965 = vld [vmem:[%s21 + $0x758] sm:$0xff]
  %v4966 = vld [vmem:[%s21 + $0x760] sm:$0xff]
  %v4967 = vld [vmem:[%s21 + $0x768] sm:$0xff]
  %v4968 = vld [vmem:[%s21 + $0x770] sm:$0xff]
  %v4969 = vld [vmem:[%s21 + $0x778] sm:$0xff]
  %v4970 = vld [vmem:[%s21 + $0x780] sm:$0xff]
  %v4971 = vld [vmem:[%s21 + $0x788] sm:$0xff]
  %v4972 = vld [vmem:[%s21 + $0x790] sm:$0xff]
  %v4973 = vld [vmem:[%s21 + $0x798] sm:$0xff]
  %v4974 = vld [vmem:[%s21 + $0x7a0] sm:$0xff]
  %v4975 = vld [vmem:[%s21 + $0x7a8] sm:$0xff]
  %v4976 = vld [vmem:[%s21 + $0x7b0] sm:$0xff]
  %v4977 = vld [vmem:[%s21 + $0x7b8] sm:$0xff]
  %v4978 = vld [vmem:[%s21 + $0x7c0] sm:$0xff]
  %v4979 = vld [vmem:[%s21 + $0x7c8] sm:$0xff]
  %v4980 = vld [vmem:[%s21 + $0x7d0] sm:$0xff]
  %v4981 = vld [vmem:[%s21 + $0x7d8] sm:$0xff]
  %v4982 = vld [vmem:[%s21 + $0x7e0] sm:$0xff]
  %v4983 = vld [vmem:[%s21 + $0x7e8] sm:$0xff]
  %v4984 = vld [vmem:[%s21 + $0x7f0] sm:$0xff]
  %v4985 = vld [vmem:[%s21 + $0x7f8] sm:$0xff]
  %v4986 = vmul.f32 %v3508, %v4730
  %v4987 = vmul.f32 %v3510, %v4731
  %v4988 = vmul.f32 %v3669, %v4732
  %v4989 = vmul.f32 %v3671, %v4733
  %v4990 = vmul.f32 %v3830, %v4734
  %v4991 = vmul.f32 %v3832, %v4735
  %v4992 = vmul.f32 %v3991, %v4736
  %v4993 = vmul.f32 %v3993, %v4737
  %v4994 = vmul.f32 %v4152, %v4738
  %v4995 = vmul.f32 %v4154, %v4739
  %v4996 = vmul.f32 %v4313, %v4740
  %v4997 = vmul.f32 %v4315, %v4741
  %v4998 = vmul.f32 %v4474, %v4742
  %v4999 = vmul.f32 %v4476, %v4743
  %v5000 = vmul.f32 %v4635, %v4744
  %v5001 = vmul.f32 %v4637, %v4745
  %v5002 = vmul.f32 %v3514, %v4746
  %v5003 = vmul.f32 %v3516, %v4747
  %v5004 = vmul.f32 %v3675, %v4748
  %v5005 = vmul.f32 %v3677, %v4749
  %v5006 = vmul.f32 %v3836, %v4750
  %v5007 = vmul.f32 %v3838, %v4751
  %v5008 = vmul.f32 %v3997, %v4752
  %v5009 = vmul.f32 %v3999, %v4753
  %v5010 = vmul.f32 %v4158, %v4754
  %v5011 = vmul.f32 %v4160, %v4755
  %v5012 = vmul.f32 %v4319, %v4756
  %v5013 = vmul.f32 %v4321, %v4757
  %v5014 = vmul.f32 %v4480, %v4758
  %v5015 = vmul.f32 %v4482, %v4759
  %v5016 = vmul.f32 %v4641, %v4760
  %v5017 = vmul.f32 %v4643, %v4761
  %v5018 = vmul.f32 %v3520, %v4762
  %v5019 = vmul.f32 %v3522, %v4763
  %v5020 = vmul.f32 %v3681, %v4764
  %v5021 = vmul.f32 %v3683, %v4765
  %v5022 = vmul.f32 %v3842, %v4766
  %v5023 = vmul.f32 %v3844, %v4767
  %v5024 = vmul.f32 %v4003, %v4768
  %v5025 = vmul.f32 %v4005, %v4769
  %v5026 = vmul.f32 %v4164, %v4770
  %v5027 = vmul.f32 %v4166, %v4771
  %v5028 = vmul.f32 %v4325, %v4772
  %v5029 = vmul.f32 %v4327, %v4773
  %v5030 = vmul.f32 %v4486, %v4774
  %v5031 = vmul.f32 %v4488, %v4775
  %v5032 = vmul.f32 %v4647, %v4776
  %v5033 = vmul.f32 %v4649, %v4777
  %v5034 = vmul.f32 %v3526, %v4778
  %v5035 = vmul.f32 %v3528, %v4779
  %v5036 = vmul.f32 %v3687, %v4780
  %v5037 = vmul.f32 %v3689, %v4781
  %v5038 = vmul.f32 %v3848, %v4782
  %v5039 = vmul.f32 %v3850, %v4783
  %v5040 = vmul.f32 %v4009, %v4784
  %v5041 = vmul.f32 %v4011, %v4785
  %v5042 = vmul.f32 %v4170, %v4786
  %v5043 = vmul.f32 %v4172, %v4787
  %v5044 = vmul.f32 %v4331, %v4788
  %v5045 = vmul.f32 %v4333, %v4789
  %v5046 = vmul.f32 %v4492, %v4790
  %v5047 = vmul.f32 %v4494, %v4791
  %v5048 = vmul.f32 %v4653, %v4792
  %v5049 = vmul.f32 %v4655, %v4793
  %v5050 = vmul.f32 %v3532, %v4794
  %v5051 = vmul.f32 %v3534, %v4795
  %v5052 = vmul.f32 %v3693, %v4796
  %v5053 = vmul.f32 %v3695, %v4797
  %v5054 = vmul.f32 %v3854, %v4798
  %v5055 = vmul.f32 %v3856, %v4799
  %v5056 = vmul.f32 %v4015, %v4800
  %v5057 = vmul.f32 %v4017, %v4801
  %v5058 = vmul.f32 %v4176, %v4802
  %v5059 = vmul.f32 %v4178, %v4803
  %v5060 = vmul.f32 %v4337, %v4804
  %v5061 = vmul.f32 %v4339, %v4805
  %v5062 = vmul.f32 %v4498, %v4806
  %v5063 = vmul.f32 %v4500, %v4807
  %v5064 = vmul.f32 %v4659, %v4808
  %v5065 = vmul.f32 %v4661, %v4809
  %v5066 = vmul.f32 %v3538, %v4810
  %v5067 = vmul.f32 %v3540, %v4811
  %v5068 = vmul.f32 %v3699, %v4812
  %v5069 = vmul.f32 %v3701, %v4813
  %v5070 = vmul.f32 %v3860, %v4814
  %v5071 = vmul.f32 %v3862, %v4815
  %v5072 = vmul.f32 %v4021, %v4816
  %v5073 = vmul.f32 %v4023, %v4817
  %v5074 = vmul.f32 %v4182, %v4818
  %v5075 = vmul.f32 %v4184, %v4819
  %v5076 = vmul.f32 %v4343, %v4820
  %v5077 = vmul.f32 %v4345, %v4821
  %v5078 = vmul.f32 %v4504, %v4822
  %v5079 = vmul.f32 %v4506, %v4823
  %v5080 = vmul.f32 %v4665, %v4824
  %v5081 = vmul.f32 %v4667, %v4825
  %v5082 = vmul.f32 %v3544, %v4826
  %v5083 = vmul.f32 %v3546, %v4827
  %v5084 = vmul.f32 %v3705, %v4828
  %v5085 = vmul.f32 %v3707, %v4829
  %v5086 = vmul.f32 %v3866, %v4830
  %v5087 = vmul.f32 %v3868, %v4831
  %v5088 = vmul.f32 %v4027, %v4832
  %v5089 = vmul.f32 %v4029, %v4833
  %v5090 = vmul.f32 %v4188, %v4834
  %v5091 = vmul.f32 %v4190, %v4835
  %v5092 = vmul.f32 %v4349, %v4836
  %v5093 = vmul.f32 %v4351, %v4837
  %v5094 = vmul.f32 %v4510, %v4838
  %v5095 = vmul.f32 %v4512, %v4839
  %v5096 = vmul.f32 %v4671, %v4840
  %v5097 = vmul.f32 %v4673, %v4841
  %v5098 = vmul.f32 %v3550, %v4842
  %v5099 = vmul.f32 %v3552, %v4843
  %v5100 = vmul.f32 %v3711, %v4844
  %v5101 = vmul.f32 %v3713, %v4845
  %v5102 = vmul.f32 %v3872, %v4846
  %v5103 = vmul.f32 %v3874, %v4847
  %v5104 = vmul.f32 %v4033, %v4848
  %v5105 = vmul.f32 %v4035, %v4849
  %v5106 = vmul.f32 %v4194, %v4850
  %v5107 = vmul.f32 %v4196, %v4851
  %v5108 = vmul.f32 %v4355, %v4852
  %v5109 = vmul.f32 %v4357, %v4853
  %v5110 = vmul.f32 %v4516, %v4854
  %v5111 = vmul.f32 %v4518, %v4855
  %v5112 = vmul.f32 %v4677, %v4856
  %v5113 = vmul.f32 %v4679, %v4857
  %v5114 = vmul.f32 %v3556, %v4858
  %v5115 = vmul.f32 %v3558, %v4859
  %v5116 = vmul.f32 %v3717, %v4860
  %v5117 = vmul.f32 %v3719, %v4861
  %v5118 = vmul.f32 %v3878, %v4862
  %v5119 = vmul.f32 %v3880, %v4863
  %v5120 = vmul.f32 %v4039, %v4864
  %v5121 = vmul.f32 %v4041, %v4865
  %v5122 = vmul.f32 %v4200, %v4866
  %v5123 = vmul.f32 %v4202, %v4867
  %v5124 = vmul.f32 %v4361, %v4868
  %v5125 = vmul.f32 %v4363, %v4869
  %v5126 = vmul.f32 %v4522, %v4870
  %v5127 = vmul.f32 %v4524, %v4871
  %v5128 = vmul.f32 %v4683, %v4872
  %v5129 = vmul.f32 %v4685, %v4873
  %v5130 = vmul.f32 %v3562, %v4874
  %v5131 = vmul.f32 %v3564, %v4875
  %v5132 = vmul.f32 %v3723, %v4876
  %v5133 = vmul.f32 %v3725, %v4877
  %v5134 = vmul.f32 %v3884, %v4878
  %v5135 = vmul.f32 %v3886, %v4879
  %v5136 = vmul.f32 %v4045, %v4880
  %v5137 = vmul.f32 %v4047, %v4881
  %v5138 = vmul.f32 %v4206, %v4882
  %v5139 = vmul.f32 %v4208, %v4883
  %v5140 = vmul.f32 %v4367, %v4884
  %v5141 = vmul.f32 %v4369, %v4885
  %v5142 = vmul.f32 %v4528, %v4886
  %v5143 = vmul.f32 %v4530, %v4887
  %v5144 = vmul.f32 %v4689, %v4888
  %v5145 = vmul.f32 %v4691, %v4889
  %v5146 = vmul.f32 %v3568, %v4890
  %v5147 = vmul.f32 %v3570, %v4891
  %v5148 = vmul.f32 %v3729, %v4892
  %v5149 = vmul.f32 %v3731, %v4893
  %v5150 = vmul.f32 %v3890, %v4894
  %v5151 = vmul.f32 %v3892, %v4895
  %v5152 = vmul.f32 %v4051, %v4896
  %v5153 = vmul.f32 %v4053, %v4897
  %v5154 = vmul.f32 %v4212, %v4898
  %v5155 = vmul.f32 %v4214, %v4899
  %v5156 = vmul.f32 %v4373, %v4900
  %v5157 = vmul.f32 %v4375, %v4901
  %v5158 = vmul.f32 %v4534, %v4902
  %v5159 = vmul.f32 %v4536, %v4903
  %v5160 = vmul.f32 %v4695, %v4904
  %v5161 = vmul.f32 %v4697, %v4905
  %v5162 = vmul.f32 %v3574, %v4906
  %v5163 = vmul.f32 %v3576, %v4907
  %v5164 = vmul.f32 %v3735, %v4908
  %v5165 = vmul.f32 %v3737, %v4909
  %v5166 = vmul.f32 %v3896, %v4910
  %v5167 = vmul.f32 %v3898, %v4911
  %v5168 = vmul.f32 %v4057, %v4912
  %v5169 = vmul.f32 %v4059, %v4913
  %v5170 = vmul.f32 %v4218, %v4914
  %v5171 = vmul.f32 %v4220, %v4915
  %v5172 = vmul.f32 %v4379, %v4916
  %v5173 = vmul.f32 %v4381, %v4917
  %v5174 = vmul.f32 %v4540, %v4918
  %v5175 = vmul.f32 %v4542, %v4919
  %v5176 = vmul.f32 %v4701, %v4920
  %v5177 = vmul.f32 %v4703, %v4921
  %v5178 = vmul.f32 %v3580, %v4922
  %v5179 = vmul.f32 %v3582, %v4923
  %v5180 = vmul.f32 %v3741, %v4924
  %v5181 = vmul.f32 %v3743, %v4925
  %v5182 = vmul.f32 %v3902, %v4926
  %v5183 = vmul.f32 %v3904, %v4927
  %v5184 = vmul.f32 %v4063, %v4928
  %v5185 = vmul.f32 %v4065, %v4929
  %v5186 = vmul.f32 %v4224, %v4930
  %v5187 = vmul.f32 %v4226, %v4931
  %v5188 = vmul.f32 %v4385, %v4932
  %v5189 = vmul.f32 %v4387, %v4933
  %v5190 = vmul.f32 %v4546, %v4934
  %v5191 = vmul.f32 %v4548, %v4935
  %v5192 = vmul.f32 %v4707, %v4936
  %v5193 = vmul.f32 %v4709, %v4937
  %v5194 = vmul.f32 %v3586, %v4938
  %v5195 = vmul.f32 %v3588, %v4939
  %v5196 = vmul.f32 %v3747, %v4940
  %v5197 = vmul.f32 %v3749, %v4941
  %v5198 = vmul.f32 %v3908, %v4942
  %v5199 = vmul.f32 %v3910, %v4943
  %v5200 = vmul.f32 %v4069, %v4944
  %v5201 = vmul.f32 %v4071, %v4945
  %v5202 = vmul.f32 %v4230, %v4946
  %v5203 = vmul.f32 %v4232, %v4947
  %v5204 = vmul.f32 %v4391, %v4948
  %v5205 = vmul.f32 %v4393, %v4949
  %v5206 = vmul.f32 %v4552, %v4950
  %v5207 = vmul.f32 %v4554, %v4951
  %v5208 = vmul.f32 %v4713, %v4952
  %v5209 = vmul.f32 %v4715, %v4953
  %v5210 = vmul.f32 %v3592, %v4954
  %v5211 = vmul.f32 %v3594, %v4955
  %v5212 = vmul.f32 %v3753, %v4956
  %v5213 = vmul.f32 %v3755, %v4957
  %v5214 = vmul.f32 %v3914, %v4958
  %v5215 = vmul.f32 %v3916, %v4959
  %v5216 = vmul.f32 %v4075, %v4960
  %v5217 = vmul.f32 %v4077, %v4961
  %v5218 = vmul.f32 %v4236, %v4962
  %v5219 = vmul.f32 %v4238, %v4963
  %v5220 = vmul.f32 %v4397, %v4964
  %v5221 = vmul.f32 %v4399, %v4965
  %v5222 = vmul.f32 %v4558, %v4966
  %v5223 = vmul.f32 %v4560, %v4967
  %v5224 = vmul.f32 %v4719, %v4968
  %v5225 = vmul.f32 %v4721, %v4969
  %v5226 = vmul.f32 %v3598, %v4970
  %v5227 = vmul.f32 %v3600, %v4971
  %v5228 = vmul.f32 %v3759, %v4972
  %v5229 = vmul.f32 %v3761, %v4973
  %v5230 = vmul.f32 %v3920, %v4974
  %v5231 = vmul.f32 %v3922, %v4975
  %v5232 = vmul.f32 %v4081, %v4976
  %v5233 = vmul.f32 %v4083, %v4977
  %v5234 = vmul.f32 %v4242, %v4978
  %v5235 = vmul.f32 %v4244, %v4979
  %v5236 = vmul.f32 %v4403, %v4980
  %v5237 = vmul.f32 %v4405, %v4981
  %v5238 = vmul.f32 %v4564, %v4982
  %v5239 = vmul.f32 %v4566, %v4983
  %v5240 = vmul.f32 %v4725, %v4984
  %v5241 = vmul.f32 %v4727, %v4985
  %5242 = vmatprep.subr.mxu0 %v4987
  %5243 = vmatpush1.msra.mxu0 %v4986
  %5244 = vmatprep.subr.mxu0 %v5003
  %5245 = vmatpush1.msra.mxu0 %v5002
  %5246 = vmatprep.subr.mxu0 %v5019
  %5247 = vmatpush1.msra.mxu0 %v5018
  %5248 = vmatprep.subr.mxu0 %v5035
  %5249 = vmatpush1.msra.mxu0 %v5034
  %5250 = vmatprep.subr.mxu0 %v5051
  %5251 = vmatpush1.msra.mxu0 %v5050
  %5252 = vmatprep.subr.mxu0 %v5067
  %5253 = vmatpush1.msra.mxu0 %v5066
  %5254 = vmatprep.subr.mxu0 %v5083
  %5255 = vmatpush1.msra.mxu0 %v5082
  %5256 = vmatprep.subr.mxu0 %v5099
  %5257 = vmatpush1.msra.mxu0 %v5098
  %5258 = vmatprep.subr.mxu0 %v5115
  %5259 = vmatpush1.msra.mxu0 %v5114
  %5260 = vmatprep.subr.mxu0 %v5131
  %5261 = vmatpush1.msra.mxu0 %v5130
  %5262 = vmatprep.subr.mxu0 %v5147
  %5263 = vmatpush1.msra.mxu0 %v5146
  %5264 = vmatprep.subr.mxu0 %v5163
  %5265 = vmatpush1.msra.mxu0 %v5162
  %5266 = vmatprep.subr.mxu0 %v5179
  %5267 = vmatpush1.msra.mxu0 %v5178
  %5268 = vmatprep.subr.mxu0 %v5195
  %5269 = vmatpush1.msra.mxu0 %v5194
  %5270 = vmatprep.subr.mxu0 %v5211
  %5271 = vmatpush1.msra.mxu0 %v5210
  %5272 = vmatprep.subr.mxu0 %v5227
  %5273 = vmatpush1.msra.mxu0 %v5226
  %5274 = vmatprep.subr.mxu0 0.0
  %5275 = vmatpush1.msra.mxu0 0.0
  %5276 = vmatprep.subr.mxu0 0.0
  %5277 = vmatpush1.msra.mxu0 0.0
  %5278 = vmatprep.subr.mxu0 0.0
  %5279 = vmatpush1.msra.mxu0 0.0
  %5280 = vmatprep.subr.mxu0 0.0
  %5281 = vmatpush1.msra.mxu0 0.0
  %5282 = vmatprep.subr.mxu0 0.0
  %5283 = vmatpush1.msra.mxu0 0.0
  %5284 = vmatprep.subr.mxu0 0.0
  %5285 = vmatpush1.msra.mxu0 0.0
  %5286 = vmatprep.subr.mxu0 0.0
  %5287 = vmatpush1.msra.mxu0 0.0
  %5288 = vmatprep.subr.mxu0 0.0
  %5289 = vmatpush1.msra.mxu0 0.0
  %5290 = vmatprep.subr.mxu0 0.0
  %5291 = vmatpush1.msra.mxu0 0.0
  %5292 = vmatprep.subr.mxu0 0.0
  %5293 = vmatpush1.msra.mxu0 0.0
  %5294 = vmatprep.subr.mxu0 0.0
  %5295 = vmatpush1.msra.mxu0 0.0
  %5296 = vmatprep.subr.mxu0 0.0
  %5297 = vmatpush1.msra.mxu0 0.0
  %5298 = vmatprep.subr.mxu0 0.0
  %5299 = vmatpush1.msra.mxu0 0.0
  %5300 = vmatprep.subr.mxu0 0.0
  %5301 = vmatpush1.msra.mxu0 0.0
  %5302 = vmatprep.subr.mxu0 0.0
  %5303 = vmatpush1.msra.mxu0 0.0
  %5304 = vmatprep.subr.mxu0 0.0
  %5305 = vmatpush1.msra.mxu0 0.0
  %5306 = vmatprep.mubr.f32.mxu0 0.0
  %5307 = vmatmul.mubr.f32.gmra.mrb[0].mxu0 %v4729
  %v5308 = vpop.f32.mrb[0].mxu0
  %v5309 = vadd.f32 0.0, %v5308
  %v5310 = vpop.f32.mrb[0].mxu0
  %v5311 = vadd.f32 0.0, %v5310
  %5312 = vdwg.mxu0
  %5313 = vmatprep.subr.mxu0 %v4989
  %5314 = vmatpush1.msra.mxu0 %v4988
  %5315 = vmatprep.subr.mxu0 %v5005
  %5316 = vmatpush1.msra.mxu0 %v5004
  %5317 = vmatprep.subr.mxu0 %v5021
  %5318 = vmatpush1.msra.mxu0 %v5020
  %5319 = vmatprep.subr.mxu0 %v5037
  %5320 = vmatpush1.msra.mxu0 %v5036
  %5321 = vmatprep.subr.mxu0 %v5053
  %5322 = vmatpush1.msra.mxu0 %v5052
  %5323 = vmatprep.subr.mxu0 %v5069
  %5324 = vmatpush1.msra.mxu0 %v5068
  %5325 = vmatprep.subr.mxu0 %v5085
  %5326 = vmatpush1.msra.mxu0 %v5084
  %5327 = vmatprep.subr.mxu0 %v5101
  %5328 = vmatpush1.msra.mxu0 %v5100
  %5329 = vmatprep.subr.mxu0 %v5117
  %5330 = vmatpush1.msra.mxu0 %v5116
  %5331 = vmatprep.subr.mxu0 %v5133
  %5332 = vmatpush1.msra.mxu0 %v5132
  %5333 = vmatprep.subr.mxu0 %v5149
  %5334 = vmatpush1.msra.mxu0 %v5148
  %5335 = vmatprep.subr.mxu0 %v5165
  %5336 = vmatpush1.msra.mxu0 %v5164
  %5337 = vmatprep.subr.mxu0 %v5181
  %5338 = vmatpush1.msra.mxu0 %v5180
  %5339 = vmatprep.subr.mxu0 %v5197
  %5340 = vmatpush1.msra.mxu0 %v5196
  %5341 = vmatprep.subr.mxu0 %v5213
  %5342 = vmatpush1.msra.mxu0 %v5212
  %5343 = vmatprep.subr.mxu0 %v5229
  %5344 = vmatpush1.msra.mxu0 %v5228
  %5345 = vmatprep.subr.mxu0 0.0
  %5346 = vmatpush1.msra.mxu0 0.0
  %5347 = vmatprep.subr.mxu0 0.0
  %5348 = vmatpush1.msra.mxu0 0.0
  %5349 = vmatprep.subr.mxu0 0.0
  %5350 = vmatpush1.msra.mxu0 0.0
  %5351 = vmatprep.subr.mxu0 0.0
  %5352 = vmatpush1.msra.mxu0 0.0
  %5353 = vmatprep.subr.mxu0 0.0
  %5354 = vmatpush1.msra.mxu0 0.0
  %5355 = vmatprep.subr.mxu0 0.0
  %5356 = vmatpush1.msra.mxu0 0.0
  %5357 = vmatprep.subr.mxu0 0.0
  %5358 = vmatpush1.msra.mxu0 0.0
  %5359 = vmatprep.subr.mxu0 0.0
  %5360 = vmatpush1.msra.mxu0 0.0
  %5361 = vmatprep.subr.mxu0 0.0
  %5362 = vmatpush1.msra.mxu0 0.0
  %5363 = vmatprep.subr.mxu0 0.0
  %5364 = vmatpush1.msra.mxu0 0.0
  %5365 = vmatprep.subr.mxu0 0.0
  %5366 = vmatpush1.msra.mxu0 0.0
  %5367 = vmatprep.subr.mxu0 0.0
  %5368 = vmatpush1.msra.mxu0 0.0
  %5369 = vmatprep.subr.mxu0 0.0
  %5370 = vmatpush1.msra.mxu0 0.0
  %5371 = vmatprep.subr.mxu0 0.0
  %5372 = vmatpush1.msra.mxu0 0.0
  %5373 = vmatprep.subr.mxu0 0.0
  %5374 = vmatpush1.msra.mxu0 0.0
  %5375 = vmatprep.subr.mxu0 0.0
  %5376 = vmatpush1.msra.mxu0 0.0
  %5377 = vmatprep.mubr.f32.mxu0 0.0
  %5378 = vmatmul.mubr.f32.gmra.mrb[0].mxu0 %v4729
  %v5379 = vpop.f32.mrb[0].mxu0
  %v5380 = vadd.f32 0.0, %v5379
  %v5381 = vpop.f32.mrb[0].mxu0
  %v5382 = vadd.f32 0.0, %v5381
  %5383 = vdwg.mxu0
  %5384 = vmatprep.subr.mxu0 %v4991
  %5385 = vmatpush1.msra.mxu0 %v4990
  %5386 = vmatprep.subr.mxu0 %v5007
  %5387 = vmatpush1.msra.mxu0 %v5006
  %5388 = vmatprep.subr.mxu0 %v5023
  %5389 = vmatpush1.msra.mxu0 %v5022
  %5390 = vmatprep.subr.mxu0 %v5039
  %5391 = vmatpush1.msra.mxu0 %v5038
  %5392 = vmatprep.subr.mxu0 %v5055
  %5393 = vmatpush1.msra.mxu0 %v5054
  %5394 = vmatprep.subr.mxu0 %v5071
  %5395 = vmatpush1.msra.mxu0 %v5070
  %5396 = vmatprep.subr.mxu0 %v5087
  %5397 = vmatpush1.msra.mxu0 %v5086
  %5398 = vmatprep.subr.mxu0 %v5103
  %5399 = vmatpush1.msra.mxu0 %v5102
  %5400 = vmatprep.subr.mxu0 %v5119
  %5401 = vmatpush1.msra.mxu0 %v5118
  %5402 = vmatprep.subr.mxu0 %v5135
  %5403 = vmatpush1.msra.mxu0 %v5134
  %5404 = vmatprep.subr.mxu0 %v5151
  %5405 = vmatpush1.msra.mxu0 %v5150
  %5406 = vmatprep.subr.mxu0 %v5167
  %5407 = vmatpush1.msra.mxu0 %v5166
  %5408 = vmatprep.subr.mxu0 %v5183
  %5409 = vmatpush1.msra.mxu0 %v5182
  %5410 = vmatprep.subr.mxu0 %v5199
  %5411 = vmatpush1.msra.mxu0 %v5198
  %5412 = vmatprep.subr.mxu0 %v5215
  %5413 = vmatpush1.msra.mxu0 %v5214
  %5414 = vmatprep.subr.mxu0 %v5231
  %5415 = vmatpush1.msra.mxu0 %v5230
  %5416 = vmatprep.subr.mxu0 0.0
  %5417 = vmatpush1.msra.mxu0 0.0
  %5418 = vmatprep.subr.mxu0 0.0
  %5419 = vmatpush1.msra.mxu0 0.0
  %5420 = vmatprep.subr.mxu0 0.0
  %5421 = vmatpush1.msra.mxu0 0.0
  %5422 = vmatprep.subr.mxu0 0.0
  %5423 = vmatpush1.msra.mxu0 0.0
  %5424 = vmatprep.subr.mxu0 0.0
  %5425 = vmatpush1.msra.mxu0 0.0
  %5426 = vmatprep.subr.mxu0 0.0
  %5427 = vmatpush1.msra.mxu0 0.0
  %5428 = vmatprep.subr.mxu0 0.0
  %5429 = vmatpush1.msra.mxu0 0.0
  %5430 = vmatprep.subr.mxu0 0.0
  %5431 = vmatpush1.msra.mxu0 0.0
  %5432 = vmatprep.subr.mxu0 0.0
  %5433 = vmatpush1.msra.mxu0 0.0
  %5434 = vmatprep.subr.mxu0 0.0
  %5435 = vmatpush1.msra.mxu0 0.0
  %5436 = vmatprep.subr.mxu0 0.0
  %5437 = vmatpush1.msra.mxu0 0.0
  %5438 = vmatprep.subr.mxu0 0.0
  %5439 = vmatpush1.msra.mxu0 0.0
  %5440 = vmatprep.subr.mxu0 0.0
  %5441 = vmatpush1.msra.mxu0 0.0
  %5442 = vmatprep.subr.mxu0 0.0
  %5443 = vmatpush1.msra.mxu0 0.0
  %5444 = vmatprep.subr.mxu0 0.0
  %5445 = vmatpush1.msra.mxu0 0.0
  %5446 = vmatprep.subr.mxu0 0.0
  %5447 = vmatpush1.msra.mxu0 0.0
  %5448 = vmatprep.mubr.f32.mxu0 0.0
  %5449 = vmatmul.mubr.f32.gmra.mrb[0].mxu0 %v4729
  %v5450 = vpop.f32.mrb[0].mxu0
  %v5451 = vadd.f32 0.0, %v5450
  %v5452 = vpop.f32.mrb[0].mxu0
  %v5453 = vadd.f32 0.0, %v5452
  %5454 = vdwg.mxu0
  %5455 = vmatprep.subr.mxu0 %v4993
  %5456 = vmatpush1.msra.mxu0 %v4992
  %5457 = vmatprep.subr.mxu0 %v5009
  %5458 = vmatpush1.msra.mxu0 %v5008
  %5459 = vmatprep.subr.mxu0 %v5025
  %5460 = vmatpush1.msra.mxu0 %v5024
  %5461 = vmatprep.subr.mxu0 %v5041
  %5462 = vmatpush1.msra.mxu0 %v5040
  %5463 = vmatprep.subr.mxu0 %v5057
  %5464 = vmatpush1.msra.mxu0 %v5056
  %5465 = vmatprep.subr.mxu0 %v5073
  %5466 = vmatpush1.msra.mxu0 %v5072
  %5467 = vmatprep.subr.mxu0 %v5089
  %5468 = vmatpush1.msra.mxu0 %v5088
  %5469 = vmatprep.subr.mxu0 %v5105
  %5470 = vmatpush1.msra.mxu0 %v5104
  %5471 = vmatprep.subr.mxu0 %v5121
  %5472 = vmatpush1.msra.mxu0 %v5120
  %5473 = vmatprep.subr.mxu0 %v5137
  %5474 = vmatpush1.msra.mxu0 %v5136
  %5475 = vmatprep.subr.mxu0 %v5153
  %5476 = vmatpush1.msra.mxu0 %v5152
  %5477 = vmatprep.subr.mxu0 %v5169
  %5478 = vmatpush1.msra.mxu0 %v5168
  %5479 = vmatprep.subr.mxu0 %v5185
  %5480 = vmatpush1.msra.mxu0 %v5184
  %5481 = vmatprep.subr.mxu0 %v5201
  %5482 = vmatpush1.msra.mxu0 %v5200
  %5483 = vmatprep.subr.mxu0 %v5217
  %5484 = vmatpush1.msra.mxu0 %v5216
  %5485 = vmatprep.subr.mxu0 %v5233
  %5486 = vmatpush1.msra.mxu0 %v5232
  %5487 = vmatprep.subr.mxu0 0.0
  %5488 = vmatpush1.msra.mxu0 0.0
  %5489 = vmatprep.subr.mxu0 0.0
  %5490 = vmatpush1.msra.mxu0 0.0
  %5491 = vmatprep.subr.mxu0 0.0
  %5492 = vmatpush1.msra.mxu0 0.0
  %5493 = vmatprep.subr.mxu0 0.0
  %5494 = vmatpush1.msra.mxu0 0.0
  %5495 = vmatprep.subr.mxu0 0.0
  %5496 = vmatpush1.msra.mxu0 0.0
  %5497 = vmatprep.subr.mxu0 0.0
  %5498 = vmatpush1.msra.mxu0 0.0
  %5499 = vmatprep.subr.mxu0 0.0
  %5500 = vmatpush1.msra.mxu0 0.0
  %5501 = vmatprep.subr.mxu0 0.0
  %5502 = vmatpush1.msra.mxu0 0.0
  %5503 = vmatprep.subr.mxu0 0.0
  %5504 = vmatpush1.msra.mxu0 0.0
  %5505 = vmatprep.subr.mxu0 0.0
  %5506 = vmatpush1.msra.mxu0 0.0
  %5507 = vmatprep.subr.mxu0 0.0
  %5508 = vmatpush1.msra.mxu0 0.0
  %5509 = vmatprep.subr.mxu0 0.0
  %5510 = vmatpush1.msra.mxu0 0.0
  %5511 = vmatprep.subr.mxu0 0.0
  %5512 = vmatpush1.msra.mxu0 0.0
  %5513 = vmatprep.subr.mxu0 0.0
  %5514 = vmatpush1.msra.mxu0 0.0
  %5515 = vmatprep.subr.mxu0 0.0
  %5516 = vmatpush1.msra.mxu0 0.0
  %5517 = vmatprep.subr.mxu0 0.0
  %5518 = vmatpush1.msra.mxu0 0.0
  %5519 = vmatprep.mubr.f32.mxu0 0.0
  %5520 = vmatmul.mubr.f32.gmra.mrb[0].mxu0 %v4729
  %v5521 = vpop.f32.mrb[0].mxu0
  %v5522 = vadd.f32 0.0, %v5521
  %v5523 = vpop.f32.mrb[0].mxu0
  %v5524 = vadd.f32 0.0, %v5523
  %5525 = vdwg.mxu0
  %5526 = vmatprep.subr.mxu0 %v4995
  %5527 = vmatpush1.msra.mxu0 %v4994
  %5528 = vmatprep.subr.mxu0 %v5011
  %5529 = vmatpush1.msra.mxu0 %v5010
  %5530 = vmatprep.subr.mxu0 %v5027
  %5531 = vmatpush1.msra.mxu0 %v5026
  %5532 = vmatprep.subr.mxu0 %v5043
  %5533 = vmatpush1.msra.mxu0 %v5042
  %5534 = vmatprep.subr.mxu0 %v5059
  %5535 = vmatpush1.msra.mxu0 %v5058
  %5536 = vmatprep.subr.mxu0 %v5075
  %5537 = vmatpush1.msra.mxu0 %v5074
  %5538 = vmatprep.subr.mxu0 %v5091
  %5539 = vmatpush1.msra.mxu0 %v5090
  %5540 = vmatprep.subr.mxu0 %v5107
  %5541 = vmatpush1.msra.mxu0 %v5106
  %5542 = vmatprep.subr.mxu0 %v5123
  %5543 = vmatpush1.msra.mxu0 %v5122
  %5544 = vmatprep.subr.mxu0 %v5139
  %5545 = vmatpush1.msra.mxu0 %v5138
  %5546 = vmatprep.subr.mxu0 %v5155
  %5547 = vmatpush1.msra.mxu0 %v5154
  %5548 = vmatprep.subr.mxu0 %v5171
  %5549 = vmatpush1.msra.mxu0 %v5170
  %5550 = vmatprep.subr.mxu0 %v5187
  %5551 = vmatpush1.msra.mxu0 %v5186
  %5552 = vmatprep.subr.mxu0 %v5203
  %5553 = vmatpush1.msra.mxu0 %v5202
  %5554 = vmatprep.subr.mxu0 %v5219
  %5555 = vmatpush1.msra.mxu0 %v5218
  %5556 = vmatprep.subr.mxu0 %v5235
  %5557 = vmatpush1.msra.mxu0 %v5234
  %5558 = vmatprep.subr.mxu0 0.0
  %5559 = vmatpush1.msra.mxu0 0.0
  %5560 = vmatprep.subr.mxu0 0.0
  %5561 = vmatpush1.msra.mxu0 0.0
  %5562 = vmatprep.subr.mxu0 0.0
  %5563 = vmatpush1.msra.mxu0 0.0
  %5564 = vmatprep.subr.mxu0 0.0
  %5565 = vmatpush1.msra.mxu0 0.0
  %5566 = vmatprep.subr.mxu0 0.0
  %5567 = vmatpush1.msra.mxu0 0.0
  %5568 = vmatprep.subr.mxu0 0.0
  %5569 = vmatpush1.msra.mxu0 0.0
  %5570 = vmatprep.subr.mxu0 0.0
  %5571 = vmatpush1.msra.mxu0 0.0
  %5572 = vmatprep.subr.mxu0 0.0
  %5573 = vmatpush1.msra.mxu0 0.0
  %5574 = vmatprep.subr.mxu0 0.0
  %5575 = vmatpush1.msra.mxu0 0.0
  %5576 = vmatprep.subr.mxu0 0.0
  %5577 = vmatpush1.msra.mxu0 0.0
  %5578 = vmatprep.subr.mxu0 0.0
  %5579 = vmatpush1.msra.mxu0 0.0
  %5580 = vmatprep.subr.mxu0 0.0
  %5581 = vmatpush1.msra.mxu0 0.0
  %5582 = vmatprep.subr.mxu0 0.0
  %5583 = vmatpush1.msra.mxu0 0.0
  %5584 = vmatprep.subr.mxu0 0.0
  %5585 = vmatpush1.msra.mxu0 0.0
  %5586 = vmatprep.subr.mxu0 0.0
  %5587 = vmatpush1.msra.mxu0 0.0
  %5588 = vmatprep.subr.mxu0 0.0
  %5589 = vmatpush1.msra.mxu0 0.0
  %5590 = vmatprep.mubr.f32.mxu0 0.0
  %5591 = vmatmul.mubr.f32.gmra.mrb[0].mxu0 %v4729
  %v5592 = vpop.f32.mrb[0].mxu0
  %v5593 = vadd.f32 0.0, %v5592
  %v5594 = vpop.f32.mrb[0].mxu0
  %v5595 = vadd.f32 0.0, %v5594
  %5596 = vdwg.mxu0
  %5597 = vmatprep.subr.mxu0 %v4997
  %5598 = vmatpush1.msra.mxu0 %v4996
  %5599 = vmatprep.subr.mxu0 %v5013
  %5600 = vmatpush1.msra.mxu0 %v5012
  %5601 = vmatprep.subr.mxu0 %v5029
  %5602 = vmatpush1.msra.mxu0 %v5028
  %5603 = vmatprep.subr.mxu0 %v5045
  %5604 = vmatpush1.msra.mxu0 %v5044
  %5605 = vmatprep.subr.mxu0 %v5061
  %5606 = vmatpush1.msra.mxu0 %v5060
  %5607 = vmatprep.subr.mxu0 %v5077
  %5608 = vmatpush1.msra.mxu0 %v5076
  %5609 = vmatprep.subr.mxu0 %v5093
  %5610 = vmatpush1.msra.mxu0 %v5092
  %5611 = vmatprep.subr.mxu0 %v5109
  %5612 = vmatpush1.msra.mxu0 %v5108
  %5613 = vmatprep.subr.mxu0 %v5125
  %5614 = vmatpush1.msra.mxu0 %v5124
  %5615 = vmatprep.subr.mxu0 %v5141
  %5616 = vmatpush1.msra.mxu0 %v5140
  %5617 = vmatprep.subr.mxu0 %v5157
  %5618 = vmatpush1.msra.mxu0 %v5156
  %5619 = vmatprep.subr.mxu0 %v5173
  %5620 = vmatpush1.msra.mxu0 %v5172
  %5621 = vmatprep.subr.mxu0 %v5189
  %5622 = vmatpush1.msra.mxu0 %v5188
  %5623 = vmatprep.subr.mxu0 %v5205
  %5624 = vmatpush1.msra.mxu0 %v5204
  %5625 = vmatprep.subr.mxu0 %v5221
  %5626 = vmatpush1.msra.mxu0 %v5220
  %5627 = vmatprep.subr.mxu0 %v5237
  %5628 = vmatpush1.msra.mxu0 %v5236
  %5629 = vmatprep.subr.mxu0 0.0
  %5630 = vmatpush1.msra.mxu0 0.0
  %5631 = vmatprep.subr.mxu0 0.0
  %5632 = vmatpush1.msra.mxu0 0.0
  %5633 = vmatprep.subr.mxu0 0.0
  %5634 = vmatpush1.msra.mxu0 0.0
  %5635 = vmatprep.subr.mxu0 0.0
  %5636 = vmatpush1.msra.mxu0 0.0
  %5637 = vmatprep.subr.mxu0 0.0
  %5638 = vmatpush1.msra.mxu0 0.0
  %5639 = vmatprep.subr.mxu0 0.0
  %5640 = vmatpush1.msra.mxu0 0.0
  %5641 = vmatprep.subr.mxu0 0.0
  %5642 = vmatpush1.msra.mxu0 0.0
  %5643 = vmatprep.subr.mxu0 0.0
  %5644 = vmatpush1.msra.mxu0 0.0
  %5645 = vmatprep.subr.mxu0 0.0
  %5646 = vmatpush1.msra.mxu0 0.0
  %5647 = vmatprep.subr.mxu0 0.0
  %5648 = vmatpush1.msra.mxu0 0.0
  %5649 = vmatprep.subr.mxu0 0.0
  %5650 = vmatpush1.msra.mxu0 0.0
  %5651 = vmatprep.subr.mxu0 0.0
  %5652 = vmatpush1.msra.mxu0 0.0
  %5653 = vmatprep.subr.mxu0 0.0
  %5654 = vmatpush1.msra.mxu0 0.0
  %5655 = vmatprep.subr.mxu0 0.0
  %5656 = vmatpush1.msra.mxu0 0.0
  %5657 = vmatprep.subr.mxu0 0.0
  %5658 = vmatpush1.msra.mxu0 0.0
  %5659 = vmatprep.subr.mxu0 0.0
  %5660 = vmatpush1.msra.mxu0 0.0
  %5661 = vmatprep.mubr.f32.mxu0 0.0
  %5662 = vmatmul.mubr.f32.gmra.mrb[0].mxu0 %v4729
  %v5663 = vpop.f32.mrb[0].mxu0
  %v5664 = vadd.f32 0.0, %v5663
  %v5665 = vpop.f32.mrb[0].mxu0
  %v5666 = vadd.f32 0.0, %v5665
  %5667 = vdwg.mxu0
  %5668 = vmatprep.subr.mxu0 %v4999
  %5669 = vmatpush1.msra.mxu0 %v4998
  %5670 = vmatprep.subr.mxu0 %v5015
  %5671 = vmatpush1.msra.mxu0 %v5014
  %5672 = vmatprep.subr.mxu0 %v5031
  %5673 = vmatpush1.msra.mxu0 %v5030
  %5674 = vmatprep.subr.mxu0 %v5047
  %5675 = vmatpush1.msra.mxu0 %v5046
  %5676 = vmatprep.subr.mxu0 %v5063
  %5677 = vmatpush1.msra.mxu0 %v5062
  %5678 = vmatprep.subr.mxu0 %v5079
  %5679 = vmatpush1.msra.mxu0 %v5078
  %5680 = vmatprep.subr.mxu0 %v5095
  %5681 = vmatpush1.msra.mxu0 %v5094
  %5682 = vmatprep.subr.mxu0 %v5111
  %5683 = vmatpush1.msra.mxu0 %v5110
  %5684 = vmatprep.subr.mxu0 %v5127
  %5685 = vmatpush1.msra.mxu0 %v5126
  %5686 = vmatprep.subr.mxu0 %v5143
  %5687 = vmatpush1.msra.mxu0 %v5142
  %5688 = vmatprep.subr.mxu0 %v5159
  %5689 = vmatpush1.msra.mxu0 %v5158
  %5690 = vmatprep.subr.mxu0 %v5175
  %5691 = vmatpush1.msra.mxu0 %v5174
  %5692 = vmatprep.subr.mxu0 %v5191
  %5693 = vmatpush1.msra.mxu0 %v5190
  %5694 = vmatprep.subr.mxu0 %v5207
  %5695 = vmatpush1.msra.mxu0 %v5206
  %5696 = vmatprep.subr.mxu0 %v5223
  %5697 = vmatpush1.msra.mxu0 %v5222
  %5698 = vmatprep.subr.mxu0 %v5239
  %5699 = vmatpush1.msra.mxu0 %v5238
  %5700 = vmatprep.subr.mxu0 0.0
  %5701 = vmatpush1.msra.mxu0 0.0
  %5702 = vmatprep.subr.mxu0 0.0
  %5703 = vmatpush1.msra.mxu0 0.0
  %5704 = vmatprep.subr.mxu0 0.0
  %5705 = vmatpush1.msra.mxu0 0.0
  %5706 = vmatprep.subr.mxu0 0.0
  %5707 = vmatpush1.msra.mxu0 0.0
  %5708 = vmatprep.subr.mxu0 0.0
  %5709 = vmatpush1.msra.mxu0 0.0
  %5710 = vmatprep.subr.mxu0 0.0
  %5711 = vmatpush1.msra.mxu0 0.0
  %5712 = vmatprep.subr.mxu0 0.0
  %5713 = vmatpush1.msra.mxu0 0.0
  %5714 = vmatprep.subr.mxu0 0.0
  %5715 = vmatpush1.msra.mxu0 0.0
  %5716 = vmatprep.subr.mxu0 0.0
  %5717 = vmatpush1.msra.mxu0 0.0
  %5718 = vmatprep.subr.mxu0 0.0
  %5719 = vmatpush1.msra.mxu0 0.0
  %5720 = vmatprep.subr.mxu0 0.0
  %5721 = vmatpush1.msra.mxu0 0.0
  %5722 = vmatprep.subr.mxu0 0.0
  %5723 = vmatpush1.msra.mxu0 0.0
  %5724 = vmatprep.subr.mxu0 0.0
  %5725 = vmatpush1.msra.mxu0 0.0
  %5726 = vmatprep.subr.mxu0 0.0
  %5727 = vmatpush1.msra.mxu0 0.0
  %5728 = vmatprep.subr.mxu0 0.0
  %5729 = vmatpush1.msra.mxu0 0.0
  %5730 = vmatprep.subr.mxu0 0.0
  %5731 = vmatpush1.msra.mxu0 0.0
  %5732 = vmatprep.mubr.f32.mxu0 0.0
  %5733 = vmatmul.mubr.f32.gmra.mrb[0].mxu0 %v4729
  %v5734 = vpop.f32.mrb[0].mxu0
  %v5735 = vadd.f32 0.0, %v5734
  %v5736 = vpop.f32.mrb[0].mxu0
  %v5737 = vadd.f32 0.0, %v5736
  %5738 = vdwg.mxu0
  %5739 = vmatprep.subr.mxu0 %v5001
  %5740 = vmatpush1.msra.mxu0 %v5000
  %5741 = vmatprep.subr.mxu0 %v5017
  %5742 = vmatpush1.msra.mxu0 %v5016
  %5743 = vmatprep.subr.mxu0 %v5033
  %5744 = vmatpush1.msra.mxu0 %v5032
  %5745 = vmatprep.subr.mxu0 %v5049
  %5746 = vmatpush1.msra.mxu0 %v5048
  %5747 = vmatprep.subr.mxu0 %v5065
  %5748 = vmatpush1.msra.mxu0 %v5064
  %5749 = vmatprep.subr.mxu0 %v5081
  %5750 = vmatpush1.msra.mxu0 %v5080
  %5751 = vmatprep.subr.mxu0 %v5097
  %5752 = vmatpush1.msra.mxu0 %v5096
  %5753 = vmatprep.subr.mxu0 %v5113
  %5754 = vmatpush1.msra.mxu0 %v5112
  %5755 = vmatprep.subr.mxu0 %v5129
  %5756 = vmatpush1.msra.mxu0 %v5128
  %5757 = vmatprep.subr.mxu0 %v5145
  %5758 = vmatpush1.msra.mxu0 %v5144
  %5759 = vmatprep.subr.mxu0 %v5161
  %5760 = vmatpush1.msra.mxu0 %v5160
  %5761 = vmatprep.subr.mxu0 %v5177
  %5762 = vmatpush1.msra.mxu0 %v5176
  %5763 = vmatprep.subr.mxu0 %v5193
  %5764 = vmatpush1.msra.mxu0 %v5192
  %5765 = vmatprep.subr.mxu0 %v5209
  %5766 = vmatpush1.msra.mxu0 %v5208
  %5767 = vmatprep.subr.mxu0 %v5225
  %5768 = vmatpush1.msra.mxu0 %v5224
  %5769 = vmatprep.subr.mxu0 %v5241
  %5770 = vmatpush1.msra.mxu0 %v5240
  %5771 = vmatprep.subr.mxu0 0.0
  %5772 = vmatpush1.msra.mxu0 0.0
  %5773 = vmatprep.subr.mxu0 0.0
  %5774 = vmatpush1.msra.mxu0 0.0
  %5775 = vmatprep.subr.mxu0 0.0
  %5776 = vmatpush1.msra.mxu0 0.0
  %5777 = vmatprep.subr.mxu0 0.0
  %5778 = vmatpush1.msra.mxu0 0.0
  %5779 = vmatprep.subr.mxu0 0.0
  %5780 = vmatpush1.msra.mxu0 0.0
  %5781 = vmatprep.subr.mxu0 0.0
  %5782 = vmatpush1.msra.mxu0 0.0
  %5783 = vmatprep.subr.mxu0 0.0
  %5784 = vmatpush1.msra.mxu0 0.0
  %5785 = vmatprep.subr.mxu0 0.0
  %5786 = vmatpush1.msra.mxu0 0.0
  %5787 = vmatprep.subr.mxu0 0.0
  %5788 = vmatpush1.msra.mxu0 0.0
  %5789 = vmatprep.subr.mxu0 0.0
  %5790 = vmatpush1.msra.mxu0 0.0
  %5791 = vmatprep.subr.mxu0 0.0
  %5792 = vmatpush1.msra.mxu0 0.0
  %5793 = vmatprep.subr.mxu0 0.0
  %5794 = vmatpush1.msra.mxu0 0.0
  %5795 = vmatprep.subr.mxu0 0.0
  %5796 = vmatpush1.msra.mxu0 0.0
  %5797 = vmatprep.subr.mxu0 0.0
  %5798 = vmatpush1.msra.mxu0 0.0
  %5799 = vmatprep.subr.mxu0 0.0
  %5800 = vmatpush1.msra.mxu0 0.0
  %5801 = vmatprep.subr.mxu0 0.0
  %5802 = vmatpush1.msra.mxu0 0.0
  %5803 = vmatprep.mubr.f32.mxu0 0.0
  %5804 = vmatmul.mubr.f32.gmra.mrb[0].mxu0 %v4729
  %v5805 = vpop.f32.mrb[0].mxu0
  %v5806 = vadd.f32 0.0, %v5805
  %v5807 = vpop.f32.mrb[0].mxu0
  %v5808 = vadd.f32 0.0, %v5807
  %5809 = vdwg.mxu0
  %v5810 = vld [vmem:[%s25] sm:$0xff]
  %v5811 = vld [vmem:[%s25 + $0x8] sm:$0xff]
  %v5812 = vld [vmem:[%s25 + $0x10] sm:$0xff]
  %v5813 = vld [vmem:[%s25 + $0x18] sm:$0xff]
  %v5814 = vld [vmem:[%s25 + $0x20] sm:$0xff]
  %v5815 = vld [vmem:[%s25 + $0x28] sm:$0xff]
  %v5816 = vld [vmem:[%s25 + $0x30] sm:$0xff]
  %v5817 = vld [vmem:[%s25 + $0x38] sm:$0xff]
  %v5818 = vld [vmem:[%s25 + $0x40] sm:$0xff]
  %v5819 = vld [vmem:[%s25 + $0x48] sm:$0xff]
  %v5820 = vld [vmem:[%s25 + $0x50] sm:$0xff]
  %v5821 = vld [vmem:[%s25 + $0x58] sm:$0xff]
  %v5822 = vld [vmem:[%s25 + $0x60] sm:$0xff]
  %v5823 = vld [vmem:[%s25 + $0x68] sm:$0xff]
  %v5824 = vld [vmem:[%s25 + $0x70] sm:$0xff]
  %v5825 = vld [vmem:[%s25 + $0x78] sm:$0xff]
  %v5826 = vld [vmem:[%s25 + $0x80] sm:$0xff]
  %v5827 = vld [vmem:[%s25 + $0x88] sm:$0xff]
  %v5828 = vld [vmem:[%s25 + $0x90] sm:$0xff]
  %v5829 = vld [vmem:[%s25 + $0x98] sm:$0xff]
  %v5830 = vld [vmem:[%s25 + $0xa0] sm:$0xff]
  %v5831 = vld [vmem:[%s25 + $0xa8] sm:$0xff]
  %v5832 = vld [vmem:[%s25 + $0xb0] sm:$0xff]
  %v5833 = vld [vmem:[%s25 + $0xb8] sm:$0xff]
  %v5834 = vld [vmem:[%s25 + $0xc0] sm:$0xff]
  %v5835 = vld [vmem:[%s25 + $0xc8] sm:$0xff]
  %v5836 = vld [vmem:[%s25 + $0xd0] sm:$0xff]
  %v5837 = vld [vmem:[%s25 + $0xd8] sm:$0xff]
  %v5838 = vld [vmem:[%s25 + $0xe0] sm:$0xff]
  %v5839 = vld [vmem:[%s25 + $0xe8] sm:$0xff]
  %v5840 = vld [vmem:[%s25 + $0xf0] sm:$0xff]
  %v5841 = vld [vmem:[%s25 + $0xf8] sm:$0xff]
  %v5842 = vld [vmem:[%s25 + $0x100] sm:$0xff]
  %v5843 = vld [vmem:[%s25 + $0x108] sm:$0xff]
  %v5844 = vld [vmem:[%s25 + $0x110] sm:$0xff]
  %v5845 = vld [vmem:[%s25 + $0x118] sm:$0xff]
  %v5846 = vld [vmem:[%s25 + $0x120] sm:$0xff]
  %v5847 = vld [vmem:[%s25 + $0x128] sm:$0xff]
  %v5848 = vld [vmem:[%s25 + $0x130] sm:$0xff]
  %v5849 = vld [vmem:[%s25 + $0x138] sm:$0xff]
  %v5850 = vld [vmem:[%s25 + $0x140] sm:$0xff]
  %v5851 = vld [vmem:[%s25 + $0x148] sm:$0xff]
  %v5852 = vld [vmem:[%s25 + $0x150] sm:$0xff]
  %v5853 = vld [vmem:[%s25 + $0x158] sm:$0xff]
  %v5854 = vld [vmem:[%s25 + $0x160] sm:$0xff]
  %v5855 = vld [vmem:[%s25 + $0x168] sm:$0xff]
  %v5856 = vld [vmem:[%s25 + $0x170] sm:$0xff]
  %v5857 = vld [vmem:[%s25 + $0x178] sm:$0xff]
  %v5858 = vld [vmem:[%s25 + $0x180] sm:$0xff]
  %v5859 = vld [vmem:[%s25 + $0x188] sm:$0xff]
  %v5860 = vld [vmem:[%s25 + $0x190] sm:$0xff]
  %v5861 = vld [vmem:[%s25 + $0x198] sm:$0xff]
  %v5862 = vld [vmem:[%s25 + $0x1a0] sm:$0xff]
  %v5863 = vld [vmem:[%s25 + $0x1a8] sm:$0xff]
  %v5864 = vld [vmem:[%s25 + $0x1b0] sm:$0xff]
  %v5865 = vld [vmem:[%s25 + $0x1b8] sm:$0xff]
  %v5866 = vld [vmem:[%s25 + $0x1c0] sm:$0xff]
  %v5867 = vld [vmem:[%s25 + $0x1c8] sm:$0xff]
  %v5868 = vld [vmem:[%s25 + $0x1d0] sm:$0xff]
  %v5869 = vld [vmem:[%s25 + $0x1d8] sm:$0xff]
  %v5870 = vld [vmem:[%s25 + $0x1e0] sm:$0xff]
  %v5871 = vld [vmem:[%s25 + $0x1e8] sm:$0xff]
  %v5872 = vld [vmem:[%s25 + $0x1f0] sm:$0xff]
  %v5873 = vld [vmem:[%s25 + $0x1f8] sm:$0xff]
  %v5874 = vld [vmem:[%s25 + $0x200] sm:$0xff]
  %v5875 = vld [vmem:[%s25 + $0x208] sm:$0xff]
  %v5876 = vld [vmem:[%s25 + $0x210] sm:$0xff]
  %v5877 = vld [vmem:[%s25 + $0x218] sm:$0xff]
  %v5878 = vld [vmem:[%s25 + $0x220] sm:$0xff]
  %v5879 = vld [vmem:[%s25 + $0x228] sm:$0xff]
  %v5880 = vld [vmem:[%s25 + $0x230] sm:$0xff]
  %v5881 = vld [vmem:[%s25 + $0x238] sm:$0xff]
  %v5882 = vld [vmem:[%s25 + $0x240] sm:$0xff]
  %v5883 = vld [vmem:[%s25 + $0x248] sm:$0xff]
  %v5884 = vld [vmem:[%s25 + $0x250] sm:$0xff]
  %v5885 = vld [vmem:[%s25 + $0x258] sm:$0xff]
  %v5886 = vld [vmem:[%s25 + $0x260] sm:$0xff]
  %v5887 = vld [vmem:[%s25 + $0x268] sm:$0xff]
  %v5888 = vld [vmem:[%s25 + $0x270] sm:$0xff]
  %v5889 = vld [vmem:[%s25 + $0x278] sm:$0xff]
  %v5890 = vld [vmem:[%s25 + $0x280] sm:$0xff]
  %v5891 = vld [vmem:[%s25 + $0x288] sm:$0xff]
  %v5892 = vld [vmem:[%s25 + $0x290] sm:$0xff]
  %v5893 = vld [vmem:[%s25 + $0x298] sm:$0xff]
  %v5894 = vld [vmem:[%s25 + $0x2a0] sm:$0xff]
  %v5895 = vld [vmem:[%s25 + $0x2a8] sm:$0xff]
  %v5896 = vld [vmem:[%s25 + $0x2b0] sm:$0xff]
  %v5897 = vld [vmem:[%s25 + $0x2b8] sm:$0xff]
  %v5898 = vld [vmem:[%s25 + $0x2c0] sm:$0xff]
  %v5899 = vld [vmem:[%s25 + $0x2c8] sm:$0xff]
  %v5900 = vld [vmem:[%s25 + $0x2d0] sm:$0xff]
  %v5901 = vld [vmem:[%s25 + $0x2d8] sm:$0xff]
  %v5902 = vld [vmem:[%s25 + $0x2e0] sm:$0xff]
  %v5903 = vld [vmem:[%s25 + $0x2e8] sm:$0xff]
  %v5904 = vld [vmem:[%s25 + $0x2f0] sm:$0xff]
  %v5905 = vld [vmem:[%s25 + $0x2f8] sm:$0xff]
  %v5906 = vld [vmem:[%s25 + $0x300] sm:$0xff]
  %v5907 = vld [vmem:[%s25 + $0x308] sm:$0xff]
  %v5908 = vld [vmem:[%s25 + $0x310] sm:$0xff]
  %v5909 = vld [vmem:[%s25 + $0x318] sm:$0xff]
  %v5910 = vld [vmem:[%s25 + $0x320] sm:$0xff]
  %v5911 = vld [vmem:[%s25 + $0x328] sm:$0xff]
  %v5912 = vld [vmem:[%s25 + $0x330] sm:$0xff]
  %v5913 = vld [vmem:[%s25 + $0x338] sm:$0xff]
  %v5914 = vld [vmem:[%s25 + $0x340] sm:$0xff]
  %v5915 = vld [vmem:[%s25 + $0x348] sm:$0xff]
  %v5916 = vld [vmem:[%s25 + $0x350] sm:$0xff]
  %v5917 = vld [vmem:[%s25 + $0x358] sm:$0xff]
  %v5918 = vld [vmem:[%s25 + $0x360] sm:$0xff]
  %v5919 = vld [vmem:[%s25 + $0x368] sm:$0xff]
  %v5920 = vld [vmem:[%s25 + $0x370] sm:$0xff]
  %v5921 = vld [vmem:[%s25 + $0x378] sm:$0xff]
  %v5922 = vld [vmem:[%s25 + $0x380] sm:$0xff]
  %v5923 = vld [vmem:[%s25 + $0x388] sm:$0xff]
  %v5924 = vld [vmem:[%s25 + $0x390] sm:$0xff]
  %v5925 = vld [vmem:[%s25 + $0x398] sm:$0xff]
  %v5926 = vld [vmem:[%s25 + $0x3a0] sm:$0xff]
  %v5927 = vld [vmem:[%s25 + $0x3a8] sm:$0xff]
  %v5928 = vld [vmem:[%s25 + $0x3b0] sm:$0xff]
  %v5929 = vld [vmem:[%s25 + $0x3b8] sm:$0xff]
  %v5930 = vld [vmem:[%s25 + $0x3c0] sm:$0xff]
  %v5931 = vld [vmem:[%s25 + $0x3c8] sm:$0xff]
  %v5932 = vld [vmem:[%s25 + $0x3d0] sm:$0xff]
  %v5933 = vld [vmem:[%s25 + $0x3d8] sm:$0xff]
  %v5934 = vld [vmem:[%s25 + $0x3e0] sm:$0xff]
  %v5935 = vld [vmem:[%s25 + $0x3e8] sm:$0xff]
  %v5936 = vld [vmem:[%s25 + $0x3f0] sm:$0xff]
  %v5937 = vld [vmem:[%s25 + $0x3f8] sm:$0xff]
  %v5938 = vld [vmem:[%s25 + $0x400] sm:$0xff]
  %v5939 = vld [vmem:[%s25 + $0x408] sm:$0xff]
  %v5940 = vld [vmem:[%s25 + $0x410] sm:$0xff]
  %v5941 = vld [vmem:[%s25 + $0x418] sm:$0xff]
  %v5942 = vld [vmem:[%s25 + $0x420] sm:$0xff]
  %v5943 = vld [vmem:[%s25 + $0x428] sm:$0xff]
  %v5944 = vld [vmem:[%s25 + $0x430] sm:$0xff]
  %v5945 = vld [vmem:[%s25 + $0x438] sm:$0xff]
  %v5946 = vld [vmem:[%s25 + $0x440] sm:$0xff]
  %v5947 = vld [vmem:[%s25 + $0x448] sm:$0xff]
  %v5948 = vld [vmem:[%s25 + $0x450] sm:$0xff]
  %v5949 = vld [vmem:[%s25 + $0x458] sm:$0xff]
  %v5950 = vld [vmem:[%s25 + $0x460] sm:$0xff]
  %v5951 = vld [vmem:[%s25 + $0x468] sm:$0xff]
  %v5952 = vld [vmem:[%s25 + $0x470] sm:$0xff]
  %v5953 = vld [vmem:[%s25 + $0x478] sm:$0xff]
  %v5954 = vld [vmem:[%s25 + $0x480] sm:$0xff]
  %v5955 = vld [vmem:[%s25 + $0x488] sm:$0xff]
  %v5956 = vld [vmem:[%s25 + $0x490] sm:$0xff]
  %v5957 = vld [vmem:[%s25 + $0x498] sm:$0xff]
  %v5958 = vld [vmem:[%s25 + $0x4a0] sm:$0xff]
  %v5959 = vld [vmem:[%s25 + $0x4a8] sm:$0xff]
  %v5960 = vld [vmem:[%s25 + $0x4b0] sm:$0xff]
  %v5961 = vld [vmem:[%s25 + $0x4b8] sm:$0xff]
  %v5962 = vld [vmem:[%s25 + $0x4c0] sm:$0xff]
  %v5963 = vld [vmem:[%s25 + $0x4c8] sm:$0xff]
  %v5964 = vld [vmem:[%s25 + $0x4d0] sm:$0xff]
  %v5965 = vld [vmem:[%s25 + $0x4d8] sm:$0xff]
  %v5966 = vld [vmem:[%s25 + $0x4e0] sm:$0xff]
  %v5967 = vld [vmem:[%s25 + $0x4e8] sm:$0xff]
  %v5968 = vld [vmem:[%s25 + $0x4f0] sm:$0xff]
  %v5969 = vld [vmem:[%s25 + $0x4f8] sm:$0xff]
  %v5970 = vld [vmem:[%s25 + $0x500] sm:$0xff]
  %v5971 = vld [vmem:[%s25 + $0x508] sm:$0xff]
  %v5972 = vld [vmem:[%s25 + $0x510] sm:$0xff]
  %v5973 = vld [vmem:[%s25 + $0x518] sm:$0xff]
  %v5974 = vld [vmem:[%s25 + $0x520] sm:$0xff]
  %v5975 = vld [vmem:[%s25 + $0x528] sm:$0xff]
  %v5976 = vld [vmem:[%s25 + $0x530] sm:$0xff]
  %v5977 = vld [vmem:[%s25 + $0x538] sm:$0xff]
  %v5978 = vld [vmem:[%s25 + $0x540] sm:$0xff]
  %v5979 = vld [vmem:[%s25 + $0x548] sm:$0xff]
  %v5980 = vld [vmem:[%s25 + $0x550] sm:$0xff]
  %v5981 = vld [vmem:[%s25 + $0x558] sm:$0xff]
  %v5982 = vld [vmem:[%s25 + $0x560] sm:$0xff]
  %v5983 = vld [vmem:[%s25 + $0x568] sm:$0xff]
  %v5984 = vld [vmem:[%s25 + $0x570] sm:$0xff]
  %v5985 = vld [vmem:[%s25 + $0x578] sm:$0xff]
  %v5986 = vld [vmem:[%s25 + $0x580] sm:$0xff]
  %v5987 = vld [vmem:[%s25 + $0x588] sm:$0xff]
  %v5988 = vld [vmem:[%s25 + $0x590] sm:$0xff]
  %v5989 = vld [vmem:[%s25 + $0x598] sm:$0xff]
  %v5990 = vld [vmem:[%s25 + $0x5a0] sm:$0xff]
  %v5991 = vld [vmem:[%s25 + $0x5a8] sm:$0xff]
  %v5992 = vld [vmem:[%s25 + $0x5b0] sm:$0xff]
  %v5993 = vld [vmem:[%s25 + $0x5b8] sm:$0xff]
  %v5994 = vld [vmem:[%s25 + $0x5c0] sm:$0xff]
  %v5995 = vld [vmem:[%s25 + $0x5c8] sm:$0xff]
  %v5996 = vld [vmem:[%s25 + $0x5d0] sm:$0xff]
  %v5997 = vld [vmem:[%s25 + $0x5d8] sm:$0xff]
  %v5998 = vld [vmem:[%s25 + $0x5e0] sm:$0xff]
  %v5999 = vld [vmem:[%s25 + $0x5e8] sm:$0xff]
  %v6000 = vld [vmem:[%s25 + $0x5f0] sm:$0xff]
  %v6001 = vld [vmem:[%s25 + $0x5f8] sm:$0xff]
  %v6002 = vld [vmem:[%s25 + $0x600] sm:$0xff]
  %v6003 = vld [vmem:[%s25 + $0x608] sm:$0xff]
  %v6004 = vld [vmem:[%s25 + $0x610] sm:$0xff]
  %v6005 = vld [vmem:[%s25 + $0x618] sm:$0xff]
  %v6006 = vld [vmem:[%s25 + $0x620] sm:$0xff]
  %v6007 = vld [vmem:[%s25 + $0x628] sm:$0xff]
  %v6008 = vld [vmem:[%s25 + $0x630] sm:$0xff]
  %v6009 = vld [vmem:[%s25 + $0x638] sm:$0xff]
  %v6010 = vld [vmem:[%s25 + $0x640] sm:$0xff]
  %v6011 = vld [vmem:[%s25 + $0x648] sm:$0xff]
  %v6012 = vld [vmem:[%s25 + $0x650] sm:$0xff]
  %v6013 = vld [vmem:[%s25 + $0x658] sm:$0xff]
  %v6014 = vld [vmem:[%s25 + $0x660] sm:$0xff]
  %v6015 = vld [vmem:[%s25 + $0x668] sm:$0xff]
  %v6016 = vld [vmem:[%s25 + $0x670] sm:$0xff]
  %v6017 = vld [vmem:[%s25 + $0x678] sm:$0xff]
  %v6018 = vld [vmem:[%s25 + $0x680] sm:$0xff]
  %v6019 = vld [vmem:[%s25 + $0x688] sm:$0xff]
  %v6020 = vld [vmem:[%s25 + $0x690] sm:$0xff]
  %v6021 = vld [vmem:[%s25 + $0x698] sm:$0xff]
  %v6022 = vld [vmem:[%s25 + $0x6a0] sm:$0xff]
  %v6023 = vld [vmem:[%s25 + $0x6a8] sm:$0xff]
  %v6024 = vld [vmem:[%s25 + $0x6b0] sm:$0xff]
  %v6025 = vld [vmem:[%s25 + $0x6b8] sm:$0xff]
  %v6026 = vld [vmem:[%s25 + $0x6c0] sm:$0xff]
  %v6027 = vld [vmem:[%s25 + $0x6c8] sm:$0xff]
  %v6028 = vld [vmem:[%s25 + $0x6d0] sm:$0xff]
  %v6029 = vld [vmem:[%s25 + $0x6d8] sm:$0xff]
  %v6030 = vld [vmem:[%s25 + $0x6e0] sm:$0xff]
  %v6031 = vld [vmem:[%s25 + $0x6e8] sm:$0xff]
  %v6032 = vld [vmem:[%s25 + $0x6f0] sm:$0xff]
  %v6033 = vld [vmem:[%s25 + $0x6f8] sm:$0xff]
  %v6034 = vld [vmem:[%s25 + $0x700] sm:$0xff]
  %v6035 = vld [vmem:[%s25 + $0x708] sm:$0xff]
  %v6036 = vld [vmem:[%s25 + $0x710] sm:$0xff]
  %v6037 = vld [vmem:[%s25 + $0x718] sm:$0xff]
  %v6038 = vld [vmem:[%s25 + $0x720] sm:$0xff]
  %v6039 = vld [vmem:[%s25 + $0x728] sm:$0xff]
  %v6040 = vld [vmem:[%s25 + $0x730] sm:$0xff]
  %v6041 = vld [vmem:[%s25 + $0x738] sm:$0xff]
  %v6042 = vld [vmem:[%s25 + $0x740] sm:$0xff]
  %v6043 = vld [vmem:[%s25 + $0x748] sm:$0xff]
  %v6044 = vld [vmem:[%s25 + $0x750] sm:$0xff]
  %v6045 = vld [vmem:[%s25 + $0x758] sm:$0xff]
  %v6046 = vld [vmem:[%s25 + $0x760] sm:$0xff]
  %v6047 = vld [vmem:[%s25 + $0x768] sm:$0xff]
  %v6048 = vld [vmem:[%s25 + $0x770] sm:$0xff]
  %v6049 = vld [vmem:[%s25 + $0x778] sm:$0xff]
  %v6050 = vld [vmem:[%s25 + $0x780] sm:$0xff]
  %v6051 = vld [vmem:[%s25 + $0x788] sm:$0xff]
  %v6052 = vld [vmem:[%s25 + $0x790] sm:$0xff]
  %v6053 = vld [vmem:[%s25 + $0x798] sm:$0xff]
  %v6054 = vld [vmem:[%s25 + $0x7a0] sm:$0xff]
  %v6055 = vld [vmem:[%s25 + $0x7a8] sm:$0xff]
  %v6056 = vld [vmem:[%s25 + $0x7b0] sm:$0xff]
  %v6057 = vld [vmem:[%s25 + $0x7b8] sm:$0xff]
  %v6058 = vld [vmem:[%s25 + $0x7c0] sm:$0xff]
  %v6059 = vld [vmem:[%s25 + $0x7c8] sm:$0xff]
  %v6060 = vld [vmem:[%s25 + $0x7d0] sm:$0xff]
  %v6061 = vld [vmem:[%s25 + $0x7d8] sm:$0xff]
  %v6062 = vld [vmem:[%s25 + $0x7e0] sm:$0xff]
  %v6063 = vld [vmem:[%s25 + $0x7e8] sm:$0xff]
  %v6064 = vld [vmem:[%s25 + $0x7f0] sm:$0xff]
  %v6065 = vld [vmem:[%s25 + $0x7f8] sm:$0xff]
  %v6066 = vld [vmem:[%s27] sm:$0x1]
  %v6068 = vlaneseq
  %v6069 = vshrl.u32 %v6068, 7
  %v6070 = vsub.s32 0, %v6069
  %v6071 = vrot.slane %v6066, %v6070
  %6073 = vmatprep.subr.mxu0 0.0
  %6074 = vmatpush1.msra.mxu0 %v5810
  %6075 = vmatprep.subr.mxu0 0.0
  %6076 = vmatpush1.msra.mxu0 %v5811
  %6077 = vmatprep.subr.mxu0 0.0
  %6078 = vmatpush1.msra.mxu0 %v5812
  %6079 = vmatprep.subr.mxu0 0.0
  %6080 = vmatpush1.msra.mxu0 %v5813
  %6081 = vmatprep.subr.mxu0 0.0
  %6082 = vmatpush1.msra.mxu0 %v5814
  %6083 = vmatprep.subr.mxu0 0.0
  %6084 = vmatpush1.msra.mxu0 %v5815
  %6085 = vmatprep.subr.mxu0 0.0
  %6086 = vmatpush1.msra.mxu0 %v5816
  %6087 = vmatprep.subr.mxu0 0.0
  %6088 = vmatpush1.msra.mxu0 %v5817
  %6089 = vmatprep.subr.mxu0 0.0
  %6090 = vmatpush1.msra.mxu0 %v5818
  %6091 = vmatprep.subr.mxu0 0.0
  %6092 = vmatpush1.msra.mxu0 %v5819
  %6093 = vmatprep.subr.mxu0 0.0
  %6094 = vmatpush1.msra.mxu0 %v5820
  %6095 = vmatprep.subr.mxu0 0.0
  %6096 = vmatpush1.msra.mxu0 %v5821
  %6097 = vmatprep.subr.mxu0 0.0
  %6098 = vmatpush1.msra.mxu0 %v5822
  %6099 = vmatprep.subr.mxu0 0.0
  %6100 = vmatpush1.msra.mxu0 %v5823
  %6101 = vmatprep.subr.mxu0 0.0
  %6102 = vmatpush1.msra.mxu0 %v5824
  %6103 = vmatprep.subr.mxu0 0.0
  %6104 = vmatpush1.msra.mxu0 %v5825
  %6105 = vmatprep.subr.mxu0 0.0
  %6106 = vmatpush1.msra.mxu0 %v5826
  %6107 = vmatprep.subr.mxu0 0.0
  %6108 = vmatpush1.msra.mxu0 %v5827
  %6109 = vmatprep.subr.mxu0 0.0
  %6110 = vmatpush1.msra.mxu0 %v5828
  %6111 = vmatprep.subr.mxu0 0.0
  %6112 = vmatpush1.msra.mxu0 %v5829
  %6113 = vmatprep.subr.mxu0 0.0
  %6114 = vmatpush1.msra.mxu0 %v5830
  %6115 = vmatprep.subr.mxu0 0.0
  %6116 = vmatpush1.msra.mxu0 %v5831
  %6117 = vmatprep.subr.mxu0 0.0
  %6118 = vmatpush1.msra.mxu0 %v5832
  %6119 = vmatprep.subr.mxu0 0.0
  %6120 = vmatpush1.msra.mxu0 %v5833
  %6121 = vmatprep.subr.mxu0 0.0
  %6122 = vmatpush1.msra.mxu0 %v5834
  %6123 = vmatprep.subr.mxu0 0.0
  %6124 = vmatpush1.msra.mxu0 %v5835
  %6125 = vmatprep.subr.mxu0 0.0
  %6126 = vmatpush1.msra.mxu0 %v5836
  %6127 = vmatprep.subr.mxu0 0.0
  %6128 = vmatpush1.msra.mxu0 %v5837
  %6129 = vmatprep.subr.mxu0 0.0
  %6130 = vmatpush1.msra.mxu0 %v5838
  %6131 = vmatprep.subr.mxu0 0.0
  %6132 = vmatpush1.msra.mxu0 %v5839
  %6133 = vmatprep.subr.mxu0 0.0
  %6134 = vmatpush1.msra.mxu0 %v5840
  %6135 = vmatprep.subr.mxu0 0.0
  %6136 = vmatpush1.msra.mxu0 %v5841
  %6137 = vmatprep.mubr.f32.mxu0 %v5311
  %6138 = vmatmul.mubr.f32.gmra.mrb[0].mxu0 %v5309
  %v6139 = vpop.f32.mrb[0].mxu0
  %v6140 = vadd.f32 %v6071, %v6139
  %v6141 = vpop.f32.mrb[0].mxu0
  %6142 = vdwg.mxu0
  %6143 = vmatprep.subr.mxu0 0.0
  %6144 = vmatpush1.msra.mxu0 %v5842
  %6145 = vmatprep.subr.mxu0 0.0
  %6146 = vmatpush1.msra.mxu0 %v5843
  %6147 = vmatprep.subr.mxu0 0.0
  %6148 = vmatpush1.msra.mxu0 %v5844
  %6149 = vmatprep.subr.mxu0 0.0
  %6150 = vmatpush1.msra.mxu0 %v5845
  %6151 = vmatprep.subr.mxu0 0.0
  %6152 = vmatpush1.msra.mxu0 %v5846
  %6153 = vmatprep.subr.mxu0 0.0
  %6154 = vmatpush1.msra.mxu0 %v5847
  %6155 = vmatprep.subr.mxu0 0.0
  %6156 = vmatpush1.msra.mxu0 %v5848
  %6157 = vmatprep.subr.mxu0 0.0
  %6158 = vmatpush1.msra.mxu0 %v5849
  %6159 = vmatprep.subr.mxu0 0.0
  %6160 = vmatpush1.msra.mxu0 %v5850
  %6161 = vmatprep.subr.mxu0 0.0
  %6162 = vmatpush1.msra.mxu0 %v5851
  %6163 = vmatprep.subr.mxu0 0.0
  %6164 = vmatpush1.msra.mxu0 %v5852
  %6165 = vmatprep.subr.mxu0 0.0
  %6166 = vmatpush1.msra.mxu0 %v5853
  %6167 = vmatprep.subr.mxu0 0.0
  %6168 = vmatpush1.msra.mxu0 %v5854
  %6169 = vmatprep.subr.mxu0 0.0
  %6170 = vmatpush1.msra.mxu0 %v5855
  %6171 = vmatprep.subr.mxu0 0.0
  %6172 = vmatpush1.msra.mxu0 %v5856
  %6173 = vmatprep.subr.mxu0 0.0
  %6174 = vmatpush1.msra.mxu0 %v5857
  %6175 = vmatprep.subr.mxu0 0.0
  %6176 = vmatpush1.msra.mxu0 %v5858
  %6177 = vmatprep.subr.mxu0 0.0
  %6178 = vmatpush1.msra.mxu0 %v5859
  %6179 = vmatprep.subr.mxu0 0.0
  %6180 = vmatpush1.msra.mxu0 %v5860
  %6181 = vmatprep.subr.mxu0 0.0
  %6182 = vmatpush1.msra.mxu0 %v5861
  %6183 = vmatprep.subr.mxu0 0.0
  %6184 = vmatpush1.msra.mxu0 %v5862
  %6185 = vmatprep.subr.mxu0 0.0
  %6186 = vmatpush1.msra.mxu0 %v5863
  %6187 = vmatprep.subr.mxu0 0.0
  %6188 = vmatpush1.msra.mxu0 %v5864
  %6189 = vmatprep.subr.mxu0 0.0
  %6190 = vmatpush1.msra.mxu0 %v5865
  %6191 = vmatprep.subr.mxu0 0.0
  %6192 = vmatpush1.msra.mxu0 %v5866
  %6193 = vmatprep.subr.mxu0 0.0
  %6194 = vmatpush1.msra.mxu0 %v5867
  %6195 = vmatprep.subr.mxu0 0.0
  %6196 = vmatpush1.msra.mxu0 %v5868
  %6197 = vmatprep.subr.mxu0 0.0
  %6198 = vmatpush1.msra.mxu0 %v5869
  %6199 = vmatprep.subr.mxu0 0.0
  %6200 = vmatpush1.msra.mxu0 %v5870
  %6201 = vmatprep.subr.mxu0 0.0
  %6202 = vmatpush1.msra.mxu0 %v5871
  %6203 = vmatprep.subr.mxu0 0.0
  %6204 = vmatpush1.msra.mxu0 %v5872
  %6205 = vmatprep.subr.mxu0 0.0
  %6206 = vmatpush1.msra.mxu0 %v5873
  %6207 = vmatprep.mubr.f32.mxu0 %v5382
  %6208 = vmatmul.mubr.f32.gmra.mrb[0].mxu0 %v5380
  %v6209 = vpop.f32.mrb[0].mxu0
  %v6210 = vadd.f32 %v6140, %v6209
  %v6211 = vpop.f32.mrb[0].mxu0
  %6212 = vdwg.mxu0
  %6213 = vmatprep.subr.mxu0 0.0
  %6214 = vmatpush1.msra.mxu0 %v5874
  %6215 = vmatprep.subr.mxu0 0.0
  %6216 = vmatpush1.msra.mxu0 %v5875
  %6217 = vmatprep.subr.mxu0 0.0
  %6218 = vmatpush1.msra.mxu0 %v5876
  %6219 = vmatprep.subr.mxu0 0.0
  %6220 = vmatpush1.msra.mxu0 %v5877
  %6221 = vmatprep.subr.mxu0 0.0
  %6222 = vmatpush1.msra.mxu0 %v5878
  %6223 = vmatprep.subr.mxu0 0.0
  %6224 = vmatpush1.msra.mxu0 %v5879
  %6225 = vmatprep.subr.mxu0 0.0
  %6226 = vmatpush1.msra.mxu0 %v5880
  %6227 = vmatprep.subr.mxu0 0.0
  %6228 = vmatpush1.msra.mxu0 %v5881
  %6229 = vmatprep.subr.mxu0 0.0
  %6230 = vmatpush1.msra.mxu0 %v5882
  %6231 = vmatprep.subr.mxu0 0.0
  %6232 = vmatpush1.msra.mxu0 %v5883
  %6233 = vmatprep.subr.mxu0 0.0
  %6234 = vmatpush1.msra.mxu0 %v5884
  %6235 = vmatprep.subr.mxu0 0.0
  %6236 = vmatpush1.msra.mxu0 %v5885
  %6237 = vmatprep.subr.mxu0 0.0
  %6238 = vmatpush1.msra.mxu0 %v5886
  %6239 = vmatprep.subr.mxu0 0.0
  %6240 = vmatpush1.msra.mxu0 %v5887
  %6241 = vmatprep.subr.mxu0 0.0
  %6242 = vmatpush1.msra.mxu0 %v5888
  %6243 = vmatprep.subr.mxu0 0.0
  %6244 = vmatpush1.msra.mxu0 %v5889
  %6245 = vmatprep.subr.mxu0 0.0
  %6246 = vmatpush1.msra.mxu0 %v5890
  %6247 = vmatprep.subr.mxu0 0.0
  %6248 = vmatpush1.msra.mxu0 %v5891
  %6249 = vmatprep.subr.mxu0 0.0
  %6250 = vmatpush1.msra.mxu0 %v5892
  %6251 = vmatprep.subr.mxu0 0.0
  %6252 = vmatpush1.msra.mxu0 %v5893
  %6253 = vmatprep.subr.mxu0 0.0
  %6254 = vmatpush1.msra.mxu0 %v5894
  %6255 = vmatprep.subr.mxu0 0.0
  %6256 = vmatpush1.msra.mxu0 %v5895
  %6257 = vmatprep.subr.mxu0 0.0
  %6258 = vmatpush1.msra.mxu0 %v5896
  %6259 = vmatprep.subr.mxu0 0.0
  %6260 = vmatpush1.msra.mxu0 %v5897
  %6261 = vmatprep.subr.mxu0 0.0
  %6262 = vmatpush1.msra.mxu0 %v5898
  %6263 = vmatprep.subr.mxu0 0.0
  %6264 = vmatpush1.msra.mxu0 %v5899
  %6265 = vmatprep.subr.mxu0 0.0
  %6266 = vmatpush1.msra.mxu0 %v5900
  %6267 = vmatprep.subr.mxu0 0.0
  %6268 = vmatpush1.msra.mxu0 %v5901
  %6269 = vmatprep.subr.mxu0 0.0
  %6270 = vmatpush1.msra.mxu0 %v5902
  %6271 = vmatprep.subr.mxu0 0.0
  %6272 = vmatpush1.msra.mxu0 %v5903
  %6273 = vmatprep.subr.mxu0 0.0
  %6274 = vmatpush1.msra.mxu0 %v5904
  %6275 = vmatprep.subr.mxu0 0.0
  %6276 = vmatpush1.msra.mxu0 %v5905
  %6277 = vmatprep.mubr.f32.mxu0 %v5453
  %6278 = vmatmul.mubr.f32.gmra.mrb[0].mxu0 %v5451
  %v6279 = vpop.f32.mrb[0].mxu0
  %v6280 = vadd.f32 %v6210, %v6279
  %v6281 = vpop.f32.mrb[0].mxu0
  %6282 = vdwg.mxu0
  %6283 = vmatprep.subr.mxu0 0.0
  %6284 = vmatpush1.msra.mxu0 %v5906
  %6285 = vmatprep.subr.mxu0 0.0
  %6286 = vmatpush1.msra.mxu0 %v5907
  %6287 = vmatprep.subr.mxu0 0.0
  %6288 = vmatpush1.msra.mxu0 %v5908
  %6289 = vmatprep.subr.mxu0 0.0
  %6290 = vmatpush1.msra.mxu0 %v5909
  %6291 = vmatprep.subr.mxu0 0.0
  %6292 = vmatpush1.msra.mxu0 %v5910
  %6293 = vmatprep.subr.mxu0 0.0
  %6294 = vmatpush1.msra.mxu0 %v5911
  %6295 = vmatprep.subr.mxu0 0.0
  %6296 = vmatpush1.msra.mxu0 %v5912
  %6297 = vmatprep.subr.mxu0 0.0
  %6298 = vmatpush1.msra.mxu0 %v5913
  %6299 = vmatprep.subr.mxu0 0.0
  %6300 = vmatpush1.msra.mxu0 %v5914
  %6301 = vmatprep.subr.mxu0 0.0
  %6302 = vmatpush1.msra.mxu0 %v5915
  %6303 = vmatprep.subr.mxu0 0.0
  %6304 = vmatpush1.msra.mxu0 %v5916
  %6305 = vmatprep.subr.mxu0 0.0
  %6306 = vmatpush1.msra.mxu0 %v5917
  %6307 = vmatprep.subr.mxu0 0.0
  %6308 = vmatpush1.msra.mxu0 %v5918
  %6309 = vmatprep.subr.mxu0 0.0
  %6310 = vmatpush1.msra.mxu0 %v5919
  %6311 = vmatprep.subr.mxu0 0.0
  %6312 = vmatpush1.msra.mxu0 %v5920
  %6313 = vmatprep.subr.mxu0 0.0
  %6314 = vmatpush1.msra.mxu0 %v5921
  %6315 = vmatprep.subr.mxu0 0.0
  %6316 = vmatpush1.msra.mxu0 %v5922
  %6317 = vmatprep.subr.mxu0 0.0
  %6318 = vmatpush1.msra.mxu0 %v5923
  %6319 = vmatprep.subr.mxu0 0.0
  %6320 = vmatpush1.msra.mxu0 %v5924
  %6321 = vmatprep.subr.mxu0 0.0
  %6322 = vmatpush1.msra.mxu0 %v5925
  %6323 = vmatprep.subr.mxu0 0.0
  %6324 = vmatpush1.msra.mxu0 %v5926
  %6325 = vmatprep.subr.mxu0 0.0
  %6326 = vmatpush1.msra.mxu0 %v5927
  %6327 = vmatprep.subr.mxu0 0.0
  %6328 = vmatpush1.msra.mxu0 %v5928
  %6329 = vmatprep.subr.mxu0 0.0
  %6330 = vmatpush1.msra.mxu0 %v5929
  %6331 = vmatprep.subr.mxu0 0.0
  %6332 = vmatpush1.msra.mxu0 %v5930
  %6333 = vmatprep.subr.mxu0 0.0
  %6334 = vmatpush1.msra.mxu0 %v5931
  %6335 = vmatprep.subr.mxu0 0.0
  %6336 = vmatpush1.msra.mxu0 %v5932
  %6337 = vmatprep.subr.mxu0 0.0
  %6338 = vmatpush1.msra.mxu0 %v5933
  %6339 = vmatprep.subr.mxu0 0.0
  %6340 = vmatpush1.msra.mxu0 %v5934
  %6341 = vmatprep.subr.mxu0 0.0
  %6342 = vmatpush1.msra.mxu0 %v5935
  %6343 = vmatprep.subr.mxu0 0.0
  %6344 = vmatpush1.msra.mxu0 %v5936
  %6345 = vmatprep.subr.mxu0 0.0
  %6346 = vmatpush1.msra.mxu0 %v5937
  %6347 = vmatprep.mubr.f32.mxu0 %v5524
  %6348 = vmatmul.mubr.f32.gmra.mrb[0].mxu0 %v5522
  %v6349 = vpop.f32.mrb[0].mxu0
  %v6350 = vadd.f32 %v6280, %v6349
  %v6351 = vpop.f32.mrb[0].mxu0
  %6352 = vdwg.mxu0
  %6353 = vmatprep.subr.mxu0 0.0
  %6354 = vmatpush1.msra.mxu0 %v5938
  %6355 = vmatprep.subr.mxu0 0.0
  %6356 = vmatpush1.msra.mxu0 %v5939
  %6357 = vmatprep.subr.mxu0 0.0
  %6358 = vmatpush1.msra.mxu0 %v5940
  %6359 = vmatprep.subr.mxu0 0.0
  %6360 = vmatpush1.msra.mxu0 %v5941
  %6361 = vmatprep.subr.mxu0 0.0
  %6362 = vmatpush1.msra.mxu0 %v5942
  %6363 = vmatprep.subr.mxu0 0.0
  %6364 = vmatpush1.msra.mxu0 %v5943
  %6365 = vmatprep.subr.mxu0 0.0
  %6366 = vmatpush1.msra.mxu0 %v5944
  %6367 = vmatprep.subr.mxu0 0.0
  %6368 = vmatpush1.msra.mxu0 %v5945
  %6369 = vmatprep.subr.mxu0 0.0
  %6370 = vmatpush1.msra.mxu0 %v5946
  %6371 = vmatprep.subr.mxu0 0.0
  %6372 = vmatpush1.msra.mxu0 %v5947
  %6373 = vmatprep.subr.mxu0 0.0
  %6374 = vmatpush1.msra.mxu0 %v5948
  %6375 = vmatprep.subr.mxu0 0.0
  %6376 = vmatpush1.msra.mxu0 %v5949
  %6377 = vmatprep.subr.mxu0 0.0
  %6378 = vmatpush1.msra.mxu0 %v5950
  %6379 = vmatprep.subr.mxu0 0.0
  %6380 = vmatpush1.msra.mxu0 %v5951
  %6381 = vmatprep.subr.mxu0 0.0
  %6382 = vmatpush1.msra.mxu0 %v5952
  %6383 = vmatprep.subr.mxu0 0.0
  %6384 = vmatpush1.msra.mxu0 %v5953
  %6385 = vmatprep.subr.mxu0 0.0
  %6386 = vmatpush1.msra.mxu0 %v5954
  %6387 = vmatprep.subr.mxu0 0.0
  %6388 = vmatpush1.msra.mxu0 %v5955
  %6389 = vmatprep.subr.mxu0 0.0
  %6390 = vmatpush1.msra.mxu0 %v5956
  %6391 = vmatprep.subr.mxu0 0.0
  %6392 = vmatpush1.msra.mxu0 %v5957
  %6393 = vmatprep.subr.mxu0 0.0
  %6394 = vmatpush1.msra.mxu0 %v5958
  %6395 = vmatprep.subr.mxu0 0.0
  %6396 = vmatpush1.msra.mxu0 %v5959
  %6397 = vmatprep.subr.mxu0 0.0
  %6398 = vmatpush1.msra.mxu0 %v5960
  %6399 = vmatprep.subr.mxu0 0.0
  %6400 = vmatpush1.msra.mxu0 %v5961
  %6401 = vmatprep.subr.mxu0 0.0
  %6402 = vmatpush1.msra.mxu0 %v5962
  %6403 = vmatprep.subr.mxu0 0.0
  %6404 = vmatpush1.msra.mxu0 %v5963
  %6405 = vmatprep.subr.mxu0 0.0
  %6406 = vmatpush1.msra.mxu0 %v5964
  %6407 = vmatprep.subr.mxu0 0.0
  %6408 = vmatpush1.msra.mxu0 %v5965
  %6409 = vmatprep.subr.mxu0 0.0
  %6410 = vmatpush1.msra.mxu0 %v5966
  %6411 = vmatprep.subr.mxu0 0.0
  %6412 = vmatpush1.msra.mxu0 %v5967
  %6413 = vmatprep.subr.mxu0 0.0
  %6414 = vmatpush1.msra.mxu0 %v5968
  %6415 = vmatprep.subr.mxu0 0.0
  %6416 = vmatpush1.msra.mxu0 %v5969
  %6417 = vmatprep.mubr.f32.mxu0 %v5595
  %6418 = vmatmul.mubr.f32.gmra.mrb[0].mxu0 %v5593
  %v6419 = vpop.f32.mrb[0].mxu0
  %v6420 = vadd.f32 %v6350, %v6419
  %v6421 = vpop.f32.mrb[0].mxu0
  %6422 = vdwg.mxu0
  %6423 = vmatprep.subr.mxu0 0.0
  %6424 = vmatpush1.msra.mxu0 %v5970
  %6425 = vmatprep.subr.mxu0 0.0
  %6426 = vmatpush1.msra.mxu0 %v5971
  %6427 = vmatprep.subr.mxu0 0.0
  %6428 = vmatpush1.msra.mxu0 %v5972
  %6429 = vmatprep.subr.mxu0 0.0
  %6430 = vmatpush1.msra.mxu0 %v5973
  %6431 = vmatprep.subr.mxu0 0.0
  %6432 = vmatpush1.msra.mxu0 %v5974
  %6433 = vmatprep.subr.mxu0 0.0
  %6434 = vmatpush1.msra.mxu0 %v5975
  %6435 = vmatprep.subr.mxu0 0.0
  %6436 = vmatpush1.msra.mxu0 %v5976
  %6437 = vmatprep.subr.mxu0 0.0
  %6438 = vmatpush1.msra.mxu0 %v5977
  %6439 = vmatprep.subr.mxu0 0.0
  %6440 = vmatpush1.msra.mxu0 %v5978
  %6441 = vmatprep.subr.mxu0 0.0
  %6442 = vmatpush1.msra.mxu0 %v5979
  %6443 = vmatprep.subr.mxu0 0.0
  %6444 = vmatpush1.msra.mxu0 %v5980
  %6445 = vmatprep.subr.mxu0 0.0
  %6446 = vmatpush1.msra.mxu0 %v5981
  %6447 = vmatprep.subr.mxu0 0.0
  %6448 = vmatpush1.msra.mxu0 %v5982
  %6449 = vmatprep.subr.mxu0 0.0
  %6450 = vmatpush1.msra.mxu0 %v5983
  %6451 = vmatprep.subr.mxu0 0.0
  %6452 = vmatpush1.msra.mxu0 %v5984
  %6453 = vmatprep.subr.mxu0 0.0
  %6454 = vmatpush1.msra.mxu0 %v5985
  %6455 = vmatprep.subr.mxu0 0.0
  %6456 = vmatpush1.msra.mxu0 %v5986
  %6457 = vmatprep.subr.mxu0 0.0
  %6458 = vmatpush1.msra.mxu0 %v5987
  %6459 = vmatprep.subr.mxu0 0.0
  %6460 = vmatpush1.msra.mxu0 %v5988
  %6461 = vmatprep.subr.mxu0 0.0
  %6462 = vmatpush1.msra.mxu0 %v5989
  %6463 = vmatprep.subr.mxu0 0.0
  %6464 = vmatpush1.msra.mxu0 %v5990
  %6465 = vmatprep.subr.mxu0 0.0
  %6466 = vmatpush1.msra.mxu0 %v5991
  %6467 = vmatprep.subr.mxu0 0.0
  %6468 = vmatpush1.msra.mxu0 %v5992
  %6469 = vmatprep.subr.mxu0 0.0
  %6470 = vmatpush1.msra.mxu0 %v5993
  %6471 = vmatprep.subr.mxu0 0.0
  %6472 = vmatpush1.msra.mxu0 %v5994
  %6473 = vmatprep.subr.mxu0 0.0
  %6474 = vmatpush1.msra.mxu0 %v5995
  %6475 = vmatprep.subr.mxu0 0.0
  %6476 = vmatpush1.msra.mxu0 %v5996
  %6477 = vmatprep.subr.mxu0 0.0
  %6478 = vmatpush1.msra.mxu0 %v5997
  %6479 = vmatprep.subr.mxu0 0.0
  %6480 = vmatpush1.msra.mxu0 %v5998
  %6481 = vmatprep.subr.mxu0 0.0
  %6482 = vmatpush1.msra.mxu0 %v5999
  %6483 = vmatprep.subr.mxu0 0.0
  %6484 = vmatpush1.msra.mxu0 %v6000
  %6485 = vmatprep.subr.mxu0 0.0
  %6486 = vmatpush1.msra.mxu0 %v6001
  %6487 = vmatprep.mubr.f32.mxu0 %v5666
  %6488 = vmatmul.mubr.f32.gmra.mrb[0].mxu0 %v5664
  %v6489 = vpop.f32.mrb[0].mxu0
  %v6490 = vadd.f32 %v6420, %v6489
  %v6491 = vpop.f32.mrb[0].mxu0
  %6492 = vdwg.mxu0
  %6493 = vmatprep.subr.mxu0 0.0
  %6494 = vmatpush1.msra.mxu0 %v6002
  %6495 = vmatprep.subr.mxu0 0.0
  %6496 = vmatpush1.msra.mxu0 %v6003
  %6497 = vmatprep.subr.mxu0 0.0
  %6498 = vmatpush1.msra.mxu0 %v6004
  %6499 = vmatprep.subr.mxu0 0.0
  %6500 = vmatpush1.msra.mxu0 %v6005
  %6501 = vmatprep.subr.mxu0 0.0
  %6502 = vmatpush1.msra.mxu0 %v6006
  %6503 = vmatprep.subr.mxu0 0.0
  %6504 = vmatpush1.msra.mxu0 %v6007
  %6505 = vmatprep.subr.mxu0 0.0
  %6506 = vmatpush1.msra.mxu0 %v6008
  %6507 = vmatprep.subr.mxu0 0.0
  %6508 = vmatpush1.msra.mxu0 %v6009
  %6509 = vmatprep.subr.mxu0 0.0
  %6510 = vmatpush1.msra.mxu0 %v6010
  %6511 = vmatprep.subr.mxu0 0.0
  %6512 = vmatpush1.msra.mxu0 %v6011
  %6513 = vmatprep.subr.mxu0 0.0
  %6514 = vmatpush1.msra.mxu0 %v6012
  %6515 = vmatprep.subr.mxu0 0.0
  %6516 = vmatpush1.msra.mxu0 %v6013
  %6517 = vmatprep.subr.mxu0 0.0
  %6518 = vmatpush1.msra.mxu0 %v6014
  %6519 = vmatprep.subr.mxu0 0.0
  %6520 = vmatpush1.msra.mxu0 %v6015
  %6521 = vmatprep.subr.mxu0 0.0
  %6522 = vmatpush1.msra.mxu0 %v6016
  %6523 = vmatprep.subr.mxu0 0.0
  %6524 = vmatpush1.msra.mxu0 %v6017
  %6525 = vmatprep.subr.mxu0 0.0
  %6526 = vmatpush1.msra.mxu0 %v6018
  %6527 = vmatprep.subr.mxu0 0.0
  %6528 = vmatpush1.msra.mxu0 %v6019
  %6529 = vmatprep.subr.mxu0 0.0
  %6530 = vmatpush1.msra.mxu0 %v6020
  %6531 = vmatprep.subr.mxu0 0.0
  %6532 = vmatpush1.msra.mxu0 %v6021
  %6533 = vmatprep.subr.mxu0 0.0
  %6534 = vmatpush1.msra.mxu0 %v6022
  %6535 = vmatprep.subr.mxu0 0.0
  %6536 = vmatpush1.msra.mxu0 %v6023
  %6537 = vmatprep.subr.mxu0 0.0
  %6538 = vmatpush1.msra.mxu0 %v6024
  %6539 = vmatprep.subr.mxu0 0.0
  %6540 = vmatpush1.msra.mxu0 %v6025
  %6541 = vmatprep.subr.mxu0 0.0
  %6542 = vmatpush1.msra.mxu0 %v6026
  %6543 = vmatprep.subr.mxu0 0.0
  %6544 = vmatpush1.msra.mxu0 %v6027
  %6545 = vmatprep.subr.mxu0 0.0
  %6546 = vmatpush1.msra.mxu0 %v6028
  %6547 = vmatprep.subr.mxu0 0.0
  %6548 = vmatpush1.msra.mxu0 %v6029
  %6549 = vmatprep.subr.mxu0 0.0
  %6550 = vmatpush1.msra.mxu0 %v6030
  %6551 = vmatprep.subr.mxu0 0.0
  %6552 = vmatpush1.msra.mxu0 %v6031
  %6553 = vmatprep.subr.mxu0 0.0
  %6554 = vmatpush1.msra.mxu0 %v6032
  %6555 = vmatprep.subr.mxu0 0.0
  %6556 = vmatpush1.msra.mxu0 %v6033
  %6557 = vmatprep.mubr.f32.mxu0 %v5737
  %6558 = vmatmul.mubr.f32.gmra.mrb[0].mxu0 %v5735
  %v6559 = vpop.f32.mrb[0].mxu0
  %v6560 = vadd.f32 %v6490, %v6559
  %v6561 = vpop.f32.mrb[0].mxu0
  %6562 = vdwg.mxu0
  %6563 = vmatprep.subr.mxu0 0.0
  %6564 = vmatpush1.msra.mxu0 %v6034
  %6565 = vmatprep.subr.mxu0 0.0
  %6566 = vmatpush1.msra.mxu0 %v6035
  %6567 = vmatprep.subr.mxu0 0.0
  %6568 = vmatpush1.msra.mxu0 %v6036
  %6569 = vmatprep.subr.mxu0 0.0
  %6570 = vmatpush1.msra.mxu0 %v6037
  %6571 = vmatprep.subr.mxu0 0.0
  %6572 = vmatpush1.msra.mxu0 %v6038
  %6573 = vmatprep.subr.mxu0 0.0
  %6574 = vmatpush1.msra.mxu0 %v6039
  %6575 = vmatprep.subr.mxu0 0.0
  %6576 = vmatpush1.msra.mxu0 %v6040
  %6577 = vmatprep.subr.mxu0 0.0
  %6578 = vmatpush1.msra.mxu0 %v6041
  %6579 = vmatprep.subr.mxu0 0.0
  %6580 = vmatpush1.msra.mxu0 %v6042
  %6581 = vmatprep.subr.mxu0 0.0
  %6582 = vmatpush1.msra.mxu0 %v6043
  %6583 = vmatprep.subr.mxu0 0.0
  %6584 = vmatpush1.msra.mxu0 %v6044
  %6585 = vmatprep.subr.mxu0 0.0
  %6586 = vmatpush1.msra.mxu0 %v6045
  %6587 = vmatprep.subr.mxu0 0.0
  %6588 = vmatpush1.msra.mxu0 %v6046
  %6589 = vmatprep.subr.mxu0 0.0
  %6590 = vmatpush1.msra.mxu0 %v6047
  %6591 = vmatprep.subr.mxu0 0.0
  %6592 = vmatpush1.msra.mxu0 %v6048
  %6593 = vmatprep.subr.mxu0 0.0
  %6594 = vmatpush1.msra.mxu0 %v6049
  %6595 = vmatprep.subr.mxu0 0.0
  %6596 = vmatpush1.msra.mxu0 %v6050
  %6597 = vmatprep.subr.mxu0 0.0
  %6598 = vmatpush1.msra.mxu0 %v6051
  %6599 = vmatprep.subr.mxu0 0.0
  %6600 = vmatpush1.msra.mxu0 %v6052
  %6601 = vmatprep.subr.mxu0 0.0
  %6602 = vmatpush1.msra.mxu0 %v6053
  %6603 = vmatprep.subr.mxu0 0.0
  %6604 = vmatpush1.msra.mxu0 %v6054
  %6605 = vmatprep.subr.mxu0 0.0
  %6606 = vmatpush1.msra.mxu0 %v6055
  %6607 = vmatprep.subr.mxu0 0.0
  %6608 = vmatpush1.msra.mxu0 %v6056
  %6609 = vmatprep.subr.mxu0 0.0
  %6610 = vmatpush1.msra.mxu0 %v6057
  %6611 = vmatprep.subr.mxu0 0.0
  %6612 = vmatpush1.msra.mxu0 %v6058
  %6613 = vmatprep.subr.mxu0 0.0
  %6614 = vmatpush1.msra.mxu0 %v6059
  %6615 = vmatprep.subr.mxu0 0.0
  %6616 = vmatpush1.msra.mxu0 %v6060
  %6617 = vmatprep.subr.mxu0 0.0
  %6618 = vmatpush1.msra.mxu0 %v6061
  %6619 = vmatprep.subr.mxu0 0.0
  %6620 = vmatpush1.msra.mxu0 %v6062
  %6621 = vmatprep.subr.mxu0 0.0
  %6622 = vmatpush1.msra.mxu0 %v6063
  %6623 = vmatprep.subr.mxu0 0.0
  %6624 = vmatpush1.msra.mxu0 %v6064
  %6625 = vmatprep.subr.mxu0 0.0
  %6626 = vmatpush1.msra.mxu0 %v6065
  %6627 = vmatprep.mubr.f32.mxu0 %v5808
  %6628 = vmatmul.mubr.f32.gmra.mrb[0].mxu0 %v5806
  %v6629 = vpop.f32.mrb[0].mxu0
  %v6630 = vadd.f32 %v6560, %v6629
  %v6631 = vpop.f32.mrb[0].mxu0
  %6632 = vdwg.mxu0
  %v6633 = vmax.f32 %v6630, 0.0
  %v6634 = vld [vmem:[%s29] sm:$0xff]
  %v6635 = vld [vmem:[%s29 + $0x8] sm:$0xff]
  %v6636 = vld [vmem:[%s29 + $0x10] sm:$0xff]
  %v6637 = vld [vmem:[%s29 + $0x18] sm:$0xff]
  %v6638 = vld [vmem:[%s29 + $0x20] sm:$0xff]
  %v6639 = vld [vmem:[%s29 + $0x28] sm:$0xff]
  %v6640 = vld [vmem:[%s29 + $0x30] sm:$0xff]
  %v6641 = vld [vmem:[%s29 + $0x38] sm:$0xff]
  %v6642 = vld [vmem:[%s29 + $0x40] sm:$0xff]
  %v6643 = vld [vmem:[%s29 + $0x48] sm:$0xff]
  %v6644 = vld [vmem:[%s29 + $0x50] sm:$0xff]
  %v6645 = vld [vmem:[%s29 + $0x58] sm:$0xff]
  %v6646 = vld [vmem:[%s29 + $0x60] sm:$0xff]
  %v6647 = vld [vmem:[%s29 + $0x68] sm:$0xff]
  %v6648 = vld [vmem:[%s29 + $0x70] sm:$0xff]
  %v6649 = vld [vmem:[%s29 + $0x78] sm:$0xff]
  %v6650 = vld [vmem:[%s31] sm:$0x3]
  %v6652 = vlaneseq
  %v6653 = vshrl.u32 %v6652, 7
  %v6654 = vsub.s32 0, %v6653
  %v6655 = vrot.slane %v6650, %v6654
  %v6656 = vlaneseq
  %v6657 = vshrl.u32 %v6656, 7
  %v6658 = vsub.s32 1, %v6657
  %v6659 = vrot.slane %v6650, %v6658
  %vm6662 = vcmask 523264
  %v6664 = vsel %vm6662, %v6633, 0
  %6666 = vmatprep.subr.mxu0 %v6635
  %6667 = vmatpush1.msra.mxu0 %v6634
  %6668 = vmatprep.subr.mxu0 %v6637
  %6669 = vmatpush1.msra.mxu0 %v6636
  %6670 = vmatprep.subr.mxu0 %v6639
  %6671 = vmatpush1.msra.mxu0 %v6638
  %6672 = vmatprep.subr.mxu0 %v6641
  %6673 = vmatpush1.msra.mxu0 %v6640
  %6674 = vmatprep.subr.mxu0 %v6643
  %6675 = vmatpush1.msra.mxu0 %v6642
  %6676 = vmatprep.subr.mxu0 %v6645
  %6677 = vmatpush1.msra.mxu0 %v6644
  %6678 = vmatprep.subr.mxu0 %v6647
  %6679 = vmatpush1.msra.mxu0 %v6646
  %6680 = vmatprep.subr.mxu0 %v6649
  %6681 = vmatpush1.msra.mxu0 %v6648
  %6682 = vmatprep.subr.mxu0 0.0
  %6683 = vmatpush1.msra.mxu0 0.0
  %6684 = vmatprep.subr.mxu0 0.0
  %6685 = vmatpush1.msra.mxu0 0.0
  %6686 = vmatprep.subr.mxu0 0.0
  %6687 = vmatpush1.msra.mxu0 0.0
  %6688 = vmatprep.subr.mxu0 0.0
  %6689 = vmatpush1.msra.mxu0 0.0
  %6690 = vmatprep.subr.mxu0 0.0
  %6691 = vmatpush1.msra.mxu0 0.0
  %6692 = vmatprep.subr.mxu0 0.0
  %6693 = vmatpush1.msra.mxu0 0.0
  %6694 = vmatprep.subr.mxu0 0.0
  %6695 = vmatpush1.msra.mxu0 0.0
  %6696 = vmatprep.subr.mxu0 0.0
  %6697 = vmatpush1.msra.mxu0 0.0
  %6698 = vmatprep.subr.mxu0 0.0
  %6699 = vmatpush1.msra.mxu0 0.0
  %6700 = vmatprep.subr.mxu0 0.0
  %6701 = vmatpush1.msra.mxu0 0.0
  %6702 = vmatprep.subr.mxu0 0.0
  %6703 = vmatpush1.msra.mxu0 0.0
  %6704 = vmatprep.subr.mxu0 0.0
  %6705 = vmatpush1.msra.mxu0 0.0
  %6706 = vmatprep.subr.mxu0 0.0
  %6707 = vmatpush1.msra.mxu0 0.0
  %6708 = vmatprep.subr.mxu0 0.0
  %6709 = vmatpush1.msra.mxu0 0.0
  %6710 = vmatprep.subr.mxu0 0.0
  %6711 = vmatpush1.msra.mxu0 0.0
  %6712 = vmatprep.subr.mxu0 0.0
  %6713 = vmatpush1.msra.mxu0 0.0
  %6714 = vmatprep.subr.mxu0 0.0
  %6715 = vmatpush1.msra.mxu0 0.0
  %6716 = vmatprep.subr.mxu0 0.0
  %6717 = vmatpush1.msra.mxu0 0.0
  %6718 = vmatprep.subr.mxu0 0.0
  %6719 = vmatpush1.msra.mxu0 0.0
  %6720 = vmatprep.subr.mxu0 0.0
  %6721 = vmatpush1.msra.mxu0 0.0
  %6722 = vmatprep.subr.mxu0 0.0
  %6723 = vmatpush1.msra.mxu0 0.0
  %6724 = vmatprep.subr.mxu0 0.0
  %6725 = vmatpush1.msra.mxu0 0.0
  %6726 = vmatprep.subr.mxu0 0.0
  %6727 = vmatpush1.msra.mxu0 0.0
  %6728 = vmatprep.subr.mxu0 0.0
  %6729 = vmatpush1.msra.mxu0 0.0
  %6730 = vmatprep.mubr.f32.mxu0 0.0
  %6731 = vmatmul.mubr.f32.gmra.mrb[0].mxu0 %v6664
  %v6732 = vpop.f32.mrb[0].mxu0
  %v6733 = vadd.f32 %v6655, %v6732
  %v6734 = vpop.f32.mrb[0].mxu0
  %v6735 = vadd.f32 %v6659, %v6734
  %6736 = vdwg.mxu0
  %v6737 = vld [vmem:[%s5] sm:$0xff]
  %v6738 = vld [vmem:[%s5 + $0x8] sm:$0xff]
  %v6739 = vld [vmem:[%s7] sm:$0xff]
  %v6740 = vld [vmem:[%s7 + $0x8] sm:$0xff]
  %v6741 = vld [vmem:[%s7 + $0x10] sm:$0xff]
  %v6742 = vld [vmem:[%s7 + $0x18] sm:$0xff]
  %v6743 = vld [vmem:[%s7 + $0x20] sm:$0xff]
  %v6744 = vld [vmem:[%s7 + $0x28] sm:$0xff]
  %v6745 = vld [vmem:[%s7 + $0x30] sm:$0xff]
  %v6746 = vld [vmem:[%s7 + $0x38] sm:$0xff]
  %v6747 = vld [vmem:[%s7 + $0x40] sm:$0xff]
  %v6748 = vld [vmem:[%s7 + $0x48] sm:$0xff]
  %v6749 = vld [vmem:[%s7 + $0x50] sm:$0xff]
  %v6750 = vld [vmem:[%s7 + $0x58] sm:$0xff]
  %v6751 = vld [vmem:[%s7 + $0x60] sm:$0xff]
  %v6752 = vld [vmem:[%s7 + $0x68] sm:$0xff]
  %v6753 = vld [vmem:[%s7 + $0x70] sm:$0xff]
  %v6754 = vld [vmem:[%s7 + $0x78] sm:$0xff]
  %6755 = vmatprep.subr.mxu0 0.0
  %6756 = vmatpush1.msra.mxu0 %v6737
  %6757 = vmatprep.subr.mxu0 0.0
  %6758 = vmatpush1.msra.mxu0 %v6738
  %6759 = vmatprep.subr.mxu0 0.0
  %6760 = vmatpush1.msra.mxu0 0.0
  %6761 = vmatprep.subr.mxu0 0.0
  %6762 = vmatpush1.msra.mxu0 0.0
  %6763 = vmatprep.subr.mxu0 0.0
  %6764 = vmatpush1.msra.mxu0 0.0
  %6765 = vmatprep.subr.mxu0 0.0
  %6766 = vmatpush1.msra.mxu0 0.0
  %6767 = vmatprep.subr.mxu0 0.0
  %6768 = vmatpush1.msra.mxu0 0.0
  %6769 = vmatprep.subr.mxu0 0.0
  %6770 = vmatpush1.msra.mxu0 0.0
  %6771 = vmatprep.subr.mxu0 0.0
  %6772 = vmatpush1.msra.mxu0 0.0
  %6773 = vmatprep.subr.mxu0 0.0
  %6774 = vmatpush1.msra.mxu0 0.0
  %6775 = vmatprep.subr.mxu0 0.0
  %6776 = vmatpush1.msra.mxu0 0.0
  %6777 = vmatprep.subr.mxu0 0.0
  %6778 = vmatpush1.msra.mxu0 0.0
  %6779 = vmatprep.subr.mxu0 0.0
  %6780 = vmatpush1.msra.mxu0 0.0
  %6781 = vmatprep.subr.mxu0 0.0
  %6782 = vmatpush1.msra.mxu0 0.0
  %6783 = vmatprep.subr.mxu0 0.0
  %6784 = vmatpush1.msra.mxu0 0.0
  %6785 = vmatprep.subr.mxu0 0.0
  %6786 = vmatpush1.msra.mxu0 0.0
  %6787 = vmatprep.subr.mxu0 0.0
  %6788 = vmatpush1.msra.mxu0 0.0
  %6789 = vmatprep.subr.mxu0 0.0
  %6790 = vmatpush1.msra.mxu0 0.0
  %6791 = vmatprep.subr.mxu0 0.0
  %6792 = vmatpush1.msra.mxu0 0.0
  %6793 = vmatprep.subr.mxu0 0.0
  %6794 = vmatpush1.msra.mxu0 0.0
  %6795 = vmatprep.subr.mxu0 0.0
  %6796 = vmatpush1.msra.mxu0 0.0
  %6797 = vmatprep.subr.mxu0 0.0
  %6798 = vmatpush1.msra.mxu0 0.0
  %6799 = vmatprep.subr.mxu0 0.0
  %6800 = vmatpush1.msra.mxu0 0.0
  %6801 = vmatprep.subr.mxu0 0.0
  %6802 = vmatpush1.msra.mxu0 0.0
  %6803 = vmatprep.subr.mxu0 0.0
  %6804 = vmatpush1.msra.mxu0 0.0
  %6805 = vmatprep.subr.mxu0 0.0
  %6806 = vmatpush1.msra.mxu0 0.0
  %6807 = vmatprep.subr.mxu0 0.0
  %6808 = vmatpush1.msra.mxu0 0.0
  %6809 = vmatprep.subr.mxu0 0.0
  %6810 = vmatpush1.msra.mxu0 0.0
  %6811 = vmatprep.subr.mxu0 0.0
  %6812 = vmatpush1.msra.mxu0 0.0
  %6813 = vmatprep.subr.mxu0 0.0
  %6814 = vmatpush1.msra.mxu0 0.0
  %6815 = vmatprep.subr.mxu0 0.0
  %6816 = vmatpush1.msra.mxu0 0.0
  %6817 = vmatprep.subr.mxu0 0.0
  %6818 = vmatpush1.msra.mxu0 0.0
  %6819 = vmatprep.mubr.f32.mxu0 0.0
  %6820 = vmatmul.mubr.f32.gmra.mrb[0].mxu0 %v248
  %v6821 = vpop.f32.mrb[0].mxu0
  %v6822 = vadd.f32 %v6739, %v6821
  %v6823 = vpop.f32.mrb[0].mxu0
  %6824 = vmatprep.mubr.f32.mxu0 0.0
  %6825 = vmatmul.mubr.f32.gmra.mrb[0].mxu0 %v251
  %v6826 = vpop.f32.mrb[0].mxu0
  %v6827 = vadd.f32 %v6740, %v6826
  %v6828 = vpop.f32.mrb[0].mxu0
  %6829 = vmatprep.mubr.f32.mxu0 0.0
  %6830 = vmatmul.mubr.f32.gmra.mrb[0].mxu0 %v254
  %v6831 = vpop.f32.mrb[0].mxu0
  %v6832 = vadd.f32 %v6741, %v6831
  %v6833 = vpop.f32.mrb[0].mxu0
  %6834 = vmatprep.mubr.f32.mxu0 0.0
  %6835 = vmatmul.mubr.f32.gmra.mrb[0].mxu0 %v257
  %v6836 = vpop.f32.mrb[0].mxu0
  %v6837 = vadd.f32 %v6742, %v6836
  %v6838 = vpop.f32.mrb[0].mxu0
  %6839 = vmatprep.mubr.f32.mxu0 0.0
  %6840 = vmatmul.mubr.f32.gmra.mrb[0].mxu0 %v260
  %v6841 = vpop.f32.mrb[0].mxu0
  %v6842 = vadd.f32 %v6743, %v6841
  %v6843 = vpop.f32.mrb[0].mxu0
  %6844 = vmatprep.mubr.f32.mxu0 0.0
  %6845 = vmatmul.mubr.f32.gmra.mrb[0].mxu0 %v263
  %v6846 = vpop.f32.mrb[0].mxu0
  %v6847 = vadd.f32 %v6744, %v6846
  %v6848 = vpop.f32.mrb[0].mxu0
  %6849 = vmatprep.mubr.f32.mxu0 0.0
  %6850 = vmatmul.mubr.f32.gmra.mrb[0].mxu0 %v266
  %v6851 = vpop.f32.mrb[0].mxu0
  %v6852 = vadd.f32 %v6745, %v6851
  %v6853 = vpop.f32.mrb[0].mxu0
  %6854 = vmatprep.mubr.f32.mxu0 0.0
  %6855 = vmatmul.mubr.f32.gmra.mrb[0].mxu0 %v269
  %v6856 = vpop.f32.mrb[0].mxu0
  %v6857 = vadd.f32 %v6746, %v6856
  %v6858 = vpop.f32.mrb[0].mxu0
  %6859 = vmatprep.mubr.f32.mxu0 0.0
  %6860 = vmatmul.mubr.f32.gmra.mrb[0].mxu0 %v272
  %v6861 = vpop.f32.mrb[0].mxu0
  %v6862 = vadd.f32 %v6747, %v6861
  %v6863 = vpop.f32.mrb[0].mxu0
  %6864 = vmatprep.mubr.f32.mxu0 0.0
  %6865 = vmatmul.mubr.f32.gmra.mrb[0].mxu0 %v275
  %v6866 = vpop.f32.mrb[0].mxu0
  %v6867 = vadd.f32 %v6748, %v6866
  %v6868 = vpop.f32.mrb[0].mxu0
  %6869 = vmatprep.mubr.f32.mxu0 0.0
  %6870 = vmatmul.mubr.f32.gmra.mrb[0].mxu0 %v278
  %v6871 = vpop.f32.mrb[0].mxu0
  %v6872 = vadd.f32 %v6749, %v6871
  %v6873 = vpop.f32.mrb[0].mxu0
  %6874 = vmatprep.mubr.f32.mxu0 0.0
  %6875 = vmatmul.mubr.f32.gmra.mrb[0].mxu0 %v281
  %v6876 = vpop.f32.mrb[0].mxu0
  %v6877 = vadd.f32 %v6750, %v6876
  %v6878 = vpop.f32.mrb[0].mxu0
  %6879 = vmatprep.mubr.f32.mxu0 0.0
  %6880 = vmatmul.mubr.f32.gmra.mrb[0].mxu0 %v284
  %v6881 = vpop.f32.mrb[0].mxu0
  %v6882 = vadd.f32 %v6751, %v6881
  %v6883 = vpop.f32.mrb[0].mxu0
  %6884 = vmatprep.mubr.f32.mxu0 0.0
  %6885 = vmatmul.mubr.f32.gmra.mrb[0].mxu0 %v287
  %v6886 = vpop.f32.mrb[0].mxu0
  %v6887 = vadd.f32 %v6752, %v6886
  %v6888 = vpop.f32.mrb[0].mxu0
  %6889 = vmatprep.mubr.f32.mxu0 0.0
  %6890 = vmatmul.mubr.f32.gmra.mrb[0].mxu0 %v290
  %v6891 = vpop.f32.mrb[0].mxu0
  %v6892 = vadd.f32 %v6753, %v6891
  %v6893 = vpop.f32.mrb[0].mxu0
  %6894 = vmatprep.mubr.f32.mxu0 0.0
  %6895 = vmatmul.mubr.f32.gmra.mrb[0].mxu0 %v293
  %v6896 = vpop.f32.mrb[0].mxu0
  %v6897 = vadd.f32 %v6754, %v6896
  %v6898 = vpop.f32.mrb[0].mxu0
  %6899 = vdwg.mxu0
  %v6900 = vld [vmem:[%s33] sm:$0xff]
  %v6901 = vld [vmem:[%s33 + $0x8] sm:$0xff]
  %v6902 = vld [vmem:[%s33 + $0x10] sm:$0xff]
  %v6903 = vld [vmem:[%s33 + $0x18] sm:$0xff]
  %v6904 = vld [vmem:[%s35] sm:$0x1]
  %v6906 = vlaneseq
  %v6907 = vshrl.u32 %v6906, 7
  %v6908 = vsub.s32 0, %v6907
  %v6909 = vrot.slane %v6904, %v6908
  %v6912 = vsel %vm2167, %v6822, 0
  %v6915 = vsel %vm2167, %v6827, 0
  %v6918 = vsel %vm2167, %v6832, 0
  %v6921 = vsel %vm2167, %v6837, 0
  %v6924 = vsel %vm2167, %v6842, 0
  %v6927 = vsel %vm2167, %v6847, 0
  %v6930 = vsel %vm2167, %v6852, 0
  %v6933 = vsel %vm2167, %v6857, 0
  %v6936 = vsel %vm2167, %v6862, 0
  %v6939 = vsel %vm2167, %v6867, 0
  %v6942 = vsel %vm2167, %v6872, 0
  %v6945 = vsel %vm2167, %v6877, 0
  %v6948 = vsel %vm2167, %v6882, 0
  %v6951 = vsel %vm2167, %v6887, 0
  %v6954 = vsel %vm2167, %v6892, 0
  %v6957 = vsel %vm2167, %v6897, 0
  %6959 = vmatprep.subr.mxu0 0.0
  %6960 = vmatpush1.msra.mxu0 %v6900
  %6961 = vmatprep.subr.mxu0 0.0
  %6962 = vmatpush1.msra.mxu0 %v6901
  %6963 = vmatprep.subr.mxu0 0.0
  %6964 = vmatpush1.msra.mxu0 %v6902
  %6965 = vmatprep.subr.mxu0 0.0
  %6966 = vmatpush1.msra.mxu0 %v6903
  %6967 = vmatprep.subr.mxu0 0.0
  %6968 = vmatpush1.msra.mxu0 0.0
  %6969 = vmatprep.subr.mxu0 0.0
  %6970 = vmatpush1.msra.mxu0 0.0
  %6971 = vmatprep.subr.mxu0 0.0
  %6972 = vmatpush1.msra.mxu0 0.0
  %6973 = vmatprep.subr.mxu0 0.0
  %6974 = vmatpush1.msra.mxu0 0.0
  %6975 = vmatprep.subr.mxu0 0.0
  %6976 = vmatpush1.msra.mxu0 0.0
  %6977 = vmatprep.subr.mxu0 0.0
  %6978 = vmatpush1.msra.mxu0 0.0
  %6979 = vmatprep.subr.mxu0 0.0
  %6980 = vmatpush1.msra.mxu0 0.0
  %6981 = vmatprep.subr.mxu0 0.0
  %6982 = vmatpush1.msra.mxu0 0.0
  %6983 = vmatprep.subr.mxu0 0.0
  %6984 = vmatpush1.msra.mxu0 0.0
  %6985 = vmatprep.subr.mxu0 0.0
  %6986 = vmatpush1.msra.mxu0 0.0
  %6987 = vmatprep.subr.mxu0 0.0
  %6988 = vmatpush1.msra.mxu0 0.0
  %6989 = vmatprep.subr.mxu0 0.0
  %6990 = vmatpush1.msra.mxu0 0.0
  %6991 = vmatprep.subr.mxu0 0.0
  %6992 = vmatpush1.msra.mxu0 0.0
  %6993 = vmatprep.subr.mxu0 0.0
  %6994 = vmatpush1.msra.mxu0 0.0
  %6995 = vmatprep.subr.mxu0 0.0
  %6996 = vmatpush1.msra.mxu0 0.0
  %6997 = vmatprep.subr.mxu0 0.0
  %6998 = vmatpush1.msra.mxu0 0.0
  %6999 = vmatprep.subr.mxu0 0.0
  %7000 = vmatpush1.msra.mxu0 0.0
  %7001 = vmatprep.subr.mxu0 0.0
  %7002 = vmatpush1.msra.mxu0 0.0
  %7003 = vmatprep.subr.mxu0 0.0
  %7004 = vmatpush1.msra.mxu0 0.0
  %7005 = vmatprep.subr.mxu0 0.0
  %7006 = vmatpush1.msra.mxu0 0.0
  %7007 = vmatprep.subr.mxu0 0.0
  %7008 = vmatpush1.msra.mxu0 0.0
  %7009 = vmatprep.subr.mxu0 0.0
  %7010 = vmatpush1.msra.mxu0 0.0
  %7011 = vmatprep.subr.mxu0 0.0
  %7012 = vmatpush1.msra.mxu0 0.0
  %7013 = vmatprep.subr.mxu0 0.0
  %7014 = vmatpush1.msra.mxu0 0.0
  %7015 = vmatprep.subr.mxu0 0.0
  %7016 = vmatpush1.msra.mxu0 0.0
  %7017 = vmatprep.subr.mxu0 0.0
  %7018 = vmatpush1.msra.mxu0 0.0
  %7019 = vmatprep.subr.mxu0 0.0
  %7020 = vmatpush1.msra.mxu0 0.0
  %7021 = vmatprep.subr.mxu0 0.0
  %7022 = vmatpush1.msra.mxu0 0.0
  %7023 = vmatprep.mubr.f32.mxu0 0.0
  %7024 = vmatmul.mubr.f32.gmra.mrb[0].mxu0 %v6912
  %v7025 = vpop.f32.mrb[0].mxu0
  %v7026 = vadd.f32 %v6909, %v7025
  %v7027 = vpop.f32.mrb[0].mxu0
  %7028 = vmatprep.mubr.f32.mxu0 0.0
  %7029 = vmatmul.mubr.f32.gmra.mrb[0].mxu0 %v6915
  %v7030 = vpop.f32.mrb[0].mxu0
  %v7031 = vadd.f32 %v6909, %v7030
  %v7032 = vpop.f32.mrb[0].mxu0
  %7033 = vmatprep.mubr.f32.mxu0 0.0
  %7034 = vmatmul.mubr.f32.gmra.mrb[0].mxu0 %v6918
  %v7035 = vpop.f32.mrb[0].mxu0
  %v7036 = vadd.f32 %v6909, %v7035
  %v7037 = vpop.f32.mrb[0].mxu0
  %7038 = vmatprep.mubr.f32.mxu0 0.0
  %7039 = vmatmul.mubr.f32.gmra.mrb[0].mxu0 %v6921
  %v7040 = vpop.f32.mrb[0].mxu0
  %v7041 = vadd.f32 %v6909, %v7040
  %v7042 = vpop.f32.mrb[0].mxu0
  %7043 = vmatprep.mubr.f32.mxu0 0.0
  %7044 = vmatmul.mubr.f32.gmra.mrb[0].mxu0 %v6924
  %v7045 = vpop.f32.mrb[0].mxu0
  %v7046 = vadd.f32 %v6909, %v7045
  %v7047 = vpop.f32.mrb[0].mxu0
  %7048 = vmatprep.mubr.f32.mxu0 0.0
  %7049 = vmatmul.mubr.f32.gmra.mrb[0].mxu0 %v6927
  %v7050 = vpop.f32.mrb[0].mxu0
  %v7051 = vadd.f32 %v6909, %v7050
  %v7052 = vpop.f32.mrb[0].mxu0
  %7053 = vmatprep.mubr.f32.mxu0 0.0
  %7054 = vmatmul.mubr.f32.gmra.mrb[0].mxu0 %v6930
  %v7055 = vpop.f32.mrb[0].mxu0
  %v7056 = vadd.f32 %v6909, %v7055
  %v7057 = vpop.f32.mrb[0].mxu0
  %7058 = vmatprep.mubr.f32.mxu0 0.0
  %7059 = vmatmul.mubr.f32.gmra.mrb[0].mxu0 %v6933
  %v7060 = vpop.f32.mrb[0].mxu0
  %v7061 = vadd.f32 %v6909, %v7060
  %v7062 = vpop.f32.mrb[0].mxu0
  %7063 = vmatprep.mubr.f32.mxu0 0.0
  %7064 = vmatmul.mubr.f32.gmra.mrb[0].mxu0 %v6936
  %v7065 = vpop.f32.mrb[0].mxu0
  %v7066 = vadd.f32 %v6909, %v7065
  %v7067 = vpop.f32.mrb[0].mxu0
  %7068 = vmatprep.mubr.f32.mxu0 0.0
  %7069 = vmatmul.mubr.f32.gmra.mrb[0].mxu0 %v6939
  %v7070 = vpop.f32.mrb[0].mxu0
  %v7071 = vadd.f32 %v6909, %v7070
  %v7072 = vpop.f32.mrb[0].mxu0
  %7073 = vmatprep.mubr.f32.mxu0 0.0
  %7074 = vmatmul.mubr.f32.gmra.mrb[0].mxu0 %v6942
  %v7075 = vpop.f32.mrb[0].mxu0
  %v7076 = vadd.f32 %v6909, %v7075
  %v7077 = vpop.f32.mrb[0].mxu0
  %7078 = vmatprep.mubr.f32.mxu0 0.0
  %7079 = vmatmul.mubr.f32.gmra.mrb[0].mxu0 %v6945
  %v7080 = vpop.f32.mrb[0].mxu0
  %v7081 = vadd.f32 %v6909, %v7080
  %v7082 = vpop.f32.mrb[0].mxu0
  %7083 = vmatprep.mubr.f32.mxu0 0.0
  %7084 = vmatmul.mubr.f32.gmra.mrb[0].mxu0 %v6948
  %v7085 = vpop.f32.mrb[0].mxu0
  %v7086 = vadd.f32 %v6909, %v7085
  %v7087 = vpop.f32.mrb[0].mxu0
  %7088 = vmatprep.mubr.f32.mxu0 0.0
  %7089 = vmatmul.mubr.f32.gmra.mrb[0].mxu0 %v6951
  %v7090 = vpop.f32.mrb[0].mxu0
  %v7091 = vadd.f32 %v6909, %v7090
  %v7092 = vpop.f32.mrb[0].mxu0
  %7093 = vmatprep.mubr.f32.mxu0 0.0
  %7094 = vmatmul.mubr.f32.gmra.mrb[0].mxu0 %v6954
  %v7095 = vpop.f32.mrb[0].mxu0
  %v7096 = vadd.f32 %v6909, %v7095
  %v7097 = vpop.f32.mrb[0].mxu0
  %7098 = vmatprep.mubr.f32.mxu0 0.0
  %7099 = vmatmul.mubr.f32.gmra.mrb[0].mxu0 %v6957
  %v7100 = vpop.f32.mrb[0].mxu0
  %v7101 = vadd.f32 %v6909, %v7100
  %v7102 = vpop.f32.mrb[0].mxu0
  %7103 = vdwg.mxu0
  %7112 = vrot.lane.b32.xlu0 %v7026, 96
  %v7113 = vpop.permute.xlu0 %7112
  %7114 = vrot.lane.b32.xlu0 %v7031, 96
  %v7115 = vpop.permute.xlu0 %7114
  %7116 = vrot.lane.b32.xlu0 %v7036, 96
  %v7117 = vpop.permute.xlu0 %7116
  %7118 = vrot.lane.b32.xlu0 %v7041, 96
  %v7119 = vpop.permute.xlu0 %7118
  %7120 = vrot.lane.b32.xlu0 %v7046, 96
  %v7121 = vpop.permute.xlu0 %7120
  %7122 = vrot.lane.b32.xlu0 %v7051, 96
  %v7123 = vpop.permute.xlu0 %7122
  %7124 = vrot.lane.b32.xlu0 %v7056, 96
  %v7125 = vpop.permute.xlu0 %7124
  %7126 = vrot.lane.b32.xlu0 %v7061, 96
  %v7127 = vpop.permute.xlu0 %7126
  %vm7128 = vcmask 64512
  %v7129 = vsel %vm7128, %v7026, 0
  %v7131 = vsel %vm7128, %v7031, 0
  %v7133 = vsel %vm7128, %v7036, 0
  %v7135 = vsel %vm7128, %v7041, 0
  %v7137 = vsel %vm7128, %v7046, 0
  %v7139 = vsel %vm7128, %v7051, 0
  %v7141 = vsel %vm7128, %v7056, 0
  %v7143 = vsel %vm7128, %v7061, 0
  %v7145 = vsel %vm7128, %v7113, 0
  %v7147 = vsel %vm7128, %v7115, 0
  %v7149 = vsel %vm7128, %v7117, 0
  %v7151 = vsel %vm7128, %v7119, 0
  %v7153 = vsel %vm7128, %v7121, 0
  %v7155 = vsel %vm7128, %v7123, 0
  %v7157 = vsel %vm7128, %v7125, 0
  %v7159 = vsel %vm7128, %v7127, 0
  %7161 = vmatprep.subr.mxu0 0.0
  %7162 = vmatpush1.xpose.msra.mxu0 %v7145
  %7163 = vmatprep.subr.mxu0 0.0
  %7164 = vmatpush1.xpose.msra.mxu0 %v7147
  %7165 = vmatprep.subr.mxu0 0.0
  %7166 = vmatpush1.xpose.msra.mxu0 %v7149
  %7167 = vmatprep.subr.mxu0 0.0
  %7168 = vmatpush1.xpose.msra.mxu0 %v7151
  %7169 = vmatprep.subr.mxu0 0.0
  %7170 = vmatpush1.xpose.msra.mxu0 %v7153
  %7171 = vmatprep.subr.mxu0 0.0
  %7172 = vmatpush1.xpose.msra.mxu0 %v7155
  %7173 = vmatprep.subr.mxu0 0.0
  %7174 = vmatpush1.xpose.msra.mxu0 %v7157
  %7175 = vmatprep.subr.mxu0 0.0
  %7176 = vmatpush1.xpose.msra.mxu0 %v7159
  %7177 = vmatprep.subr.mxu0 0.0
  %7178 = vmatpush1.xpose.msra.mxu0 0.0
  %7179 = vmatprep.subr.mxu0 0.0
  %7180 = vmatpush1.xpose.msra.mxu0 0.0
  %7181 = vmatprep.subr.mxu0 0.0
  %7182 = vmatpush1.xpose.msra.mxu0 0.0
  %7183 = vmatprep.subr.mxu0 0.0
  %7184 = vmatpush1.xpose.msra.mxu0 0.0
  %7185 = vmatprep.subr.mxu0 0.0
  %7186 = vmatpush1.xpose.msra.mxu0 0.0
  %7187 = vmatprep.subr.mxu0 0.0
  %7188 = vmatpush1.xpose.msra.mxu0 0.0
  %7189 = vmatprep.subr.mxu0 0.0
  %7190 = vmatpush1.xpose.msra.mxu0 0.0
  %7191 = vmatprep.subr.mxu0 0.0
  %7192 = vmatpush1.xpose.msra.mxu0 0.0
  %7193 = vmatprep.subr.mxu0 0.0
  %7194 = vmatpush1.xpose.msra.mxu0 0.0
  %7195 = vmatprep.subr.mxu0 0.0
  %7196 = vmatpush1.xpose.msra.mxu0 0.0
  %7197 = vmatprep.subr.mxu0 0.0
  %7198 = vmatpush1.xpose.msra.mxu0 0.0
  %7199 = vmatprep.subr.mxu0 0.0
  %7200 = vmatpush1.xpose.msra.mxu0 0.0
  %7201 = vmatprep.subr.mxu0 0.0
  %7202 = vmatpush1.xpose.msra.mxu0 0.0
  %7203 = vmatprep.subr.mxu0 0.0
  %7204 = vmatpush1.xpose.msra.mxu0 0.0
  %7205 = vmatprep.subr.mxu0 0.0
  %7206 = vmatpush1.xpose.msra.mxu0 0.0
  %7207 = vmatprep.subr.mxu0 0.0
  %7208 = vmatpush1.xpose.msra.mxu0 0.0
  %7209 = vmatprep.subr.mxu0 0.0
  %7210 = vmatpush1.xpose.msra.mxu0 0.0
  %7211 = vmatprep.subr.mxu0 0.0
  %7212 = vmatpush1.xpose.msra.mxu0 0.0
  %7213 = vmatprep.subr.mxu0 0.0
  %7214 = vmatpush1.xpose.msra.mxu0 0.0
  %7215 = vmatprep.subr.mxu0 0.0
  %7216 = vmatpush1.xpose.msra.mxu0 0.0
  %7217 = vmatprep.subr.mxu0 0.0
  %7218 = vmatpush1.xpose.msra.mxu0 0.0
  %7219 = vmatprep.subr.mxu0 0.0
  %7220 = vmatpush1.xpose.msra.mxu0 0.0
  %7221 = vmatprep.subr.mxu0 0.0
  %7222 = vmatpush1.xpose.msra.mxu0 0.0
  %7223 = vmatprep.subr.mxu0 0.0
  %7224 = vmatpush1.xpose.msra.mxu0 0.0
  %7225 = vmatprep.mubr.f32.mxu0 0.0
  %7226 = vmatmul.mubr.f32.gmra.mrb[0].mxu0 %v7129
  %v7227 = vpop.f32.mrb[0].mxu0
  %v7228 = vadd.f32 0.0, %v7227
  %v7229 = vpop.f32.mrb[0].mxu0
  %7230 = vmatprep.mubr.f32.mxu0 0.0
  %7231 = vmatmul.mubr.f32.gmra.mrb[0].mxu0 %v7131
  %v7232 = vpop.f32.mrb[0].mxu0
  %v7233 = vadd.f32 0.0, %v7232
  %v7234 = vpop.f32.mrb[0].mxu0
  %7235 = vmatprep.mubr.f32.mxu0 0.0
  %7236 = vmatmul.mubr.f32.gmra.mrb[0].mxu0 %v7133
  %v7237 = vpop.f32.mrb[0].mxu0
  %v7238 = vadd.f32 0.0, %v7237
  %v7239 = vpop.f32.mrb[0].mxu0
  %7240 = vmatprep.mubr.f32.mxu0 0.0
  %7241 = vmatmul.mubr.f32.gmra.mrb[0].mxu0 %v7135
  %v7242 = vpop.f32.mrb[0].mxu0
  %v7243 = vadd.f32 0.0, %v7242
  %v7244 = vpop.f32.mrb[0].mxu0
  %7245 = vmatprep.mubr.f32.mxu0 0.0
  %7246 = vmatmul.mubr.f32.gmra.mrb[0].mxu0 %v7137
  %v7247 = vpop.f32.mrb[0].mxu0
  %v7248 = vadd.f32 0.0, %v7247
  %v7249 = vpop.f32.mrb[0].mxu0
  %7250 = vmatprep.mubr.f32.mxu0 0.0
  %7251 = vmatmul.mubr.f32.gmra.mrb[0].mxu0 %v7139
  %v7252 = vpop.f32.mrb[0].mxu0
  %v7253 = vadd.f32 0.0, %v7252
  %v7254 = vpop.f32.mrb[0].mxu0
  %7255 = vmatprep.mubr.f32.mxu0 0.0
  %7256 = vmatmul.mubr.f32.gmra.mrb[0].mxu0 %v7141
  %v7257 = vpop.f32.mrb[0].mxu0
  %v7258 = vadd.f32 0.0, %v7257
  %v7259 = vpop.f32.mrb[0].mxu0
  %7260 = vmatprep.mubr.f32.mxu0 0.0
  %7261 = vmatmul.mubr.f32.gmra.mrb[0].mxu0 %v7143
  %v7262 = vpop.f32.mrb[0].mxu0
  %v7263 = vadd.f32 0.0, %v7262
  %v7264 = vpop.f32.mrb[0].mxu0
  %7265 = vdwg.mxu0
  %v7266 = vmul.f32 %v7228, 0.35355338
  %v7267 = vmul.f32 %v7233, 0.35355338
  %v7268 = vmul.f32 %v7238, 0.35355338
  %v7269 = vmul.f32 %v7243, 0.35355338
  %v7270 = vmul.f32 %v7248, 0.35355338
  %v7271 = vmul.f32 %v7253, 0.35355338
  %v7272 = vmul.f32 %v7258, 0.35355338
  %v7273 = vmul.f32 %v7263, 0.35355338
  %v7274 = vsel %vm6662, %v7266, -inf
  %7275 = vmax.xlane.f32.xlu0 %v7274
  %v7276 = vpop.xlane.xlu0 %7275
  %v7277 = vsel %vm6662, %v7267, -inf
  %7278 = vmax.xlane.f32.xlu0 %v7277
  %v7279 = vpop.xlane.xlu0 %7278
  %v7280 = vsel %vm6662, %v7268, -inf
  %7281 = vmax.xlane.f32.xlu0 %v7280
  %v7282 = vpop.xlane.xlu0 %7281
  %v7283 = vsel %vm6662, %v7269, -inf
  %7284 = vmax.xlane.f32.xlu0 %v7283
  %v7285 = vpop.xlane.xlu0 %7284
  %v7286 = vsel %vm6662, %v7270, -inf
  %7287 = vmax.xlane.f32.xlu0 %v7286
  %v7288 = vpop.xlane.xlu0 %7287
  %v7289 = vsel %vm6662, %v7271, -inf
  %7290 = vmax.xlane.f32.xlu0 %v7289
  %v7291 = vpop.xlane.xlu0 %7290
  %v7292 = vsel %vm6662, %v7272, -inf
  %7293 = vmax.xlane.f32.xlu0 %v7292
  %v7294 = vpop.xlane.xlu0 %7293
  %v7295 = vsel %vm6662, %v7273, -inf
  %7296 = vmax.xlane.f32.xlu0 %v7295
  %v7297 = vpop.xlane.xlu0 %7296
  %v7298 = vsub.f32 %v7266, %v7276
  %v7299 = vsub.f32 %v7267, %v7279
  %v7300 = vsub.f32 %v7268, %v7282
  %v7301 = vsub.f32 %v7269, %v7285
  %v7302 = vsub.f32 %v7270, %v7288
  %v7303 = vsub.f32 %v7271, %v7291
  %v7304 = vsub.f32 %v7272, %v7294
  %v7305 = vsub.f32 %v7273, %v7297
  %v7306 = vmul.f32 %v7298, 1.442695
  %v7307 = vpow.pop %v7306
  %v7308 = vmul.f32 %v7299, 1.442695
  %v7309 = vpow.pop %v7308
  %v7310 = vmul.f32 %v7300, 1.442695
  %v7311 = vpow.pop %v7310
  %v7312 = vmul.f32 %v7301, 1.442695
  %v7313 = vpow.pop %v7312
  %v7314 = vmul.f32 %v7302, 1.442695
  %v7315 = vpow.pop %v7314
  %v7316 = vmul.f32 %v7303, 1.442695
  %v7317 = vpow.pop %v7316
  %v7318 = vmul.f32 %v7304, 1.442695
  %v7319 = vpow.pop %v7318
  %v7320 = vmul.f32 %v7305, 1.442695
  %v7321 = vpow.pop %v7320
  %v7322 = vsel %vm6662, %v7307, 0.0
  %7323 = vadd.xlane.f32.xlu0 %v7322
  %v7324 = vpop.xlane.xlu0 %7323
  %v7325 = vsel %vm6662, %v7309, 0.0
  %7326 = vadd.xlane.f32.xlu0 %v7325
  %v7327 = vpop.xlane.xlu0 %7326
  %v7328 = vsel %vm6662, %v7311, 0.0
  %7329 = vadd.xlane.f32.xlu0 %v7328
  %v7330 = vpop.xlane.xlu0 %7329
  %v7331 = vsel %vm6662, %v7313, 0.0
  %7332 = vadd.xlane.f32.xlu0 %v7331
  %v7333 = vpop.xlane.xlu0 %7332
  %v7334 = vsel %vm6662, %v7315, 0.0
  %7335 = vadd.xlane.f32.xlu0 %v7334
  %v7336 = vpop.xlane.xlu0 %7335
  %v7337 = vsel %vm6662, %v7317, 0.0
  %7338 = vadd.xlane.f32.xlu0 %v7337
  %v7339 = vpop.xlane.xlu0 %7338
  %v7340 = vsel %vm6662, %v7319, 0.0
  %7341 = vadd.xlane.f32.xlu0 %v7340
  %v7342 = vpop.xlane.xlu0 %7341
  %v7343 = vsel %vm6662, %v7321, 0.0
  %7344 = vadd.xlane.f32.xlu0 %v7343
  %v7345 = vpop.xlane.xlu0 %7344
  %v7346 = vrcp.pop %v7324
  %v7347 = vrcp.pop %v7327
  %v7348 = vrcp.pop %v7330
  %v7349 = vrcp.pop %v7333
  %v7350 = vrcp.pop %v7336
  %v7351 = vrcp.pop %v7339
  %v7352 = vrcp.pop %v7342
  %v7353 = vrcp.pop %v7345
  %v7354 = vmul.f32 %v7307, %v7346
  %v7355 = vmul.f32 %v7309, %v7347
  %v7356 = vmul.f32 %v7311, %v7348
  %v7357 = vmul.f32 %v7313, %v7349
  %v7358 = vmul.f32 %v7315, %v7350
  %v7359 = vmul.f32 %v7317, %v7351
  %v7360 = vmul.f32 %v7319, %v7352
  %v7361 = vmul.f32 %v7321, %v7353
  %7362 = vrot.lane.b32.xlu0 %v7026, 64
  %v7363 = vpop.permute.xlu0 %7362
  %7364 = vrot.lane.b32.xlu0 %v7031, 64
  %v7365 = vpop.permute.xlu0 %7364
  %7366 = vrot.lane.b32.xlu0 %v7036, 64
  %v7367 = vpop.permute.xlu0 %7366
  %7368 = vrot.lane.b32.xlu0 %v7041, 64
  %v7369 = vpop.permute.xlu0 %7368
  %7370 = vrot.lane.b32.xlu0 %v7046, 64
  %v7371 = vpop.permute.xlu0 %7370
  %7372 = vrot.lane.b32.xlu0 %v7051, 64
  %v7373 = vpop.permute.xlu0 %7372
  %7374 = vrot.lane.b32.xlu0 %v7056, 64
  %v7375 = vpop.permute.xlu0 %7374
  %7376 = vrot.lane.b32.xlu0 %v7061, 64
  %v7377 = vpop.permute.xlu0 %7376
  %v7387 = vsel %vm6662, %v7354, 0
  %v7390 = vsel %vm6662, %v7355, 0
  %v7393 = vsel %vm6662, %v7356, 0
  %v7396 = vsel %vm6662, %v7357, 0
  %v7399 = vsel %vm6662, %v7358, 0
  %v7402 = vsel %vm6662, %v7359, 0
  %v7405 = vsel %vm6662, %v7360, 0
  %v7408 = vsel %vm6662, %v7361, 0
  %7410 = vmatprep.subr.mxu0 0.0
  %7411 = vmatpush1.msra.mxu0 %v7363
  %7412 = vmatprep.subr.mxu0 0.0
  %7413 = vmatpush1.msra.mxu0 %v7365
  %7414 = vmatprep.subr.mxu0 0.0
  %7415 = vmatpush1.msra.mxu0 %v7367
  %7416 = vmatprep.subr.mxu0 0.0
  %7417 = vmatpush1.msra.mxu0 %v7369
  %7418 = vmatprep.subr.mxu0 0.0
  %7419 = vmatpush1.msra.mxu0 %v7371
  %7420 = vmatprep.subr.mxu0 0.0
  %7421 = vmatpush1.msra.mxu0 %v7373
  %7422 = vmatprep.subr.mxu0 0.0
  %7423 = vmatpush1.msra.mxu0 %v7375
  %7424 = vmatprep.subr.mxu0 0.0
  %7425 = vmatpush1.msra.mxu0 %v7377
  %7426 = vmatprep.subr.mxu0 0.0
  %7427 = vmatpush1.msra.mxu0 0.0
  %7428 = vmatprep.subr.mxu0 0.0
  %7429 = vmatpush1.msra.mxu0 0.0
  %7430 = vmatprep.subr.mxu0 0.0
  %7431 = vmatpush1.msra.mxu0 0.0
  %7432 = vmatprep.subr.mxu0 0.0
  %7433 = vmatpush1.msra.mxu0 0.0
  %7434 = vmatprep.subr.mxu0 0.0
  %7435 = vmatpush1.msra.mxu0 0.0
  %7436 = vmatprep.subr.mxu0 0.0
  %7437 = vmatpush1.msra.mxu0 0.0
  %7438 = vmatprep.subr.mxu0 0.0
  %7439 = vmatpush1.msra.mxu0 0.0
  %7440 = vmatprep.subr.mxu0 0.0
  %7441 = vmatpush1.msra.mxu0 0.0
  %7442 = vmatprep.subr.mxu0 0.0
  %7443 = vmatpush1.msra.mxu0 0.0
  %7444 = vmatprep.subr.mxu0 0.0
  %7445 = vmatpush1.msra.mxu0 0.0
  %7446 = vmatprep.subr.mxu0 0.0
  %7447 = vmatpush1.msra.mxu0 0.0
  %7448 = vmatprep.subr.mxu0 0.0
  %7449 = vmatpush1.msra.mxu0 0.0
  %7450 = vmatprep.subr.mxu0 0.0
  %7451 = vmatpush1.msra.mxu0 0.0
  %7452 = vmatprep.subr.mxu0 0.0
  %7453 = vmatpush1.msra.mxu0 0.0
  %7454 = vmatprep.subr.mxu0 0.0
  %7455 = vmatpush1.msra.mxu0 0.0
  %7456 = vmatprep.subr.mxu0 0.0
  %7457 = vmatpush1.msra.mxu0 0.0
  %7458 = vmatprep.subr.mxu0 0.0
  %7459 = vmatpush1.msra.mxu0 0.0
  %7460 = vmatprep.subr.mxu0 0.0
  %7461 = vmatpush1.msra.mxu0 0.0
  %7462 = vmatprep.subr.mxu0 0.0
  %7463 = vmatpush1.msra.mxu0 0.0
  %7464 = vmatprep.subr.mxu0 0.0
  %7465 = vmatpush1.msra.mxu0 0.0
  %7466 = vmatprep.subr.mxu0 0.0
  %7467 = vmatpush1.msra.mxu0 0.0
  %7468 = vmatprep.subr.mxu0 0.0
  %7469 = vmatpush1.msra.mxu0 0.0
  %7470 = vmatprep.subr.mxu0 0.0
  %7471 = vmatpush1.msra.mxu0 0.0
  %7472 = vmatprep.subr.mxu0 0.0
  %7473 = vmatpush1.msra.mxu0 0.0
  %7474 = vmatprep.mubr.f32.mxu0 0.0
  %7475 = vmatmul.mubr.f32.gmra.mrb[0].mxu0 %v7387
  %v7476 = vpop.f32.mrb[0].mxu0
  %v7477 = vadd.f32 0.0, %v7476
  %v7478 = vpop.f32.mrb[0].mxu0
  %7479 = vmatprep.mubr.f32.mxu0 0.0
  %7480 = vmatmul.mubr.f32.gmra.mrb[0].mxu0 %v7390
  %v7481 = vpop.f32.mrb[0].mxu0
  %v7482 = vadd.f32 0.0, %v7481
  %v7483 = vpop.f32.mrb[0].mxu0
  %7484 = vmatprep.mubr.f32.mxu0 0.0
  %7485 = vmatmul.mubr.f32.gmra.mrb[0].mxu0 %v7393
  %v7486 = vpop.f32.mrb[0].mxu0
  %v7487 = vadd.f32 0.0, %v7486
  %v7488 = vpop.f32.mrb[0].mxu0
  %7489 = vmatprep.mubr.f32.mxu0 0.0
  %7490 = vmatmul.mubr.f32.gmra.mrb[0].mxu0 %v7396
  %v7491 = vpop.f32.mrb[0].mxu0
  %v7492 = vadd.f32 0.0, %v7491
  %v7493 = vpop.f32.mrb[0].mxu0
  %7494 = vmatprep.mubr.f32.mxu0 0.0
  %7495 = vmatmul.mubr.f32.gmra.mrb[0].mxu0 %v7399
  %v7496 = vpop.f32.mrb[0].mxu0
  %v7497 = vadd.f32 0.0, %v7496
  %v7498 = vpop.f32.mrb[0].mxu0
  %7499 = vmatprep.mubr.f32.mxu0 0.0
  %7500 = vmatmul.mubr.f32.gmra.mrb[0].mxu0 %v7402
  %v7501 = vpop.f32.mrb[0].mxu0
  %v7502 = vadd.f32 0.0, %v7501
  %v7503 = vpop.f32.mrb[0].mxu0
  %7504 = vmatprep.mubr.f32.mxu0 0.0
  %7505 = vmatmul.mubr.f32.gmra.mrb[0].mxu0 %v7405
  %v7506 = vpop.f32.mrb[0].mxu0
  %v7507 = vadd.f32 0.0, %v7506
  %v7508 = vpop.f32.mrb[0].mxu0
  %7509 = vmatprep.mubr.f32.mxu0 0.0
  %7510 = vmatmul.mubr.f32.gmra.mrb[0].mxu0 %v7408
  %v7511 = vpop.f32.mrb[0].mxu0
  %v7512 = vadd.f32 0.0, %v7511
  %v7513 = vpop.f32.mrb[0].mxu0
  %7514 = vdwg.mxu0
  %7515 = vrot.lane.b32.xlu0 %v7026, 120
  %v7516 = vpop.permute.xlu0 %7515
  %7517 = vrot.lane.b32.xlu0 %v7031, 120
  %v7518 = vpop.permute.xlu0 %7517
  %7519 = vrot.lane.b32.xlu0 %v7036, 120
  %v7520 = vpop.permute.xlu0 %7519
  %7521 = vrot.lane.b32.xlu0 %v7041, 120
  %v7522 = vpop.permute.xlu0 %7521
  %7523 = vrot.lane.b32.xlu0 %v7046, 120
  %v7524 = vpop.permute.xlu0 %7523
  %7525 = vrot.lane.b32.xlu0 %v7051, 120
  %v7526 = vpop.permute.xlu0 %7525
  %7527 = vrot.lane.b32.xlu0 %v7056, 120
  %v7528 = vpop.permute.xlu0 %7527
  %7529 = vrot.lane.b32.xlu0 %v7061, 120
  %v7530 = vpop.permute.xlu0 %7529
  %7531 = vrot.lane.b32.xlu0 %v7026, 88
  %v7532 = vpop.permute.xlu0 %7531
  %7533 = vrot.lane.b32.xlu0 %v7031, 88
  %v7534 = vpop.permute.xlu0 %7533
  %7535 = vrot.lane.b32.xlu0 %v7036, 88
  %v7536 = vpop.permute.xlu0 %7535
  %7537 = vrot.lane.b32.xlu0 %v7041, 88
  %v7538 = vpop.permute.xlu0 %7537
  %7539 = vrot.lane.b32.xlu0 %v7046, 88
  %v7540 = vpop.permute.xlu0 %7539
  %7541 = vrot.lane.b32.xlu0 %v7051, 88
  %v7542 = vpop.permute.xlu0 %7541
  %7543 = vrot.lane.b32.xlu0 %v7056, 88
  %v7544 = vpop.permute.xlu0 %7543
  %7545 = vrot.lane.b32.xlu0 %v7061, 88
  %v7546 = vpop.permute.xlu0 %7545
  %v7547 = vsel %vm7128, %v7516, 0
  %v7549 = vsel %vm7128, %v7518, 0
  %v7551 = vsel %vm7128, %v7520, 0
  %v7553 = vsel %vm7128, %v7522, 0
  %v7555 = vsel %vm7128, %v7524, 0
  %v7557 = vsel %vm7128, %v7526, 0
  %v7559 = vsel %vm7128, %v7528, 0
  %v7561 = vsel %vm7128, %v7530, 0
  %v7563 = vsel %vm7128, %v7532, 0
  %v7565 = vsel %vm7128, %v7534, 0
  %v7567 = vsel %vm7128, %v7536, 0
  %v7569 = vsel %vm7128, %v7538, 0
  %v7571 = vsel %vm7128, %v7540, 0
  %v7573 = vsel %vm7128, %v7542, 0
  %v7575 = vsel %vm7128, %v7544, 0
  %v7577 = vsel %vm7128, %v7546, 0
  %7579 = vmatprep.subr.mxu0 0.0
  %7580 = vmatpush1.xpose.msra.mxu0 %v7563
  %7581 = vmatprep.subr.mxu0 0.0
  %7582 = vmatpush1.xpose.msra.mxu0 %v7565
  %7583 = vmatprep.subr.mxu0 0.0
  %7584 = vmatpush1.xpose.msra.mxu0 %v7567
  %7585 = vmatprep.subr.mxu0 0.0
  %7586 = vmatpush1.xpose.msra.mxu0 %v7569
  %7587 = vmatprep.subr.mxu0 0.0
  %7588 = vmatpush1.xpose.msra.mxu0 %v7571
  %7589 = vmatprep.subr.mxu0 0.0
  %7590 = vmatpush1.xpose.msra.mxu0 %v7573
  %7591 = vmatprep.subr.mxu0 0.0
  %7592 = vmatpush1.xpose.msra.mxu0 %v7575
  %7593 = vmatprep.subr.mxu0 0.0
  %7594 = vmatpush1.xpose.msra.mxu0 %v7577
  %7595 = vmatprep.subr.mxu0 0.0
  %7596 = vmatpush1.xpose.msra.mxu0 0.0
  %7597 = vmatprep.subr.mxu0 0.0
  %7598 = vmatpush1.xpose.msra.mxu0 0.0
  %7599 = vmatprep.subr.mxu0 0.0
  %7600 = vmatpush1.xpose.msra.mxu0 0.0
  %7601 = vmatprep.subr.mxu0 0.0
  %7602 = vmatpush1.xpose.msra.mxu0 0.0
  %7603 = vmatprep.subr.mxu0 0.0
  %7604 = vmatpush1.xpose.msra.mxu0 0.0
  %7605 = vmatprep.subr.mxu0 0.0
  %7606 = vmatpush1.xpose.msra.mxu0 0.0
  %7607 = vmatprep.subr.mxu0 0.0
  %7608 = vmatpush1.xpose.msra.mxu0 0.0
  %7609 = vmatprep.subr.mxu0 0.0
  %7610 = vmatpush1.xpose.msra.mxu0 0.0
  %7611 = vmatprep.subr.mxu0 0.0
  %7612 = vmatpush1.xpose.msra.mxu0 0.0
  %7613 = vmatprep.subr.mxu0 0.0
  %7614 = vmatpush1.xpose.msra.mxu0 0.0
  %7615 = vmatprep.subr.mxu0 0.0
  %7616 = vmatpush1.xpose.msra.mxu0 0.0
  %7617 = vmatprep.subr.mxu0 0.0
  %7618 = vmatpush1.xpose.msra.mxu0 0.0
  %7619 = vmatprep.subr.mxu0 0.0
  %7620 = vmatpush1.xpose.msra.mxu0 0.0
  %7621 = vmatprep.subr.mxu0 0.0
  %7622 = vmatpush1.xpose.msra.mxu0 0.0
  %7623 = vmatprep.subr.mxu0 0.0
  %7624 = vmatpush1.xpose.msra.mxu0 0.0
  %7625 = vmatprep.subr.mxu0 0.0
  %7626 = vmatpush1.xpose.msra.mxu0 0.0
  %7627 = vmatprep.subr.mxu0 0.0
  %7628 = vmatpush1.xpose.msra.mxu0 0.0
  %7629 = vmatprep.subr.mxu0 0.0
  %7630 = vmatpush1.xpose.msra.mxu0 0.0
  %7631 = vmatprep.subr.mxu0 0.0
  %7632 = vmatpush1.xpose.msra.mxu0 0.0
  %7633 = vmatprep.subr.mxu0 0.0
  %7634 = vmatpush1.xpose.msra.mxu0 0.0
  %7635 = vmatprep.subr.mxu0 0.0
  %7636 = vmatpush1.xpose.msra.mxu0 0.0
  %7637 = vmatprep.subr.mxu0 0.0
  %7638 = vmatpush1.xpose.msra.mxu0 0.0
  %7639 = vmatprep.subr.mxu0 0.0
  %7640 = vmatpush1.xpose.msra.mxu0 0.0
  %7641 = vmatprep.subr.mxu0 0.0
  %7642 = vmatpush1.xpose.msra.mxu0 0.0
  %7643 = vmatprep.mubr.f32.mxu0 0.0
  %7644 = vmatmul.mubr.f32.gmra.mrb[0].mxu0 %v7547
  %v7645 = vpop.f32.mrb[0].mxu0
  %v7646 = vadd.f32 0.0, %v7645
  %v7647 = vpop.f32.mrb[0].mxu0
  %7648 = vmatprep.mubr.f32.mxu0 0.0
  %7649 = vmatmul.mubr.f32.gmra.mrb[0].mxu0 %v7549
  %v7650 = vpop.f32.mrb[0].mxu0
  %v7651 = vadd.f32 0.0, %v7650
  %v7652 = vpop.f32.mrb[0].mxu0
  %7653 = vmatprep.mubr.f32.mxu0 0.0
  %7654 = vmatmul.mubr.f32.gmra.mrb[0].mxu0 %v7551
  %v7655 = vpop.f32.mrb[0].mxu0
  %v7656 = vadd.f32 0.0, %v7655
  %v7657 = vpop.f32.mrb[0].mxu0
  %7658 = vmatprep.mubr.f32.mxu0 0.0
  %7659 = vmatmul.mubr.f32.gmra.mrb[0].mxu0 %v7553
  %v7660 = vpop.f32.mrb[0].mxu0
  %v7661 = vadd.f32 0.0, %v7660
  %v7662 = vpop.f32.mrb[0].mxu0
  %7663 = vmatprep.mubr.f32.mxu0 0.0
  %7664 = vmatmul.mubr.f32.gmra.mrb[0].mxu0 %v7555
  %v7665 = vpop.f32.mrb[0].mxu0
  %v7666 = vadd.f32 0.0, %v7665
  %v7667 = vpop.f32.mrb[0].mxu0
  %7668 = vmatprep.mubr.f32.mxu0 0.0
  %7669 = vmatmul.mubr.f32.gmra.mrb[0].mxu0 %v7557
  %v7670 = vpop.f32.mrb[0].mxu0
  %v7671 = vadd.f32 0.0, %v7670
  %v7672 = vpop.f32.mrb[0].mxu0
  %7673 = vmatprep.mubr.f32.mxu0 0.0
  %7674 = vmatmul.mubr.f32.gmra.mrb[0].mxu0 %v7559
  %v7675 = vpop.f32.mrb[0].mxu0
  %v7676 = vadd.f32 0.0, %v7675
  %v7677 = vpop.f32.mrb[0].mxu0
  %7678 = vmatprep.mubr.f32.mxu0 0.0
  %7679 = vmatmul.mubr.f32.gmra.mrb[0].mxu0 %v7561
  %v7680 = vpop.f32.mrb[0].mxu0
  %v7681 = vadd.f32 0.0, %v7680
  %v7682 = vpop.f32.mrb[0].mxu0
  %7683 = vdwg.mxu0
  %v7684 = vmul.f32 %v7646, 0.35355338
  %v7685 = vmul.f32 %v7651, 0.35355338
  %v7686 = vmul.f32 %v7656, 0.35355338
  %v7687 = vmul.f32 %v7661, 0.35355338
  %v7688 = vmul.f32 %v7666, 0.35355338
  %v7689 = vmul.f32 %v7671, 0.35355338
  %v7690 = vmul.f32 %v7676, 0.35355338
  %v7691 = vmul.f32 %v7681, 0.35355338
  %v7692 = vsel %vm6662, %v7684, -inf
  %7693 = vmax.xlane.f32.xlu0 %v7692
  %v7694 = vpop.xlane.xlu0 %7693
  %v7695 = vsel %vm6662, %v7685, -inf
  %7696 = vmax.xlane.f32.xlu0 %v7695
  %v7697 = vpop.xlane.xlu0 %7696
  %v7698 = vsel %vm6662, %v7686, -inf
  %7699 = vmax.xlane.f32.xlu0 %v7698
  %v7700 = vpop.xlane.xlu0 %7699
  %v7701 = vsel %vm6662, %v7687, -inf
  %7702 = vmax.xlane.f32.xlu0 %v7701
  %v7703 = vpop.xlane.xlu0 %7702
  %v7704 = vsel %vm6662, %v7688, -inf
  %7705 = vmax.xlane.f32.xlu0 %v7704
  %v7706 = vpop.xlane.xlu0 %7705
  %v7707 = vsel %vm6662, %v7689, -inf
  %7708 = vmax.xlane.f32.xlu0 %v7707
  %v7709 = vpop.xlane.xlu0 %7708
  %v7710 = vsel %vm6662, %v7690, -inf
  %7711 = vmax.xlane.f32.xlu0 %v7710
  %v7712 = vpop.xlane.xlu0 %7711
  %v7713 = vsel %vm6662, %v7691, -inf
  %7714 = vmax.xlane.f32.xlu0 %v7713
  %v7715 = vpop.xlane.xlu0 %7714
  %v7716 = vsub.f32 %v7684, %v7694
  %v7717 = vsub.f32 %v7685, %v7697
  %v7718 = vsub.f32 %v7686, %v7700
  %v7719 = vsub.f32 %v7687, %v7703
  %v7720 = vsub.f32 %v7688, %v7706
  %v7721 = vsub.f32 %v7689, %v7709
  %v7722 = vsub.f32 %v7690, %v7712
  %v7723 = vsub.f32 %v7691, %v7715
  %v7724 = vmul.f32 %v7716, 1.442695
  %v7725 = vpow.pop %v7724
  %v7726 = vmul.f32 %v7717, 1.442695
  %v7727 = vpow.pop %v7726
  %v7728 = vmul.f32 %v7718, 1.442695
  %v7729 = vpow.pop %v7728
  %v7730 = vmul.f32 %v7719, 1.442695
  %v7731 = vpow.pop %v7730
  %v7732 = vmul.f32 %v7720, 1.442695
  %v7733 = vpow.pop %v7732
  %v7734 = vmul.f32 %v7721, 1.442695
  %v7735 = vpow.pop %v7734
  %v7736 = vmul.f32 %v7722, 1.442695
  %v7737 = vpow.pop %v7736
  %v7738 = vmul.f32 %v7723, 1.442695
  %v7739 = vpow.pop %v7738
  %v7740 = vsel %vm6662, %v7725, 0.0
  %7741 = vadd.xlane.f32.xlu0 %v7740
  %v7742 = vpop.xlane.xlu0 %7741
  %v7743 = vsel %vm6662, %v7727, 0.0
  %7744 = vadd.xlane.f32.xlu0 %v7743
  %v7745 = vpop.xlane.xlu0 %7744
  %v7746 = vsel %vm6662, %v7729, 0.0
  %7747 = vadd.xlane.f32.xlu0 %v7746
  %v7748 = vpop.xlane.xlu0 %7747
  %v7749 = vsel %vm6662, %v7731, 0.0
  %7750 = vadd.xlane.f32.xlu0 %v7749
  %v7751 = vpop.xlane.xlu0 %7750
  %v7752 = vsel %vm6662, %v7733, 0.0
  %7753 = vadd.xlane.f32.xlu0 %v7752
  %v7754 = vpop.xlane.xlu0 %7753
  %v7755 = vsel %vm6662, %v7735, 0.0
  %7756 = vadd.xlane.f32.xlu0 %v7755
  %v7757 = vpop.xlane.xlu0 %7756
  %v7758 = vsel %vm6662, %v7737, 0.0
  %7759 = vadd.xlane.f32.xlu0 %v7758
  %v7760 = vpop.xlane.xlu0 %7759
  %v7761 = vsel %vm6662, %v7739, 0.0
  %7762 = vadd.xlane.f32.xlu0 %v7761
  %v7763 = vpop.xlane.xlu0 %7762
  %v7764 = vrcp.pop %v7742
  %v7765 = vrcp.pop %v7745
  %v7766 = vrcp.pop %v7748
  %v7767 = vrcp.pop %v7751
  %v7768 = vrcp.pop %v7754
  %v7769 = vrcp.pop %v7757
  %v7770 = vrcp.pop %v7760
  %v7771 = vrcp.pop %v7763
  %v7772 = vmul.f32 %v7725, %v7764
  %v7773 = vmul.f32 %v7727, %v7765
  %v7774 = vmul.f32 %v7729, %v7766
  %v7775 = vmul.f32 %v7731, %v7767
  %v7776 = vmul.f32 %v7733, %v7768
  %v7777 = vmul.f32 %v7735, %v7769
  %v7778 = vmul.f32 %v7737, %v7770
  %v7779 = vmul.f32 %v7739, %v7771
  %7780 = vrot.lane.b32.xlu0 %v7026, 56
  %v7781 = vpop.permute.xlu0 %7780
  %7782 = vrot.lane.b32.xlu0 %v7031, 56
  %v7783 = vpop.permute.xlu0 %7782
  %7784 = vrot.lane.b32.xlu0 %v7036, 56
  %v7785 = vpop.permute.xlu0 %7784
  %7786 = vrot.lane.b32.xlu0 %v7041, 56
  %v7787 = vpop.permute.xlu0 %7786
  %7788 = vrot.lane.b32.xlu0 %v7046, 56
  %v7789 = vpop.permute.xlu0 %7788
  %7790 = vrot.lane.b32.xlu0 %v7051, 56
  %v7791 = vpop.permute.xlu0 %7790
  %7792 = vrot.lane.b32.xlu0 %v7056, 56
  %v7793 = vpop.permute.xlu0 %7792
  %7794 = vrot.lane.b32.xlu0 %v7061, 56
  %v7795 = vpop.permute.xlu0 %7794
  %v7805 = vsel %vm6662, %v7772, 0
  %v7808 = vsel %vm6662, %v7773, 0
  %v7811 = vsel %vm6662, %v7774, 0
  %v7814 = vsel %vm6662, %v7775, 0
  %v7817 = vsel %vm6662, %v7776, 0
  %v7820 = vsel %vm6662, %v7777, 0
  %v7823 = vsel %vm6662, %v7778, 0
  %v7826 = vsel %vm6662, %v7779, 0
  %7828 = vmatprep.subr.mxu0 0.0
  %7829 = vmatpush1.msra.mxu0 %v7781
  %7830 = vmatprep.subr.mxu0 0.0
  %7831 = vmatpush1.msra.mxu0 %v7783
  %7832 = vmatprep.subr.mxu0 0.0
  %7833 = vmatpush1.msra.mxu0 %v7785
  %7834 = vmatprep.subr.mxu0 0.0
  %7835 = vmatpush1.msra.mxu0 %v7787
  %7836 = vmatprep.subr.mxu0 0.0
  %7837 = vmatpush1.msra.mxu0 %v7789
  %7838 = vmatprep.subr.mxu0 0.0
  %7839 = vmatpush1.msra.mxu0 %v7791
  %7840 = vmatprep.subr.mxu0 0.0
  %7841 = vmatpush1.msra.mxu0 %v7793
  %7842 = vmatprep.subr.mxu0 0.0
  %7843 = vmatpush1.msra.mxu0 %v7795
  %7844 = vmatprep.subr.mxu0 0.0
  %7845 = vmatpush1.msra.mxu0 0.0
  %7846 = vmatprep.subr.mxu0 0.0
  %7847 = vmatpush1.msra.mxu0 0.0
  %7848 = vmatprep.subr.mxu0 0.0
  %7849 = vmatpush1.msra.mxu0 0.0
  %7850 = vmatprep.subr.mxu0 0.0
  %7851 = vmatpush1.msra.mxu0 0.0
  %7852 = vmatprep.subr.mxu0 0.0
  %7853 = vmatpush1.msra.mxu0 0.0
  %7854 = vmatprep.subr.mxu0 0.0
  %7855 = vmatpush1.msra.mxu0 0.0
  %7856 = vmatprep.subr.mxu0 0.0
  %7857 = vmatpush1.msra.mxu0 0.0
  %7858 = vmatprep.subr.mxu0 0.0
  %7859 = vmatpush1.msra.mxu0 0.0
  %7860 = vmatprep.subr.mxu0 0.0
  %7861 = vmatpush1.msra.mxu0 0.0
  %7862 = vmatprep.subr.mxu0 0.0
  %7863 = vmatpush1.msra.mxu0 0.0
  %7864 = vmatprep.subr.mxu0 0.0
  %7865 = vmatpush1.msra.mxu0 0.0
  %7866 = vmatprep.subr.mxu0 0.0
  %7867 = vmatpush1.msra.mxu0 0.0
  %7868 = vmatprep.subr.mxu0 0.0
  %7869 = vmatpush1.msra.mxu0 0.0
  %7870 = vmatprep.subr.mxu0 0.0
  %7871 = vmatpush1.msra.mxu0 0.0
  %7872 = vmatprep.subr.mxu0 0.0
  %7873 = vmatpush1.msra.mxu0 0.0
  %7874 = vmatprep.subr.mxu0 0.0
  %7875 = vmatpush1.msra.mxu0 0.0
  %7876 = vmatprep.subr.mxu0 0.0
  %7877 = vmatpush1.msra.mxu0 0.0
  %7878 = vmatprep.subr.mxu0 0.0
  %7879 = vmatpush1.msra.mxu0 0.0
  %7880 = vmatprep.subr.mxu0 0.0
  %7881 = vmatpush1.msra.mxu0 0.0
  %7882 = vmatprep.subr.mxu0 0.0
  %7883 = vmatpush1.msra.mxu0 0.0
  %7884 = vmatprep.subr.mxu0 0.0
  %7885 = vmatpush1.msra.mxu0 0.0
  %7886 = vmatprep.subr.mxu0 0.0
  %7887 = vmatpush1.msra.mxu0 0.0
  %7888 = vmatprep.subr.mxu0 0.0
  %7889 = vmatpush1.msra.mxu0 0.0
  %7890 = vmatprep.subr.mxu0 0.0
  %7891 = vmatpush1.msra.mxu0 0.0
  %7892 = vmatprep.mubr.f32.mxu0 0.0
  %7893 = vmatmul.mubr.f32.gmra.mrb[0].mxu0 %v7805
  %v7894 = vpop.f32.mrb[0].mxu0
  %v7895 = vadd.f32 0.0, %v7894
  %v7896 = vpop.f32.mrb[0].mxu0
  %7897 = vmatprep.mubr.f32.mxu0 0.0
  %7898 = vmatmul.mubr.f32.gmra.mrb[0].mxu0 %v7808
  %v7899 = vpop.f32.mrb[0].mxu0
  %v7900 = vadd.f32 0.0, %v7899
  %v7901 = vpop.f32.mrb[0].mxu0
  %7902 = vmatprep.mubr.f32.mxu0 0.0
  %7903 = vmatmul.mubr.f32.gmra.mrb[0].mxu0 %v7811
  %v7904 = vpop.f32.mrb[0].mxu0
  %v7905 = vadd.f32 0.0, %v7904
  %v7906 = vpop.f32.mrb[0].mxu0
  %7907 = vmatprep.mubr.f32.mxu0 0.0
  %7908 = vmatmul.mubr.f32.gmra.mrb[0].mxu0 %v7814
  %v7909 = vpop.f32.mrb[0].mxu0
  %v7910 = vadd.f32 0.0, %v7909
  %v7911 = vpop.f32.mrb[0].mxu0
  %7912 = vmatprep.mubr.f32.mxu0 0.0
  %7913 = vmatmul.mubr.f32.gmra.mrb[0].mxu0 %v7817
  %v7914 = vpop.f32.mrb[0].mxu0
  %v7915 = vadd.f32 0.0, %v7914
  %v7916 = vpop.f32.mrb[0].mxu0
  %7917 = vmatprep.mubr.f32.mxu0 0.0
  %7918 = vmatmul.mubr.f32.gmra.mrb[0].mxu0 %v7820
  %v7919 = vpop.f32.mrb[0].mxu0
  %v7920 = vadd.f32 0.0, %v7919
  %v7921 = vpop.f32.mrb[0].mxu0
  %7922 = vmatprep.mubr.f32.mxu0 0.0
  %7923 = vmatmul.mubr.f32.gmra.mrb[0].mxu0 %v7823
  %v7924 = vpop.f32.mrb[0].mxu0
  %v7925 = vadd.f32 0.0, %v7924
  %v7926 = vpop.f32.mrb[0].mxu0
  %7927 = vmatprep.mubr.f32.mxu0 0.0
  %7928 = vmatmul.mubr.f32.gmra.mrb[0].mxu0 %v7826
  %v7929 = vpop.f32.mrb[0].mxu0
  %v7930 = vadd.f32 0.0, %v7929
  %v7931 = vpop.f32.mrb[0].mxu0
  %7932 = vdwg.mxu0
  %7933 = vrot.lane.b32.xlu0 %v7026, 112
  %v7934 = vpop.permute.xlu0 %7933
  %7935 = vrot.lane.b32.xlu0 %v7031, 112
  %v7936 = vpop.permute.xlu0 %7935
  %7937 = vrot.lane.b32.xlu0 %v7036, 112
  %v7938 = vpop.permute.xlu0 %7937
  %7939 = vrot.lane.b32.xlu0 %v7041, 112
  %v7940 = vpop.permute.xlu0 %7939
  %7941 = vrot.lane.b32.xlu0 %v7046, 112
  %v7942 = vpop.permute.xlu0 %7941
  %7943 = vrot.lane.b32.xlu0 %v7051, 112
  %v7944 = vpop.permute.xlu0 %7943
  %7945 = vrot.lane.b32.xlu0 %v7056, 112
  %v7946 = vpop.permute.xlu0 %7945
  %7947 = vrot.lane.b32.xlu0 %v7061, 112
  %v7948 = vpop.permute.xlu0 %7947
  %7949 = vrot.lane.b32.xlu0 %v7026, 80
  %v7950 = vpop.permute.xlu0 %7949
  %7951 = vrot.lane.b32.xlu0 %v7031, 80
  %v7952 = vpop.permute.xlu0 %7951
  %7953 = vrot.lane.b32.xlu0 %v7036, 80
  %v7954 = vpop.permute.xlu0 %7953
  %7955 = vrot.lane.b32.xlu0 %v7041, 80
  %v7956 = vpop.permute.xlu0 %7955
  %7957 = vrot.lane.b32.xlu0 %v7046, 80
  %v7958 = vpop.permute.xlu0 %7957
  %7959 = vrot.lane.b32.xlu0 %v7051, 80
  %v7960 = vpop.permute.xlu0 %7959
  %7961 = vrot.lane.b32.xlu0 %v7056, 80
  %v7962 = vpop.permute.xlu0 %7961
  %7963 = vrot.lane.b32.xlu0 %v7061, 80
  %v7964 = vpop.permute.xlu0 %7963
  %v7965 = vsel %vm7128, %v7934, 0
  %v7967 = vsel %vm7128, %v7936, 0
  %v7969 = vsel %vm7128, %v7938, 0
  %v7971 = vsel %vm7128, %v7940, 0
  %v7973 = vsel %vm7128, %v7942, 0
  %v7975 = vsel %vm7128, %v7944, 0
  %v7977 = vsel %vm7128, %v7946, 0
  %v7979 = vsel %vm7128, %v7948, 0
  %v7981 = vsel %vm7128, %v7950, 0
  %v7983 = vsel %vm7128, %v7952, 0
  %v7985 = vsel %vm7128, %v7954, 0
  %v7987 = vsel %vm7128, %v7956, 0
  %v7989 = vsel %vm7128, %v7958, 0
  %v7991 = vsel %vm7128, %v7960, 0
  %v7993 = vsel %vm7128, %v7962, 0
  %v7995 = vsel %vm7128, %v7964, 0
  %7997 = vmatprep.subr.mxu0 0.0
  %7998 = vmatpush1.xpose.msra.mxu0 %v7981
  %7999 = vmatprep.subr.mxu0 0.0
  %8000 = vmatpush1.xpose.msra.mxu0 %v7983
  %8001 = vmatprep.subr.mxu0 0.0
  %8002 = vmatpush1.xpose.msra.mxu0 %v7985
  %8003 = vmatprep.subr.mxu0 0.0
  %8004 = vmatpush1.xpose.msra.mxu0 %v7987
  %8005 = vmatprep.subr.mxu0 0.0
  %8006 = vmatpush1.xpose.msra.mxu0 %v7989
  %8007 = vmatprep.subr.mxu0 0.0
  %8008 = vmatpush1.xpose.msra.mxu0 %v7991
  %8009 = vmatprep.subr.mxu0 0.0
  %8010 = vmatpush1.xpose.msra.mxu0 %v7993
  %8011 = vmatprep.subr.mxu0 0.0
  %8012 = vmatpush1.xpose.msra.mxu0 %v7995
  %8013 = vmatprep.subr.mxu0 0.0
  %8014 = vmatpush1.xpose.msra.mxu0 0.0
  %8015 = vmatprep.subr.mxu0 0.0
  %8016 = vmatpush1.xpose.msra.mxu0 0.0
  %8017 = vmatprep.subr.mxu0 0.0
  %8018 = vmatpush1.xpose.msra.mxu0 0.0
  %8019 = vmatprep.subr.mxu0 0.0
  %8020 = vmatpush1.xpose.msra.mxu0 0.0
  %8021 = vmatprep.subr.mxu0 0.0
  %8022 = vmatpush1.xpose.msra.mxu0 0.0
  %8023 = vmatprep.subr.mxu0 0.0
  %8024 = vmatpush1.xpose.msra.mxu0 0.0
  %8025 = vmatprep.subr.mxu0 0.0
  %8026 = vmatpush1.xpose.msra.mxu0 0.0
  %8027 = vmatprep.subr.mxu0 0.0
  %8028 = vmatpush1.xpose.msra.mxu0 0.0
  %8029 = vmatprep.subr.mxu0 0.0
  %8030 = vmatpush1.xpose.msra.mxu0 0.0
  %8031 = vmatprep.subr.mxu0 0.0
  %8032 = vmatpush1.xpose.msra.mxu0 0.0
  %8033 = vmatprep.subr.mxu0 0.0
  %8034 = vmatpush1.xpose.msra.mxu0 0.0
  %8035 = vmatprep.subr.mxu0 0.0
  %8036 = vmatpush1.xpose.msra.mxu0 0.0
  %8037 = vmatprep.subr.mxu0 0.0
  %8038 = vmatpush1.xpose.msra.mxu0 0.0
  %8039 = vmatprep.subr.mxu0 0.0
  %8040 = vmatpush1.xpose.msra.mxu0 0.0
  %8041 = vmatprep.subr.mxu0 0.0
  %8042 = vmatpush1.xpose.msra.mxu0 0.0
  %8043 = vmatprep.subr.mxu0 0.0
  %8044 = vmatpush1.xpose.msra.mxu0 0.0
  %8045 = vmatprep.subr.mxu0 0.0
  %8046 = vmatpush1.xpose.msra.mxu0 0.0
  %8047 = vmatprep.subr.mxu0 0.0
  %8048 = vmatpush1.xpose.msra.mxu0 0.0
  %8049 = vmatprep.subr.mxu0 0.0
  %8050 = vmatpush1.xpose.msra.mxu0 0.0
  %8051 = vmatprep.subr.mxu0 0.0
  %8052 = vmatpush1.xpose.msra.mxu0 0.0
  %8053 = vmatprep.subr.mxu0 0.0
  %8054 = vmatpush1.xpose.msra.mxu0 0.0
  %8055 = vmatprep.subr.mxu0 0.0
  %8056 = vmatpush1.xpose.msra.mxu0 0.0
  %8057 = vmatprep.subr.mxu0 0.0
  %8058 = vmatpush1.xpose.msra.mxu0 0.0
  %8059 = vmatprep.subr.mxu0 0.0
  %8060 = vmatpush1.xpose.msra.mxu0 0.0
  %8061 = vmatprep.mubr.f32.mxu0 0.0
  %8062 = vmatmul.mubr.f32.gmra.mrb[0].mxu0 %v7965
  %v8063 = vpop.f32.mrb[0].mxu0
  %v8064 = vadd.f32 0.0, %v8063
  %v8065 = vpop.f32.mrb[0].mxu0
  %8066 = vmatprep.mubr.f32.mxu0 0.0
  %8067 = vmatmul.mubr.f32.gmra.mrb[0].mxu0 %v7967
  %v8068 = vpop.f32.mrb[0].mxu0
  %v8069 = vadd.f32 0.0, %v8068
  %v8070 = vpop.f32.mrb[0].mxu0
  %8071 = vmatprep.mubr.f32.mxu0 0.0
  %8072 = vmatmul.mubr.f32.gmra.mrb[0].mxu0 %v7969
  %v8073 = vpop.f32.mrb[0].mxu0
  %v8074 = vadd.f32 0.0, %v8073
  %v8075 = vpop.f32.mrb[0].mxu0
  %8076 = vmatprep.mubr.f32.mxu0 0.0
  %8077 = vmatmul.mubr.f32.gmra.mrb[0].mxu0 %v7971
  %v8078 = vpop.f32.mrb[0].mxu0
  %v8079 = vadd.f32 0.0, %v8078
  %v8080 = vpop.f32.mrb[0].mxu0
  %8081 = vmatprep.mubr.f32.mxu0 0.0
  %8082 = vmatmul.mubr.f32.gmra.mrb[0].mxu0 %v7973
  %v8083 = vpop.f32.mrb[0].mxu0
  %v8084 = vadd.f32 0.0, %v8083
  %v8085 = vpop.f32.mrb[0].mxu0
  %8086 = vmatprep.mubr.f32.mxu0 0.0
  %8087 = vmatmul.mubr.f32.gmra.mrb[0].mxu0 %v7975
  %v8088 = vpop.f32.mrb[0].mxu0
  %v8089 = vadd.f32 0.0, %v8088
  %v8090 = vpop.f32.mrb[0].mxu0
  %8091 = vmatprep.mubr.f32.mxu0 0.0
  %8092 = vmatmul.mubr.f32.gmra.mrb[0].mxu0 %v7977
  %v8093 = vpop.f32.mrb[0].mxu0
  %v8094 = vadd.f32 0.0, %v8093
  %v8095 = vpop.f32.mrb[0].mxu0
  %8096 = vmatprep.mubr.f32.mxu0 0.0
  %8097 = vmatmul.mubr.f32.gmra.mrb[0].mxu0 %v7979
  %v8098 = vpop.f32.mrb[0].mxu0
  %v8099 = vadd.f32 0.0, %v8098
  %v8100 = vpop.f32.mrb[0].mxu0
  %8101 = vdwg.mxu0
  %v8102 = vmul.f32 %v8064, 0.35355338
  %v8103 = vmul.f32 %v8069, 0.35355338
  %v8104 = vmul.f32 %v8074, 0.35355338
  %v8105 = vmul.f32 %v8079, 0.35355338
  %v8106 = vmul.f32 %v8084, 0.35355338
  %v8107 = vmul.f32 %v8089, 0.35355338
  %v8108 = vmul.f32 %v8094, 0.35355338
  %v8109 = vmul.f32 %v8099, 0.35355338
  %v8110 = vsel %vm6662, %v8102, -inf
  %8111 = vmax.xlane.f32.xlu0 %v8110
  %v8112 = vpop.xlane.xlu0 %8111
  %v8113 = vsel %vm6662, %v8103, -inf
  %8114 = vmax.xlane.f32.xlu0 %v8113
  %v8115 = vpop.xlane.xlu0 %8114
  %v8116 = vsel %vm6662, %v8104, -inf
  %8117 = vmax.xlane.f32.xlu0 %v8116
  %v8118 = vpop.xlane.xlu0 %8117
  %v8119 = vsel %vm6662, %v8105, -inf
  %8120 = vmax.xlane.f32.xlu0 %v8119
  %v8121 = vpop.xlane.xlu0 %8120
  %v8122 = vsel %vm6662, %v8106, -inf
  %8123 = vmax.xlane.f32.xlu0 %v8122
  %v8124 = vpop.xlane.xlu0 %8123
  %v8125 = vsel %vm6662, %v8107, -inf
  %8126 = vmax.xlane.f32.xlu0 %v8125
  %v8127 = vpop.xlane.xlu0 %8126
  %v8128 = vsel %vm6662, %v8108, -inf
  %8129 = vmax.xlane.f32.xlu0 %v8128
  %v8130 = vpop.xlane.xlu0 %8129
  %v8131 = vsel %vm6662, %v8109, -inf
  %8132 = vmax.xlane.f32.xlu0 %v8131
  %v8133 = vpop.xlane.xlu0 %8132
  %v8134 = vsub.f32 %v8102, %v8112
  %v8135 = vsub.f32 %v8103, %v8115
  %v8136 = vsub.f32 %v8104, %v8118
  %v8137 = vsub.f32 %v8105, %v8121
  %v8138 = vsub.f32 %v8106, %v8124
  %v8139 = vsub.f32 %v8107, %v8127
  %v8140 = vsub.f32 %v8108, %v8130
  %v8141 = vsub.f32 %v8109, %v8133
  %v8142 = vmul.f32 %v8134, 1.442695
  %v8143 = vpow.pop %v8142
  %v8144 = vmul.f32 %v8135, 1.442695
  %v8145 = vpow.pop %v8144
  %v8146 = vmul.f32 %v8136, 1.442695
  %v8147 = vpow.pop %v8146
  %v8148 = vmul.f32 %v8137, 1.442695
  %v8149 = vpow.pop %v8148
  %v8150 = vmul.f32 %v8138, 1.442695
  %v8151 = vpow.pop %v8150
  %v8152 = vmul.f32 %v8139, 1.442695
  %v8153 = vpow.pop %v8152
  %v8154 = vmul.f32 %v8140, 1.442695
  %v8155 = vpow.pop %v8154
  %v8156 = vmul.f32 %v8141, 1.442695
  %v8157 = vpow.pop %v8156
  %v8158 = vsel %vm6662, %v8143, 0.0
  %8159 = vadd.xlane.f32.xlu0 %v8158
  %v8160 = vpop.xlane.xlu0 %8159
  %v8161 = vsel %vm6662, %v8145, 0.0
  %8162 = vadd.xlane.f32.xlu0 %v8161
  %v8163 = vpop.xlane.xlu0 %8162
  %v8164 = vsel %vm6662, %v8147, 0.0
  %8165 = vadd.xlane.f32.xlu0 %v8164
  %v8166 = vpop.xlane.xlu0 %8165
  %v8167 = vsel %vm6662, %v8149, 0.0
  %8168 = vadd.xlane.f32.xlu0 %v8167
  %v8169 = vpop.xlane.xlu0 %8168
  %v8170 = vsel %vm6662, %v8151, 0.0
  %8171 = vadd.xlane.f32.xlu0 %v8170
  %v8172 = vpop.xlane.xlu0 %8171
  %v8173 = vsel %vm6662, %v8153, 0.0
  %8174 = vadd.xlane.f32.xlu0 %v8173
  %v8175 = vpop.xlane.xlu0 %8174
  %v8176 = vsel %vm6662, %v8155, 0.0
  %8177 = vadd.xlane.f32.xlu0 %v8176
  %v8178 = vpop.xlane.xlu0 %8177
  %v8179 = vsel %vm6662, %v8157, 0.0
  %8180 = vadd.xlane.f32.xlu0 %v8179
  %v8181 = vpop.xlane.xlu0 %8180
  %v8182 = vrcp.pop %v8160
  %v8183 = vrcp.pop %v8163
  %v8184 = vrcp.pop %v8166
  %v8185 = vrcp.pop %v8169
  %v8186 = vrcp.pop %v8172
  %v8187 = vrcp.pop %v8175
  %v8188 = vrcp.pop %v8178
  %v8189 = vrcp.pop %v8181
  %v8190 = vmul.f32 %v8143, %v8182
  %v8191 = vmul.f32 %v8145, %v8183
  %v8192 = vmul.f32 %v8147, %v8184
  %v8193 = vmul.f32 %v8149, %v8185
  %v8194 = vmul.f32 %v8151, %v8186
  %v8195 = vmul.f32 %v8153, %v8187
  %v8196 = vmul.f32 %v8155, %v8188
  %v8197 = vmul.f32 %v8157, %v8189
  %8198 = vrot.lane.b32.xlu0 %v7026, 48
  %v8199 = vpop.permute.xlu0 %8198
  %8200 = vrot.lane.b32.xlu0 %v7031, 48
  %v8201 = vpop.permute.xlu0 %8200
  %8202 = vrot.lane.b32.xlu0 %v7036, 48
  %v8203 = vpop.permute.xlu0 %8202
  %8204 = vrot.lane.b32.xlu0 %v7041, 48
  %v8205 = vpop.permute.xlu0 %8204
  %8206 = vrot.lane.b32.xlu0 %v7046, 48
  %v8207 = vpop.permute.xlu0 %8206
  %8208 = vrot.lane.b32.xlu0 %v7051, 48
  %v8209 = vpop.permute.xlu0 %8208
  %8210 = vrot.lane.b32.xlu0 %v7056, 48
  %v8211 = vpop.permute.xlu0 %8210
  %8212 = vrot.lane.b32.xlu0 %v7061, 48
  %v8213 = vpop.permute.xlu0 %8212
  %v8223 = vsel %vm6662, %v8190, 0
  %v8226 = vsel %vm6662, %v8191, 0
  %v8229 = vsel %vm6662, %v8192, 0
  %v8232 = vsel %vm6662, %v8193, 0
  %v8235 = vsel %vm6662, %v8194, 0
  %v8238 = vsel %vm6662, %v8195, 0
  %v8241 = vsel %vm6662, %v8196, 0
  %v8244 = vsel %vm6662, %v8197, 0
  %8246 = vmatprep.subr.mxu0 0.0
  %8247 = vmatpush1.msra.mxu0 %v8199
  %8248 = vmatprep.subr.mxu0 0.0
  %8249 = vmatpush1.msra.mxu0 %v8201
  %8250 = vmatprep.subr.mxu0 0.0
  %8251 = vmatpush1.msra.mxu0 %v8203
  %8252 = vmatprep.subr.mxu0 0.0
  %8253 = vmatpush1.msra.mxu0 %v8205
  %8254 = vmatprep.subr.mxu0 0.0
  %8255 = vmatpush1.msra.mxu0 %v8207
  %8256 = vmatprep.subr.mxu0 0.0
  %8257 = vmatpush1.msra.mxu0 %v8209
  %8258 = vmatprep.subr.mxu0 0.0
  %8259 = vmatpush1.msra.mxu0 %v8211
  %8260 = vmatprep.subr.mxu0 0.0
  %8261 = vmatpush1.msra.mxu0 %v8213
  %8262 = vmatprep.subr.mxu0 0.0
  %8263 = vmatpush1.msra.mxu0 0.0
  %8264 = vmatprep.subr.mxu0 0.0
  %8265 = vmatpush1.msra.mxu0 0.0
  %8266 = vmatprep.subr.mxu0 0.0
  %8267 = vmatpush1.msra.mxu0 0.0
  %8268 = vmatprep.subr.mxu0 0.0
  %8269 = vmatpush1.msra.mxu0 0.0
  %8270 = vmatprep.subr.mxu0 0.0
  %8271 = vmatpush1.msra.mxu0 0.0
  %8272 = vmatprep.subr.mxu0 0.0
  %8273 = vmatpush1.msra.mxu0 0.0
  %8274 = vmatprep.subr.mxu0 0.0
  %8275 = vmatpush1.msra.mxu0 0.0
  %8276 = vmatprep.subr.mxu0 0.0
  %8277 = vmatpush1.msra.mxu0 0.0
  %8278 = vmatprep.subr.mxu0 0.0
  %8279 = vmatpush1.msra.mxu0 0.0
  %8280 = vmatprep.subr.mxu0 0.0
  %8281 = vmatpush1.msra.mxu0 0.0
  %8282 = vmatprep.subr.mxu0 0.0
  %8283 = vmatpush1.msra.mxu0 0.0
  %8284 = vmatprep.subr.mxu0 0.0
  %8285 = vmatpush1.msra.mxu0 0.0
  %8286 = vmatprep.subr.mxu0 0.0
  %8287 = vmatpush1.msra.mxu0 0.0
  %8288 = vmatprep.subr.mxu0 0.0
  %8289 = vmatpush1.msra.mxu0 0.0
  %8290 = vmatprep.subr.mxu0 0.0
  %8291 = vmatpush1.msra.mxu0 0.0
  %8292 = vmatprep.subr.mxu0 0.0
  %8293 = vmatpush1.msra.mxu0 0.0
  %8294 = vmatprep.subr.mxu0 0.0
  %8295 = vmatpush1.msra.mxu0 0.0
  %8296 = vmatprep.subr.mxu0 0.0
  %8297 = vmatpush1.msra.mxu0 0.0
  %8298 = vmatprep.subr.mxu0 0.0
  %8299 = vmatpush1.msra.mxu0 0.0
  %8300 = vmatprep.subr.mxu0 0.0
  %8301 = vmatpush1.msra.mxu0 0.0
  %8302 = vmatprep.subr.mxu0 0.0
  %8303 = vmatpush1.msra.mxu0 0.0
  %8304 = vmatprep.subr.mxu0 0.0
  %8305 = vmatpush1.msra.mxu0 0.0
  %8306 = vmatprep.subr.mxu0 0.0
  %8307 = vmatpush1.msra.mxu0 0.0
  %8308 = vmatprep.subr.mxu0 0.0
  %8309 = vmatpush1.msra.mxu0 0.0
  %8310 = vmatprep.mubr.f32.mxu0 0.0
  %8311 = vmatmul.mubr.f32.gmra.mrb[0].mxu0 %v8223
  %v8312 = vpop.f32.mrb[0].mxu0
  %v8313 = vadd.f32 0.0, %v8312
  %v8314 = vpop.f32.mrb[0].mxu0
  %8315 = vmatprep.mubr.f32.mxu0 0.0
  %8316 = vmatmul.mubr.f32.gmra.mrb[0].mxu0 %v8226
  %v8317 = vpop.f32.mrb[0].mxu0
  %v8318 = vadd.f32 0.0, %v8317
  %v8319 = vpop.f32.mrb[0].mxu0
  %8320 = vmatprep.mubr.f32.mxu0 0.0
  %8321 = vmatmul.mubr.f32.gmra.mrb[0].mxu0 %v8229
  %v8322 = vpop.f32.mrb[0].mxu0
  %v8323 = vadd.f32 0.0, %v8322
  %v8324 = vpop.f32.mrb[0].mxu0
  %8325 = vmatprep.mubr.f32.mxu0 0.0
  %8326 = vmatmul.mubr.f32.gmra.mrb[0].mxu0 %v8232
  %v8327 = vpop.f32.mrb[0].mxu0
  %v8328 = vadd.f32 0.0, %v8327
  %v8329 = vpop.f32.mrb[0].mxu0
  %8330 = vmatprep.mubr.f32.mxu0 0.0
  %8331 = vmatmul.mubr.f32.gmra.mrb[0].mxu0 %v8235
  %v8332 = vpop.f32.mrb[0].mxu0
  %v8333 = vadd.f32 0.0, %v8332
  %v8334 = vpop.f32.mrb[0].mxu0
  %8335 = vmatprep.mubr.f32.mxu0 0.0
  %8336 = vmatmul.mubr.f32.gmra.mrb[0].mxu0 %v8238
  %v8337 = vpop.f32.mrb[0].mxu0
  %v8338 = vadd.f32 0.0, %v8337
  %v8339 = vpop.f32.mrb[0].mxu0
  %8340 = vmatprep.mubr.f32.mxu0 0.0
  %8341 = vmatmul.mubr.f32.gmra.mrb[0].mxu0 %v8241
  %v8342 = vpop.f32.mrb[0].mxu0
  %v8343 = vadd.f32 0.0, %v8342
  %v8344 = vpop.f32.mrb[0].mxu0
  %8345 = vmatprep.mubr.f32.mxu0 0.0
  %8346 = vmatmul.mubr.f32.gmra.mrb[0].mxu0 %v8244
  %v8347 = vpop.f32.mrb[0].mxu0
  %v8348 = vadd.f32 0.0, %v8347
  %v8349 = vpop.f32.mrb[0].mxu0
  %8350 = vdwg.mxu0
  %8351 = vrot.lane.b32.xlu0 %v7026, 104
  %v8352 = vpop.permute.xlu0 %8351
  %8353 = vrot.lane.b32.xlu0 %v7031, 104
  %v8354 = vpop.permute.xlu0 %8353
  %8355 = vrot.lane.b32.xlu0 %v7036, 104
  %v8356 = vpop.permute.xlu0 %8355
  %8357 = vrot.lane.b32.xlu0 %v7041, 104
  %v8358 = vpop.permute.xlu0 %8357
  %8359 = vrot.lane.b32.xlu0 %v7046, 104
  %v8360 = vpop.permute.xlu0 %8359
  %8361 = vrot.lane.b32.xlu0 %v7051, 104
  %v8362 = vpop.permute.xlu0 %8361
  %8363 = vrot.lane.b32.xlu0 %v7056, 104
  %v8364 = vpop.permute.xlu0 %8363
  %8365 = vrot.lane.b32.xlu0 %v7061, 104
  %v8366 = vpop.permute.xlu0 %8365
  %8367 = vrot.lane.b32.xlu0 %v7026, 72
  %v8368 = vpop.permute.xlu0 %8367
  %8369 = vrot.lane.b32.xlu0 %v7031, 72
  %v8370 = vpop.permute.xlu0 %8369
  %8371 = vrot.lane.b32.xlu0 %v7036, 72
  %v8372 = vpop.permute.xlu0 %8371
  %8373 = vrot.lane.b32.xlu0 %v7041, 72
  %v8374 = vpop.permute.xlu0 %8373
  %8375 = vrot.lane.b32.xlu0 %v7046, 72
  %v8376 = vpop.permute.xlu0 %8375
  %8377 = vrot.lane.b32.xlu0 %v7051, 72
  %v8378 = vpop.permute.xlu0 %8377
  %8379 = vrot.lane.b32.xlu0 %v7056, 72
  %v8380 = vpop.permute.xlu0 %8379
  %8381 = vrot.lane.b32.xlu0 %v7061, 72
  %v8382 = vpop.permute.xlu0 %8381
  %v8383 = vsel %vm7128, %v8352, 0
  %v8385 = vsel %vm7128, %v8354, 0
  %v8387 = vsel %vm7128, %v8356, 0
  %v8389 = vsel %vm7128, %v8358, 0
  %v8391 = vsel %vm7128, %v8360, 0
  %v8393 = vsel %vm7128, %v8362, 0
  %v8395 = vsel %vm7128, %v8364, 0
  %v8397 = vsel %vm7128, %v8366, 0
  %v8399 = vsel %vm7128, %v8368, 0
  %v8401 = vsel %vm7128, %v8370, 0
  %v8403 = vsel %vm7128, %v8372, 0
  %v8405 = vsel %vm7128, %v8374, 0
  %v8407 = vsel %vm7128, %v8376, 0
  %v8409 = vsel %vm7128, %v8378, 0
  %v8411 = vsel %vm7128, %v8380, 0
  %v8413 = vsel %vm7128, %v8382, 0
  %8415 = vmatprep.subr.mxu0 0.0
  %8416 = vmatpush1.xpose.msra.mxu0 %v8399
  %8417 = vmatprep.subr.mxu0 0.0
  %8418 = vmatpush1.xpose.msra.mxu0 %v8401
  %8419 = vmatprep.subr.mxu0 0.0
  %8420 = vmatpush1.xpose.msra.mxu0 %v8403
  %8421 = vmatprep.subr.mxu0 0.0
  %8422 = vmatpush1.xpose.msra.mxu0 %v8405
  %8423 = vmatprep.subr.mxu0 0.0
  %8424 = vmatpush1.xpose.msra.mxu0 %v8407
  %8425 = vmatprep.subr.mxu0 0.0
  %8426 = vmatpush1.xpose.msra.mxu0 %v8409
  %8427 = vmatprep.subr.mxu0 0.0
  %8428 = vmatpush1.xpose.msra.mxu0 %v8411
  %8429 = vmatprep.subr.mxu0 0.0
  %8430 = vmatpush1.xpose.msra.mxu0 %v8413
  %8431 = vmatprep.subr.mxu0 0.0
  %8432 = vmatpush1.xpose.msra.mxu0 0.0
  %8433 = vmatprep.subr.mxu0 0.0
  %8434 = vmatpush1.xpose.msra.mxu0 0.0
  %8435 = vmatprep.subr.mxu0 0.0
  %8436 = vmatpush1.xpose.msra.mxu0 0.0
  %8437 = vmatprep.subr.mxu0 0.0
  %8438 = vmatpush1.xpose.msra.mxu0 0.0
  %8439 = vmatprep.subr.mxu0 0.0
  %8440 = vmatpush1.xpose.msra.mxu0 0.0
  %8441 = vmatprep.subr.mxu0 0.0
  %8442 = vmatpush1.xpose.msra.mxu0 0.0
  %8443 = vmatprep.subr.mxu0 0.0
  %8444 = vmatpush1.xpose.msra.mxu0 0.0
  %8445 = vmatprep.subr.mxu0 0.0
  %8446 = vmatpush1.xpose.msra.mxu0 0.0
  %8447 = vmatprep.subr.mxu0 0.0
  %8448 = vmatpush1.xpose.msra.mxu0 0.0
  %8449 = vmatprep.subr.mxu0 0.0
  %8450 = vmatpush1.xpose.msra.mxu0 0.0
  %8451 = vmatprep.subr.mxu0 0.0
  %8452 = vmatpush1.xpose.msra.mxu0 0.0
  %8453 = vmatprep.subr.mxu0 0.0
  %8454 = vmatpush1.xpose.msra.mxu0 0.0
  %8455 = vmatprep.subr.mxu0 0.0
  %8456 = vmatpush1.xpose.msra.mxu0 0.0
  %8457 = vmatprep.subr.mxu0 0.0
  %8458 = vmatpush1.xpose.msra.mxu0 0.0
  %8459 = vmatprep.subr.mxu0 0.0
  %8460 = vmatpush1.xpose.msra.mxu0 0.0
  %8461 = vmatprep.subr.mxu0 0.0
  %8462 = vmatpush1.xpose.msra.mxu0 0.0
  %8463 = vmatprep.subr.mxu0 0.0
  %8464 = vmatpush1.xpose.msra.mxu0 0.0
  %8465 = vmatprep.subr.mxu0 0.0
  %8466 = vmatpush1.xpose.msra.mxu0 0.0
  %8467 = vmatprep.subr.mxu0 0.0
  %8468 = vmatpush1.xpose.msra.mxu0 0.0
  %8469 = vmatprep.subr.mxu0 0.0
  %8470 = vmatpush1.xpose.msra.mxu0 0.0
  %8471 = vmatprep.subr.mxu0 0.0
  %8472 = vmatpush1.xpose.msra.mxu0 0.0
  %8473 = vmatprep.subr.mxu0 0.0
  %8474 = vmatpush1.xpose.msra.mxu0 0.0
  %8475 = vmatprep.subr.mxu0 0.0
  %8476 = vmatpush1.xpose.msra.mxu0 0.0
  %8477 = vmatprep.subr.mxu0 0.0
  %8478 = vmatpush1.xpose.msra.mxu0 0.0
  %8479 = vmatprep.mubr.f32.mxu0 0.0
  %8480 = vmatmul.mubr.f32.gmra.mrb[0].mxu0 %v8383
  %v8481 = vpop.f32.mrb[0].mxu0
  %v8482 = vadd.f32 0.0, %v8481
  %v8483 = vpop.f32.mrb[0].mxu0
  %8484 = vmatprep.mubr.f32.mxu0 0.0
  %8485 = vmatmul.mubr.f32.gmra.mrb[0].mxu0 %v8385
  %v8486 = vpop.f32.mrb[0].mxu0
  %v8487 = vadd.f32 0.0, %v8486
  %v8488 = vpop.f32.mrb[0].mxu0
  %8489 = vmatprep.mubr.f32.mxu0 0.0
  %8490 = vmatmul.mubr.f32.gmra.mrb[0].mxu0 %v8387
  %v8491 = vpop.f32.mrb[0].mxu0
  %v8492 = vadd.f32 0.0, %v8491
  %v8493 = vpop.f32.mrb[0].mxu0
  %8494 = vmatprep.mubr.f32.mxu0 0.0
  %8495 = vmatmul.mubr.f32.gmra.mrb[0].mxu0 %v8389
  %v8496 = vpop.f32.mrb[0].mxu0
  %v8497 = vadd.f32 0.0, %v8496
  %v8498 = vpop.f32.mrb[0].mxu0
  %8499 = vmatprep.mubr.f32.mxu0 0.0
  %8500 = vmatmul.mubr.f32.gmra.mrb[0].mxu0 %v8391
  %v8501 = vpop.f32.mrb[0].mxu0
  %v8502 = vadd.f32 0.0, %v8501
  %v8503 = vpop.f32.mrb[0].mxu0
  %8504 = vmatprep.mubr.f32.mxu0 0.0
  %8505 = vmatmul.mubr.f32.gmra.mrb[0].mxu0 %v8393
  %v8506 = vpop.f32.mrb[0].mxu0
  %v8507 = vadd.f32 0.0, %v8506
  %v8508 = vpop.f32.mrb[0].mxu0
  %8509 = vmatprep.mubr.f32.mxu0 0.0
  %8510 = vmatmul.mubr.f32.gmra.mrb[0].mxu0 %v8395
  %v8511 = vpop.f32.mrb[0].mxu0
  %v8512 = vadd.f32 0.0, %v8511
  %v8513 = vpop.f32.mrb[0].mxu0
  %8514 = vmatprep.mubr.f32.mxu0 0.0
  %8515 = vmatmul.mubr.f32.gmra.mrb[0].mxu0 %v8397
  %v8516 = vpop.f32.mrb[0].mxu0
  %v8517 = vadd.f32 0.0, %v8516
  %v8518 = vpop.f32.mrb[0].mxu0
  %8519 = vdwg.mxu0
  %v8520 = vmul.f32 %v8482, 0.35355338
  %v8521 = vmul.f32 %v8487, 0.35355338
  %v8522 = vmul.f32 %v8492, 0.35355338
  %v8523 = vmul.f32 %v8497, 0.35355338
  %v8524 = vmul.f32 %v8502, 0.35355338
  %v8525 = vmul.f32 %v8507, 0.35355338
  %v8526 = vmul.f32 %v8512, 0.35355338
  %v8527 = vmul.f32 %v8517, 0.35355338
  %v8528 = vsel %vm6662, %v8520, -inf
  %8529 = vmax.xlane.f32.xlu0 %v8528
  %v8530 = vpop.xlane.xlu0 %8529
  %v8531 = vsel %vm6662, %v8521, -inf
  %8532 = vmax.xlane.f32.xlu0 %v8531
  %v8533 = vpop.xlane.xlu0 %8532
  %v8534 = vsel %vm6662, %v8522, -inf
  %8535 = vmax.xlane.f32.xlu0 %v8534
  %v8536 = vpop.xlane.xlu0 %8535
  %v8537 = vsel %vm6662, %v8523, -inf
  %8538 = vmax.xlane.f32.xlu0 %v8537
  %v8539 = vpop.xlane.xlu0 %8538
  %v8540 = vsel %vm6662, %v8524, -inf
  %8541 = vmax.xlane.f32.xlu0 %v8540
  %v8542 = vpop.xlane.xlu0 %8541
  %v8543 = vsel %vm6662, %v8525, -inf
  %8544 = vmax.xlane.f32.xlu0 %v8543
  %v8545 = vpop.xlane.xlu0 %8544
  %v8546 = vsel %vm6662, %v8526, -inf
  %8547 = vmax.xlane.f32.xlu0 %v8546
  %v8548 = vpop.xlane.xlu0 %8547
  %v8549 = vsel %vm6662, %v8527, -inf
  %8550 = vmax.xlane.f32.xlu0 %v8549
  %v8551 = vpop.xlane.xlu0 %8550
  %v8552 = vsub.f32 %v8520, %v8530
  %v8553 = vsub.f32 %v8521, %v8533
  %v8554 = vsub.f32 %v8522, %v8536
  %v8555 = vsub.f32 %v8523, %v8539
  %v8556 = vsub.f32 %v8524, %v8542
  %v8557 = vsub.f32 %v8525, %v8545
  %v8558 = vsub.f32 %v8526, %v8548
  %v8559 = vsub.f32 %v8527, %v8551
  %v8560 = vmul.f32 %v8552, 1.442695
  %v8561 = vpow.pop %v8560
  %v8562 = vmul.f32 %v8553, 1.442695
  %v8563 = vpow.pop %v8562
  %v8564 = vmul.f32 %v8554, 1.442695
  %v8565 = vpow.pop %v8564
  %v8566 = vmul.f32 %v8555, 1.442695
  %v8567 = vpow.pop %v8566
  %v8568 = vmul.f32 %v8556, 1.442695
  %v8569 = vpow.pop %v8568
  %v8570 = vmul.f32 %v8557, 1.442695
  %v8571 = vpow.pop %v8570
  %v8572 = vmul.f32 %v8558, 1.442695
  %v8573 = vpow.pop %v8572
  %v8574 = vmul.f32 %v8559, 1.442695
  %v8575 = vpow.pop %v8574
  %v8576 = vsel %vm6662, %v8561, 0.0
  %8577 = vadd.xlane.f32.xlu0 %v8576
  %v8578 = vpop.xlane.xlu0 %8577
  %v8579 = vsel %vm6662, %v8563, 0.0
  %8580 = vadd.xlane.f32.xlu0 %v8579
  %v8581 = vpop.xlane.xlu0 %8580
  %v8582 = vsel %vm6662, %v8565, 0.0
  %8583 = vadd.xlane.f32.xlu0 %v8582
  %v8584 = vpop.xlane.xlu0 %8583
  %v8585 = vsel %vm6662, %v8567, 0.0
  %8586 = vadd.xlane.f32.xlu0 %v8585
  %v8587 = vpop.xlane.xlu0 %8586
  %v8588 = vsel %vm6662, %v8569, 0.0
  %8589 = vadd.xlane.f32.xlu0 %v8588
  %v8590 = vpop.xlane.xlu0 %8589
  %v8591 = vsel %vm6662, %v8571, 0.0
  %8592 = vadd.xlane.f32.xlu0 %v8591
  %v8593 = vpop.xlane.xlu0 %8592
  %v8594 = vsel %vm6662, %v8573, 0.0
  %8595 = vadd.xlane.f32.xlu0 %v8594
  %v8596 = vpop.xlane.xlu0 %8595
  %v8597 = vsel %vm6662, %v8575, 0.0
  %8598 = vadd.xlane.f32.xlu0 %v8597
  %v8599 = vpop.xlane.xlu0 %8598
  %v8600 = vrcp.pop %v8578
  %v8601 = vrcp.pop %v8581
  %v8602 = vrcp.pop %v8584
  %v8603 = vrcp.pop %v8587
  %v8604 = vrcp.pop %v8590
  %v8605 = vrcp.pop %v8593
  %v8606 = vrcp.pop %v8596
  %v8607 = vrcp.pop %v8599
  %v8608 = vmul.f32 %v8561, %v8600
  %v8609 = vmul.f32 %v8563, %v8601
  %v8610 = vmul.f32 %v8565, %v8602
  %v8611 = vmul.f32 %v8567, %v8603
  %v8612 = vmul.f32 %v8569, %v8604
  %v8613 = vmul.f32 %v8571, %v8605
  %v8614 = vmul.f32 %v8573, %v8606
  %v8615 = vmul.f32 %v8575, %v8607
  %8616 = vrot.lane.b32.xlu0 %v7026, 40
  %v8617 = vpop.permute.xlu0 %8616
  %8618 = vrot.lane.b32.xlu0 %v7031, 40
  %v8619 = vpop.permute.xlu0 %8618
  %8620 = vrot.lane.b32.xlu0 %v7036, 40
  %v8621 = vpop.permute.xlu0 %8620
  %8622 = vrot.lane.b32.xlu0 %v7041, 40
  %v8623 = vpop.permute.xlu0 %8622
  %8624 = vrot.lane.b32.xlu0 %v7046, 40
  %v8625 = vpop.permute.xlu0 %8624
  %8626 = vrot.lane.b32.xlu0 %v7051, 40
  %v8627 = vpop.permute.xlu0 %8626
  %8628 = vrot.lane.b32.xlu0 %v7056, 40
  %v8629 = vpop.permute.xlu0 %8628
  %8630 = vrot.lane.b32.xlu0 %v7061, 40
  %v8631 = vpop.permute.xlu0 %8630
  %v8641 = vsel %vm6662, %v8608, 0
  %v8644 = vsel %vm6662, %v8609, 0
  %v8647 = vsel %vm6662, %v8610, 0
  %v8650 = vsel %vm6662, %v8611, 0
  %v8653 = vsel %vm6662, %v8612, 0
  %v8656 = vsel %vm6662, %v8613, 0
  %v8659 = vsel %vm6662, %v8614, 0
  %v8662 = vsel %vm6662, %v8615, 0
  %8664 = vmatprep.subr.mxu0 0.0
  %8665 = vmatpush1.msra.mxu0 %v8617
  %8666 = vmatprep.subr.mxu0 0.0
  %8667 = vmatpush1.msra.mxu0 %v8619
  %8668 = vmatprep.subr.mxu0 0.0
  %8669 = vmatpush1.msra.mxu0 %v8621
  %8670 = vmatprep.subr.mxu0 0.0
  %8671 = vmatpush1.msra.mxu0 %v8623
  %8672 = vmatprep.subr.mxu0 0.0
  %8673 = vmatpush1.msra.mxu0 %v8625
  %8674 = vmatprep.subr.mxu0 0.0
  %8675 = vmatpush1.msra.mxu0 %v8627
  %8676 = vmatprep.subr.mxu0 0.0
  %8677 = vmatpush1.msra.mxu0 %v8629
  %8678 = vmatprep.subr.mxu0 0.0
  %8679 = vmatpush1.msra.mxu0 %v8631
  %8680 = vmatprep.subr.mxu0 0.0
  %8681 = vmatpush1.msra.mxu0 0.0
  %8682 = vmatprep.subr.mxu0 0.0
  %8683 = vmatpush1.msra.mxu0 0.0
  %8684 = vmatprep.subr.mxu0 0.0
  %8685 = vmatpush1.msra.mxu0 0.0
  %8686 = vmatprep.subr.mxu0 0.0
  %8687 = vmatpush1.msra.mxu0 0.0
  %8688 = vmatprep.subr.mxu0 0.0
  %8689 = vmatpush1.msra.mxu0 0.0
  %8690 = vmatprep.subr.mxu0 0.0
  %8691 = vmatpush1.msra.mxu0 0.0
  %8692 = vmatprep.subr.mxu0 0.0
  %8693 = vmatpush1.msra.mxu0 0.0
  %8694 = vmatprep.subr.mxu0 0.0
  %8695 = vmatpush1.msra.mxu0 0.0
  %8696 = vmatprep.subr.mxu0 0.0
  %8697 = vmatpush1.msra.mxu0 0.0
  %8698 = vmatprep.subr.mxu0 0.0
  %8699 = vmatpush1.msra.mxu0 0.0
  %8700 = vmatprep.subr.mxu0 0.0
  %8701 = vmatpush1.msra.mxu0 0.0
  %8702 = vmatprep.subr.mxu0 0.0
  %8703 = vmatpush1.msra.mxu0 0.0
  %8704 = vmatprep.subr.mxu0 0.0
  %8705 = vmatpush1.msra.mxu0 0.0
  %8706 = vmatprep.subr.mxu0 0.0
  %8707 = vmatpush1.msra.mxu0 0.0
  %8708 = vmatprep.subr.mxu0 0.0
  %8709 = vmatpush1.msra.mxu0 0.0
  %8710 = vmatprep.subr.mxu0 0.0
  %8711 = vmatpush1.msra.mxu0 0.0
  %8712 = vmatprep.subr.mxu0 0.0
  %8713 = vmatpush1.msra.mxu0 0.0
  %8714 = vmatprep.subr.mxu0 0.0
  %8715 = vmatpush1.msra.mxu0 0.0
  %8716 = vmatprep.subr.mxu0 0.0
  %8717 = vmatpush1.msra.mxu0 0.0
  %8718 = vmatprep.subr.mxu0 0.0
  %8719 = vmatpush1.msra.mxu0 0.0
  %8720 = vmatprep.subr.mxu0 0.0
  %8721 = vmatpush1.msra.mxu0 0.0
  %8722 = vmatprep.subr.mxu0 0.0
  %8723 = vmatpush1.msra.mxu0 0.0
  %8724 = vmatprep.subr.mxu0 0.0
  %8725 = vmatpush1.msra.mxu0 0.0
  %8726 = vmatprep.subr.mxu0 0.0
  %8727 = vmatpush1.msra.mxu0 0.0
  %8728 = vmatprep.mubr.f32.mxu0 0.0
  %8729 = vmatmul.mubr.f32.gmra.mrb[0].mxu0 %v8641
  %v8730 = vpop.f32.mrb[0].mxu0
  %v8731 = vadd.f32 0.0, %v8730
  %v8732 = vpop.f32.mrb[0].mxu0
  %8733 = vmatprep.mubr.f32.mxu0 0.0
  %8734 = vmatmul.mubr.f32.gmra.mrb[0].mxu0 %v8644
  %v8735 = vpop.f32.mrb[0].mxu0
  %v8736 = vadd.f32 0.0, %v8735
  %v8737 = vpop.f32.mrb[0].mxu0
  %8738 = vmatprep.mubr.f32.mxu0 0.0
  %8739 = vmatmul.mubr.f32.gmra.mrb[0].mxu0 %v8647
  %v8740 = vpop.f32.mrb[0].mxu0
  %v8741 = vadd.f32 0.0, %v8740
  %v8742 = vpop.f32.mrb[0].mxu0
  %8743 = vmatprep.mubr.f32.mxu0 0.0
  %8744 = vmatmul.mubr.f32.gmra.mrb[0].mxu0 %v8650
  %v8745 = vpop.f32.mrb[0].mxu0
  %v8746 = vadd.f32 0.0, %v8745
  %v8747 = vpop.f32.mrb[0].mxu0
  %8748 = vmatprep.mubr.f32.mxu0 0.0
  %8749 = vmatmul.mubr.f32.gmra.mrb[0].mxu0 %v8653
  %v8750 = vpop.f32.mrb[0].mxu0
  %v8751 = vadd.f32 0.0, %v8750
  %v8752 = vpop.f32.mrb[0].mxu0
  %8753 = vmatprep.mubr.f32.mxu0 0.0
  %8754 = vmatmul.mubr.f32.gmra.mrb[0].mxu0 %v8656
  %v8755 = vpop.f32.mrb[0].mxu0
  %v8756 = vadd.f32 0.0, %v8755
  %v8757 = vpop.f32.mrb[0].mxu0
  %8758 = vmatprep.mubr.f32.mxu0 0.0
  %8759 = vmatmul.mubr.f32.gmra.mrb[0].mxu0 %v8659
  %v8760 = vpop.f32.mrb[0].mxu0
  %v8761 = vadd.f32 0.0, %v8760
  %v8762 = vpop.f32.mrb[0].mxu0
  %8763 = vmatprep.mubr.f32.mxu0 0.0
  %8764 = vmatmul.mubr.f32.gmra.mrb[0].mxu0 %v8662
  %v8765 = vpop.f32.mrb[0].mxu0
  %v8766 = vadd.f32 0.0, %v8765
  %v8767 = vpop.f32.mrb[0].mxu0
  %8768 = vdwg.mxu0
  %8777 = vrot.lane.b32.xlu0 %v7895, 8
  %v8778 = vpop.permute.xlu0 %8777
  %8779 = vrot.lane.b32.xlu0 %v7900, 8
  %v8780 = vpop.permute.xlu0 %8779
  %8781 = vrot.lane.b32.xlu0 %v7905, 8
  %v8782 = vpop.permute.xlu0 %8781
  %8783 = vrot.lane.b32.xlu0 %v7910, 8
  %v8784 = vpop.permute.xlu0 %8783
  %8785 = vrot.lane.b32.xlu0 %v7915, 8
  %v8786 = vpop.permute.xlu0 %8785
  %8787 = vrot.lane.b32.xlu0 %v7920, 8
  %v8788 = vpop.permute.xlu0 %8787
  %8789 = vrot.lane.b32.xlu0 %v7925, 8
  %v8790 = vpop.permute.xlu0 %8789
  %8791 = vrot.lane.b32.xlu0 %v7930, 8
  %v8792 = vpop.permute.xlu0 %8791
  %8809 = vrot.lane.b32.xlu0 %v8313, 16
  %v8810 = vpop.permute.xlu0 %8809
  %8811 = vrot.lane.b32.xlu0 %v8318, 16
  %v8812 = vpop.permute.xlu0 %8811
  %8813 = vrot.lane.b32.xlu0 %v8323, 16
  %v8814 = vpop.permute.xlu0 %8813
  %8815 = vrot.lane.b32.xlu0 %v8328, 16
  %v8816 = vpop.permute.xlu0 %8815
  %8817 = vrot.lane.b32.xlu0 %v8333, 16
  %v8818 = vpop.permute.xlu0 %8817
  %8819 = vrot.lane.b32.xlu0 %v8338, 16
  %v8820 = vpop.permute.xlu0 %8819
  %8821 = vrot.lane.b32.xlu0 %v8343, 16
  %v8822 = vpop.permute.xlu0 %8821
  %8823 = vrot.lane.b32.xlu0 %v8348, 16
  %v8824 = vpop.permute.xlu0 %8823
  %8841 = vrot.lane.b32.xlu0 %v8731, 24
  %v8842 = vpop.permute.xlu0 %8841
  %8843 = vrot.lane.b32.xlu0 %v8736, 24
  %v8844 = vpop.permute.xlu0 %8843
  %8845 = vrot.lane.b32.xlu0 %v8741, 24
  %v8846 = vpop.permute.xlu0 %8845
  %8847 = vrot.lane.b32.xlu0 %v8746, 24
  %v8848 = vpop.permute.xlu0 %8847
  %8849 = vrot.lane.b32.xlu0 %v8751, 24
  %v8850 = vpop.permute.xlu0 %8849
  %8851 = vrot.lane.b32.xlu0 %v8756, 24
  %v8852 = vpop.permute.xlu0 %8851
  %8853 = vrot.lane.b32.xlu0 %v8761, 24
  %v8854 = vpop.permute.xlu0 %8853
  %8855 = vrot.lane.b32.xlu0 %v8766, 24
  %v8856 = vpop.permute.xlu0 %8855
  %v8865 = vsel %vm7128, %v7477, %v8778
  %v8866 = vsel %vm7128, %v7482, %v8780
  %v8867 = vsel %vm7128, %v7487, %v8782
  %v8868 = vsel %vm7128, %v7492, %v8784
  %v8869 = vsel %vm7128, %v7497, %v8786
  %v8870 = vsel %vm7128, %v7502, %v8788
  %v8871 = vsel %vm7128, %v7507, %v8790
  %v8872 = vsel %vm7128, %v7512, %v8792
  %v8873 = vsel %vm246, %v8865, %v8810
  %v8874 = vsel %vm246, %v8866, %v8812
  %v8875 = vsel %vm246, %v8867, %v8814
  %v8876 = vsel %vm246, %v8868, %v8816
  %v8877 = vsel %vm246, %v8869, %v8818
  %v8878 = vsel %vm246, %v8870, %v8820
  %v8879 = vsel %vm246, %v8871, %v8822
  %v8880 = vsel %vm246, %v8872, %v8824
  %vm8881 = vcmask 195584
  %v8882 = vsel %vm8881, %v8873, %v8842
  %v8883 = vsel %vm8881, %v8874, %v8844
  %v8884 = vsel %vm8881, %v8875, %v8846
  %v8885 = vsel %vm8881, %v8876, %v8848
  %v8886 = vsel %vm8881, %v8877, %v8850
  %v8887 = vsel %vm8881, %v8878, %v8852
  %v8888 = vsel %vm8881, %v8879, %v8854
  %v8889 = vsel %vm8881, %v8880, %v8856
  %8898 = vrot.lane.b32.xlu0 %v7066, 96
  %v8899 = vpop.permute.xlu0 %8898
  %8900 = vrot.lane.b32.xlu0 %v7071, 96
  %v8901 = vpop.permute.xlu0 %8900
  %8902 = vrot.lane.b32.xlu0 %v7076, 96
  %v8903 = vpop.permute.xlu0 %8902
  %8904 = vrot.lane.b32.xlu0 %v7081, 96
  %v8905 = vpop.permute.xlu0 %8904
  %8906 = vrot.lane.b32.xlu0 %v7086, 96
  %v8907 = vpop.permute.xlu0 %8906
  %8908 = vrot.lane.b32.xlu0 %v7091, 96
  %v8909 = vpop.permute.xlu0 %8908
  %8910 = vrot.lane.b32.xlu0 %v7096, 96
  %v8911 = vpop.permute.xlu0 %8910
  %8912 = vrot.lane.b32.xlu0 %v7101, 96
  %v8913 = vpop.permute.xlu0 %8912
  %v8914 = vsel %vm7128, %v7066, 0
  %v8916 = vsel %vm7128, %v7071, 0
  %v8918 = vsel %vm7128, %v7076, 0
  %v8920 = vsel %vm7128, %v7081, 0
  %v8922 = vsel %vm7128, %v7086, 0
  %v8924 = vsel %vm7128, %v7091, 0
  %v8926 = vsel %vm7128, %v7096, 0
  %v8928 = vsel %vm7128, %v7101, 0
  %v8930 = vsel %vm7128, %v8899, 0
  %v8932 = vsel %vm7128, %v8901, 0
  %v8934 = vsel %vm7128, %v8903, 0
  %v8936 = vsel %vm7128, %v8905, 0
  %v8938 = vsel %vm7128, %v8907, 0
  %v8940 = vsel %vm7128, %v8909, 0
  %v8942 = vsel %vm7128, %v8911, 0
  %v8944 = vsel %vm7128, %v8913, 0
  %8946 = vmatprep.subr.mxu0 0.0
  %8947 = vmatpush1.xpose.msra.mxu0 %v8930
  %8948 = vmatprep.subr.mxu0 0.0
  %8949 = vmatpush1.xpose.msra.mxu0 %v8932
  %8950 = vmatprep.subr.mxu0 0.0
  %8951 = vmatpush1.xpose.msra.mxu0 %v8934
  %8952 = vmatprep.subr.mxu0 0.0
  %8953 = vmatpush1.xpose.msra.mxu0 %v8936
  %8954 = vmatprep.subr.mxu0 0.0
  %8955 = vmatpush1.xpose.msra.mxu0 %v8938
  %8956 = vmatprep.subr.mxu0 0.0
  %8957 = vmatpush1.xpose.msra.mxu0 %v8940
  %8958 = vmatprep.subr.mxu0 0.0
  %8959 = vmatpush1.xpose.msra.mxu0 %v8942
  %8960 = vmatprep.subr.mxu0 0.0
  %8961 = vmatpush1.xpose.msra.mxu0 %v8944
  %8962 = vmatprep.subr.mxu0 0.0
  %8963 = vmatpush1.xpose.msra.mxu0 0.0
  %8964 = vmatprep.subr.mxu0 0.0
  %8965 = vmatpush1.xpose.msra.mxu0 0.0
  %8966 = vmatprep.subr.mxu0 0.0
  %8967 = vmatpush1.xpose.msra.mxu0 0.0
  %8968 = vmatprep.subr.mxu0 0.0
  %8969 = vmatpush1.xpose.msra.mxu0 0.0
  %8970 = vmatprep.subr.mxu0 0.0
  %8971 = vmatpush1.xpose.msra.mxu0 0.0
  %8972 = vmatprep.subr.mxu0 0.0
  %8973 = vmatpush1.xpose.msra.mxu0 0.0
  %8974 = vmatprep.subr.mxu0 0.0
  %8975 = vmatpush1.xpose.msra.mxu0 0.0
  %8976 = vmatprep.subr.mxu0 0.0
  %8977 = vmatpush1.xpose.msra.mxu0 0.0
  %8978 = vmatprep.subr.mxu0 0.0
  %8979 = vmatpush1.xpose.msra.mxu0 0.0
  %8980 = vmatprep.subr.mxu0 0.0
  %8981 = vmatpush1.xpose.msra.mxu0 0.0
  %8982 = vmatprep.subr.mxu0 0.0
  %8983 = vmatpush1.xpose.msra.mxu0 0.0
  %8984 = vmatprep.subr.mxu0 0.0
  %8985 = vmatpush1.xpose.msra.mxu0 0.0
  %8986 = vmatprep.subr.mxu0 0.0
  %8987 = vmatpush1.xpose.msra.mxu0 0.0
  %8988 = vmatprep.subr.mxu0 0.0
  %8989 = vmatpush1.xpose.msra.mxu0 0.0
  %8990 = vmatprep.subr.mxu0 0.0
  %8991 = vmatpush1.xpose.msra.mxu0 0.0
  %8992 = vmatprep.subr.mxu0 0.0
  %8993 = vmatpush1.xpose.msra.mxu0 0.0
  %8994 = vmatprep.subr.mxu0 0.0
  %8995 = vmatpush1.xpose.msra.mxu0 0.0
  %8996 = vmatprep.subr.mxu0 0.0
  %8997 = vmatpush1.xpose.msra.mxu0 0.0
  %8998 = vmatprep.subr.mxu0 0.0
  %8999 = vmatpush1.xpose.msra.mxu0 0.0
  %9000 = vmatprep.subr.mxu0 0.0
  %9001 = vmatpush1.xpose.msra.mxu0 0.0
  %9002 = vmatprep.subr.mxu0 0.0
  %9003 = vmatpush1.xpose.msra.mxu0 0.0
  %9004 = vmatprep.subr.mxu0 0.0
  %9005 = vmatpush1.xpose.msra.mxu0 0.0
  %9006 = vmatprep.subr.mxu0 0.0
  %9007 = vmatpush1.xpose.msra.mxu0 0.0
  %9008 = vmatprep.subr.mxu0 0.0
  %9009 = vmatpush1.xpose.msra.mxu0 0.0
  %9010 = vmatprep.mubr.f32.mxu0 0.0
  %9011 = vmatmul.mubr.f32.gmra.mrb[0].mxu0 %v8914
  %v9012 = vpop.f32.mrb[0].mxu0
  %v9013 = vadd.f32 0.0, %v9012
  %v9014 = vpop.f32.mrb[0].mxu0
  %9015 = vmatprep.mubr.f32.mxu0 0.0
  %9016 = vmatmul.mubr.f32.gmra.mrb[0].mxu0 %v8916
  %v9017 = vpop.f32.mrb[0].mxu0
  %v9018 = vadd.f32 0.0, %v9017
  %v9019 = vpop.f32.mrb[0].mxu0
  %9020 = vmatprep.mubr.f32.mxu0 0.0
  %9021 = vmatmul.mubr.f32.gmra.mrb[0].mxu0 %v8918
  %v9022 = vpop.f32.mrb[0].mxu0
  %v9023 = vadd.f32 0.0, %v9022
  %v9024 = vpop.f32.mrb[0].mxu0
  %9025 = vmatprep.mubr.f32.mxu0 0.0
  %9026 = vmatmul.mubr.f32.gmra.mrb[0].mxu0 %v8920
  %v9027 = vpop.f32.mrb[0].mxu0
  %v9028 = vadd.f32 0.0, %v9027
  %v9029 = vpop.f32.mrb[0].mxu0
  %9030 = vmatprep.mubr.f32.mxu0 0.0
  %9031 = vmatmul.mubr.f32.gmra.mrb[0].mxu0 %v8922
  %v9032 = vpop.f32.mrb[0].mxu0
  %v9033 = vadd.f32 0.0, %v9032
  %v9034 = vpop.f32.mrb[0].mxu0
  %9035 = vmatprep.mubr.f32.mxu0 0.0
  %9036 = vmatmul.mubr.f32.gmra.mrb[0].mxu0 %v8924
  %v9037 = vpop.f32.mrb[0].mxu0
  %v9038 = vadd.f32 0.0, %v9037
  %v9039 = vpop.f32.mrb[0].mxu0
  %9040 = vmatprep.mubr.f32.mxu0 0.0
  %9041 = vmatmul.mubr.f32.gmra.mrb[0].mxu0 %v8926
  %v9042 = vpop.f32.mrb[0].mxu0
  %v9043 = vadd.f32 0.0, %v9042
  %v9044 = vpop.f32.mrb[0].mxu0
  %9045 = vmatprep.mubr.f32.mxu0 0.0
  %9046 = vmatmul.mubr.f32.gmra.mrb[0].mxu0 %v8928
  %v9047 = vpop.f32.mrb[0].mxu0
  %v9048 = vadd.f32 0.0, %v9047
  %v9049 = vpop.f32.mrb[0].mxu0
  %9050 = vdwg.mxu0
  %v9051 = vmul.f32 %v9013, 0.35355338
  %v9052 = vmul.f32 %v9018, 0.35355338
  %v9053 = vmul.f32 %v9023, 0.35355338
  %v9054 = vmul.f32 %v9028, 0.35355338
  %v9055 = vmul.f32 %v9033, 0.35355338
  %v9056 = vmul.f32 %v9038, 0.35355338
  %v9057 = vmul.f32 %v9043, 0.35355338
  %v9058 = vmul.f32 %v9048, 0.35355338
  %v9059 = vsel %vm6662, %v9051, -inf
  %9060 = vmax.xlane.f32.xlu0 %v9059
  %v9061 = vpop.xlane.xlu0 %9060
  %v9062 = vsel %vm6662, %v9052, -inf
  %9063 = vmax.xlane.f32.xlu0 %v9062
  %v9064 = vpop.xlane.xlu0 %9063
  %v9065 = vsel %vm6662, %v9053, -inf
  %9066 = vmax.xlane.f32.xlu0 %v9065
  %v9067 = vpop.xlane.xlu0 %9066
  %v9068 = vsel %vm6662, %v9054, -inf
  %9069 = vmax.xlane.f32.xlu0 %v9068
  %v9070 = vpop.xlane.xlu0 %9069
  %v9071 = vsel %vm6662, %v9055, -inf
  %9072 = vmax.xlane.f32.xlu0 %v9071
  %v9073 = vpop.xlane.xlu0 %9072
  %v9074 = vsel %vm6662, %v9056, -inf
  %9075 = vmax.xlane.f32.xlu0 %v9074
  %v9076 = vpop.xlane.xlu0 %9075
  %v9077 = vsel %vm6662, %v9057, -inf
  %9078 = vmax.xlane.f32.xlu0 %v9077
  %v9079 = vpop.xlane.xlu0 %9078
  %v9080 = vsel %vm6662, %v9058, -inf
  %9081 = vmax.xlane.f32.xlu0 %v9080
  %v9082 = vpop.xlane.xlu0 %9081
  %v9083 = vsub.f32 %v9051, %v9061
  %v9084 = vsub.f32 %v9052, %v9064
  %v9085 = vsub.f32 %v9053, %v9067
  %v9086 = vsub.f32 %v9054, %v9070
  %v9087 = vsub.f32 %v9055, %v9073
  %v9088 = vsub.f32 %v9056, %v9076
  %v9089 = vsub.f32 %v9057, %v9079
  %v9090 = vsub.f32 %v9058, %v9082
  %v9091 = vmul.f32 %v9083, 1.442695
  %v9092 = vpow.pop %v9091
  %v9093 = vmul.f32 %v9084, 1.442695
  %v9094 = vpow.pop %v9093
  %v9095 = vmul.f32 %v9085, 1.442695
  %v9096 = vpow.pop %v9095
  %v9097 = vmul.f32 %v9086, 1.442695
  %v9098 = vpow.pop %v9097
  %v9099 = vmul.f32 %v9087, 1.442695
  %v9100 = vpow.pop %v9099
  %v9101 = vmul.f32 %v9088, 1.442695
  %v9102 = vpow.pop %v9101
  %v9103 = vmul.f32 %v9089, 1.442695
  %v9104 = vpow.pop %v9103
  %v9105 = vmul.f32 %v9090, 1.442695
  %v9106 = vpow.pop %v9105
  %v9107 = vsel %vm6662, %v9092, 0.0
  %9108 = vadd.xlane.f32.xlu0 %v9107
  %v9109 = vpop.xlane.xlu0 %9108
  %v9110 = vsel %vm6662, %v9094, 0.0
  %9111 = vadd.xlane.f32.xlu0 %v9110
  %v9112 = vpop.xlane.xlu0 %9111
  %v9113 = vsel %vm6662, %v9096, 0.0
  %9114 = vadd.xlane.f32.xlu0 %v9113
  %v9115 = vpop.xlane.xlu0 %9114
  %v9116 = vsel %vm6662, %v9098, 0.0
  %9117 = vadd.xlane.f32.xlu0 %v9116
  %v9118 = vpop.xlane.xlu0 %9117
  %v9119 = vsel %vm6662, %v9100, 0.0
  %9120 = vadd.xlane.f32.xlu0 %v9119
  %v9121 = vpop.xlane.xlu0 %9120
  %v9122 = vsel %vm6662, %v9102, 0.0
  %9123 = vadd.xlane.f32.xlu0 %v9122
  %v9124 = vpop.xlane.xlu0 %9123
  %v9125 = vsel %vm6662, %v9104, 0.0
  %9126 = vadd.xlane.f32.xlu0 %v9125
  %v9127 = vpop.xlane.xlu0 %9126
  %v9128 = vsel %vm6662, %v9106, 0.0
  %9129 = vadd.xlane.f32.xlu0 %v9128
  %v9130 = vpop.xlane.xlu0 %9129
  %v9131 = vrcp.pop %v9109
  %v9132 = vrcp.pop %v9112
  %v9133 = vrcp.pop %v9115
  %v9134 = vrcp.pop %v9118
  %v9135 = vrcp.pop %v9121
  %v9136 = vrcp.pop %v9124
  %v9137 = vrcp.pop %v9127
  %v9138 = vrcp.pop %v9130
  %v9139 = vmul.f32 %v9092, %v9131
  %v9140 = vmul.f32 %v9094, %v9132
  %v9141 = vmul.f32 %v9096, %v9133
  %v9142 = vmul.f32 %v9098, %v9134
  %v9143 = vmul.f32 %v9100, %v9135
  %v9144 = vmul.f32 %v9102, %v9136
  %v9145 = vmul.f32 %v9104, %v9137
  %v9146 = vmul.f32 %v9106, %v9138
  %9147 = vrot.lane.b32.xlu0 %v7066, 64
  %v9148 = vpop.permute.xlu0 %9147
  %9149 = vrot.lane.b32.xlu0 %v7071, 64
  %v9150 = vpop.permute.xlu0 %9149
  %9151 = vrot.lane.b32.xlu0 %v7076, 64
  %v9152 = vpop.permute.xlu0 %9151
  %9153 = vrot.lane.b32.xlu0 %v7081, 64
  %v9154 = vpop.permute.xlu0 %9153
  %9155 = vrot.lane.b32.xlu0 %v7086, 64
  %v9156 = vpop.permute.xlu0 %9155
  %9157 = vrot.lane.b32.xlu0 %v7091, 64
  %v9158 = vpop.permute.xlu0 %9157
  %9159 = vrot.lane.b32.xlu0 %v7096, 64
  %v9160 = vpop.permute.xlu0 %9159
  %9161 = vrot.lane.b32.xlu0 %v7101, 64
  %v9162 = vpop.permute.xlu0 %9161
  %v9172 = vsel %vm6662, %v9139, 0
  %v9175 = vsel %vm6662, %v9140, 0
  %v9178 = vsel %vm6662, %v9141, 0
  %v9181 = vsel %vm6662, %v9142, 0
  %v9184 = vsel %vm6662, %v9143, 0
  %v9187 = vsel %vm6662, %v9144, 0
  %v9190 = vsel %vm6662, %v9145, 0
  %v9193 = vsel %vm6662, %v9146, 0
  %9195 = vmatprep.subr.mxu0 0.0
  %9196 = vmatpush1.msra.mxu0 %v9148
  %9197 = vmatprep.subr.mxu0 0.0
  %9198 = vmatpush1.msra.mxu0 %v9150
  %9199 = vmatprep.subr.mxu0 0.0
  %9200 = vmatpush1.msra.mxu0 %v9152
  %9201 = vmatprep.subr.mxu0 0.0
  %9202 = vmatpush1.msra.mxu0 %v9154
  %9203 = vmatprep.subr.mxu0 0.0
  %9204 = vmatpush1.msra.mxu0 %v9156
  %9205 = vmatprep.subr.mxu0 0.0
  %9206 = vmatpush1.msra.mxu0 %v9158
  %9207 = vmatprep.subr.mxu0 0.0
  %9208 = vmatpush1.msra.mxu0 %v9160
  %9209 = vmatprep.subr.mxu0 0.0
  %9210 = vmatpush1.msra.mxu0 %v9162
  %9211 = vmatprep.subr.mxu0 0.0
  %9212 = vmatpush1.msra.mxu0 0.0
  %9213 = vmatprep.subr.mxu0 0.0
  %9214 = vmatpush1.msra.mxu0 0.0
  %9215 = vmatprep.subr.mxu0 0.0
  %9216 = vmatpush1.msra.mxu0 0.0
  %9217 = vmatprep.subr.mxu0 0.0
  %9218 = vmatpush1.msra.mxu0 0.0
  %9219 = vmatprep.subr.mxu0 0.0
  %9220 = vmatpush1.msra.mxu0 0.0
  %9221 = vmatprep.subr.mxu0 0.0
  %9222 = vmatpush1.msra.mxu0 0.0
  %9223 = vmatprep.subr.mxu0 0.0
  %9224 = vmatpush1.msra.mxu0 0.0
  %9225 = vmatprep.subr.mxu0 0.0
  %9226 = vmatpush1.msra.mxu0 0.0
  %9227 = vmatprep.subr.mxu0 0.0
  %9228 = vmatpush1.msra.mxu0 0.0
  %9229 = vmatprep.subr.mxu0 0.0
  %9230 = vmatpush1.msra.mxu0 0.0
  %9231 = vmatprep.subr.mxu0 0.0
  %9232 = vmatpush1.msra.mxu0 0.0
  %9233 = vmatprep.subr.mxu0 0.0
  %9234 = vmatpush1.msra.mxu0 0.0
  %9235 = vmatprep.subr.mxu0 0.0
  %9236 = vmatpush1.msra.mxu0 0.0
  %9237 = vmatprep.subr.mxu0 0.0
  %9238 = vmatpush1.msra.mxu0 0.0
  %9239 = vmatprep.subr.mxu0 0.0
  %9240 = vmatpush1.msra.mxu0 0.0
  %9241 = vmatprep.subr.mxu0 0.0
  %9242 = vmatpush1.msra.mxu0 0.0
  %9243 = vmatprep.subr.mxu0 0.0
  %9244 = vmatpush1.msra.mxu0 0.0
  %9245 = vmatprep.subr.mxu0 0.0
  %9246 = vmatpush1.msra.mxu0 0.0
  %9247 = vmatprep.subr.mxu0 0.0
  %9248 = vmatpush1.msra.mxu0 0.0
  %9249 = vmatprep.subr.mxu0 0.0
  %9250 = vmatpush1.msra.mxu0 0.0
  %9251 = vmatprep.subr.mxu0 0.0
  %9252 = vmatpush1.msra.mxu0 0.0
  %9253 = vmatprep.subr.mxu0 0.0
  %9254 = vmatpush1.msra.mxu0 0.0
  %9255 = vmatprep.subr.mxu0 0.0
  %9256 = vmatpush1.msra.mxu0 0.0
  %9257 = vmatprep.subr.mxu0 0.0
  %9258 = vmatpush1.msra.mxu0 0.0
  %9259 = vmatprep.mubr.f32.mxu0 0.0
  %9260 = vmatmul.mubr.f32.gmra.mrb[0].mxu0 %v9172
  %v9261 = vpop.f32.mrb[0].mxu0
  %v9262 = vadd.f32 0.0, %v9261
  %v9263 = vpop.f32.mrb[0].mxu0
  %9264 = vmatprep.mubr.f32.mxu0 0.0
  %9265 = vmatmul.mubr.f32.gmra.mrb[0].mxu0 %v9175
  %v9266 = vpop.f32.mrb[0].mxu0
  %v9267 = vadd.f32 0.0, %v9266
  %v9268 = vpop.f32.mrb[0].mxu0
  %9269 = vmatprep.mubr.f32.mxu0 0.0
  %9270 = vmatmul.mubr.f32.gmra.mrb[0].mxu0 %v9178
  %v9271 = vpop.f32.mrb[0].mxu0
  %v9272 = vadd.f32 0.0, %v9271
  %v9273 = vpop.f32.mrb[0].mxu0
  %9274 = vmatprep.mubr.f32.mxu0 0.0
  %9275 = vmatmul.mubr.f32.gmra.mrb[0].mxu0 %v9181
  %v9276 = vpop.f32.mrb[0].mxu0
  %v9277 = vadd.f32 0.0, %v9276
  %v9278 = vpop.f32.mrb[0].mxu0
  %9279 = vmatprep.mubr.f32.mxu0 0.0
  %9280 = vmatmul.mubr.f32.gmra.mrb[0].mxu0 %v9184
  %v9281 = vpop.f32.mrb[0].mxu0
  %v9282 = vadd.f32 0.0, %v9281
  %v9283 = vpop.f32.mrb[0].mxu0
  %9284 = vmatprep.mubr.f32.mxu0 0.0
  %9285 = vmatmul.mubr.f32.gmra.mrb[0].mxu0 %v9187
  %v9286 = vpop.f32.mrb[0].mxu0
  %v9287 = vadd.f32 0.0, %v9286
  %v9288 = vpop.f32.mrb[0].mxu0
  %9289 = vmatprep.mubr.f32.mxu0 0.0
  %9290 = vmatmul.mubr.f32.gmra.mrb[0].mxu0 %v9190
  %v9291 = vpop.f32.mrb[0].mxu0
  %v9292 = vadd.f32 0.0, %v9291
  %v9293 = vpop.f32.mrb[0].mxu0
  %9294 = vmatprep.mubr.f32.mxu0 0.0
  %9295 = vmatmul.mubr.f32.gmra.mrb[0].mxu0 %v9193
  %v9296 = vpop.f32.mrb[0].mxu0
  %v9297 = vadd.f32 0.0, %v9296
  %v9298 = vpop.f32.mrb[0].mxu0
  %9299 = vdwg.mxu0
  %9300 = vrot.lane.b32.xlu0 %v7066, 120
  %v9301 = vpop.permute.xlu0 %9300
  %9302 = vrot.lane.b32.xlu0 %v7071, 120
  %v9303 = vpop.permute.xlu0 %9302
  %9304 = vrot.lane.b32.xlu0 %v7076, 120
  %v9305 = vpop.permute.xlu0 %9304
  %9306 = vrot.lane.b32.xlu0 %v7081, 120
  %v9307 = vpop.permute.xlu0 %9306
  %9308 = vrot.lane.b32.xlu0 %v7086, 120
  %v9309 = vpop.permute.xlu0 %9308
  %9310 = vrot.lane.b32.xlu0 %v7091, 120
  %v9311 = vpop.permute.xlu0 %9310
  %9312 = vrot.lane.b32.xlu0 %v7096, 120
  %v9313 = vpop.permute.xlu0 %9312
  %9314 = vrot.lane.b32.xlu0 %v7101, 120
  %v9315 = vpop.permute.xlu0 %9314
  %9316 = vrot.lane.b32.xlu0 %v7066, 88
  %v9317 = vpop.permute.xlu0 %9316
  %9318 = vrot.lane.b32.xlu0 %v7071, 88
  %v9319 = vpop.permute.xlu0 %9318
  %9320 = vrot.lane.b32.xlu0 %v7076, 88
  %v9321 = vpop.permute.xlu0 %9320
  %9322 = vrot.lane.b32.xlu0 %v7081, 88
  %v9323 = vpop.permute.xlu0 %9322
  %9324 = vrot.lane.b32.xlu0 %v7086, 88
  %v9325 = vpop.permute.xlu0 %9324
  %9326 = vrot.lane.b32.xlu0 %v7091, 88
  %v9327 = vpop.permute.xlu0 %9326
  %9328 = vrot.lane.b32.xlu0 %v7096, 88
  %v9329 = vpop.permute.xlu0 %9328
  %9330 = vrot.lane.b32.xlu0 %v7101, 88
  %v9331 = vpop.permute.xlu0 %9330
  %v9332 = vsel %vm7128, %v9301, 0
  %v9334 = vsel %vm7128, %v9303, 0
  %v9336 = vsel %vm7128, %v9305, 0
  %v9338 = vsel %vm7128, %v9307, 0
  %v9340 = vsel %vm7128, %v9309, 0
  %v9342 = vsel %vm7128, %v9311, 0
  %v9344 = vsel %vm7128, %v9313, 0
  %v9346 = vsel %vm7128, %v9315, 0
  %v9348 = vsel %vm7128, %v9317, 0
  %v9350 = vsel %vm7128, %v9319, 0
  %v9352 = vsel %vm7128, %v9321, 0
  %v9354 = vsel %vm7128, %v9323, 0
  %v9356 = vsel %vm7128, %v9325, 0
  %v9358 = vsel %vm7128, %v9327, 0
  %v9360 = vsel %vm7128, %v9329, 0
  %v9362 = vsel %vm7128, %v9331, 0
  %9364 = vmatprep.subr.mxu0 0.0
  %9365 = vmatpush1.xpose.msra.mxu0 %v9348
  %9366 = vmatprep.subr.mxu0 0.0
  %9367 = vmatpush1.xpose.msra.mxu0 %v9350
  %9368 = vmatprep.subr.mxu0 0.0
  %9369 = vmatpush1.xpose.msra.mxu0 %v9352
  %9370 = vmatprep.subr.mxu0 0.0
  %9371 = vmatpush1.xpose.msra.mxu0 %v9354
  %9372 = vmatprep.subr.mxu0 0.0
  %9373 = vmatpush1.xpose.msra.mxu0 %v9356
  %9374 = vmatprep.subr.mxu0 0.0
  %9375 = vmatpush1.xpose.msra.mxu0 %v9358
  %9376 = vmatprep.subr.mxu0 0.0
  %9377 = vmatpush1.xpose.msra.mxu0 %v9360
  %9378 = vmatprep.subr.mxu0 0.0
  %9379 = vmatpush1.xpose.msra.mxu0 %v9362
  %9380 = vmatprep.subr.mxu0 0.0
  %9381 = vmatpush1.xpose.msra.mxu0 0.0
  %9382 = vmatprep.subr.mxu0 0.0
  %9383 = vmatpush1.xpose.msra.mxu0 0.0
  %9384 = vmatprep.subr.mxu0 0.0
  %9385 = vmatpush1.xpose.msra.mxu0 0.0
  %9386 = vmatprep.subr.mxu0 0.0
  %9387 = vmatpush1.xpose.msra.mxu0 0.0
  %9388 = vmatprep.subr.mxu0 0.0
  %9389 = vmatpush1.xpose.msra.mxu0 0.0
  %9390 = vmatprep.subr.mxu0 0.0
  %9391 = vmatpush1.xpose.msra.mxu0 0.0
  %9392 = vmatprep.subr.mxu0 0.0
  %9393 = vmatpush1.xpose.msra.mxu0 0.0
  %9394 = vmatprep.subr.mxu0 0.0
  %9395 = vmatpush1.xpose.msra.mxu0 0.0
  %9396 = vmatprep.subr.mxu0 0.0
  %9397 = vmatpush1.xpose.msra.mxu0 0.0
  %9398 = vmatprep.subr.mxu0 0.0
  %9399 = vmatpush1.xpose.msra.mxu0 0.0
  %9400 = vmatprep.subr.mxu0 0.0
  %9401 = vmatpush1.xpose.msra.mxu0 0.0
  %9402 = vmatprep.subr.mxu0 0.0
  %9403 = vmatpush1.xpose.msra.mxu0 0.0
  %9404 = vmatprep.subr.mxu0 0.0
  %9405 = vmatpush1.xpose.msra.mxu0 0.0
  %9406 = vmatprep.subr.mxu0 0.0
  %9407 = vmatpush1.xpose.msra.mxu0 0.0
  %9408 = vmatprep.subr.mxu0 0.0
  %9409 = vmatpush1.xpose.msra.mxu0 0.0
  %9410 = vmatprep.subr.mxu0 0.0
  %9411 = vmatpush1.xpose.msra.mxu0 0.0
  %9412 = vmatprep.subr.mxu0 0.0
  %9413 = vmatpush1.xpose.msra.mxu0 0.0
  %9414 = vmatprep.subr.mxu0 0.0
  %9415 = vmatpush1.xpose.msra.mxu0 0.0
  %9416 = vmatprep.subr.mxu0 0.0
  %9417 = vmatpush1.xpose.msra.mxu0 0.0
  %9418 = vmatprep.subr.mxu0 0.0
  %9419 = vmatpush1.xpose.msra.mxu0 0.0
  %9420 = vmatprep.subr.mxu0 0.0
  %9421 = vmatpush1.xpose.msra.mxu0 0.0
  %9422 = vmatprep.subr.mxu0 0.0
  %9423 = vmatpush1.xpose.msra.mxu0 0.0
  %9424 = vmatprep.subr.mxu0 0.0
  %9425 = vmatpush1.xpose.msra.mxu0 0.0
  %9426 = vmatprep.subr.mxu0 0.0
  %9427 = vmatpush1.xpose.msra.mxu0 0.0
  %9428 = vmatprep.mubr.f32.mxu0 0.0
  %9429 = vmatmul.mubr.f32.gmra.mrb[0].mxu0 %v9332
  %v9430 = vpop.f32.mrb[0].mxu0
  %v9431 = vadd.f32 0.0, %v9430
  %v9432 = vpop.f32.mrb[0].mxu0
  %9433 = vmatprep.mubr.f32.mxu0 0.0
  %9434 = vmatmul.mubr.f32.gmra.mrb[0].mxu0 %v9334
  %v9435 = vpop.f32.mrb[0].mxu0
  %v9436 = vadd.f32 0.0, %v9435
  %v9437 = vpop.f32.mrb[0].mxu0
  %9438 = vmatprep.mubr.f32.mxu0 0.0
  %9439 = vmatmul.mubr.f32.gmra.mrb[0].mxu0 %v9336
  %v9440 = vpop.f32.mrb[0].mxu0
  %v9441 = vadd.f32 0.0, %v9440
  %v9442 = vpop.f32.mrb[0].mxu0
  %9443 = vmatprep.mubr.f32.mxu0 0.0
  %9444 = vmatmul.mubr.f32.gmra.mrb[0].mxu0 %v9338
  %v9445 = vpop.f32.mrb[0].mxu0
  %v9446 = vadd.f32 0.0, %v9445
  %v9447 = vpop.f32.mrb[0].mxu0
  %9448 = vmatprep.mubr.f32.mxu0 0.0
  %9449 = vmatmul.mubr.f32.gmra.mrb[0].mxu0 %v9340
  %v9450 = vpop.f32.mrb[0].mxu0
  %v9451 = vadd.f32 0.0, %v9450
  %v9452 = vpop.f32.mrb[0].mxu0
  %9453 = vmatprep.mubr.f32.mxu0 0.0
  %9454 = vmatmul.mubr.f32.gmra.mrb[0].mxu0 %v9342
  %v9455 = vpop.f32.mrb[0].mxu0
  %v9456 = vadd.f32 0.0, %v9455
  %v9457 = vpop.f32.mrb[0].mxu0
  %9458 = vmatprep.mubr.f32.mxu0 0.0
  %9459 = vmatmul.mubr.f32.gmra.mrb[0].mxu0 %v9344
  %v9460 = vpop.f32.mrb[0].mxu0
  %v9461 = vadd.f32 0.0, %v9460
  %v9462 = vpop.f32.mrb[0].mxu0
  %9463 = vmatprep.mubr.f32.mxu0 0.0
  %9464 = vmatmul.mubr.f32.gmra.mrb[0].mxu0 %v9346
  %v9465 = vpop.f32.mrb[0].mxu0
  %v9466 = vadd.f32 0.0, %v9465
  %v9467 = vpop.f32.mrb[0].mxu0
  %9468 = vdwg.mxu0
  %v9469 = vmul.f32 %v9431, 0.35355338
  %v9470 = vmul.f32 %v9436, 0.35355338
  %v9471 = vmul.f32 %v9441, 0.35355338
  %v9472 = vmul.f32 %v9446, 0.35355338
  %v9473 = vmul.f32 %v9451, 0.35355338
  %v9474 = vmul.f32 %v9456, 0.35355338
  %v9475 = vmul.f32 %v9461, 0.35355338
  %v9476 = vmul.f32 %v9466, 0.35355338
  %v9477 = vsel %vm6662, %v9469, -inf
  %9478 = vmax.xlane.f32.xlu0 %v9477
  %v9479 = vpop.xlane.xlu0 %9478
  %v9480 = vsel %vm6662, %v9470, -inf
  %9481 = vmax.xlane.f32.xlu0 %v9480
  %v9482 = vpop.xlane.xlu0 %9481
  %v9483 = vsel %vm6662, %v9471, -inf
  %9484 = vmax.xlane.f32.xlu0 %v9483
  %v9485 = vpop.xlane.xlu0 %9484
  %v9486 = vsel %vm6662, %v9472, -inf
  %9487 = vmax.xlane.f32.xlu0 %v9486
  %v9488 = vpop.xlane.xlu0 %9487
  %v9489 = vsel %vm6662, %v9473, -inf
  %9490 = vmax.xlane.f32.xlu0 %v9489
  %v9491 = vpop.xlane.xlu0 %9490
  %v9492 = vsel %vm6662, %v9474, -inf
  %9493 = vmax.xlane.f32.xlu0 %v9492
  %v9494 = vpop.xlane.xlu0 %9493
  %v9495 = vsel %vm6662, %v9475, -inf
  %9496 = vmax.xlane.f32.xlu0 %v9495
  %v9497 = vpop.xlane.xlu0 %9496
  %v9498 = vsel %vm6662, %v9476, -inf
  %9499 = vmax.xlane.f32.xlu0 %v9498
  %v9500 = vpop.xlane.xlu0 %9499
  %v9501 = vsub.f32 %v9469, %v9479
  %v9502 = vsub.f32 %v9470, %v9482
  %v9503 = vsub.f32 %v9471, %v9485
  %v9504 = vsub.f32 %v9472, %v9488
  %v9505 = vsub.f32 %v9473, %v9491
  %v9506 = vsub.f32 %v9474, %v9494
  %v9507 = vsub.f32 %v9475, %v9497
  %v9508 = vsub.f32 %v9476, %v9500
  %v9509 = vmul.f32 %v9501, 1.442695
  %v9510 = vpow.pop %v9509
  %v9511 = vmul.f32 %v9502, 1.442695
  %v9512 = vpow.pop %v9511
  %v9513 = vmul.f32 %v9503, 1.442695
  %v9514 = vpow.pop %v9513
  %v9515 = vmul.f32 %v9504, 1.442695
  %v9516 = vpow.pop %v9515
  %v9517 = vmul.f32 %v9505, 1.442695
  %v9518 = vpow.pop %v9517
  %v9519 = vmul.f32 %v9506, 1.442695
  %v9520 = vpow.pop %v9519
  %v9521 = vmul.f32 %v9507, 1.442695
  %v9522 = vpow.pop %v9521
  %v9523 = vmul.f32 %v9508, 1.442695
  %v9524 = vpow.pop %v9523
  %v9525 = vsel %vm6662, %v9510, 0.0
  %9526 = vadd.xlane.f32.xlu0 %v9525
  %v9527 = vpop.xlane.xlu0 %9526
  %v9528 = vsel %vm6662, %v9512, 0.0
  %9529 = vadd.xlane.f32.xlu0 %v9528
  %v9530 = vpop.xlane.xlu0 %9529
  %v9531 = vsel %vm6662, %v9514, 0.0
  %9532 = vadd.xlane.f32.xlu0 %v9531
  %v9533 = vpop.xlane.xlu0 %9532
  %v9534 = vsel %vm6662, %v9516, 0.0
  %9535 = vadd.xlane.f32.xlu0 %v9534
  %v9536 = vpop.xlane.xlu0 %9535
  %v9537 = vsel %vm6662, %v9518, 0.0
  %9538 = vadd.xlane.f32.xlu0 %v9537
  %v9539 = vpop.xlane.xlu0 %9538
  %v9540 = vsel %vm6662, %v9520, 0.0
  %9541 = vadd.xlane.f32.xlu0 %v9540
  %v9542 = vpop.xlane.xlu0 %9541
  %v9543 = vsel %vm6662, %v9522, 0.0
  %9544 = vadd.xlane.f32.xlu0 %v9543
  %v9545 = vpop.xlane.xlu0 %9544
  %v9546 = vsel %vm6662, %v9524, 0.0
  %9547 = vadd.xlane.f32.xlu0 %v9546
  %v9548 = vpop.xlane.xlu0 %9547
  %v9549 = vrcp.pop %v9527
  %v9550 = vrcp.pop %v9530
  %v9551 = vrcp.pop %v9533
  %v9552 = vrcp.pop %v9536
  %v9553 = vrcp.pop %v9539
  %v9554 = vrcp.pop %v9542
  %v9555 = vrcp.pop %v9545
  %v9556 = vrcp.pop %v9548
  %v9557 = vmul.f32 %v9510, %v9549
  %v9558 = vmul.f32 %v9512, %v9550
  %v9559 = vmul.f32 %v9514, %v9551
  %v9560 = vmul.f32 %v9516, %v9552
  %v9561 = vmul.f32 %v9518, %v9553
  %v9562 = vmul.f32 %v9520, %v9554
  %v9563 = vmul.f32 %v9522, %v9555
  %v9564 = vmul.f32 %v9524, %v9556
  %9565 = vrot.lane.b32.xlu0 %v7066, 56
  %v9566 = vpop.permute.xlu0 %9565
  %9567 = vrot.lane.b32.xlu0 %v7071, 56
  %v9568 = vpop.permute.xlu0 %9567
  %9569 = vrot.lane.b32.xlu0 %v7076, 56
  %v9570 = vpop.permute.xlu0 %9569
  %9571 = vrot.lane.b32.xlu0 %v7081, 56
  %v9572 = vpop.permute.xlu0 %9571
  %9573 = vrot.lane.b32.xlu0 %v7086, 56
  %v9574 = vpop.permute.xlu0 %9573
  %9575 = vrot.lane.b32.xlu0 %v7091, 56
  %v9576 = vpop.permute.xlu0 %9575
  %9577 = vrot.lane.b32.xlu0 %v7096, 56
  %v9578 = vpop.permute.xlu0 %9577
  %9579 = vrot.lane.b32.xlu0 %v7101, 56
  %v9580 = vpop.permute.xlu0 %9579
  %v9590 = vsel %vm6662, %v9557, 0
  %v9593 = vsel %vm6662, %v9558, 0
  %v9596 = vsel %vm6662, %v9559, 0
  %v9599 = vsel %vm6662, %v9560, 0
  %v9602 = vsel %vm6662, %v9561, 0
  %v9605 = vsel %vm6662, %v9562, 0
  %v9608 = vsel %vm6662, %v9563, 0
  %v9611 = vsel %vm6662, %v9564, 0
  %9613 = vmatprep.subr.mxu0 0.0
  %9614 = vmatpush1.msra.mxu0 %v9566
  %9615 = vmatprep.subr.mxu0 0.0
  %9616 = vmatpush1.msra.mxu0 %v9568
  %9617 = vmatprep.subr.mxu0 0.0
  %9618 = vmatpush1.msra.mxu0 %v9570
  %9619 = vmatprep.subr.mxu0 0.0
  %9620 = vmatpush1.msra.mxu0 %v9572
  %9621 = vmatprep.subr.mxu0 0.0
  %9622 = vmatpush1.msra.mxu0 %v9574
  %9623 = vmatprep.subr.mxu0 0.0
  %9624 = vmatpush1.msra.mxu0 %v9576
  %9625 = vmatprep.subr.mxu0 0.0
  %9626 = vmatpush1.msra.mxu0 %v9578
  %9627 = vmatprep.subr.mxu0 0.0
  %9628 = vmatpush1.msra.mxu0 %v9580
  %9629 = vmatprep.subr.mxu0 0.0
  %9630 = vmatpush1.msra.mxu0 0.0
  %9631 = vmatprep.subr.mxu0 0.0
  %9632 = vmatpush1.msra.mxu0 0.0
  %9633 = vmatprep.subr.mxu0 0.0
  %9634 = vmatpush1.msra.mxu0 0.0
  %9635 = vmatprep.subr.mxu0 0.0
  %9636 = vmatpush1.msra.mxu0 0.0
  %9637 = vmatprep.subr.mxu0 0.0
  %9638 = vmatpush1.msra.mxu0 0.0
  %9639 = vmatprep.subr.mxu0 0.0
  %9640 = vmatpush1.msra.mxu0 0.0
  %9641 = vmatprep.subr.mxu0 0.0
  %9642 = vmatpush1.msra.mxu0 0.0
  %9643 = vmatprep.subr.mxu0 0.0
  %9644 = vmatpush1.msra.mxu0 0.0
  %9645 = vmatprep.subr.mxu0 0.0
  %9646 = vmatpush1.msra.mxu0 0.0
  %9647 = vmatprep.subr.mxu0 0.0
  %9648 = vmatpush1.msra.mxu0 0.0
  %9649 = vmatprep.subr.mxu0 0.0
  %9650 = vmatpush1.msra.mxu0 0.0
  %9651 = vmatprep.subr.mxu0 0.0
  %9652 = vmatpush1.msra.mxu0 0.0
  %9653 = vmatprep.subr.mxu0 0.0
  %9654 = vmatpush1.msra.mxu0 0.0
  %9655 = vmatprep.subr.mxu0 0.0
  %9656 = vmatpush1.msra.mxu0 0.0
  %9657 = vmatprep.subr.mxu0 0.0
  %9658 = vmatpush1.msra.mxu0 0.0
  %9659 = vmatprep.subr.mxu0 0.0
  %9660 = vmatpush1.msra.mxu0 0.0
  %9661 = vmatprep.subr.mxu0 0.0
  %9662 = vmatpush1.msra.mxu0 0.0
  %9663 = vmatprep.subr.mxu0 0.0
  %9664 = vmatpush1.msra.mxu0 0.0
  %9665 = vmatprep.subr.mxu0 0.0
  %9666 = vmatpush1.msra.mxu0 0.0
  %9667 = vmatprep.subr.mxu0 0.0
  %9668 = vmatpush1.msra.mxu0 0.0
  %9669 = vmatprep.subr.mxu0 0.0
  %9670 = vmatpush1.msra.mxu0 0.0
  %9671 = vmatprep.subr.mxu0 0.0
  %9672 = vmatpush1.msra.mxu0 0.0
  %9673 = vmatprep.subr.mxu0 0.0
  %9674 = vmatpush1.msra.mxu0 0.0
  %9675 = vmatprep.subr.mxu0 0.0
  %9676 = vmatpush1.msra.mxu0 0.0
  %9677 = vmatprep.mubr.f32.mxu0 0.0
  %9678 = vmatmul.mubr.f32.gmra.mrb[0].mxu0 %v9590
  %v9679 = vpop.f32.mrb[0].mxu0
  %v9680 = vadd.f32 0.0, %v9679
  %v9681 = vpop.f32.mrb[0].mxu0
  %9682 = vmatprep.mubr.f32.mxu0 0.0
  %9683 = vmatmul.mubr.f32.gmra.mrb[0].mxu0 %v9593
  %v9684 = vpop.f32.mrb[0].mxu0
  %v9685 = vadd.f32 0.0, %v9684
  %v9686 = vpop.f32.mrb[0].mxu0
  %9687 = vmatprep.mubr.f32.mxu0 0.0
  %9688 = vmatmul.mubr.f32.gmra.mrb[0].mxu0 %v9596
  %v9689 = vpop.f32.mrb[0].mxu0
  %v9690 = vadd.f32 0.0, %v9689
  %v9691 = vpop.f32.mrb[0].mxu0
  %9692 = vmatprep.mubr.f32.mxu0 0.0
  %9693 = vmatmul.mubr.f32.gmra.mrb[0].mxu0 %v9599
  %v9694 = vpop.f32.mrb[0].mxu0
  %v9695 = vadd.f32 0.0, %v9694
  %v9696 = vpop.f32.mrb[0].mxu0
  %9697 = vmatprep.mubr.f32.mxu0 0.0
  %9698 = vmatmul.mubr.f32.gmra.mrb[0].mxu0 %v9602
  %v9699 = vpop.f32.mrb[0].mxu0
  %v9700 = vadd.f32 0.0, %v9699
  %v9701 = vpop.f32.mrb[0].mxu0
  %9702 = vmatprep.mubr.f32.mxu0 0.0
  %9703 = vmatmul.mubr.f32.gmra.mrb[0].mxu0 %v9605
  %v9704 = vpop.f32.mrb[0].mxu0
  %v9705 = vadd.f32 0.0, %v9704
  %v9706 = vpop.f32.mrb[0].mxu0
  %9707 = vmatprep.mubr.f32.mxu0 0.0
  %9708 = vmatmul.mubr.f32.gmra.mrb[0].mxu0 %v9608
  %v9709 = vpop.f32.mrb[0].mxu0
  %v9710 = vadd.f32 0.0, %v9709
  %v9711 = vpop.f32.mrb[0].mxu0
  %9712 = vmatprep.mubr.f32.mxu0 0.0
  %9713 = vmatmul.mubr.f32.gmra.mrb[0].mxu0 %v9611
  %v9714 = vpop.f32.mrb[0].mxu0
  %v9715 = vadd.f32 0.0, %v9714
  %v9716 = vpop.f32.mrb[0].mxu0
  %9717 = vdwg.mxu0
  %9718 = vrot.lane.b32.xlu0 %v7066, 112
  %v9719 = vpop.permute.xlu0 %9718
  %9720 = vrot.lane.b32.xlu0 %v7071, 112
  %v9721 = vpop.permute.xlu0 %9720
  %9722 = vrot.lane.b32.xlu0 %v7076, 112
  %v9723 = vpop.permute.xlu0 %9722
  %9724 = vrot.lane.b32.xlu0 %v7081, 112
  %v9725 = vpop.permute.xlu0 %9724
  %9726 = vrot.lane.b32.xlu0 %v7086, 112
  %v9727 = vpop.permute.xlu0 %9726
  %9728 = vrot.lane.b32.xlu0 %v7091, 112
  %v9729 = vpop.permute.xlu0 %9728
  %9730 = vrot.lane.b32.xlu0 %v7096, 112
  %v9731 = vpop.permute.xlu0 %9730
  %9732 = vrot.lane.b32.xlu0 %v7101, 112
  %v9733 = vpop.permute.xlu0 %9732
  %9734 = vrot.lane.b32.xlu0 %v7066, 80
  %v9735 = vpop.permute.xlu0 %9734
  %9736 = vrot.lane.b32.xlu0 %v7071, 80
  %v9737 = vpop.permute.xlu0 %9736
  %9738 = vrot.lane.b32.xlu0 %v7076, 80
  %v9739 = vpop.permute.xlu0 %9738
  %9740 = vrot.lane.b32.xlu0 %v7081, 80
  %v9741 = vpop.permute.xlu0 %9740
  %9742 = vrot.lane.b32.xlu0 %v7086, 80
  %v9743 = vpop.permute.xlu0 %9742
  %9744 = vrot.lane.b32.xlu0 %v7091, 80
  %v9745 = vpop.permute.xlu0 %9744
  %9746 = vrot.lane.b32.xlu0 %v7096, 80
  %v9747 = vpop.permute.xlu0 %9746
  %9748 = vrot.lane.b32.xlu0 %v7101, 80
  %v9749 = vpop.permute.xlu0 %9748
  %v9750 = vsel %vm7128, %v9719, 0
  %v9752 = vsel %vm7128, %v9721, 0
  %v9754 = vsel %vm7128, %v9723, 0
  %v9756 = vsel %vm7128, %v9725, 0
  %v9758 = vsel %vm7128, %v9727, 0
  %v9760 = vsel %vm7128, %v9729, 0
  %v9762 = vsel %vm7128, %v9731, 0
  %v9764 = vsel %vm7128, %v9733, 0
  %v9766 = vsel %vm7128, %v9735, 0
  %v9768 = vsel %vm7128, %v9737, 0
  %v9770 = vsel %vm7128, %v9739, 0
  %v9772 = vsel %vm7128, %v9741, 0
  %v9774 = vsel %vm7128, %v9743, 0
  %v9776 = vsel %vm7128, %v9745, 0
  %v9778 = vsel %vm7128, %v9747, 0
  %v9780 = vsel %vm7128, %v9749, 0
  %9782 = vmatprep.subr.mxu0 0.0
  %9783 = vmatpush1.xpose.msra.mxu0 %v9766
  %9784 = vmatprep.subr.mxu0 0.0
  %9785 = vmatpush1.xpose.msra.mxu0 %v9768
  %9786 = vmatprep.subr.mxu0 0.0
  %9787 = vmatpush1.xpose.msra.mxu0 %v9770
  %9788 = vmatprep.subr.mxu0 0.0
  %9789 = vmatpush1.xpose.msra.mxu0 %v9772
  %9790 = vmatprep.subr.mxu0 0.0
  %9791 = vmatpush1.xpose.msra.mxu0 %v9774
  %9792 = vmatprep.subr.mxu0 0.0
  %9793 = vmatpush1.xpose.msra.mxu0 %v9776
  %9794 = vmatprep.subr.mxu0 0.0
  %9795 = vmatpush1.xpose.msra.mxu0 %v9778
  %9796 = vmatprep.subr.mxu0 0.0
  %9797 = vmatpush1.xpose.msra.mxu0 %v9780
  %9798 = vmatprep.subr.mxu0 0.0
  %9799 = vmatpush1.xpose.msra.mxu0 0.0
  %9800 = vmatprep.subr.mxu0 0.0
  %9801 = vmatpush1.xpose.msra.mxu0 0.0
  %9802 = vmatprep.subr.mxu0 0.0
  %9803 = vmatpush1.xpose.msra.mxu0 0.0
  %9804 = vmatprep.subr.mxu0 0.0
  %9805 = vmatpush1.xpose.msra.mxu0 0.0
  %9806 = vmatprep.subr.mxu0 0.0
  %9807 = vmatpush1.xpose.msra.mxu0 0.0
  %9808 = vmatprep.subr.mxu0 0.0
  %9809 = vmatpush1.xpose.msra.mxu0 0.0
  %9810 = vmatprep.subr.mxu0 0.0
  %9811 = vmatpush1.xpose.msra.mxu0 0.0
  %9812 = vmatprep.subr.mxu0 0.0
  %9813 = vmatpush1.xpose.msra.mxu0 0.0
  %9814 = vmatprep.subr.mxu0 0.0
  %9815 = vmatpush1.xpose.msra.mxu0 0.0
  %9816 = vmatprep.subr.mxu0 0.0
  %9817 = vmatpush1.xpose.msra.mxu0 0.0
  %9818 = vmatprep.subr.mxu0 0.0
  %9819 = vmatpush1.xpose.msra.mxu0 0.0
  %9820 = vmatprep.subr.mxu0 0.0
  %9821 = vmatpush1.xpose.msra.mxu0 0.0
  %9822 = vmatprep.subr.mxu0 0.0
  %9823 = vmatpush1.xpose.msra.mxu0 0.0
  %9824 = vmatprep.subr.mxu0 0.0
  %9825 = vmatpush1.xpose.msra.mxu0 0.0
  %9826 = vmatprep.subr.mxu0 0.0
  %9827 = vmatpush1.xpose.msra.mxu0 0.0
  %9828 = vmatprep.subr.mxu0 0.0
  %9829 = vmatpush1.xpose.msra.mxu0 0.0
  %9830 = vmatprep.subr.mxu0 0.0
  %9831 = vmatpush1.xpose.msra.mxu0 0.0
  %9832 = vmatprep.subr.mxu0 0.0
  %9833 = vmatpush1.xpose.msra.mxu0 0.0
  %9834 = vmatprep.subr.mxu0 0.0
  %9835 = vmatpush1.xpose.msra.mxu0 0.0
  %9836 = vmatprep.subr.mxu0 0.0
  %9837 = vmatpush1.xpose.msra.mxu0 0.0
  %9838 = vmatprep.subr.mxu0 0.0
  %9839 = vmatpush1.xpose.msra.mxu0 0.0
  %9840 = vmatprep.subr.mxu0 0.0
  %9841 = vmatpush1.xpose.msra.mxu0 0.0
  %9842 = vmatprep.subr.mxu0 0.0
  %9843 = vmatpush1.xpose.msra.mxu0 0.0
  %9844 = vmatprep.subr.mxu0 0.0
  %9845 = vmatpush1.xpose.msra.mxu0 0.0
  %9846 = vmatprep.mubr.f32.mxu0 0.0
  %9847 = vmatmul.mubr.f32.gmra.mrb[0].mxu0 %v9750
  %v9848 = vpop.f32.mrb[0].mxu0
  %v9849 = vadd.f32 0.0, %v9848
  %v9850 = vpop.f32.mrb[0].mxu0
  %9851 = vmatprep.mubr.f32.mxu0 0.0
  %9852 = vmatmul.mubr.f32.gmra.mrb[0].mxu0 %v9752
  %v9853 = vpop.f32.mrb[0].mxu0
  %v9854 = vadd.f32 0.0, %v9853
  %v9855 = vpop.f32.mrb[0].mxu0
  %9856 = vmatprep.mubr.f32.mxu0 0.0
  %9857 = vmatmul.mubr.f32.gmra.mrb[0].mxu0 %v9754
  %v9858 = vpop.f32.mrb[0].mxu0
  %v9859 = vadd.f32 0.0, %v9858
  %v9860 = vpop.f32.mrb[0].mxu0
  %9861 = vmatprep.mubr.f32.mxu0 0.0
  %9862 = vmatmul.mubr.f32.gmra.mrb[0].mxu0 %v9756
  %v9863 = vpop.f32.mrb[0].mxu0
  %v9864 = vadd.f32 0.0, %v9863
  %v9865 = vpop.f32.mrb[0].mxu0
  %9866 = vmatprep.mubr.f32.mxu0 0.0
  %9867 = vmatmul.mubr.f32.gmra.mrb[0].mxu0 %v9758
  %v9868 = vpop.f32.mrb[0].mxu0
  %v9869 = vadd.f32 0.0, %v9868
  %v9870 = vpop.f32.mrb[0].mxu0
  %9871 = vmatprep.mubr.f32.mxu0 0.0
  %9872 = vmatmul.mubr.f32.gmra.mrb[0].mxu0 %v9760
  %v9873 = vpop.f32.mrb[0].mxu0
  %v9874 = vadd.f32 0.0, %v9873
  %v9875 = vpop.f32.mrb[0].mxu0
  %9876 = vmatprep.mubr.f32.mxu0 0.0
  %9877 = vmatmul.mubr.f32.gmra.mrb[0].mxu0 %v9762
  %v9878 = vpop.f32.mrb[0].mxu0
  %v9879 = vadd.f32 0.0, %v9878
  %v9880 = vpop.f32.mrb[0].mxu0
  %9881 = vmatprep.mubr.f32.mxu0 0.0
  %9882 = vmatmul.mubr.f32.gmra.mrb[0].mxu0 %v9764
  %v9883 = vpop.f32.mrb[0].mxu0
  %v9884 = vadd.f32 0.0, %v9883
  %v9885 = vpop.f32.mrb[0].mxu0
  %9886 = vdwg.mxu0
  %v9887 = vmul.f32 %v9849, 0.35355338
  %v9888 = vmul.f32 %v9854, 0.35355338
  %v9889 = vmul.f32 %v9859, 0.35355338
  %v9890 = vmul.f32 %v9864, 0.35355338
  %v9891 = vmul.f32 %v9869, 0.35355338
  %v9892 = vmul.f32 %v9874, 0.35355338
  %v9893 = vmul.f32 %v9879, 0.35355338
  %v9894 = vmul.f32 %v9884, 0.35355338
  %v9895 = vsel %vm6662, %v9887, -inf
  %9896 = vmax.xlane.f32.xlu0 %v9895
  %v9897 = vpop.xlane.xlu0 %9896
  %v9898 = vsel %vm6662, %v9888, -inf
  %9899 = vmax.xlane.f32.xlu0 %v9898
  %v9900 = vpop.xlane.xlu0 %9899
  %v9901 = vsel %vm6662, %v9889, -inf
  %9902 = vmax.xlane.f32.xlu0 %v9901
  %v9903 = vpop.xlane.xlu0 %9902
  %v9904 = vsel %vm6662, %v9890, -inf
  %9905 = vmax.xlane.f32.xlu0 %v9904
  %v9906 = vpop.xlane.xlu0 %9905
  %v9907 = vsel %vm6662, %v9891, -inf
  %9908 = vmax.xlane.f32.xlu0 %v9907
  %v9909 = vpop.xlane.xlu0 %9908
  %v9910 = vsel %vm6662, %v9892, -inf
  %9911 = vmax.xlane.f32.xlu0 %v9910
  %v9912 = vpop.xlane.xlu0 %9911
  %v9913 = vsel %vm6662, %v9893, -inf
  %9914 = vmax.xlane.f32.xlu0 %v9913
  %v9915 = vpop.xlane.xlu0 %9914
  %v9916 = vsel %vm6662, %v9894, -inf
  %9917 = vmax.xlane.f32.xlu0 %v9916
  %v9918 = vpop.xlane.xlu0 %9917
  %v9919 = vsub.f32 %v9887, %v9897
  %v9920 = vsub.f32 %v9888, %v9900
  %v9921 = vsub.f32 %v9889, %v9903
  %v9922 = vsub.f32 %v9890, %v9906
  %v9923 = vsub.f32 %v9891, %v9909
  %v9924 = vsub.f32 %v9892, %v9912
  %v9925 = vsub.f32 %v9893, %v9915
  %v9926 = vsub.f32 %v9894, %v9918
  %v9927 = vmul.f32 %v9919, 1.442695
  %v9928 = vpow.pop %v9927
  %v9929 = vmul.f32 %v9920, 1.442695
  %v9930 = vpow.pop %v9929
  %v9931 = vmul.f32 %v9921, 1.442695
  %v9932 = vpow.pop %v9931
  %v9933 = vmul.f32 %v9922, 1.442695
  %v9934 = vpow.pop %v9933
  %v9935 = vmul.f32 %v9923, 1.442695
  %v9936 = vpow.pop %v9935
  %v9937 = vmul.f32 %v9924, 1.442695
  %v9938 = vpow.pop %v9937
  %v9939 = vmul.f32 %v9925, 1.442695
  %v9940 = vpow.pop %v9939
  %v9941 = vmul.f32 %v9926, 1.442695
  %v9942 = vpow.pop %v9941
  %v9943 = vsel %vm6662, %v9928, 0.0
  %9944 = vadd.xlane.f32.xlu0 %v9943
  %v9945 = vpop.xlane.xlu0 %9944
  %v9946 = vsel %vm6662, %v9930, 0.0
  %9947 = vadd.xlane.f32.xlu0 %v9946
  %v9948 = vpop.xlane.xlu0 %9947
  %v9949 = vsel %vm6662, %v9932, 0.0
  %9950 = vadd.xlane.f32.xlu0 %v9949
  %v9951 = vpop.xlane.xlu0 %9950
  %v9952 = vsel %vm6662, %v9934, 0.0
  %9953 = vadd.xlane.f32.xlu0 %v9952
  %v9954 = vpop.xlane.xlu0 %9953
  %v9955 = vsel %vm6662, %v9936, 0.0
  %9956 = vadd.xlane.f32.xlu0 %v9955
  %v9957 = vpop.xlane.xlu0 %9956
  %v9958 = vsel %vm6662, %v9938, 0.0
  %9959 = vadd.xlane.f32.xlu0 %v9958
  %v9960 = vpop.xlane.xlu0 %9959
  %v9961 = vsel %vm6662, %v9940, 0.0
  %9962 = vadd.xlane.f32.xlu0 %v9961
  %v9963 = vpop.xlane.xlu0 %9962
  %v9964 = vsel %vm6662, %v9942, 0.0
  %9965 = vadd.xlane.f32.xlu0 %v9964
  %v9966 = vpop.xlane.xlu0 %9965
  %v9967 = vrcp.pop %v9945
  %v9968 = vrcp.pop %v9948
  %v9969 = vrcp.pop %v9951
  %v9970 = vrcp.pop %v9954
  %v9971 = vrcp.pop %v9957
  %v9972 = vrcp.pop %v9960
  %v9973 = vrcp.pop %v9963
  %v9974 = vrcp.pop %v9966
  %v9975 = vmul.f32 %v9928, %v9967
  %v9976 = vmul.f32 %v9930, %v9968
  %v9977 = vmul.f32 %v9932, %v9969
  %v9978 = vmul.f32 %v9934, %v9970
  %v9979 = vmul.f32 %v9936, %v9971
  %v9980 = vmul.f32 %v9938, %v9972
  %v9981 = vmul.f32 %v9940, %v9973
  %v9982 = vmul.f32 %v9942, %v9974
  %9983 = vrot.lane.b32.xlu0 %v7066, 48
  %v9984 = vpop.permute.xlu0 %9983
  %9985 = vrot.lane.b32.xlu0 %v7071, 48
  %v9986 = vpop.permute.xlu0 %9985
  %9987 = vrot.lane.b32.xlu0 %v7076, 48
  %v9988 = vpop.permute.xlu0 %9987
  %9989 = vrot.lane.b32.xlu0 %v7081, 48
  %v9990 = vpop.permute.xlu0 %9989
  %9991 = vrot.lane.b32.xlu0 %v7086, 48
  %v9992 = vpop.permute.xlu0 %9991
  %9993 = vrot.lane.b32.xlu0 %v7091, 48
  %v9994 = vpop.permute.xlu0 %9993
  %9995 = vrot.lane.b32.xlu0 %v7096, 48
  %v9996 = vpop.permute.xlu0 %9995
  %9997 = vrot.lane.b32.xlu0 %v7101, 48
  %v9998 = vpop.permute.xlu0 %9997
  %v10008 = vsel %vm6662, %v9975, 0
  %v10011 = vsel %vm6662, %v9976, 0
  %v10014 = vsel %vm6662, %v9977, 0
  %v10017 = vsel %vm6662, %v9978, 0
  %v10020 = vsel %vm6662, %v9979, 0
  %v10023 = vsel %vm6662, %v9980, 0
  %v10026 = vsel %vm6662, %v9981, 0
  %v10029 = vsel %vm6662, %v9982, 0
  %10031 = vmatprep.subr.mxu0 0.0
  %10032 = vmatpush1.msra.mxu0 %v9984
  %10033 = vmatprep.subr.mxu0 0.0
  %10034 = vmatpush1.msra.mxu0 %v9986
  %10035 = vmatprep.subr.mxu0 0.0
  %10036 = vmatpush1.msra.mxu0 %v9988
  %10037 = vmatprep.subr.mxu0 0.0
  %10038 = vmatpush1.msra.mxu0 %v9990
  %10039 = vmatprep.subr.mxu0 0.0
  %10040 = vmatpush1.msra.mxu0 %v9992
  %10041 = vmatprep.subr.mxu0 0.0
  %10042 = vmatpush1.msra.mxu0 %v9994
  %10043 = vmatprep.subr.mxu0 0.0
  %10044 = vmatpush1.msra.mxu0 %v9996
  %10045 = vmatprep.subr.mxu0 0.0
  %10046 = vmatpush1.msra.mxu0 %v9998
  %10047 = vmatprep.subr.mxu0 0.0
  %10048 = vmatpush1.msra.mxu0 0.0
  %10049 = vmatprep.subr.mxu0 0.0
  %10050 = vmatpush1.msra.mxu0 0.0
  %10051 = vmatprep.subr.mxu0 0.0
  %10052 = vmatpush1.msra.mxu0 0.0
  %10053 = vmatprep.subr.mxu0 0.0
  %10054 = vmatpush1.msra.mxu0 0.0
  %10055 = vmatprep.subr.mxu0 0.0
  %10056 = vmatpush1.msra.mxu0 0.0
  %10057 = vmatprep.subr.mxu0 0.0
  %10058 = vmatpush1.msra.mxu0 0.0
  %10059 = vmatprep.subr.mxu0 0.0
  %10060 = vmatpush1.msra.mxu0 0.0
  %10061 = vmatprep.subr.mxu0 0.0
  %10062 = vmatpush1.msra.mxu0 0.0
  %10063 = vmatprep.subr.mxu0 0.0
  %10064 = vmatpush1.msra.mxu0 0.0
  %10065 = vmatprep.subr.mxu0 0.0
  %10066 = vmatpush1.msra.mxu0 0.0
  %10067 = vmatprep.subr.mxu0 0.0
  %10068 = vmatpush1.msra.mxu0 0.0
  %10069 = vmatprep.subr.mxu0 0.0
  %10070 = vmatpush1.msra.mxu0 0.0
  %10071 = vmatprep.subr.mxu0 0.0
  %10072 = vmatpush1.msra.mxu0 0.0
  %10073 = vmatprep.subr.mxu0 0.0
  %10074 = vmatpush1.msra.mxu0 0.0
  %10075 = vmatprep.subr.mxu0 0.0
  %10076 = vmatpush1.msra.mxu0 0.0
  %10077 = vmatprep.subr.mxu0 0.0
  %10078 = vmatpush1.msra.mxu0 0.0
  %10079 = vmatprep.subr.mxu0 0.0
  %10080 = vmatpush1.msra.mxu0 0.0
  %10081 = vmatprep.subr.mxu0 0.0
  %10082 = vmatpush1.msra.mxu0 0.0
  %10083 = vmatprep.subr.mxu0 0.0
  %10084 = vmatpush1.msra.mxu0 0.0
  %10085 = vmatprep.subr.mxu0 0.0
  %10086 = vmatpush1.msra.mxu0 0.0
  %10087 = vmatprep.subr.mxu0 0.0
  %10088 = vmatpush1.msra.mxu0 0.0
  %10089 = vmatprep.subr.mxu0 0.0
  %10090 = vmatpush1.msra.mxu0 0.0
  %10091 = vmatprep.subr.mxu0 0.0
  %10092 = vmatpush1.msra.mxu0 0.0
  %10093 = vmatprep.subr.mxu0 0.0
  %10094 = vmatpush1.msra.mxu0 0.0
  %10095 = vmatprep.mubr.f32.mxu0 0.0
  %10096 = vmatmul.mubr.f32.gmra.mrb[0].mxu0 %v10008
  %v10097 = vpop.f32.mrb[0].mxu0
  %v10098 = vadd.f32 0.0, %v10097
  %v10099 = vpop.f32.mrb[0].mxu0
  %10100 = vmatprep.mubr.f32.mxu0 0.0
  %10101 = vmatmul.mubr.f32.gmra.mrb[0].mxu0 %v10011
  %v10102 = vpop.f32.mrb[0].mxu0
  %v10103 = vadd.f32 0.0, %v10102
  %v10104 = vpop.f32.mrb[0].mxu0
  %10105 = vmatprep.mubr.f32.mxu0 0.0
  %10106 = vmatmul.mubr.f32.gmra.mrb[0].mxu0 %v10014
  %v10107 = vpop.f32.mrb[0].mxu0
  %v10108 = vadd.f32 0.0, %v10107
  %v10109 = vpop.f32.mrb[0].mxu0
  %10110 = vmatprep.mubr.f32.mxu0 0.0
  %10111 = vmatmul.mubr.f32.gmra.mrb[0].mxu0 %v10017
  %v10112 = vpop.f32.mrb[0].mxu0
  %v10113 = vadd.f32 0.0, %v10112
  %v10114 = vpop.f32.mrb[0].mxu0
  %10115 = vmatprep.mubr.f32.mxu0 0.0
  %10116 = vmatmul.mubr.f32.gmra.mrb[0].mxu0 %v10020
  %v10117 = vpop.f32.mrb[0].mxu0
  %v10118 = vadd.f32 0.0, %v10117
  %v10119 = vpop.f32.mrb[0].mxu0
  %10120 = vmatprep.mubr.f32.mxu0 0.0
  %10121 = vmatmul.mubr.f32.gmra.mrb[0].mxu0 %v10023
  %v10122 = vpop.f32.mrb[0].mxu0
  %v10123 = vadd.f32 0.0, %v10122
  %v10124 = vpop.f32.mrb[0].mxu0
  %10125 = vmatprep.mubr.f32.mxu0 0.0
  %10126 = vmatmul.mubr.f32.gmra.mrb[0].mxu0 %v10026
  %v10127 = vpop.f32.mrb[0].mxu0
  %v10128 = vadd.f32 0.0, %v10127
  %v10129 = vpop.f32.mrb[0].mxu0
  %10130 = vmatprep.mubr.f32.mxu0 0.0
  %10131 = vmatmul.mubr.f32.gmra.mrb[0].mxu0 %v10029
  %v10132 = vpop.f32.mrb[0].mxu0
  %v10133 = vadd.f32 0.0, %v10132
  %v10134 = vpop.f32.mrb[0].mxu0
  %10135 = vdwg.mxu0
  %10136 = vrot.lane.b32.xlu0 %v7066, 104
  %v10137 = vpop.permute.xlu0 %10136
  %10138 = vrot.lane.b32.xlu0 %v7071, 104
  %v10139 = vpop.permute.xlu0 %10138
  %10140 = vrot.lane.b32.xlu0 %v7076, 104
  %v10141 = vpop.permute.xlu0 %10140
  %10142 = vrot.lane.b32.xlu0 %v7081, 104
  %v10143 = vpop.permute.xlu0 %10142
  %10144 = vrot.lane.b32.xlu0 %v7086, 104
  %v10145 = vpop.permute.xlu0 %10144
  %10146 = vrot.lane.b32.xlu0 %v7091, 104
  %v10147 = vpop.permute.xlu0 %10146
  %10148 = vrot.lane.b32.xlu0 %v7096, 104
  %v10149 = vpop.permute.xlu0 %10148
  %10150 = vrot.lane.b32.xlu0 %v7101, 104
  %v10151 = vpop.permute.xlu0 %10150
  %10152 = vrot.lane.b32.xlu0 %v7066, 72
  %v10153 = vpop.permute.xlu0 %10152
  %10154 = vrot.lane.b32.xlu0 %v7071, 72
  %v10155 = vpop.permute.xlu0 %10154
  %10156 = vrot.lane.b32.xlu0 %v7076, 72
  %v10157 = vpop.permute.xlu0 %10156
  %10158 = vrot.lane.b32.xlu0 %v7081, 72
  %v10159 = vpop.permute.xlu0 %10158
  %10160 = vrot.lane.b32.xlu0 %v7086, 72
  %v10161 = vpop.permute.xlu0 %10160
  %10162 = vrot.lane.b32.xlu0 %v7091, 72
  %v10163 = vpop.permute.xlu0 %10162
  %10164 = vrot.lane.b32.xlu0 %v7096, 72
  %v10165 = vpop.permute.xlu0 %10164
  %10166 = vrot.lane.b32.xlu0 %v7101, 72
  %v10167 = vpop.permute.xlu0 %10166
  %v10168 = vsel %vm7128, %v10137, 0
  %v10170 = vsel %vm7128, %v10139, 0
  %v10172 = vsel %vm7128, %v10141, 0
  %v10174 = vsel %vm7128, %v10143, 0
  %v10176 = vsel %vm7128, %v10145, 0
  %v10178 = vsel %vm7128, %v10147, 0
  %v10180 = vsel %vm7128, %v10149, 0
  %v10182 = vsel %vm7128, %v10151, 0
  %v10184 = vsel %vm7128, %v10153, 0
  %v10186 = vsel %vm7128, %v10155, 0
  %v10188 = vsel %vm7128, %v10157, 0
  %v10190 = vsel %vm7128, %v10159, 0
  %v10192 = vsel %vm7128, %v10161, 0
  %v10194 = vsel %vm7128, %v10163, 0
  %v10196 = vsel %vm7128, %v10165, 0
  %v10198 = vsel %vm7128, %v10167, 0
  %10200 = vmatprep.subr.mxu0 0.0
  %10201 = vmatpush1.xpose.msra.mxu0 %v10184
  %10202 = vmatprep.subr.mxu0 0.0
  %10203 = vmatpush1.xpose.msra.mxu0 %v10186
  %10204 = vmatprep.subr.mxu0 0.0
  %10205 = vmatpush1.xpose.msra.mxu0 %v10188
  %10206 = vmatprep.subr.mxu0 0.0
  %10207 = vmatpush1.xpose.msra.mxu0 %v10190
  %10208 = vmatprep.subr.mxu0 0.0
  %10209 = vmatpush1.xpose.msra.mxu0 %v10192
  %10210 = vmatprep.subr.mxu0 0.0
  %10211 = vmatpush1.xpose.msra.mxu0 %v10194
  %10212 = vmatprep.subr.mxu0 0.0
  %10213 = vmatpush1.xpose.msra.mxu0 %v10196
  %10214 = vmatprep.subr.mxu0 0.0
  %10215 = vmatpush1.xpose.msra.mxu0 %v10198
  %10216 = vmatprep.subr.mxu0 0.0
  %10217 = vmatpush1.xpose.msra.mxu0 0.0
  %10218 = vmatprep.subr.mxu0 0.0
  %10219 = vmatpush1.xpose.msra.mxu0 0.0
  %10220 = vmatprep.subr.mxu0 0.0
  %10221 = vmatpush1.xpose.msra.mxu0 0.0
  %10222 = vmatprep.subr.mxu0 0.0
  %10223 = vmatpush1.xpose.msra.mxu0 0.0
  %10224 = vmatprep.subr.mxu0 0.0
  %10225 = vmatpush1.xpose.msra.mxu0 0.0
  %10226 = vmatprep.subr.mxu0 0.0
  %10227 = vmatpush1.xpose.msra.mxu0 0.0
  %10228 = vmatprep.subr.mxu0 0.0
  %10229 = vmatpush1.xpose.msra.mxu0 0.0
  %10230 = vmatprep.subr.mxu0 0.0
  %10231 = vmatpush1.xpose.msra.mxu0 0.0
  %10232 = vmatprep.subr.mxu0 0.0
  %10233 = vmatpush1.xpose.msra.mxu0 0.0
  %10234 = vmatprep.subr.mxu0 0.0
  %10235 = vmatpush1.xpose.msra.mxu0 0.0
  %10236 = vmatprep.subr.mxu0 0.0
  %10237 = vmatpush1.xpose.msra.mxu0 0.0
  %10238 = vmatprep.subr.mxu0 0.0
  %10239 = vmatpush1.xpose.msra.mxu0 0.0
  %10240 = vmatprep.subr.mxu0 0.0
  %10241 = vmatpush1.xpose.msra.mxu0 0.0
  %10242 = vmatprep.subr.mxu0 0.0
  %10243 = vmatpush1.xpose.msra.mxu0 0.0
  %10244 = vmatprep.subr.mxu0 0.0
  %10245 = vmatpush1.xpose.msra.mxu0 0.0
  %10246 = vmatprep.subr.mxu0 0.0
  %10247 = vmatpush1.xpose.msra.mxu0 0.0
  %10248 = vmatprep.subr.mxu0 0.0
  %10249 = vmatpush1.xpose.msra.mxu0 0.0
  %10250 = vmatprep.subr.mxu0 0.0
  %10251 = vmatpush1.xpose.msra.mxu0 0.0
  %10252 = vmatprep.subr.mxu0 0.0
  %10253 = vmatpush1.xpose.msra.mxu0 0.0
  %10254 = vmatprep.subr.mxu0 0.0
  %10255 = vmatpush1.xpose.msra.mxu0 0.0
  %10256 = vmatprep.subr.mxu0 0.0
  %10257 = vmatpush1.xpose.msra.mxu0 0.0
  %10258 = vmatprep.subr.mxu0 0.0
  %10259 = vmatpush1.xpose.msra.mxu0 0.0
  %10260 = vmatprep.subr.mxu0 0.0
  %10261 = vmatpush1.xpose.msra.mxu0 0.0
  %10262 = vmatprep.subr.mxu0 0.0
  %10263 = vmatpush1.xpose.msra.mxu0 0.0
  %10264 = vmatprep.mubr.f32.mxu0 0.0
  %10265 = vmatmul.mubr.f32.gmra.mrb[0].mxu0 %v10168
  %v10266 = vpop.f32.mrb[0].mxu0
  %v10267 = vadd.f32 0.0, %v10266
  %v10268 = vpop.f32.mrb[0].mxu0
  %10269 = vmatprep.mubr.f32.mxu0 0.0
  %10270 = vmatmul.mubr.f32.gmra.mrb[0].mxu0 %v10170
  %v10271 = vpop.f32.mrb[0].mxu0
  %v10272 = vadd.f32 0.0, %v10271
  %v10273 = vpop.f32.mrb[0].mxu0
  %10274 = vmatprep.mubr.f32.mxu0 0.0
  %10275 = vmatmul.mubr.f32.gmra.mrb[0].mxu0 %v10172
  %v10276 = vpop.f32.mrb[0].mxu0
  %v10277 = vadd.f32 0.0, %v10276
  %v10278 = vpop.f32.mrb[0].mxu0
  %10279 = vmatprep.mubr.f32.mxu0 0.0
  %10280 = vmatmul.mubr.f32.gmra.mrb[0].mxu0 %v10174
  %v10281 = vpop.f32.mrb[0].mxu0
  %v10282 = vadd.f32 0.0, %v10281
  %v10283 = vpop.f32.mrb[0].mxu0
  %10284 = vmatprep.mubr.f32.mxu0 0.0
  %10285 = vmatmul.mubr.f32.gmra.mrb[0].mxu0 %v10176
  %v10286 = vpop.f32.mrb[0].mxu0
  %v10287 = vadd.f32 0.0, %v10286
  %v10288 = vpop.f32.mrb[0].mxu0
  %10289 = vmatprep.mubr.f32.mxu0 0.0
  %10290 = vmatmul.mubr.f32.gmra.mrb[0].mxu0 %v10178
  %v10291 = vpop.f32.mrb[0].mxu0
  %v10292 = vadd.f32 0.0, %v10291
  %v10293 = vpop.f32.mrb[0].mxu0
  %10294 = vmatprep.mubr.f32.mxu0 0.0
  %10295 = vmatmul.mubr.f32.gmra.mrb[0].mxu0 %v10180
  %v10296 = vpop.f32.mrb[0].mxu0
  %v10297 = vadd.f32 0.0, %v10296
  %v10298 = vpop.f32.mrb[0].mxu0
  %10299 = vmatprep.mubr.f32.mxu0 0.0
  %10300 = vmatmul.mubr.f32.gmra.mrb[0].mxu0 %v10182
  %v10301 = vpop.f32.mrb[0].mxu0
  %v10302 = vadd.f32 0.0, %v10301
  %v10303 = vpop.f32.mrb[0].mxu0
  %10304 = vdwg.mxu0
  %v10305 = vmul.f32 %v10267, 0.35355338
  %v10306 = vmul.f32 %v10272, 0.35355338
  %v10307 = vmul.f32 %v10277, 0.35355338
  %v10308 = vmul.f32 %v10282, 0.35355338
  %v10309 = vmul.f32 %v10287, 0.35355338
  %v10310 = vmul.f32 %v10292, 0.35355338
  %v10311 = vmul.f32 %v10297, 0.35355338
  %v10312 = vmul.f32 %v10302, 0.35355338
  %v10313 = vsel %vm6662, %v10305, -inf
  %10314 = vmax.xlane.f32.xlu0 %v10313
  %v10315 = vpop.xlane.xlu0 %10314
  %v10316 = vsel %vm6662, %v10306, -inf
  %10317 = vmax.xlane.f32.xlu0 %v10316
  %v10318 = vpop.xlane.xlu0 %10317
  %v10319 = vsel %vm6662, %v10307, -inf
  %10320 = vmax.xlane.f32.xlu0 %v10319
  %v10321 = vpop.xlane.xlu0 %10320
  %v10322 = vsel %vm6662, %v10308, -inf
  %10323 = vmax.xlane.f32.xlu0 %v10322
  %v10324 = vpop.xlane.xlu0 %10323
  %v10325 = vsel %vm6662, %v10309, -inf
  %10326 = vmax.xlane.f32.xlu0 %v10325
  %v10327 = vpop.xlane.xlu0 %10326
  %v10328 = vsel %vm6662, %v10310, -inf
  %10329 = vmax.xlane.f32.xlu0 %v10328
  %v10330 = vpop.xlane.xlu0 %10329
  %v10331 = vsel %vm6662, %v10311, -inf
  %10332 = vmax.xlane.f32.xlu0 %v10331
  %v10333 = vpop.xlane.xlu0 %10332
  %v10334 = vsel %vm6662, %v10312, -inf
  %10335 = vmax.xlane.f32.xlu0 %v10334
  %v10336 = vpop.xlane.xlu0 %10335
  %v10337 = vsub.f32 %v10305, %v10315
  %v10338 = vsub.f32 %v10306, %v10318
  %v10339 = vsub.f32 %v10307, %v10321
  %v10340 = vsub.f32 %v10308, %v10324
  %v10341 = vsub.f32 %v10309, %v10327
  %v10342 = vsub.f32 %v10310, %v10330
  %v10343 = vsub.f32 %v10311, %v10333
  %v10344 = vsub.f32 %v10312, %v10336
  %v10345 = vmul.f32 %v10337, 1.442695
  %v10346 = vpow.pop %v10345
  %v10347 = vmul.f32 %v10338, 1.442695
  %v10348 = vpow.pop %v10347
  %v10349 = vmul.f32 %v10339, 1.442695
  %v10350 = vpow.pop %v10349
  %v10351 = vmul.f32 %v10340, 1.442695
  %v10352 = vpow.pop %v10351
  %v10353 = vmul.f32 %v10341, 1.442695
  %v10354 = vpow.pop %v10353
  %v10355 = vmul.f32 %v10342, 1.442695
  %v10356 = vpow.pop %v10355
  %v10357 = vmul.f32 %v10343, 1.442695
  %v10358 = vpow.pop %v10357
  %v10359 = vmul.f32 %v10344, 1.442695
  %v10360 = vpow.pop %v10359
  %v10361 = vsel %vm6662, %v10346, 0.0
  %10362 = vadd.xlane.f32.xlu0 %v10361
  %v10363 = vpop.xlane.xlu0 %10362
  %v10364 = vsel %vm6662, %v10348, 0.0
  %10365 = vadd.xlane.f32.xlu0 %v10364
  %v10366 = vpop.xlane.xlu0 %10365
  %v10367 = vsel %vm6662, %v10350, 0.0
  %10368 = vadd.xlane.f32.xlu0 %v10367
  %v10369 = vpop.xlane.xlu0 %10368
  %v10370 = vsel %vm6662, %v10352, 0.0
  %10371 = vadd.xlane.f32.xlu0 %v10370
  %v10372 = vpop.xlane.xlu0 %10371
  %v10373 = vsel %vm6662, %v10354, 0.0
  %10374 = vadd.xlane.f32.xlu0 %v10373
  %v10375 = vpop.xlane.xlu0 %10374
  %v10376 = vsel %vm6662, %v10356, 0.0
  %10377 = vadd.xlane.f32.xlu0 %v10376
  %v10378 = vpop.xlane.xlu0 %10377
  %v10379 = vsel %vm6662, %v10358, 0.0
  %10380 = vadd.xlane.f32.xlu0 %v10379
  %v10381 = vpop.xlane.xlu0 %10380
  %v10382 = vsel %vm6662, %v10360, 0.0
  %10383 = vadd.xlane.f32.xlu0 %v10382
  %v10384 = vpop.xlane.xlu0 %10383
  %v10385 = vrcp.pop %v10363
  %v10386 = vrcp.pop %v10366
  %v10387 = vrcp.pop %v10369
  %v10388 = vrcp.pop %v10372
  %v10389 = vrcp.pop %v10375
  %v10390 = vrcp.pop %v10378
  %v10391 = vrcp.pop %v10381
  %v10392 = vrcp.pop %v10384
  %v10393 = vmul.f32 %v10346, %v10385
  %v10394 = vmul.f32 %v10348, %v10386
  %v10395 = vmul.f32 %v10350, %v10387
  %v10396 = vmul.f32 %v10352, %v10388
  %v10397 = vmul.f32 %v10354, %v10389
  %v10398 = vmul.f32 %v10356, %v10390
  %v10399 = vmul.f32 %v10358, %v10391
  %v10400 = vmul.f32 %v10360, %v10392
  %10401 = vrot.lane.b32.xlu0 %v7066, 40
  %v10402 = vpop.permute.xlu0 %10401
  %10403 = vrot.lane.b32.xlu0 %v7071, 40
  %v10404 = vpop.permute.xlu0 %10403
  %10405 = vrot.lane.b32.xlu0 %v7076, 40
  %v10406 = vpop.permute.xlu0 %10405
  %10407 = vrot.lane.b32.xlu0 %v7081, 40
  %v10408 = vpop.permute.xlu0 %10407
  %10409 = vrot.lane.b32.xlu0 %v7086, 40
  %v10410 = vpop.permute.xlu0 %10409
  %10411 = vrot.lane.b32.xlu0 %v7091, 40
  %v10412 = vpop.permute.xlu0 %10411
  %10413 = vrot.lane.b32.xlu0 %v7096, 40
  %v10414 = vpop.permute.xlu0 %10413
  %10415 = vrot.lane.b32.xlu0 %v7101, 40
  %v10416 = vpop.permute.xlu0 %10415
  %v10426 = vsel %vm6662, %v10393, 0
  %v10429 = vsel %vm6662, %v10394, 0
  %v10432 = vsel %vm6662, %v10395, 0
  %v10435 = vsel %vm6662, %v10396, 0
  %v10438 = vsel %vm6662, %v10397, 0
  %v10441 = vsel %vm6662, %v10398, 0
  %v10444 = vsel %vm6662, %v10399, 0
  %v10447 = vsel %vm6662, %v10400, 0
  %10449 = vmatprep.subr.mxu0 0.0
  %10450 = vmatpush1.msra.mxu0 %v10402
  %10451 = vmatprep.subr.mxu0 0.0
  %10452 = vmatpush1.msra.mxu0 %v10404
  %10453 = vmatprep.subr.mxu0 0.0
  %10454 = vmatpush1.msra.mxu0 %v10406
  %10455 = vmatprep.subr.mxu0 0.0
  %10456 = vmatpush1.msra.mxu0 %v10408
  %10457 = vmatprep.subr.mxu0 0.0
  %10458 = vmatpush1.msra.mxu0 %v10410
  %10459 = vmatprep.subr.mxu0 0.0
  %10460 = vmatpush1.msra.mxu0 %v10412
  %10461 = vmatprep.subr.mxu0 0.0
  %10462 = vmatpush1.msra.mxu0 %v10414
  %10463 = vmatprep.subr.mxu0 0.0
  %10464 = vmatpush1.msra.mxu0 %v10416
  %10465 = vmatprep.subr.mxu0 0.0
  %10466 = vmatpush1.msra.mxu0 0.0
  %10467 = vmatprep.subr.mxu0 0.0
  %10468 = vmatpush1.msra.mxu0 0.0
  %10469 = vmatprep.subr.mxu0 0.0
  %10470 = vmatpush1.msra.mxu0 0.0
  %10471 = vmatprep.subr.mxu0 0.0
  %10472 = vmatpush1.msra.mxu0 0.0
  %10473 = vmatprep.subr.mxu0 0.0
  %10474 = vmatpush1.msra.mxu0 0.0
  %10475 = vmatprep.subr.mxu0 0.0
  %10476 = vmatpush1.msra.mxu0 0.0
  %10477 = vmatprep.subr.mxu0 0.0
  %10478 = vmatpush1.msra.mxu0 0.0
  %10479 = vmatprep.subr.mxu0 0.0
  %10480 = vmatpush1.msra.mxu0 0.0
  %10481 = vmatprep.subr.mxu0 0.0
  %10482 = vmatpush1.msra.mxu0 0.0
  %10483 = vmatprep.subr.mxu0 0.0
  %10484 = vmatpush1.msra.mxu0 0.0
  %10485 = vmatprep.subr.mxu0 0.0
  %10486 = vmatpush1.msra.mxu0 0.0
  %10487 = vmatprep.subr.mxu0 0.0
  %10488 = vmatpush1.msra.mxu0 0.0
  %10489 = vmatprep.subr.mxu0 0.0
  %10490 = vmatpush1.msra.mxu0 0.0
  %10491 = vmatprep.subr.mxu0 0.0
  %10492 = vmatpush1.msra.mxu0 0.0
  %10493 = vmatprep.subr.mxu0 0.0
  %10494 = vmatpush1.msra.mxu0 0.0
  %10495 = vmatprep.subr.mxu0 0.0
  %10496 = vmatpush1.msra.mxu0 0.0
  %10497 = vmatprep.subr.mxu0 0.0
  %10498 = vmatpush1.msra.mxu0 0.0
  %10499 = vmatprep.subr.mxu0 0.0
  %10500 = vmatpush1.msra.mxu0 0.0
  %10501 = vmatprep.subr.mxu0 0.0
  %10502 = vmatpush1.msra.mxu0 0.0
  %10503 = vmatprep.subr.mxu0 0.0
  %10504 = vmatpush1.msra.mxu0 0.0
  %10505 = vmatprep.subr.mxu0 0.0
  %10506 = vmatpush1.msra.mxu0 0.0
  %10507 = vmatprep.subr.mxu0 0.0
  %10508 = vmatpush1.msra.mxu0 0.0
  %10509 = vmatprep.subr.mxu0 0.0
  %10510 = vmatpush1.msra.mxu0 0.0
  %10511 = vmatprep.subr.mxu0 0.0
  %10512 = vmatpush1.msra.mxu0 0.0
  %10513 = vmatprep.mubr.f32.mxu0 0.0
  %10514 = vmatmul.mubr.f32.gmra.mrb[0].mxu0 %v10426
  %v10515 = vpop.f32.mrb[0].mxu0
  %v10516 = vadd.f32 0.0, %v10515
  %v10517 = vpop.f32.mrb[0].mxu0
  %10518 = vmatprep.mubr.f32.mxu0 0.0
  %10519 = vmatmul.mubr.f32.gmra.mrb[0].mxu0 %v10429
  %v10520 = vpop.f32.mrb[0].mxu0
  %v10521 = vadd.f32 0.0, %v10520
  %v10522 = vpop.f32.mrb[0].mxu0
  %10523 = vmatprep.mubr.f32.mxu0 0.0
  %10524 = vmatmul.mubr.f32.gmra.mrb[0].mxu0 %v10432
  %v10525 = vpop.f32.mrb[0].mxu0
  %v10526 = vadd.f32 0.0, %v10525
  %v10527 = vpop.f32.mrb[0].mxu0
  %10528 = vmatprep.mubr.f32.mxu0 0.0
  %10529 = vmatmul.mubr.f32.gmra.mrb[0].mxu0 %v10435
  %v10530 = vpop.f32.mrb[0].mxu0
  %v10531 = vadd.f32 0.0, %v10530
  %v10532 = vpop.f32.mrb[0].mxu0
  %10533 = vmatprep.mubr.f32.mxu0 0.0
  %10534 = vmatmul.mubr.f32.gmra.mrb[0].mxu0 %v10438
  %v10535 = vpop.f32.mrb[0].mxu0
  %v10536 = vadd.f32 0.0, %v10535
  %v10537 = vpop.f32.mrb[0].mxu0
  %10538 = vmatprep.mubr.f32.mxu0 0.0
  %10539 = vmatmul.mubr.f32.gmra.mrb[0].mxu0 %v10441
  %v10540 = vpop.f32.mrb[0].mxu0
  %v10541 = vadd.f32 0.0, %v10540
  %v10542 = vpop.f32.mrb[0].mxu0
  %10543 = vmatprep.mubr.f32.mxu0 0.0
  %10544 = vmatmul.mubr.f32.gmra.mrb[0].mxu0 %v10444
  %v10545 = vpop.f32.mrb[0].mxu0
  %v10546 = vadd.f32 0.0, %v10545
  %v10547 = vpop.f32.mrb[0].mxu0
  %10548 = vmatprep.mubr.f32.mxu0 0.0
  %10549 = vmatmul.mubr.f32.gmra.mrb[0].mxu0 %v10447
  %v10550 = vpop.f32.mrb[0].mxu0
  %v10551 = vadd.f32 0.0, %v10550
  %v10552 = vpop.f32.mrb[0].mxu0
  %10553 = vdwg.mxu0
  %10562 = vrot.lane.b32.xlu0 %v9680, 8
  %v10563 = vpop.permute.xlu0 %10562
  %10564 = vrot.lane.b32.xlu0 %v9685, 8
  %v10565 = vpop.permute.xlu0 %10564
  %10566 = vrot.lane.b32.xlu0 %v9690, 8
  %v10567 = vpop.permute.xlu0 %10566
  %10568 = vrot.lane.b32.xlu0 %v9695, 8
  %v10569 = vpop.permute.xlu0 %10568
  %10570 = vrot.lane.b32.xlu0 %v9700, 8
  %v10571 = vpop.permute.xlu0 %10570
  %10572 = vrot.lane.b32.xlu0 %v9705, 8
  %v10573 = vpop.permute.xlu0 %10572
  %10574 = vrot.lane.b32.xlu0 %v9710, 8
  %v10575 = vpop.permute.xlu0 %10574
  %10576 = vrot.lane.b32.xlu0 %v9715, 8
  %v10577 = vpop.permute.xlu0 %10576
  %10594 = vrot.lane.b32.xlu0 %v10098, 16
  %v10595 = vpop.permute.xlu0 %10594
  %10596 = vrot.lane.b32.xlu0 %v10103, 16
  %v10597 = vpop.permute.xlu0 %10596
  %10598 = vrot.lane.b32.xlu0 %v10108, 16
  %v10599 = vpop.permute.xlu0 %10598
  %10600 = vrot.lane.b32.xlu0 %v10113, 16
  %v10601 = vpop.permute.xlu0 %10600
  %10602 = vrot.lane.b32.xlu0 %v10118, 16
  %v10603 = vpop.permute.xlu0 %10602
  %10604 = vrot.lane.b32.xlu0 %v10123, 16
  %v10605 = vpop.permute.xlu0 %10604
  %10606 = vrot.lane.b32.xlu0 %v10128, 16
  %v10607 = vpop.permute.xlu0 %10606
  %10608 = vrot.lane.b32.xlu0 %v10133, 16
  %v10609 = vpop.permute.xlu0 %10608
  %10626 = vrot.lane.b32.xlu0 %v10516, 24
  %v10627 = vpop.permute.xlu0 %10626
  %10628 = vrot.lane.b32.xlu0 %v10521, 24
  %v10629 = vpop.permute.xlu0 %10628
  %10630 = vrot.lane.b32.xlu0 %v10526, 24
  %v10631 = vpop.permute.xlu0 %10630
  %10632 = vrot.lane.b32.xlu0 %v10531, 24
  %v10633 = vpop.permute.xlu0 %10632
  %10634 = vrot.lane.b32.xlu0 %v10536, 24
  %v10635 = vpop.permute.xlu0 %10634
  %10636 = vrot.lane.b32.xlu0 %v10541, 24
  %v10637 = vpop.permute.xlu0 %10636
  %10638 = vrot.lane.b32.xlu0 %v10546, 24
  %v10639 = vpop.permute.xlu0 %10638
  %10640 = vrot.lane.b32.xlu0 %v10551, 24
  %v10641 = vpop.permute.xlu0 %10640
  %v10650 = vsel %vm7128, %v9262, %v10563
  %v10651 = vsel %vm7128, %v9267, %v10565
  %v10652 = vsel %vm7128, %v9272, %v10567
  %v10653 = vsel %vm7128, %v9277, %v10569
  %v10654 = vsel %vm7128, %v9282, %v10571
  %v10655 = vsel %vm7128, %v9287, %v10573
  %v10656 = vsel %vm7128, %v9292, %v10575
  %v10657 = vsel %vm7128, %v9297, %v10577
  %v10658 = vsel %vm246, %v10650, %v10595
  %v10659 = vsel %vm246, %v10651, %v10597
  %v10660 = vsel %vm246, %v10652, %v10599
  %v10661 = vsel %vm246, %v10653, %v10601
  %v10662 = vsel %vm246, %v10654, %v10603
  %v10663 = vsel %vm246, %v10655, %v10605
  %v10664 = vsel %vm246, %v10656, %v10607
  %v10665 = vsel %vm246, %v10657, %v10609
  %v10666 = vsel %vm8881, %v10658, %v10627
  %v10667 = vsel %vm8881, %v10659, %v10629
  %v10668 = vsel %vm8881, %v10660, %v10631
  %v10669 = vsel %vm8881, %v10661, %v10633
  %v10670 = vsel %vm8881, %v10662, %v10635
  %v10671 = vsel %vm8881, %v10663, %v10637
  %v10672 = vsel %vm8881, %v10664, %v10639
  %v10673 = vsel %vm8881, %v10665, %v10641
  %v10674 = vld [vmem:[%s37] sm:$0xff]
  %v10675 = vld [vmem:[%s37 + $0x8] sm:$0xff]
  %v10676 = vld [vmem:[%s37 + $0x10] sm:$0xff]
  %v10677 = vld [vmem:[%s37 + $0x18] sm:$0xff]
  %v10678 = vld [vmem:[%s39] sm:$0x1]
  %v10680 = vlaneseq
  %v10681 = vshrl.u32 %v10680, 7
  %v10682 = vsub.s32 0, %v10681
  %v10683 = vrot.slane %v10678, %v10682
  %v10686 = vsel %vm2167, %v8882, 0
  %v10689 = vsel %vm2167, %v8883, 0
  %v10692 = vsel %vm2167, %v8884, 0
  %v10695 = vsel %vm2167, %v8885, 0
  %v10698 = vsel %vm2167, %v8886, 0
  %v10701 = vsel %vm2167, %v8887, 0
  %v10704 = vsel %vm2167, %v8888, 0
  %v10707 = vsel %vm2167, %v8889, 0
  %v10710 = vsel %vm2167, %v10666, 0
  %v10713 = vsel %vm2167, %v10667, 0
  %v10716 = vsel %vm2167, %v10668, 0
  %v10719 = vsel %vm2167, %v10669, 0
  %v10722 = vsel %vm2167, %v10670, 0
  %v10725 = vsel %vm2167, %v10671, 0
  %v10728 = vsel %vm2167, %v10672, 0
  %v10731 = vsel %vm2167, %v10673, 0
  %10733 = vmatprep.subr.mxu0 0.0
  %10734 = vmatpush1.msra.mxu0 %v10674
  %10735 = vmatprep.subr.mxu0 0.0
  %10736 = vmatpush1.msra.mxu0 %v10675
  %10737 = vmatprep.subr.mxu0 0.0
  %10738 = vmatpush1.msra.mxu0 %v10676
  %10739 = vmatprep.subr.mxu0 0.0
  %10740 = vmatpush1.msra.mxu0 %v10677
  %10741 = vmatprep.subr.mxu0 0.0
  %10742 = vmatpush1.msra.mxu0 0.0
  %10743 = vmatprep.subr.mxu0 0.0
  %10744 = vmatpush1.msra.mxu0 0.0
  %10745 = vmatprep.subr.mxu0 0.0
  %10746 = vmatpush1.msra.mxu0 0.0
  %10747 = vmatprep.subr.mxu0 0.0
  %10748 = vmatpush1.msra.mxu0 0.0
  %10749 = vmatprep.subr.mxu0 0.0
  %10750 = vmatpush1.msra.mxu0 0.0
  %10751 = vmatprep.subr.mxu0 0.0
  %10752 = vmatpush1.msra.mxu0 0.0
  %10753 = vmatprep.subr.mxu0 0.0
  %10754 = vmatpush1.msra.mxu0 0.0
  %10755 = vmatprep.subr.mxu0 0.0
  %10756 = vmatpush1.msra.mxu0 0.0
  %10757 = vmatprep.subr.mxu0 0.0
  %10758 = vmatpush1.msra.mxu0 0.0
  %10759 = vmatprep.subr.mxu0 0.0
  %10760 = vmatpush1.msra.mxu0 0.0
  %10761 = vmatprep.subr.mxu0 0.0
  %10762 = vmatpush1.msra.mxu0 0.0
  %10763 = vmatprep.subr.mxu0 0.0
  %10764 = vmatpush1.msra.mxu0 0.0
  %10765 = vmatprep.subr.mxu0 0.0
  %10766 = vmatpush1.msra.mxu0 0.0
  %10767 = vmatprep.subr.mxu0 0.0
  %10768 = vmatpush1.msra.mxu0 0.0
  %10769 = vmatprep.subr.mxu0 0.0
  %10770 = vmatpush1.msra.mxu0 0.0
  %10771 = vmatprep.subr.mxu0 0.0
  %10772 = vmatpush1.msra.mxu0 0.0
  %10773 = vmatprep.subr.mxu0 0.0
  %10774 = vmatpush1.msra.mxu0 0.0
  %10775 = vmatprep.subr.mxu0 0.0
  %10776 = vmatpush1.msra.mxu0 0.0
  %10777 = vmatprep.subr.mxu0 0.0
  %10778 = vmatpush1.msra.mxu0 0.0
  %10779 = vmatprep.subr.mxu0 0.0
  %10780 = vmatpush1.msra.mxu0 0.0
  %10781 = vmatprep.subr.mxu0 0.0
  %10782 = vmatpush1.msra.mxu0 0.0
  %10783 = vmatprep.subr.mxu0 0.0
  %10784 = vmatpush1.msra.mxu0 0.0
  %10785 = vmatprep.subr.mxu0 0.0
  %10786 = vmatpush1.msra.mxu0 0.0
  %10787 = vmatprep.subr.mxu0 0.0
  %10788 = vmatpush1.msra.mxu0 0.0
  %10789 = vmatprep.subr.mxu0 0.0
  %10790 = vmatpush1.msra.mxu0 0.0
  %10791 = vmatprep.subr.mxu0 0.0
  %10792 = vmatpush1.msra.mxu0 0.0
  %10793 = vmatprep.subr.mxu0 0.0
  %10794 = vmatpush1.msra.mxu0 0.0
  %10795 = vmatprep.subr.mxu0 0.0
  %10796 = vmatpush1.msra.mxu0 0.0
  %10797 = vmatprep.mubr.f32.mxu0 0.0
  %10798 = vmatmul.mubr.f32.gmra.mrb[0].mxu0 %v10686
  %v10799 = vpop.f32.mrb[0].mxu0
  %v10800 = vadd.f32 %v10683, %v10799
  %v10801 = vpop.f32.mrb[0].mxu0
  %10802 = vmatprep.mubr.f32.mxu0 0.0
  %10803 = vmatmul.mubr.f32.gmra.mrb[0].mxu0 %v10689
  %v10804 = vpop.f32.mrb[0].mxu0
  %v10805 = vadd.f32 %v10683, %v10804
  %v10806 = vpop.f32.mrb[0].mxu0
  %10807 = vmatprep.mubr.f32.mxu0 0.0
  %10808 = vmatmul.mubr.f32.gmra.mrb[0].mxu0 %v10692
  %v10809 = vpop.f32.mrb[0].mxu0
  %v10810 = vadd.f32 %v10683, %v10809
  %v10811 = vpop.f32.mrb[0].mxu0
  %10812 = vmatprep.mubr.f32.mxu0 0.0
  %10813 = vmatmul.mubr.f32.gmra.mrb[0].mxu0 %v10695
  %v10814 = vpop.f32.mrb[0].mxu0
  %v10815 = vadd.f32 %v10683, %v10814
  %v10816 = vpop.f32.mrb[0].mxu0
  %10817 = vmatprep.mubr.f32.mxu0 0.0
  %10818 = vmatmul.mubr.f32.gmra.mrb[0].mxu0 %v10698
  %v10819 = vpop.f32.mrb[0].mxu0
  %v10820 = vadd.f32 %v10683, %v10819
  %v10821 = vpop.f32.mrb[0].mxu0
  %10822 = vmatprep.mubr.f32.mxu0 0.0
  %10823 = vmatmul.mubr.f32.gmra.mrb[0].mxu0 %v10701
  %v10824 = vpop.f32.mrb[0].mxu0
  %v10825 = vadd.f32 %v10683, %v10824
  %v10826 = vpop.f32.mrb[0].mxu0
  %10827 = vmatprep.mubr.f32.mxu0 0.0
  %10828 = vmatmul.mubr.f32.gmra.mrb[0].mxu0 %v10704
  %v10829 = vpop.f32.mrb[0].mxu0
  %v10830 = vadd.f32 %v10683, %v10829
  %v10831 = vpop.f32.mrb[0].mxu0
  %10832 = vmatprep.mubr.f32.mxu0 0.0
  %10833 = vmatmul.mubr.f32.gmra.mrb[0].mxu0 %v10707
  %v10834 = vpop.f32.mrb[0].mxu0
  %v10835 = vadd.f32 %v10683, %v10834
  %v10836 = vpop.f32.mrb[0].mxu0
  %10837 = vmatprep.mubr.f32.mxu0 0.0
  %10838 = vmatmul.mubr.f32.gmra.mrb[0].mxu0 %v10710
  %v10839 = vpop.f32.mrb[0].mxu0
  %v10840 = vadd.f32 %v10683, %v10839
  %v10841 = vpop.f32.mrb[0].mxu0
  %10842 = vmatprep.mubr.f32.mxu0 0.0
  %10843 = vmatmul.mubr.f32.gmra.mrb[0].mxu0 %v10713
  %v10844 = vpop.f32.mrb[0].mxu0
  %v10845 = vadd.f32 %v10683, %v10844
  %v10846 = vpop.f32.mrb[0].mxu0
  %10847 = vmatprep.mubr.f32.mxu0 0.0
  %10848 = vmatmul.mubr.f32.gmra.mrb[0].mxu0 %v10716
  %v10849 = vpop.f32.mrb[0].mxu0
  %v10850 = vadd.f32 %v10683, %v10849
  %v10851 = vpop.f32.mrb[0].mxu0
  %10852 = vmatprep.mubr.f32.mxu0 0.0
  %10853 = vmatmul.mubr.f32.gmra.mrb[0].mxu0 %v10719
  %v10854 = vpop.f32.mrb[0].mxu0
  %v10855 = vadd.f32 %v10683, %v10854
  %v10856 = vpop.f32.mrb[0].mxu0
  %10857 = vmatprep.mubr.f32.mxu0 0.0
  %10858 = vmatmul.mubr.f32.gmra.mrb[0].mxu0 %v10722
  %v10859 = vpop.f32.mrb[0].mxu0
  %v10860 = vadd.f32 %v10683, %v10859
  %v10861 = vpop.f32.mrb[0].mxu0
  %10862 = vmatprep.mubr.f32.mxu0 0.0
  %10863 = vmatmul.mubr.f32.gmra.mrb[0].mxu0 %v10725
  %v10864 = vpop.f32.mrb[0].mxu0
  %v10865 = vadd.f32 %v10683, %v10864
  %v10866 = vpop.f32.mrb[0].mxu0
  %10867 = vmatprep.mubr.f32.mxu0 0.0
  %10868 = vmatmul.mubr.f32.gmra.mrb[0].mxu0 %v10728
  %v10869 = vpop.f32.mrb[0].mxu0
  %v10870 = vadd.f32 %v10683, %v10869
  %v10871 = vpop.f32.mrb[0].mxu0
  %10872 = vmatprep.mubr.f32.mxu0 0.0
  %10873 = vmatmul.mubr.f32.gmra.mrb[0].mxu0 %v10731
  %v10874 = vpop.f32.mrb[0].mxu0
  %v10875 = vadd.f32 %v10683, %v10874
  %v10876 = vpop.f32.mrb[0].mxu0
  %10877 = vdwg.mxu0
  %v10878 = vadd.f32 %v6822, %v10800
  %v10879 = vadd.f32 %v6827, %v10805
  %v10880 = vadd.f32 %v6832, %v10810
  %v10881 = vadd.f32 %v6837, %v10815
  %v10882 = vadd.f32 %v6842, %v10820
  %v10883 = vadd.f32 %v6847, %v10825
  %v10884 = vadd.f32 %v6852, %v10830
  %v10885 = vadd.f32 %v6857, %v10835
  %v10886 = vadd.f32 %v6862, %v10840
  %v10887 = vadd.f32 %v6867, %v10845
  %v10888 = vadd.f32 %v6872, %v10850
  %v10889 = vadd.f32 %v6877, %v10855
  %v10890 = vadd.f32 %v6882, %v10860
  %v10891 = vadd.f32 %v6887, %v10865
  %v10892 = vadd.f32 %v6892, %v10870
  %v10893 = vadd.f32 %v6897, %v10875
  %v10894 = vld [vmem:[%s41] sm:$0x1]
  %v10895 = vld [vmem:[%s43] sm:$0x1]
  %v10896 = vsel %vm2167, %v10878, 0.0
  %10897 = vadd.xlane.f32.xlu0 %v10896
  %v10898 = vpop.xlane.xlu0 %10897
  %v10899 = vsel %vm2167, %v10879, 0.0
  %10900 = vadd.xlane.f32.xlu0 %v10899
  %v10901 = vpop.xlane.xlu0 %10900
  %v10902 = vsel %vm2167, %v10880, 0.0
  %10903 = vadd.xlane.f32.xlu0 %v10902
  %v10904 = vpop.xlane.xlu0 %10903
  %v10905 = vsel %vm2167, %v10881, 0.0
  %10906 = vadd.xlane.f32.xlu0 %v10905
  %v10907 = vpop.xlane.xlu0 %10906
  %v10908 = vsel %vm2167, %v10882, 0.0
  %10909 = vadd.xlane.f32.xlu0 %v10908
  %v10910 = vpop.xlane.xlu0 %10909
  %v10911 = vsel %vm2167, %v10883, 0.0
  %10912 = vadd.xlane.f32.xlu0 %v10911
  %v10913 = vpop.xlane.xlu0 %10912
  %v10914 = vsel %vm2167, %v10884, 0.0
  %10915 = vadd.xlane.f32.xlu0 %v10914
  %v10916 = vpop.xlane.xlu0 %10915
  %v10917 = vsel %vm2167, %v10885, 0.0
  %10918 = vadd.xlane.f32.xlu0 %v10917
  %v10919 = vpop.xlane.xlu0 %10918
  %v10920 = vsel %vm2167, %v10886, 0.0
  %10921 = vadd.xlane.f32.xlu0 %v10920
  %v10922 = vpop.xlane.xlu0 %10921
  %v10923 = vsel %vm2167, %v10887, 0.0
  %10924 = vadd.xlane.f32.xlu0 %v10923
  %v10925 = vpop.xlane.xlu0 %10924
  %v10926 = vsel %vm2167, %v10888, 0.0
  %10927 = vadd.xlane.f32.xlu0 %v10926
  %v10928 = vpop.xlane.xlu0 %10927
  %v10929 = vsel %vm2167, %v10889, 0.0
  %10930 = vadd.xlane.f32.xlu0 %v10929
  %v10931 = vpop.xlane.xlu0 %10930
  %v10932 = vsel %vm2167, %v10890, 0.0
  %10933 = vadd.xlane.f32.xlu0 %v10932
  %v10934 = vpop.xlane.xlu0 %10933
  %v10935 = vsel %vm2167, %v10891, 0.0
  %10936 = vadd.xlane.f32.xlu0 %v10935
  %v10937 = vpop.xlane.xlu0 %10936
  %v10938 = vsel %vm2167, %v10892, 0.0
  %10939 = vadd.xlane.f32.xlu0 %v10938
  %v10940 = vpop.xlane.xlu0 %10939
  %v10941 = vsel %vm2167, %v10893, 0.0
  %10942 = vadd.xlane.f32.xlu0 %v10941
  %v10943 = vpop.xlane.xlu0 %10942
  %v10944 = vrcp.pop 32.0
  %v10945 = vmul.f32 %v10898, %v10944
  %v10946 = vmul.f32 %v10901, %v10944
  %v10947 = vmul.f32 %v10904, %v10944
  %v10948 = vmul.f32 %v10907, %v10944
  %v10949 = vmul.f32 %v10910, %v10944
  %v10950 = vmul.f32 %v10913, %v10944
  %v10951 = vmul.f32 %v10916, %v10944
  %v10952 = vmul.f32 %v10919, %v10944
  %v10953 = vmul.f32 %v10922, %v10944
  %v10954 = vmul.f32 %v10925, %v10944
  %v10955 = vmul.f32 %v10928, %v10944
  %v10956 = vmul.f32 %v10931, %v10944
  %v10957 = vmul.f32 %v10934, %v10944
  %v10958 = vmul.f32 %v10937, %v10944
  %v10959 = vmul.f32 %v10940, %v10944
  %v10960 = vmul.f32 %v10943, %v10944
  %v10961 = vsub.f32 %v10878, %v10945
  %v10962 = vsub.f32 %v10879, %v10946
  %v10963 = vsub.f32 %v10880, %v10947
  %v10964 = vsub.f32 %v10881, %v10948
  %v10965 = vsub.f32 %v10882, %v10949
  %v10966 = vsub.f32 %v10883, %v10950
  %v10967 = vsub.f32 %v10884, %v10951
  %v10968 = vsub.f32 %v10885, %v10952
  %v10969 = vsub.f32 %v10886, %v10953
  %v10970 = vsub.f32 %v10887, %v10954
  %v10971 = vsub.f32 %v10888, %v10955
  %v10972 = vsub.f32 %v10889, %v10956
  %v10973 = vsub.f32 %v10890, %v10957
  %v10974 = vsub.f32 %v10891, %v10958
  %v10975 = vsub.f32 %v10892, %v10959
  %v10976 = vsub.f32 %v10893, %v10960
  %v10977 = vmul.f32 %v10961, %v10961
  %v10978 = vmul.f32 %v10962, %v10962
  %v10979 = vmul.f32 %v10963, %v10963
  %v10980 = vmul.f32 %v10964, %v10964
  %v10981 = vmul.f32 %v10965, %v10965
  %v10982 = vmul.f32 %v10966, %v10966
  %v10983 = vmul.f32 %v10967, %v10967
  %v10984 = vmul.f32 %v10968, %v10968
  %v10985 = vmul.f32 %v10969, %v10969
  %v10986 = vmul.f32 %v10970, %v10970
  %v10987 = vmul.f32 %v10971, %v10971
  %v10988 = vmul.f32 %v10972, %v10972
  %v10989 = vmul.f32 %v10973, %v10973
  %v10990 = vmul.f32 %v10974, %v10974
  %v10991 = vmul.f32 %v10975, %v10975
  %v10992 = vmul.f32 %v10976, %v10976
  %v10993 = vsel %vm2167, %v10977, 0.0
  %10994 = vadd.xlane.f32.xlu0 %v10993
  %v10995 = vpop.xlane.xlu0 %10994
  %v10996 = vsel %vm2167, %v10978, 0.0
  %10997 = vadd.xlane.f32.xlu0 %v10996
  %v10998 = vpop.xlane.xlu0 %10997
  %v10999 = vsel %vm2167, %v10979, 0.0
  %11000 = vadd.xlane.f32.xlu0 %v10999
  %v11001 = vpop.xlane.xlu0 %11000
  %v11002 = vsel %vm2167, %v10980, 0.0
  %11003 = vadd.xlane.f32.xlu0 %v11002
  %v11004 = vpop.xlane.xlu0 %11003
  %v11005 = vsel %vm2167, %v10981, 0.0
  %11006 = vadd.xlane.f32.xlu0 %v11005
  %v11007 = vpop.xlane.xlu0 %11006
  %v11008 = vsel %vm2167, %v10982, 0.0
  %11009 = vadd.xlane.f32.xlu0 %v11008
  %v11010 = vpop.xlane.xlu0 %11009
  %v11011 = vsel %vm2167, %v10983, 0.0
  %11012 = vadd.xlane.f32.xlu0 %v11011
  %v11013 = vpop.xlane.xlu0 %11012
  %v11014 = vsel %vm2167, %v10984, 0.0
  %11015 = vadd.xlane.f32.xlu0 %v11014
  %v11016 = vpop.xlane.xlu0 %11015
  %v11017 = vsel %vm2167, %v10985, 0.0
  %11018 = vadd.xlane.f32.xlu0 %v11017
  %v11019 = vpop.xlane.xlu0 %11018
  %v11020 = vsel %vm2167, %v10986, 0.0
  %11021 = vadd.xlane.f32.xlu0 %v11020
  %v11022 = vpop.xlane.xlu0 %11021
  %v11023 = vsel %vm2167, %v10987, 0.0
  %11024 = vadd.xlane.f32.xlu0 %v11023
  %v11025 = vpop.xlane.xlu0 %11024
  %v11026 = vsel %vm2167, %v10988, 0.0
  %11027 = vadd.xlane.f32.xlu0 %v11026
  %v11028 = vpop.xlane.xlu0 %11027
  %v11029 = vsel %vm2167, %v10989, 0.0
  %11030 = vadd.xlane.f32.xlu0 %v11029
  %v11031 = vpop.xlane.xlu0 %11030
  %v11032 = vsel %vm2167, %v10990, 0.0
  %11033 = vadd.xlane.f32.xlu0 %v11032
  %v11034 = vpop.xlane.xlu0 %11033
  %v11035 = vsel %vm2167, %v10991, 0.0
  %11036 = vadd.xlane.f32.xlu0 %v11035
  %v11037 = vpop.xlane.xlu0 %11036
  %v11038 = vsel %vm2167, %v10992, 0.0
  %11039 = vadd.xlane.f32.xlu0 %v11038
  %v11040 = vpop.xlane.xlu0 %11039
  %v11041 = vmul.f32 %v10995, %v10944
  %v11042 = vmul.f32 %v10998, %v10944
  %v11043 = vmul.f32 %v11001, %v10944
  %v11044 = vmul.f32 %v11004, %v10944
  %v11045 = vmul.f32 %v11007, %v10944
  %v11046 = vmul.f32 %v11010, %v10944
  %v11047 = vmul.f32 %v11013, %v10944
  %v11048 = vmul.f32 %v11016, %v10944
  %v11049 = vmul.f32 %v11019, %v10944
  %v11050 = vmul.f32 %v11022, %v10944
  %v11051 = vmul.f32 %v11025, %v10944
  %v11052 = vmul.f32 %v11028, %v10944
  %v11053 = vmul.f32 %v11031, %v10944
  %v11054 = vmul.f32 %v11034, %v10944
  %v11055 = vmul.f32 %v11037, %v10944
  %v11056 = vmul.f32 %v11040, %v10944
  %v11057 = vadd.f32 %v11041, 1e-05
  %v11058 = vadd.f32 %v11042, 1e-05
  %v11059 = vadd.f32 %v11043, 1e-05
  %v11060 = vadd.f32 %v11044, 1e-05
  %v11061 = vadd.f32 %v11045, 1e-05
  %v11062 = vadd.f32 %v11046, 1e-05
  %v11063 = vadd.f32 %v11047, 1e-05
  %v11064 = vadd.f32 %v11048, 1e-05
  %v11065 = vadd.f32 %v11049, 1e-05
  %v11066 = vadd.f32 %v11050, 1e-05
  %v11067 = vadd.f32 %v11051, 1e-05
  %v11068 = vadd.f32 %v11052, 1e-05
  %v11069 = vadd.f32 %v11053, 1e-05
  %v11070 = vadd.f32 %v11054, 1e-05
  %v11071 = vadd.f32 %v11055, 1e-05
  %v11072 = vadd.f32 %v11056, 1e-05
  %v11073 = vrsqrt.pop %v11057
  %v11074 = vrsqrt.pop %v11058
  %v11075 = vrsqrt.pop %v11059
  %v11076 = vrsqrt.pop %v11060
  %v11077 = vrsqrt.pop %v11061
  %v11078 = vrsqrt.pop %v11062
  %v11079 = vrsqrt.pop %v11063
  %v11080 = vrsqrt.pop %v11064
  %v11081 = vrsqrt.pop %v11065
  %v11082 = vrsqrt.pop %v11066
  %v11083 = vrsqrt.pop %v11067
  %v11084 = vrsqrt.pop %v11068
  %v11085 = vrsqrt.pop %v11069
  %v11086 = vrsqrt.pop %v11070
  %v11087 = vrsqrt.pop %v11071
  %v11088 = vrsqrt.pop %v11072
  %v11089 = vmul.f32 %v10961, %v11073
  %v11090 = vmul.f32 %v10962, %v11074
  %v11091 = vmul.f32 %v10963, %v11075
  %v11092 = vmul.f32 %v10964, %v11076
  %v11093 = vmul.f32 %v10965, %v11077
  %v11094 = vmul.f32 %v10966, %v11078
  %v11095 = vmul.f32 %v10967, %v11079
  %v11096 = vmul.f32 %v10968, %v11080
  %v11097 = vmul.f32 %v10969, %v11081
  %v11098 = vmul.f32 %v10970, %v11082
  %v11099 = vmul.f32 %v10971, %v11083
  %v11100 = vmul.f32 %v10972, %v11084
  %v11101 = vmul.f32 %v10973, %v11085
  %v11102 = vmul.f32 %v10974, %v11086
  %v11103 = vmul.f32 %v10975, %v11087
  %v11104 = vmul.f32 %v10976, %v11088
  %v11106 = vlaneseq
  %v11107 = vshrl.u32 %v11106, 7
  %v11108 = vsub.s32 0, %v11107
  %v11109 = vrot.slane %v10894, %v11108
  %v11111 = vmul.f32 %v11089, %v11109
  %v11112 = vmul.f32 %v11090, %v11109
  %v11113 = vmul.f32 %v11091, %v11109
  %v11114 = vmul.f32 %v11092, %v11109
  %v11115 = vmul.f32 %v11093, %v11109
  %v11116 = vmul.f32 %v11094, %v11109
  %v11117 = vmul.f32 %v11095, %v11109
  %v11118 = vmul.f32 %v11096, %v11109
  %v11119 = vmul.f32 %v11097, %v11109
  %v11120 = vmul.f32 %v11098, %v11109
  %v11121 = vmul.f32 %v11099, %v11109
  %v11122 = vmul.f32 %v11100, %v11109
  %v11123 = vmul.f32 %v11101, %v11109
  %v11124 = vmul.f32 %v11102, %v11109
  %v11125 = vmul.f32 %v11103, %v11109
  %v11126 = vmul.f32 %v11104, %v11109
  %v11128 = vlaneseq
  %v11129 = vshrl.u32 %v11128, 7
  %v11130 = vsub.s32 0, %v11129
  %v11131 = vrot.slane %v10895, %v11130
  %v11133 = vadd.f32 %v11111, %v11131
  %v11134 = vadd.f32 %v11112, %v11131
  %v11135 = vadd.f32 %v11113, %v11131
  %v11136 = vadd.f32 %v11114, %v11131
  %v11137 = vadd.f32 %v11115, %v11131
  %v11138 = vadd.f32 %v11116, %v11131
  %v11139 = vadd.f32 %v11117, %v11131
  %v11140 = vadd.f32 %v11118, %v11131
  %v11141 = vadd.f32 %v11119, %v11131
  %v11142 = vadd.f32 %v11120, %v11131
  %v11143 = vadd.f32 %v11121, %v11131
  %v11144 = vadd.f32 %v11122, %v11131
  %v11145 = vadd.f32 %v11123, %v11131
  %v11146 = vadd.f32 %v11124, %v11131
  %v11147 = vadd.f32 %v11125, %v11131
  %v11148 = vadd.f32 %v11126, %v11131
  %v11149 = vld [vmem:[%s49] sm:$0xff]
  %v11150 = vld [vmem:[%s49 + $0x8] sm:$0xff]
  %v11151 = vld [vmem:[%s49 + $0x10] sm:$0xff]
  %v11152 = vld [vmem:[%s49 + $0x18] sm:$0xff]
  %v11153 = vld [vmem:[%s51] sm:$0x1]
  %v11155 = vlaneseq
  %v11156 = vshrl.u32 %v11155, 7
  %v11157 = vsub.s32 0, %v11156
  %v11158 = vrot.slane %v11153, %v11157
  %v11161 = vsel %vm2167, %v11133, 0
  %v11164 = vsel %vm2167, %v11134, 0
  %v11167 = vsel %vm2167, %v11135, 0
  %v11170 = vsel %vm2167, %v11136, 0
  %v11173 = vsel %vm2167, %v11137, 0
  %v11176 = vsel %vm2167, %v11138, 0
  %v11179 = vsel %vm2167, %v11139, 0
  %v11182 = vsel %vm2167, %v11140, 0
  %v11185 = vsel %vm2167, %v11141, 0
  %v11188 = vsel %vm2167, %v11142, 0
  %v11191 = vsel %vm2167, %v11143, 0
  %v11194 = vsel %vm2167, %v11144, 0
  %v11197 = vsel %vm2167, %v11145, 0
  %v11200 = vsel %vm2167, %v11146, 0
  %v11203 = vsel %vm2167, %v11147, 0
  %v11206 = vsel %vm2167, %v11148, 0
  %11208 = vmatprep.subr.mxu0 0.0
  %11209 = vmatpush1.msra.mxu0 %v11149
  %11210 = vmatprep.subr.mxu0 0.0
  %11211 = vmatpush1.msra.mxu0 %v11150
  %11212 = vmatprep.subr.mxu0 0.0
  %11213 = vmatpush1.msra.mxu0 %v11151
  %11214 = vmatprep.subr.mxu0 0.0
  %11215 = vmatpush1.msra.mxu0 %v11152
  %11216 = vmatprep.subr.mxu0 0.0
  %11217 = vmatpush1.msra.mxu0 0.0
  %11218 = vmatprep.subr.mxu0 0.0
  %11219 = vmatpush1.msra.mxu0 0.0
  %11220 = vmatprep.subr.mxu0 0.0
  %11221 = vmatpush1.msra.mxu0 0.0
  %11222 = vmatprep.subr.mxu0 0.0
  %11223 = vmatpush1.msra.mxu0 0.0
  %11224 = vmatprep.subr.mxu0 0.0
  %11225 = vmatpush1.msra.mxu0 0.0
  %11226 = vmatprep.subr.mxu0 0.0
  %11227 = vmatpush1.msra.mxu0 0.0
  %11228 = vmatprep.subr.mxu0 0.0
  %11229 = vmatpush1.msra.mxu0 0.0
  %11230 = vmatprep.subr.mxu0 0.0
  %11231 = vmatpush1.msra.mxu0 0.0
  %11232 = vmatprep.subr.mxu0 0.0
  %11233 = vmatpush1.msra.mxu0 0.0
  %11234 = vmatprep.subr.mxu0 0.0
  %11235 = vmatpush1.msra.mxu0 0.0
  %11236 = vmatprep.subr.mxu0 0.0
  %11237 = vmatpush1.msra.mxu0 0.0
  %11238 = vmatprep.subr.mxu0 0.0
  %11239 = vmatpush1.msra.mxu0 0.0
  %11240 = vmatprep.subr.mxu0 0.0
  %11241 = vmatpush1.msra.mxu0 0.0
  %11242 = vmatprep.subr.mxu0 0.0
  %11243 = vmatpush1.msra.mxu0 0.0
  %11244 = vmatprep.subr.mxu0 0.0
  %11245 = vmatpush1.msra.mxu0 0.0
  %11246 = vmatprep.subr.mxu0 0.0
  %11247 = vmatpush1.msra.mxu0 0.0
  %11248 = vmatprep.subr.mxu0 0.0
  %11249 = vmatpush1.msra.mxu0 0.0
  %11250 = vmatprep.subr.mxu0 0.0
  %11251 = vmatpush1.msra.mxu0 0.0
  %11252 = vmatprep.subr.mxu0 0.0
  %11253 = vmatpush1.msra.mxu0 0.0
  %11254 = vmatprep.subr.mxu0 0.0
  %11255 = vmatpush1.msra.mxu0 0.0
  %11256 = vmatprep.subr.mxu0 0.0
  %11257 = vmatpush1.msra.mxu0 0.0
  %11258 = vmatprep.subr.mxu0 0.0
  %11259 = vmatpush1.msra.mxu0 0.0
  %11260 = vmatprep.subr.mxu0 0.0
  %11261 = vmatpush1.msra.mxu0 0.0
  %11262 = vmatprep.subr.mxu0 0.0
  %11263 = vmatpush1.msra.mxu0 0.0
  %11264 = vmatprep.subr.mxu0 0.0
  %11265 = vmatpush1.msra.mxu0 0.0
  %11266 = vmatprep.subr.mxu0 0.0
  %11267 = vmatpush1.msra.mxu0 0.0
  %11268 = vmatprep.subr.mxu0 0.0
  %11269 = vmatpush1.msra.mxu0 0.0
  %11270 = vmatprep.subr.mxu0 0.0
  %11271 = vmatpush1.msra.mxu0 0.0
  %11272 = vmatprep.mubr.f32.mxu0 0.0
  %11273 = vmatmul.mubr.f32.gmra.mrb[0].mxu0 %v11161
  %v11274 = vpop.f32.mrb[0].mxu0
  %v11275 = vadd.f32 %v11158, %v11274
  %v11276 = vpop.f32.mrb[0].mxu0
  %11277 = vmatprep.mubr.f32.mxu0 0.0
  %11278 = vmatmul.mubr.f32.gmra.mrb[0].mxu0 %v11164
  %v11279 = vpop.f32.mrb[0].mxu0
  %v11280 = vadd.f32 %v11158, %v11279
  %v11281 = vpop.f32.mrb[0].mxu0
  %11282 = vmatprep.mubr.f32.mxu0 0.0
  %11283 = vmatmul.mubr.f32.gmra.mrb[0].mxu0 %v11167
  %v11284 = vpop.f32.mrb[0].mxu0
  %v11285 = vadd.f32 %v11158, %v11284
  %v11286 = vpop.f32.mrb[0].mxu0
  %11287 = vmatprep.mubr.f32.mxu0 0.0
  %11288 = vmatmul.mubr.f32.gmra.mrb[0].mxu0 %v11170
  %v11289 = vpop.f32.mrb[0].mxu0
  %v11290 = vadd.f32 %v11158, %v11289
  %v11291 = vpop.f32.mrb[0].mxu0
  %11292 = vmatprep.mubr.f32.mxu0 0.0
  %11293 = vmatmul.mubr.f32.gmra.mrb[0].mxu0 %v11173
  %v11294 = vpop.f32.mrb[0].mxu0
  %v11295 = vadd.f32 %v11158, %v11294
  %v11296 = vpop.f32.mrb[0].mxu0
  %11297 = vmatprep.mubr.f32.mxu0 0.0
  %11298 = vmatmul.mubr.f32.gmra.mrb[0].mxu0 %v11176
  %v11299 = vpop.f32.mrb[0].mxu0
  %v11300 = vadd.f32 %v11158, %v11299
  %v11301 = vpop.f32.mrb[0].mxu0
  %11302 = vmatprep.mubr.f32.mxu0 0.0
  %11303 = vmatmul.mubr.f32.gmra.mrb[0].mxu0 %v11179
  %v11304 = vpop.f32.mrb[0].mxu0
  %v11305 = vadd.f32 %v11158, %v11304
  %v11306 = vpop.f32.mrb[0].mxu0
  %11307 = vmatprep.mubr.f32.mxu0 0.0
  %11308 = vmatmul.mubr.f32.gmra.mrb[0].mxu0 %v11182
  %v11309 = vpop.f32.mrb[0].mxu0
  %v11310 = vadd.f32 %v11158, %v11309
  %v11311 = vpop.f32.mrb[0].mxu0
  %11312 = vmatprep.mubr.f32.mxu0 0.0
  %11313 = vmatmul.mubr.f32.gmra.mrb[0].mxu0 %v11185
  %v11314 = vpop.f32.mrb[0].mxu0
  %v11315 = vadd.f32 %v11158, %v11314
  %v11316 = vpop.f32.mrb[0].mxu0
  %11317 = vmatprep.mubr.f32.mxu0 0.0
  %11318 = vmatmul.mubr.f32.gmra.mrb[0].mxu0 %v11188
  %v11319 = vpop.f32.mrb[0].mxu0
  %v11320 = vadd.f32 %v11158, %v11319
  %v11321 = vpop.f32.mrb[0].mxu0
  %11322 = vmatprep.mubr.f32.mxu0 0.0
  %11323 = vmatmul.mubr.f32.gmra.mrb[0].mxu0 %v11191
  %v11324 = vpop.f32.mrb[0].mxu0
  %v11325 = vadd.f32 %v11158, %v11324
  %v11326 = vpop.f32.mrb[0].mxu0
  %11327 = vmatprep.mubr.f32.mxu0 0.0
  %11328 = vmatmul.mubr.f32.gmra.mrb[0].mxu0 %v11194
  %v11329 = vpop.f32.mrb[0].mxu0
  %v11330 = vadd.f32 %v11158, %v11329
  %v11331 = vpop.f32.mrb[0].mxu0
  %11332 = vmatprep.mubr.f32.mxu0 0.0
  %11333 = vmatmul.mubr.f32.gmra.mrb[0].mxu0 %v11197
  %v11334 = vpop.f32.mrb[0].mxu0
  %v11335 = vadd.f32 %v11158, %v11334
  %v11336 = vpop.f32.mrb[0].mxu0
  %11337 = vmatprep.mubr.f32.mxu0 0.0
  %11338 = vmatmul.mubr.f32.gmra.mrb[0].mxu0 %v11200
  %v11339 = vpop.f32.mrb[0].mxu0
  %v11340 = vadd.f32 %v11158, %v11339
  %v11341 = vpop.f32.mrb[0].mxu0
  %11342 = vmatprep.mubr.f32.mxu0 0.0
  %11343 = vmatmul.mubr.f32.gmra.mrb[0].mxu0 %v11203
  %v11344 = vpop.f32.mrb[0].mxu0
  %v11345 = vadd.f32 %v11158, %v11344
  %v11346 = vpop.f32.mrb[0].mxu0
  %11347 = vmatprep.mubr.f32.mxu0 0.0
  %11348 = vmatmul.mubr.f32.gmra.mrb[0].mxu0 %v11206
  %v11349 = vpop.f32.mrb[0].mxu0
  %v11350 = vadd.f32 %v11158, %v11349
  %v11351 = vpop.f32.mrb[0].mxu0
  %11352 = vdwg.mxu0
  %v11353 = vmax.f32 %v11275, 0.0
  %v11354 = vmax.f32 %v11280, 0.0
  %v11355 = vmax.f32 %v11285, 0.0
  %v11356 = vmax.f32 %v11290, 0.0
  %v11357 = vmax.f32 %v11295, 0.0
  %v11358 = vmax.f32 %v11300, 0.0
  %v11359 = vmax.f32 %v11305, 0.0
  %v11360 = vmax.f32 %v11310, 0.0
  %v11361 = vmax.f32 %v11315, 0.0
  %v11362 = vmax.f32 %v11320, 0.0
  %v11363 = vmax.f32 %v11325, 0.0
  %v11364 = vmax.f32 %v11330, 0.0
  %v11365 = vmax.f32 %v11335, 0.0
  %v11366 = vmax.f32 %v11340, 0.0
  %v11367 = vmax.f32 %v11345, 0.0
  %v11368 = vmax.f32 %v11350, 0.0
  %v11369 = vld [vmem:[%s53] sm:$0xff]
  %v11370 = vld [vmem:[%s53 + $0x8] sm:$0xff]
  %v11371 = vld [vmem:[%s53 + $0x10] sm:$0xff]
  %v11372 = vld [vmem:[%s53 + $0x18] sm:$0xff]
  %v11373 = vld [vmem:[%s53 + $0x20] sm:$0xff]
  %v11374 = vld [vmem:[%s53 + $0x28] sm:$0xff]
  %v11375 = vld [vmem:[%s53 + $0x30] sm:$0xff]
  %v11376 = vld [vmem:[%s53 + $0x38] sm:$0xff]
  %v11377 = vld [vmem:[%s55] sm:$0x1]
  %v11379 = vlaneseq
  %v11380 = vshrl.u32 %v11379, 7
  %v11381 = vsub.s32 0, %v11380
  %v11382 = vrot.slane %v11377, %v11381
  %v11385 = vsel %vm6662, %v11353, 0
  %v11388 = vsel %vm6662, %v11354, 0
  %v11391 = vsel %vm6662, %v11355, 0
  %v11394 = vsel %vm6662, %v11356, 0
  %v11397 = vsel %vm6662, %v11357, 0
  %v11400 = vsel %vm6662, %v11358, 0
  %v11403 = vsel %vm6662, %v11359, 0
  %v11406 = vsel %vm6662, %v11360, 0
  %v11409 = vsel %vm6662, %v11361, 0
  %v11412 = vsel %vm6662, %v11362, 0
  %v11415 = vsel %vm6662, %v11363, 0
  %v11418 = vsel %vm6662, %v11364, 0
  %v11421 = vsel %vm6662, %v11365, 0
  %v11424 = vsel %vm6662, %v11366, 0
  %v11427 = vsel %vm6662, %v11367, 0
  %v11430 = vsel %vm6662, %v11368, 0
  %11432 = vmatprep.subr.mxu0 0.0
  %11433 = vmatpush1.msra.mxu0 %v11369
  %11434 = vmatprep.subr.mxu0 0.0
  %11435 = vmatpush1.msra.mxu0 %v11370
  %11436 = vmatprep.subr.mxu0 0.0
  %11437 = vmatpush1.msra.mxu0 %v11371
  %11438 = vmatprep.subr.mxu0 0.0
  %11439 = vmatpush1.msra.mxu0 %v11372
  %11440 = vmatprep.subr.mxu0 0.0
  %11441 = vmatpush1.msra.mxu0 %v11373
  %11442 = vmatprep.subr.mxu0 0.0
  %11443 = vmatpush1.msra.mxu0 %v11374
  %11444 = vmatprep.subr.mxu0 0.0
  %11445 = vmatpush1.msra.mxu0 %v11375
  %11446 = vmatprep.subr.mxu0 0.0
  %11447 = vmatpush1.msra.mxu0 %v11376
  %11448 = vmatprep.subr.mxu0 0.0
  %11449 = vmatpush1.msra.mxu0 0.0
  %11450 = vmatprep.subr.mxu0 0.0
  %11451 = vmatpush1.msra.mxu0 0.0
  %11452 = vmatprep.subr.mxu0 0.0
  %11453 = vmatpush1.msra.mxu0 0.0
  %11454 = vmatprep.subr.mxu0 0.0
  %11455 = vmatpush1.msra.mxu0 0.0
  %11456 = vmatprep.subr.mxu0 0.0
  %11457 = vmatpush1.msra.mxu0 0.0
  %11458 = vmatprep.subr.mxu0 0.0
  %11459 = vmatpush1.msra.mxu0 0.0
  %11460 = vmatprep.subr.mxu0 0.0
  %11461 = vmatpush1.msra.mxu0 0.0
  %11462 = vmatprep.subr.mxu0 0.0
  %11463 = vmatpush1.msra.mxu0 0.0
  %11464 = vmatprep.subr.mxu0 0.0
  %11465 = vmatpush1.msra.mxu0 0.0
  %11466 = vmatprep.subr.mxu0 0.0
  %11467 = vmatpush1.msra.mxu0 0.0
  %11468 = vmatprep.subr.mxu0 0.0
  %11469 = vmatpush1.msra.mxu0 0.0
  %11470 = vmatprep.subr.mxu0 0.0
  %11471 = vmatpush1.msra.mxu0 0.0
  %11472 = vmatprep.subr.mxu0 0.0
  %11473 = vmatpush1.msra.mxu0 0.0
  %11474 = vmatprep.subr.mxu0 0.0
  %11475 = vmatpush1.msra.mxu0 0.0
  %11476 = vmatprep.subr.mxu0 0.0
  %11477 = vmatpush1.msra.mxu0 0.0
  %11478 = vmatprep.subr.mxu0 0.0
  %11479 = vmatpush1.msra.mxu0 0.0
  %11480 = vmatprep.subr.mxu0 0.0
  %11481 = vmatpush1.msra.mxu0 0.0
  %11482 = vmatprep.subr.mxu0 0.0
  %11483 = vmatpush1.msra.mxu0 0.0
  %11484 = vmatprep.subr.mxu0 0.0
  %11485 = vmatpush1.msra.mxu0 0.0
  %11486 = vmatprep.subr.mxu0 0.0
  %11487 = vmatpush1.msra.mxu0 0.0
  %11488 = vmatprep.subr.mxu0 0.0
  %11489 = vmatpush1.msra.mxu0 0.0
  %11490 = vmatprep.subr.mxu0 0.0
  %11491 = vmatpush1.msra.mxu0 0.0
  %11492 = vmatprep.subr.mxu0 0.0
  %11493 = vmatpush1.msra.mxu0 0.0
  %11494 = vmatprep.subr.mxu0 0.0
  %11495 = vmatpush1.msra.mxu0 0.0
  %11496 = vmatprep.mubr.f32.mxu0 0.0
  %11497 = vmatmul.mubr.f32.gmra.mrb[0].mxu0 %v11385
  %v11498 = vpop.f32.mrb[0].mxu0
  %v11499 = vadd.f32 %v11382, %v11498
  %v11500 = vpop.f32.mrb[0].mxu0
  %11501 = vmatprep.mubr.f32.mxu0 0.0
  %11502 = vmatmul.mubr.f32.gmra.mrb[0].mxu0 %v11388
  %v11503 = vpop.f32.mrb[0].mxu0
  %v11504 = vadd.f32 %v11382, %v11503
  %v11505 = vpop.f32.mrb[0].mxu0
  %11506 = vmatprep.mubr.f32.mxu0 0.0
  %11507 = vmatmul.mubr.f32.gmra.mrb[0].mxu0 %v11391
  %v11508 = vpop.f32.mrb[0].mxu0
  %v11509 = vadd.f32 %v11382, %v11508
  %v11510 = vpop.f32.mrb[0].mxu0
  %11511 = vmatprep.mubr.f32.mxu0 0.0
  %11512 = vmatmul.mubr.f32.gmra.mrb[0].mxu0 %v11394
  %v11513 = vpop.f32.mrb[0].mxu0
  %v11514 = vadd.f32 %v11382, %v11513
  %v11515 = vpop.f32.mrb[0].mxu0
  %11516 = vmatprep.mubr.f32.mxu0 0.0
  %11517 = vmatmul.mubr.f32.gmra.mrb[0].mxu0 %v11397
  %v11518 = vpop.f32.mrb[0].mxu0
  %v11519 = vadd.f32 %v11382, %v11518
  %v11520 = vpop.f32.mrb[0].mxu0
  %11521 = vmatprep.mubr.f32.mxu0 0.0
  %11522 = vmatmul.mubr.f32.gmra.mrb[0].mxu0 %v11400
  %v11523 = vpop.f32.mrb[0].mxu0
  %v11524 = vadd.f32 %v11382, %v11523
  %v11525 = vpop.f32.mrb[0].mxu0
  %11526 = vmatprep.mubr.f32.mxu0 0.0
  %11527 = vmatmul.mubr.f32.gmra.mrb[0].mxu0 %v11403
  %v11528 = vpop.f32.mrb[0].mxu0
  %v11529 = vadd.f32 %v11382, %v11528
  %v11530 = vpop.f32.mrb[0].mxu0
  %11531 = vmatprep.mubr.f32.mxu0 0.0
  %11532 = vmatmul.mubr.f32.gmra.mrb[0].mxu0 %v11406
  %v11533 = vpop.f32.mrb[0].mxu0
  %v11534 = vadd.f32 %v11382, %v11533
  %v11535 = vpop.f32.mrb[0].mxu0
  %11536 = vmatprep.mubr.f32.mxu0 0.0
  %11537 = vmatmul.mubr.f32.gmra.mrb[0].mxu0 %v11409
  %v11538 = vpop.f32.mrb[0].mxu0
  %v11539 = vadd.f32 %v11382, %v11538
  %v11540 = vpop.f32.mrb[0].mxu0
  %11541 = vmatprep.mubr.f32.mxu0 0.0
  %11542 = vmatmul.mubr.f32.gmra.mrb[0].mxu0 %v11412
  %v11543 = vpop.f32.mrb[0].mxu0
  %v11544 = vadd.f32 %v11382, %v11543
  %v11545 = vpop.f32.mrb[0].mxu0
  %11546 = vmatprep.mubr.f32.mxu0 0.0
  %11547 = vmatmul.mubr.f32.gmra.mrb[0].mxu0 %v11415
  %v11548 = vpop.f32.mrb[0].mxu0
  %v11549 = vadd.f32 %v11382, %v11548
  %v11550 = vpop.f32.mrb[0].mxu0
  %11551 = vmatprep.mubr.f32.mxu0 0.0
  %11552 = vmatmul.mubr.f32.gmra.mrb[0].mxu0 %v11418
  %v11553 = vpop.f32.mrb[0].mxu0
  %v11554 = vadd.f32 %v11382, %v11553
  %v11555 = vpop.f32.mrb[0].mxu0
  %11556 = vmatprep.mubr.f32.mxu0 0.0
  %11557 = vmatmul.mubr.f32.gmra.mrb[0].mxu0 %v11421
  %v11558 = vpop.f32.mrb[0].mxu0
  %v11559 = vadd.f32 %v11382, %v11558
  %v11560 = vpop.f32.mrb[0].mxu0
  %11561 = vmatprep.mubr.f32.mxu0 0.0
  %11562 = vmatmul.mubr.f32.gmra.mrb[0].mxu0 %v11424
  %v11563 = vpop.f32.mrb[0].mxu0
  %v11564 = vadd.f32 %v11382, %v11563
  %v11565 = vpop.f32.mrb[0].mxu0
  %11566 = vmatprep.mubr.f32.mxu0 0.0
  %11567 = vmatmul.mubr.f32.gmra.mrb[0].mxu0 %v11427
  %v11568 = vpop.f32.mrb[0].mxu0
  %v11569 = vadd.f32 %v11382, %v11568
  %v11570 = vpop.f32.mrb[0].mxu0
  %11571 = vmatprep.mubr.f32.mxu0 0.0
  %11572 = vmatmul.mubr.f32.gmra.mrb[0].mxu0 %v11430
  %v11573 = vpop.f32.mrb[0].mxu0
  %v11574 = vadd.f32 %v11382, %v11573
  %v11575 = vpop.f32.mrb[0].mxu0
  %11576 = vdwg.mxu0
  %v11577 = vadd.f32 %v11133, %v11499
  %v11578 = vadd.f32 %v11134, %v11504
  %v11579 = vadd.f32 %v11135, %v11509
  %v11580 = vadd.f32 %v11136, %v11514
  %v11581 = vadd.f32 %v11137, %v11519
  %v11582 = vadd.f32 %v11138, %v11524
  %v11583 = vadd.f32 %v11139, %v11529
  %v11584 = vadd.f32 %v11140, %v11534
  %v11585 = vadd.f32 %v11141, %v11539
  %v11586 = vadd.f32 %v11142, %v11544
  %v11587 = vadd.f32 %v11143, %v11549
  %v11588 = vadd.f32 %v11144, %v11554
  %v11589 = vadd.f32 %v11145, %v11559
  %v11590 = vadd.f32 %v11146, %v11564
  %v11591 = vadd.f32 %v11147, %v11569
  %v11592 = vadd.f32 %v11148, %v11574
  %v11593 = vld [vmem:[%s45] sm:$0x1]
  %v11594 = vld [vmem:[%s47] sm:$0x1]
  %v11595 = vsel %vm2167, %v11577, 0.0
  %11596 = vadd.xlane.f32.xlu0 %v11595
  %v11597 = vpop.xlane.xlu0 %11596
  %v11598 = vsel %vm2167, %v11578, 0.0
  %11599 = vadd.xlane.f32.xlu0 %v11598
  %v11600 = vpop.xlane.xlu0 %11599
  %v11601 = vsel %vm2167, %v11579, 0.0
  %11602 = vadd.xlane.f32.xlu0 %v11601
  %v11603 = vpop.xlane.xlu0 %11602
  %v11604 = vsel %vm2167, %v11580, 0.0
  %11605 = vadd.xlane.f32.xlu0 %v11604
  %v11606 = vpop.xlane.xlu0 %11605
  %v11607 = vsel %vm2167, %v11581, 0.0
  %11608 = vadd.xlane.f32.xlu0 %v11607
  %v11609 = vpop.xlane.xlu0 %11608
  %v11610 = vsel %vm2167, %v11582, 0.0
  %11611 = vadd.xlane.f32.xlu0 %v11610
  %v11612 = vpop.xlane.xlu0 %11611
  %v11613 = vsel %vm2167, %v11583, 0.0
  %11614 = vadd.xlane.f32.xlu0 %v11613
  %v11615 = vpop.xlane.xlu0 %11614
  %v11616 = vsel %vm2167, %v11584, 0.0
  %11617 = vadd.xlane.f32.xlu0 %v11616
  %v11618 = vpop.xlane.xlu0 %11617
  %v11619 = vsel %vm2167, %v11585, 0.0
  %11620 = vadd.xlane.f32.xlu0 %v11619
  %v11621 = vpop.xlane.xlu0 %11620
  %v11622 = vsel %vm2167, %v11586, 0.0
  %11623 = vadd.xlane.f32.xlu0 %v11622
  %v11624 = vpop.xlane.xlu0 %11623
  %v11625 = vsel %vm2167, %v11587, 0.0
  %11626 = vadd.xlane.f32.xlu0 %v11625
  %v11627 = vpop.xlane.xlu0 %11626
  %v11628 = vsel %vm2167, %v11588, 0.0
  %11629 = vadd.xlane.f32.xlu0 %v11628
  %v11630 = vpop.xlane.xlu0 %11629
  %v11631 = vsel %vm2167, %v11589, 0.0
  %11632 = vadd.xlane.f32.xlu0 %v11631
  %v11633 = vpop.xlane.xlu0 %11632
  %v11634 = vsel %vm2167, %v11590, 0.0
  %11635 = vadd.xlane.f32.xlu0 %v11634
  %v11636 = vpop.xlane.xlu0 %11635
  %v11637 = vsel %vm2167, %v11591, 0.0
  %11638 = vadd.xlane.f32.xlu0 %v11637
  %v11639 = vpop.xlane.xlu0 %11638
  %v11640 = vsel %vm2167, %v11592, 0.0
  %11641 = vadd.xlane.f32.xlu0 %v11640
  %v11642 = vpop.xlane.xlu0 %11641
  %v11643 = vmul.f32 %v11597, %v10944
  %v11644 = vmul.f32 %v11600, %v10944
  %v11645 = vmul.f32 %v11603, %v10944
  %v11646 = vmul.f32 %v11606, %v10944
  %v11647 = vmul.f32 %v11609, %v10944
  %v11648 = vmul.f32 %v11612, %v10944
  %v11649 = vmul.f32 %v11615, %v10944
  %v11650 = vmul.f32 %v11618, %v10944
  %v11651 = vmul.f32 %v11621, %v10944
  %v11652 = vmul.f32 %v11624, %v10944
  %v11653 = vmul.f32 %v11627, %v10944
  %v11654 = vmul.f32 %v11630, %v10944
  %v11655 = vmul.f32 %v11633, %v10944
  %v11656 = vmul.f32 %v11636, %v10944
  %v11657 = vmul.f32 %v11639, %v10944
  %v11658 = vmul.f32 %v11642, %v10944
  %v11659 = vsub.f32 %v11577, %v11643
  %v11660 = vsub.f32 %v11578, %v11644
  %v11661 = vsub.f32 %v11579, %v11645
  %v11662 = vsub.f32 %v11580, %v11646
  %v11663 = vsub.f32 %v11581, %v11647
  %v11664 = vsub.f32 %v11582, %v11648
  %v11665 = vsub.f32 %v11583, %v11649
  %v11666 = vsub.f32 %v11584, %v11650
  %v11667 = vsub.f32 %v11585, %v11651
  %v11668 = vsub.f32 %v11586, %v11652
  %v11669 = vsub.f32 %v11587, %v11653
  %v11670 = vsub.f32 %v11588, %v11654
  %v11671 = vsub.f32 %v11589, %v11655
  %v11672 = vsub.f32 %v11590, %v11656
  %v11673 = vsub.f32 %v11591, %v11657
  %v11674 = vsub.f32 %v11592, %v11658
  %v11675 = vmul.f32 %v11659, %v11659
  %v11676 = vmul.f32 %v11660, %v11660
  %v11677 = vmul.f32 %v11661, %v11661
  %v11678 = vmul.f32 %v11662, %v11662
  %v11679 = vmul.f32 %v11663, %v11663
  %v11680 = vmul.f32 %v11664, %v11664
  %v11681 = vmul.f32 %v11665, %v11665
  %v11682 = vmul.f32 %v11666, %v11666
  %v11683 = vmul.f32 %v11667, %v11667
  %v11684 = vmul.f32 %v11668, %v11668
  %v11685 = vmul.f32 %v11669, %v11669
  %v11686 = vmul.f32 %v11670, %v11670
  %v11687 = vmul.f32 %v11671, %v11671
  %v11688 = vmul.f32 %v11672, %v11672
  %v11689 = vmul.f32 %v11673, %v11673
  %v11690 = vmul.f32 %v11674, %v11674
  %v11691 = vsel %vm2167, %v11675, 0.0
  %11692 = vadd.xlane.f32.xlu0 %v11691
  %v11693 = vpop.xlane.xlu0 %11692
  %v11694 = vsel %vm2167, %v11676, 0.0
  %11695 = vadd.xlane.f32.xlu0 %v11694
  %v11696 = vpop.xlane.xlu0 %11695
  %v11697 = vsel %vm2167, %v11677, 0.0
  %11698 = vadd.xlane.f32.xlu0 %v11697
  %v11699 = vpop.xlane.xlu0 %11698
  %v11700 = vsel %vm2167, %v11678, 0.0
  %11701 = vadd.xlane.f32.xlu0 %v11700
  %v11702 = vpop.xlane.xlu0 %11701
  %v11703 = vsel %vm2167, %v11679, 0.0
  %11704 = vadd.xlane.f32.xlu0 %v11703
  %v11705 = vpop.xlane.xlu0 %11704
  %v11706 = vsel %vm2167, %v11680, 0.0
  %11707 = vadd.xlane.f32.xlu0 %v11706
  %v11708 = vpop.xlane.xlu0 %11707
  %v11709 = vsel %vm2167, %v11681, 0.0
  %11710 = vadd.xlane.f32.xlu0 %v11709
  %v11711 = vpop.xlane.xlu0 %11710
  %v11712 = vsel %vm2167, %v11682, 0.0
  %11713 = vadd.xlane.f32.xlu0 %v11712
  %v11714 = vpop.xlane.xlu0 %11713
  %v11715 = vsel %vm2167, %v11683, 0.0
  %11716 = vadd.xlane.f32.xlu0 %v11715
  %v11717 = vpop.xlane.xlu0 %11716
  %v11718 = vsel %vm2167, %v11684, 0.0
  %11719 = vadd.xlane.f32.xlu0 %v11718
  %v11720 = vpop.xlane.xlu0 %11719
  %v11721 = vsel %vm2167, %v11685, 0.0
  %11722 = vadd.xlane.f32.xlu0 %v11721
  %v11723 = vpop.xlane.xlu0 %11722
  %v11724 = vsel %vm2167, %v11686, 0.0
  %11725 = vadd.xlane.f32.xlu0 %v11724
  %v11726 = vpop.xlane.xlu0 %11725
  %v11727 = vsel %vm2167, %v11687, 0.0
  %11728 = vadd.xlane.f32.xlu0 %v11727
  %v11729 = vpop.xlane.xlu0 %11728
  %v11730 = vsel %vm2167, %v11688, 0.0
  %11731 = vadd.xlane.f32.xlu0 %v11730
  %v11732 = vpop.xlane.xlu0 %11731
  %v11733 = vsel %vm2167, %v11689, 0.0
  %11734 = vadd.xlane.f32.xlu0 %v11733
  %v11735 = vpop.xlane.xlu0 %11734
  %v11736 = vsel %vm2167, %v11690, 0.0
  %11737 = vadd.xlane.f32.xlu0 %v11736
  %v11738 = vpop.xlane.xlu0 %11737
  %v11739 = vmul.f32 %v11693, %v10944
  %v11740 = vmul.f32 %v11696, %v10944
  %v11741 = vmul.f32 %v11699, %v10944
  %v11742 = vmul.f32 %v11702, %v10944
  %v11743 = vmul.f32 %v11705, %v10944
  %v11744 = vmul.f32 %v11708, %v10944
  %v11745 = vmul.f32 %v11711, %v10944
  %v11746 = vmul.f32 %v11714, %v10944
  %v11747 = vmul.f32 %v11717, %v10944
  %v11748 = vmul.f32 %v11720, %v10944
  %v11749 = vmul.f32 %v11723, %v10944
  %v11750 = vmul.f32 %v11726, %v10944
  %v11751 = vmul.f32 %v11729, %v10944
  %v11752 = vmul.f32 %v11732, %v10944
  %v11753 = vmul.f32 %v11735, %v10944
  %v11754 = vmul.f32 %v11738, %v10944
  %v11755 = vadd.f32 %v11739, 1e-05
  %v11756 = vadd.f32 %v11740, 1e-05
  %v11757 = vadd.f32 %v11741, 1e-05
  %v11758 = vadd.f32 %v11742, 1e-05
  %v11759 = vadd.f32 %v11743, 1e-05
  %v11760 = vadd.f32 %v11744, 1e-05
  %v11761 = vadd.f32 %v11745, 1e-05
  %v11762 = vadd.f32 %v11746, 1e-05
  %v11763 = vadd.f32 %v11747, 1e-05
  %v11764 = vadd.f32 %v11748, 1e-05
  %v11765 = vadd.f32 %v11749, 1e-05
  %v11766 = vadd.f32 %v11750, 1e-05
  %v11767 = vadd.f32 %v11751, 1e-05
  %v11768 = vadd.f32 %v11752, 1e-05
  %v11769 = vadd.f32 %v11753, 1e-05
  %v11770 = vadd.f32 %v11754, 1e-05
  %v11771 = vrsqrt.pop %v11755
  %v11772 = vrsqrt.pop %v11756
  %v11773 = vrsqrt.pop %v11757
  %v11774 = vrsqrt.pop %v11758
  %v11775 = vrsqrt.pop %v11759
  %v11776 = vrsqrt.pop %v11760
  %v11777 = vrsqrt.pop %v11761
  %v11778 = vrsqrt.pop %v11762
  %v11779 = vrsqrt.pop %v11763
  %v11780 = vrsqrt.pop %v11764
  %v11781 = vrsqrt.pop %v11765
  %v11782 = vrsqrt.pop %v11766
  %v11783 = vrsqrt.pop %v11767
  %v11784 = vrsqrt.pop %v11768
  %v11785 = vrsqrt.pop %v11769
  %v11786 = vrsqrt.pop %v11770
  %v11787 = vmul.f32 %v11659, %v11771
  %v11788 = vmul.f32 %v11660, %v11772
  %v11789 = vmul.f32 %v11661, %v11773
  %v11790 = vmul.f32 %v11662, %v11774
  %v11791 = vmul.f32 %v11663, %v11775
  %v11792 = vmul.f32 %v11664, %v11776
  %v11793 = vmul.f32 %v11665, %v11777
  %v11794 = vmul.f32 %v11666, %v11778
  %v11795 = vmul.f32 %v11667, %v11779
  %v11796 = vmul.f32 %v11668, %v11780
  %v11797 = vmul.f32 %v11669, %v11781
  %v11798 = vmul.f32 %v11670, %v11782
  %v11799 = vmul.f32 %v11671, %v11783
  %v11800 = vmul.f32 %v11672, %v11784
  %v11801 = vmul.f32 %v11673, %v11785
  %v11802 = vmul.f32 %v11674, %v11786
  %v11804 = vlaneseq
  %v11805 = vshrl.u32 %v11804, 7
  %v11806 = vsub.s32 0, %v11805
  %v11807 = vrot.slane %v11593, %v11806
  %v11809 = vmul.f32 %v11787, %v11807
  %v11810 = vmul.f32 %v11788, %v11807
  %v11811 = vmul.f32 %v11789, %v11807
  %v11812 = vmul.f32 %v11790, %v11807
  %v11813 = vmul.f32 %v11791, %v11807
  %v11814 = vmul.f32 %v11792, %v11807
  %v11815 = vmul.f32 %v11793, %v11807
  %v11816 = vmul.f32 %v11794, %v11807
  %v11817 = vmul.f32 %v11795, %v11807
  %v11818 = vmul.f32 %v11796, %v11807
  %v11819 = vmul.f32 %v11797, %v11807
  %v11820 = vmul.f32 %v11798, %v11807
  %v11821 = vmul.f32 %v11799, %v11807
  %v11822 = vmul.f32 %v11800, %v11807
  %v11823 = vmul.f32 %v11801, %v11807
  %v11824 = vmul.f32 %v11802, %v11807
  %v11826 = vlaneseq
  %v11827 = vshrl.u32 %v11826, 7
  %v11828 = vsub.s32 0, %v11827
  %v11829 = vrot.slane %v11594, %v11828
  %v11831 = vadd.f32 %v11809, %v11829
  %v11832 = vadd.f32 %v11810, %v11829
  %v11833 = vadd.f32 %v11811, %v11829
  %v11834 = vadd.f32 %v11812, %v11829
  %v11835 = vadd.f32 %v11813, %v11829
  %v11836 = vadd.f32 %v11814, %v11829
  %v11837 = vadd.f32 %v11815, %v11829
  %v11838 = vadd.f32 %v11816, %v11829
  %v11839 = vadd.f32 %v11817, %v11829
  %v11840 = vadd.f32 %v11818, %v11829
  %v11841 = vadd.f32 %v11819, %v11829
  %v11842 = vadd.f32 %v11820, %v11829
  %v11843 = vadd.f32 %v11821, %v11829
  %v11844 = vadd.f32 %v11822, %v11829
  %v11845 = vadd.f32 %v11823, %v11829
  %v11846 = vadd.f32 %v11824, %v11829
  %11847 = vmatprep.subr.mxu0 0.0
  %11848 = vmatpush1.msra.mxu0 %v11831
  %11849 = vmatprep.subr.mxu0 0.0
  %11850 = vmatpush1.msra.mxu0 %v11832
  %11851 = vmatprep.subr.mxu0 0.0
  %11852 = vmatpush1.msra.mxu0 %v11833
  %11853 = vmatprep.subr.mxu0 0.0
  %11854 = vmatpush1.msra.mxu0 %v11834
  %11855 = vmatprep.subr.mxu0 0.0
  %11856 = vmatpush1.msra.mxu0 %v11835
  %11857 = vmatprep.subr.mxu0 0.0
  %11858 = vmatpush1.msra.mxu0 %v11836
  %11859 = vmatprep.subr.mxu0 0.0
  %11860 = vmatpush1.msra.mxu0 %v11837
  %11861 = vmatprep.subr.mxu0 0.0
  %11862 = vmatpush1.msra.mxu0 %v11838
  %11863 = vmatprep.subr.mxu0 0.0
  %11864 = vmatpush1.msra.mxu0 %v11839
  %11865 = vmatprep.subr.mxu0 0.0
  %11866 = vmatpush1.msra.mxu0 %v11840
  %11867 = vmatprep.subr.mxu0 0.0
  %11868 = vmatpush1.msra.mxu0 %v11841
  %11869 = vmatprep.subr.mxu0 0.0
  %11870 = vmatpush1.msra.mxu0 %v11842
  %11871 = vmatprep.subr.mxu0 0.0
  %11872 = vmatpush1.msra.mxu0 %v11843
  %11873 = vmatprep.subr.mxu0 0.0
  %11874 = vmatpush1.msra.mxu0 %v11844
  %11875 = vmatprep.subr.mxu0 0.0
  %11876 = vmatpush1.msra.mxu0 %v11845
  %11877 = vmatprep.subr.mxu0 0.0
  %11878 = vmatpush1.msra.mxu0 %v11846
  %11879 = vmatprep.subr.mxu0 0.0
  %11880 = vmatpush1.msra.mxu0 0.0
  %11881 = vmatprep.subr.mxu0 0.0
  %11882 = vmatpush1.msra.mxu0 0.0
  %11883 = vmatprep.subr.mxu0 0.0
  %11884 = vmatpush1.msra.mxu0 0.0
  %11885 = vmatprep.subr.mxu0 0.0
  %11886 = vmatpush1.msra.mxu0 0.0
  %11887 = vmatprep.subr.mxu0 0.0
  %11888 = vmatpush1.msra.mxu0 0.0
  %11889 = vmatprep.subr.mxu0 0.0
  %11890 = vmatpush1.msra.mxu0 0.0
  %11891 = vmatprep.subr.mxu0 0.0
  %11892 = vmatpush1.msra.mxu0 0.0
  %11893 = vmatprep.subr.mxu0 0.0
  %11894 = vmatpush1.msra.mxu0 0.0
  %11895 = vmatprep.subr.mxu0 0.0
  %11896 = vmatpush1.msra.mxu0 0.0
  %11897 = vmatprep.subr.mxu0 0.0
  %11898 = vmatpush1.msra.mxu0 0.0
  %11899 = vmatprep.subr.mxu0 0.0
  %11900 = vmatpush1.msra.mxu0 0.0
  %11901 = vmatprep.subr.mxu0 0.0
  %11902 = vmatpush1.msra.mxu0 0.0
  %11903 = vmatprep.subr.mxu0 0.0
  %11904 = vmatpush1.msra.mxu0 0.0
  %11905 = vmatprep.subr.mxu0 0.0
  %11906 = vmatpush1.msra.mxu0 0.0
  %11907 = vmatprep.subr.mxu0 0.0
  %11908 = vmatpush1.msra.mxu0 0.0
  %11909 = vmatprep.subr.mxu0 0.0
  %11910 = vmatpush1.msra.mxu0 0.0
  %11911 = vmatprep.mubr.f32.mxu0 0.0
  %11912 = vmatmul.mubr.f32.gmra.mrb[0].mxu0 %v4729
  %v11913 = vpop.f32.mrb[0].mxu0
  %v11914 = vadd.f32 0.0, %v11913
  %v11915 = vpop.f32.mrb[0].mxu0
  %11916 = vdwg.mxu0
  %v11917 = vmul.f32 %v11914, 0.015625
  %v11918 = vld [vmem:[%s57] sm:$0xff]
  %v11919 = vld [vmem:[%s57 + $0x8] sm:$0xff]
  %v11920 = vld [vmem:[%s57 + $0x10] sm:$0xff]
  %v11921 = vld [vmem:[%s57 + $0x18] sm:$0xff]
  %v11922 = vld [vmem:[%s57 + $0x20] sm:$0xff]
  %v11923 = vld [vmem:[%s57 + $0x28] sm:$0xff]
  %v11924 = vld [vmem:[%s57 + $0x30] sm:$0xff]
  %v11925 = vld [vmem:[%s57 + $0x38] sm:$0xff]
  %v11926 = vld [vmem:[%s59] sm:$0x3]
  %v11928 = vlaneseq
  %v11929 = vshrl.u32 %v11928, 7
  %v11930 = vsub.s32 0, %v11929
  %v11931 = vrot.slane %v11926, %v11930
  %v11932 = vlaneseq
  %v11933 = vshrl.u32 %v11932, 7
  %v11934 = vsub.s32 1, %v11933
  %v11935 = vrot.slane %v11926, %v11934
  %v11939 = vsel %vm2167, %v11917, 0
  %11941 = vmatprep.subr.mxu0 %v11919
  %11942 = vmatpush1.msra.mxu0 %v11918
  %11943 = vmatprep.subr.mxu0 %v11921
  %11944 = vmatpush1.msra.mxu0 %v11920
  %11945 = vmatprep.subr.mxu0 %v11923
  %11946 = vmatpush1.msra.mxu0 %v11922
  %11947 = vmatprep.subr.mxu0 %v11925
  %11948 = vmatpush1.msra.mxu0 %v11924
  %11949 = vmatprep.subr.mxu0 0.0
  %11950 = vmatpush1.msra.mxu0 0.0
  %11951 = vmatprep.subr.mxu0 0.0
  %11952 = vmatpush1.msra.mxu0 0.0
  %11953 = vmatprep.subr.mxu0 0.0
  %11954 = vmatpush1.msra.mxu0 0.0
  %11955 = vmatprep.subr.mxu0 0.0
  %11956 = vmatpush1.msra.mxu0 0.0
  %11957 = vmatprep.subr.mxu0 0.0
  %11958 = vmatpush1.msra.mxu0 0.0
  %11959 = vmatprep.subr.mxu0 0.0
  %11960 = vmatpush1.msra.mxu0 0.0
  %11961 = vmatprep.subr.mxu0 0.0
  %11962 = vmatpush1.msra.mxu0 0.0
  %11963 = vmatprep.subr.mxu0 0.0
  %11964 = vmatpush1.msra.mxu0 0.0
  %11965 = vmatprep.subr.mxu0 0.0
  %11966 = vmatpush1.msra.mxu0 0.0
  %11967 = vmatprep.subr.mxu0 0.0
  %11968 = vmatpush1.msra.mxu0 0.0
  %11969 = vmatprep.subr.mxu0 0.0
  %11970 = vmatpush1.msra.mxu0 0.0
  %11971 = vmatprep.subr.mxu0 0.0
  %11972 = vmatpush1.msra.mxu0 0.0
  %11973 = vmatprep.subr.mxu0 0.0
  %11974 = vmatpush1.msra.mxu0 0.0
  %11975 = vmatprep.subr.mxu0 0.0
  %11976 = vmatpush1.msra.mxu0 0.0
  %11977 = vmatprep.subr.mxu0 0.0
  %11978 = vmatpush1.msra.mxu0 0.0
  %11979 = vmatprep.subr.mxu0 0.0
  %11980 = vmatpush1.msra.mxu0 0.0
  %11981 = vmatprep.subr.mxu0 0.0
  %11982 = vmatpush1.msra.mxu0 0.0
  %11983 = vmatprep.subr.mxu0 0.0
  %11984 = vmatpush1.msra.mxu0 0.0
  %11985 = vmatprep.subr.mxu0 0.0
  %11986 = vmatpush1.msra.mxu0 0.0
  %11987 = vmatprep.subr.mxu0 0.0
  %11988 = vmatpush1.msra.mxu0 0.0
  %11989 = vmatprep.subr.mxu0 0.0
  %11990 = vmatpush1.msra.mxu0 0.0
  %11991 = vmatprep.subr.mxu0 0.0
  %11992 = vmatpush1.msra.mxu0 0.0
  %11993 = vmatprep.subr.mxu0 0.0
  %11994 = vmatpush1.msra.mxu0 0.0
  %11995 = vmatprep.subr.mxu0 0.0
  %11996 = vmatpush1.msra.mxu0 0.0
  %11997 = vmatprep.subr.mxu0 0.0
  %11998 = vmatpush1.msra.mxu0 0.0
  %11999 = vmatprep.subr.mxu0 0.0
  %12000 = vmatpush1.msra.mxu0 0.0
  %12001 = vmatprep.subr.mxu0 0.0
  %12002 = vmatpush1.msra.mxu0 0.0
  %12003 = vmatprep.subr.mxu0 0.0
  %12004 = vmatpush1.msra.mxu0 0.0
  %12005 = vmatprep.mubr.f32.mxu0 0.0
  %12006 = vmatmul.mubr.f32.gmra.mrb[0].mxu0 %v11939
  %v12007 = vpop.f32.mrb[0].mxu0
  %v12008 = vadd.f32 %v11931, %v12007
  %v12009 = vpop.f32.mrb[0].mxu0
  %v12010 = vadd.f32 %v11935, %v12009
  %12011 = vdwg.mxu0
  %v12012 = vld [vmem:[%s61] sm:$0x3]
  %v12014 = vlaneseq
  %v12015 = vshrl.u32 %v12014, 7
  %v12016 = vsub.s32 0, %v12015
  %v12017 = vrot.slane %v12012, %v12016
  %v12018 = vlaneseq
  %v12019 = vshrl.u32 %v12018, 7
  %v12020 = vsub.s32 1, %v12019
  %v12021 = vrot.slane %v12012, %v12020
  %v12024 = vmul.f32 %v6733, %v12017
  %v12025 = vmul.f32 %v6735, %v12021
  %v12026 = vsub.f32 1.0, %v12012
  %v12028 = vlaneseq
  %v12029 = vshrl.u32 %v12028, 7
  %v12030 = vsub.s32 0, %v12029
  %v12031 = vrot.slane %v12026, %v12030
  %v12032 = vlaneseq
  %v12033 = vshrl.u32 %v12032, 7
  %v12034 = vsub.s32 1, %v12033
  %v12035 = vrot.slane %v12026, %v12034
  %v12038 = vmul.f32 %v12008, %v12031
  %v12039 = vmul.f32 %v12010, %v12035
  %v12040 = vadd.f32 %v12024, %v12038
  %v12041 = vadd.f32 %v12025, %v12039
  %v12044 = vcombine.low %v12040, %v12041
  %v12046 = vunpack.c.l.s4 1983009808
  %v12047 = vunpack.c.0.s8 %v12046
  %v12048 = vlaneseq
  %v12049 = vshrl.u32 %v12048, 7
  %v12050 = vsub.s32 %v12047, %v12049
  %v12051 = vrot.slane %v12044, %v12050
  %vm12053 = vcmask 1041408
  %vm12054 = vcmask 519170
  %vm12055 = vmor %vm12054, %vm12053
  %12056 = vst.msk [vmem:[%s63] sm:$0xf] %vm12055, %v12051
  // Predicated region
  $region126: #{ensemble_forward.1} parent=0 // pred_check
    _
  $region127: #{ensemble_forward.1} parent=0 // pred_check_branch
    %12058 = sbr.rel (0) target = $region129
  $region128: #{ensemble_forward.1} parent=0 // pred_region
    _
  $region129: #{ensemble_forward.1} parent=0 // pred_fallthru
    _
  // Predicated region
  $region130: #{ensemble_forward.1} parent=0 // pred_check
    _
  $region131: #{ensemble_forward.1} parent=0 // pred_check_branch
    %12060 = sbr.rel (0) target = $region133
  $region132: #{ensemble_forward.1} parent=0 // pred_region
    _
  $region133: #{ensemble_forward.1} parent=0 // pred_fallthru
    _

</llo_original>
